<compile_context>
chip_gen: v5e
topology: v5e:2x2
jax: 0.10.0
libtpu: 0.0.40
codegen_flags: <defaults>
</compile_context>

<pallas_src>
import jax
import jax.numpy as jnp
from jax import lax
from jax.experimental import pallas as pl
from jax.experimental.pallas import tpu as pltpu

EPS = 1e-5  # nn.BatchNorm1d default eps

DIMS = [10000, 512, 128, 32, 1]
TK1 = 5120            # layer-1 reduction tile: 2 grid steps, 5 MiB bf16 W1 tile
K_PAD = 2 * TK1       # 10240: W1's input dim is zero-padded to this (exact)


# --------------------------- kernel -------------------------------------------

def fused_mlp_kernel(x_ref, w1_ref, b1_ref, w2_ref, b2_ref, w3_ref, b3_ref,
                     w4_ref, b4_ref, o_ref, acc_ref):
    """Entire MLP in one kernel.

    Grid axis 0 streams the layer-1 reduction (K) dimension; the tiny
    downstream layers + sigmoid execute in the last-step epilogue (free filler:
    the kernel is HBM-bound on the bf16 W1 stream, not MXU/VALU-bound).
    BatchNorm is pre-folded into weights/biases; dropout is eval-identity.
    """
    k = pl.program_id(0)

    @pl.when(k == 0)
    def _():
        acc_ref[...] = jnp.zeros_like(acc_ref)

    # x is the raw (B, 10000) array; the last K tile overhangs by 240 columns.
    # Mask the overhang explicitly (never trust out-of-bounds buffer contents),
    # then cast to bf16 to pair with the bf16 W1 tile on the MXU.
    valid = DIMS[0] - k * TK1                                   # scalar
    col = lax.broadcasted_iota(jnp.int32, x_ref.shape, 1)
    x = jnp.where(col < valid, x_ref[...], 0.0).astype(jnp.bfloat16)

    acc_ref[...] += jnp.dot(x, w1_ref[...],
                            preferred_element_type=jnp.float32)

    @pl.when(k == pl.num_programs(0) - 1)
    def _():
        h1 = jnp.maximum(acc_ref[...] + b1_ref[...], 0.0)          # fc1+bn1+relu
        h2 = jnp.maximum(
            jnp.dot(h1, w2_ref[...], preferred_element_type=jnp.float32)
            + b2_ref[...], 0.0)                                     # fc2+bn2+relu
        h3 = jnp.maximum(
            jnp.dot(h2, w3_ref[...], preferred_element_type=jnp.float32)
            + b3_ref[...], 0.0)                                     # fc3+bn3+relu
        y = jnp.dot(h3, w4_ref[...], preferred_element_type=jnp.float32) \
            + b4_ref[...]                                           # fc4
        o_ref[...] = (1.0 / (1.0 + jnp.exp(-y))).astype(o_ref.dtype)  # sigmoid


# --------------------------- wrapper -------------------------------------------

def fused_mlp(x, w1, b1, w2, b2, w3, b3, w4, b4):
    B, K = x.shape
    nk = pl.cdiv(K, TK1)                     # 2 steps for K=10000, TK1=5120
    assert w1.shape == (nk * TK1, DIMS[1])   # W1 padded once at prep time

    def full_block(shape):
        return pl.BlockSpec(shape, lambda k: (0, 0))

    return pl.pallas_call(
        fused_mlp_kernel,
        out_shape=jax.ShapeDtypeStruct((B, DIMS[4]), jnp.float32),
        grid_spec=pltpu.PrefetchScalarGridSpec(
            num_scalar_prefetch=0,
            grid=(nk,),
            in_specs=[
                pl.BlockSpec((B, TK1), lambda k: (0, k)),        # x stream over K
                pl.BlockSpec((TK1, DIMS[1]), lambda k: (k, 0)),  # W1' (bf16) stream
                full_block((1, DIMS[1])),                        # b1' (BN folded)
                full_block((DIMS[1], DIMS[2])),                  # W2'
                full_block((1, DIMS[2])),                        # b2'
                full_block((DIMS[2], DIMS[3])),                  # W3'
                full_block((1, DIMS[3])),                        # b3'
                full_block((DIMS[3], DIMS[4])),                  # W4
                full_block((1, DIMS[4])),                        # b4
            ],
            out_specs=pl.BlockSpec((B, DIMS[4]), lambda k: (0, 0)),
            scratch_shapes=[pltpu.VMEM((B, DIMS[1]), jnp.float32)],  # resident acc
        ),
        compiler_params=pltpu.CompilerParams(
            dimension_semantics=("arbitrary",),      # K is a reduction axis
            vmem_limit_bytes=32 * 1024 * 1024,       # ~11.5 MiB used; safe v5e/v6e/v7x
        ),
    )(x, w1, b1, w2, b2, w3, b3, w4, b4)


# --------------------------- params --------------------------------------------

def init_params(key):
    """PyTorch-style shapes/init: Linear W/b ~ U(-1/sqrt(fan_in), +1/sqrt(fan_in)),
    fresh-module BatchNorm stats (gamma=1, beta=0, running_mean=0, running_var=1)."""
    params = {}
    keys = jax.random.split(key, 8)
    for li in range(4):
        fan_in, fan_out = DIMS[li], DIMS[li + 1]
        bound = 1.0 / jnp.sqrt(jnp.float32(fan_in))
        params[f"w{li + 1}"] = jax.random.uniform(
            keys[2 * li], (fan_in, fan_out), jnp.float32, -bound, bound)
        params[f"b{li + 1}"] = jax.random.uniform(
            keys[2 * li + 1], (1, fan_out), jnp.float32, -bound, bound)
        if li < 3:  # BN after fc1, fc2, fc3
            params[f"g{li + 1}"] = jnp.ones((1, fan_out), jnp.float32)
            params[f"be{li + 1}"] = jnp.zeros((1, fan_out), jnp.float32)
            params[f"m{li + 1}"] = jnp.zeros((1, fan_out), jnp.float32)
            params[f"v{li + 1}"] = jnp.ones((1, fan_out), jnp.float32)
    return params


def prepare_params(params):
    """One-time prep (OUTSIDE the jitted forward; no per-call HBM copies of W1):
      * fold eval-mode BatchNorm into the preceding Linear:
          scale = gamma * rsqrt(var + eps)
          W' = W * scale (per output column);  b' = (b - mean) * scale + beta
      * zero-pad W1's input dim 10000 -> K_PAD (exact: padded rows meet masked
        zero inputs), then cast W1 to bfloat16 (halves the dominant HBM stream;
        biases, small layers and the accumulator stay f32).
    """
    prep = {}
    for li in range(1, 4):
        scale = params[f"g{li}"] * jax.lax.rsqrt(params[f"v{li}"] + EPS)   # (1, N)
        prep[f"w{li}"] = params[f"w{li}"] * scale
        prep[f"b{li}"] = (params[f"b{li}"] - params[f"m{li}"]) * scale + params[f"be{li}"]
    prep["w4"] = params["w4"]
    prep["b4"] = params["b4"]
    prep["w1"] = jnp.pad(prep["w1"],
                         ((0, K_PAD - DIMS[0]), (0, 0))).astype(jnp.bfloat16)
    return prep


# --------------------------- model forward --------------------------------------

@jax.jit
def fake_news_detector_forward(x, prep):
    # Unpadded (B, 10000) activations go straight in; the kernel masks the
    # overhanging tail of the last K tile. Dropout = identity (eval mode).
    return fused_mlp(x,
                     prep["w1"], prep["b1"],
                     prep["w2"], prep["b2"],
                     prep["w3"], prep["b3"],
                     prep["w4"], prep["b4"])


# --------------------------- pure-JAX reference ----------------------------------

def reference_forward(x, params):
    """Eval-mode reference in f32 (BatchNorm with running stats, dropout identity)."""
    h = x
    for li in range(1, 4):
        h = h @ params[f"w{li}"] + params[f"b{li}"]
        scale = params[f"g{li}"] * lax.rsqrt(params[f"v{li}"] + EPS)
        h = (h - params[f"m{li}"]) * scale + params[f"be{li}"]
        h = jnp.maximum(h, 0.0)
    y = h @ params["w4"] + params["b4"]
    return jax.nn.sigmoid(y)


if __name__ == "__main__":
    key = jax.random.PRNGKey(0)
    k_param, k_x = jax.random.split(key)
    params = init_params(k_param)
    prep = prepare_params(params)   # BN folding + W1 padding + bf16 cast, done once

    batch = 8
    x = jax.random.normal(k_x, (batch, DIMS[0]), jnp.float32)

    out = fake_news_detector_forward(x, prep)
    out = jax.block_until_ready(out)

    ref = reference_forward(x, params)

    assert out.shape == (batch, 1)
    assert bool(jnp.all((out >= 0.0) & (out <= 1.0)))
    # bf16 W1 trades ~1e-3 relative deviation for ~2x speed; generous tolerance.
    assert bool(jnp.allclose(out, ref, atol=5e-2, rtol=5e-2))
    print("KERNEL_OK")
</pallas_src>

<mosaic_0001>
module attributes {stable_mosaic.version = 11 : i64} {
  func.func @fused_mlp_kernel(%arg0: i32, %arg1: memref<8x5120xf32, #tpu.memory_space<vmem>>, %arg2: memref<5120x512xbf16, #tpu.memory_space<vmem>>, %arg3: memref<1x512xf32, #tpu.memory_space<vmem>>, %arg4: memref<512x128xf32, #tpu.memory_space<vmem>>, %arg5: memref<1x128xf32, #tpu.memory_space<vmem>>, %arg6: memref<128x32xf32, #tpu.memory_space<vmem>>, %arg7: memref<1x32xf32, #tpu.memory_space<vmem>>, %arg8: memref<32x1xf32, #tpu.memory_space<vmem>>, %arg9: memref<1x1xf32, #tpu.memory_space<vmem>>, %arg10: memref<8x1xf32, #tpu.memory_space<vmem>>, %arg11: memref<8x512xf32, #tpu.memory_space<vmem>>) attributes {dimension_semantics = [#tpu.dimension_semantics<arbitrary>], iteration_bounds = array<i64: 2>, scalar_prefetch = 0 : i64, scratch_operands = 1 : i64, tpu.core_type = #tpu.core_type<tc>, window_params = [{transform_indices = @transform_0, window_bounds = array<i64: 8, 5120>}, {transform_indices = @transform_1, window_bounds = array<i64: 5120, 512>}, {pipeline_mode = #tpu.pipeline_mode<synchronous>, transform_indices = @transform_2, window_bounds = array<i64: 1, 512>}, {pipeline_mode = #tpu.pipeline_mode<synchronous>, transform_indices = @transform_3, window_bounds = array<i64: 512, 128>}, {pipeline_mode = #tpu.pipeline_mode<synchronous>, transform_indices = @transform_4, window_bounds = array<i64: 1, 128>}, {pipeline_mode = #tpu.pipeline_mode<synchronous>, transform_indices = @transform_5, window_bounds = array<i64: 128, 32>}, {pipeline_mode = #tpu.pipeline_mode<synchronous>, transform_indices = @transform_6, window_bounds = array<i64: 1, 32>}, {pipeline_mode = #tpu.pipeline_mode<synchronous>, transform_indices = @transform_7, window_bounds = array<i64: 32, 1>}, {pipeline_mode = #tpu.pipeline_mode<synchronous>, transform_indices = @transform_8, window_bounds = array<i64: 1, 1>}, {pipeline_mode = #tpu.pipeline_mode<synchronous>, transform_indices = @transform_9, window_bounds = array<i64: 8, 1>}]} {
    %c0_i32 = arith.constant 0 : i32
    %0 = arith.cmpi eq, %arg0, %c0_i32 : i32
    %1 = arith.extui %0 : i1 to i32
    %c0_i32_0 = arith.constant 0 : i32
    %2 = arith.cmpi ne, %1, %c0_i32_0 : i32
    scf.if %2 {
      %cst_10 = arith.constant 0.000000e+00 : f32
      %20 = vector.broadcast %cst_10 : f32 to vector<8x512xf32>
      %c0_11 = arith.constant 0 : index
      %c0_12 = arith.constant 0 : index
      %21 = vector.load %arg11[%c0_11, %c0_12] : memref<8x512xf32, #tpu.memory_space<vmem>>, vector<8x512xf32>
      tpu.vector_store %arg11[%c0_11, %c0_12], %20 {strides = array<i32>} : memref<8x512xf32, #tpu.memory_space<vmem>>, vector<8x512xf32>,
    } else {
    }
    %c5120_i32 = arith.constant 5120 : i32
    %3 = arith.muli %arg0, %c5120_i32 : i32
    %c10000_i32 = arith.constant 10000 : i32
    %4 = arith.subi %c10000_i32, %3 : i32
    %5 = tpu.iota {dimensions = array<i32: 1>} : vector<8x5120xi32>
    %6 = vector.broadcast %4 : i32 to vector<8x5120xi32>
    %7 = arith.cmpi slt, %5, %6 : vector<8x5120xi32>
    %c0 = arith.constant 0 : index
    %c0_1 = arith.constant 0 : index
    %8 = vector.load %arg1[%c0, %c0_1] : memref<8x5120xf32, #tpu.memory_space<vmem>>, vector<8x5120xf32>
    %cst = arith.constant 0.000000e+00 : f32
    %9 = vector.broadcast %cst : f32 to vector<8x5120xf32>
    %10 = arith.select %7, %8, %9 : vector<8x5120xi1>, vector<8x5120xf32>
    %11 = arith.truncf %10 : vector<8x5120xf32> to vector<8x5120xbf16>
    %c0_2 = arith.constant 0 : index
    %c0_3 = arith.constant 0 : index
    %12 = vector.load %arg11[%c0_2, %c0_3] : memref<8x512xf32, #tpu.memory_space<vmem>>, vector<8x512xf32>
    %c0_4 = arith.constant 0 : index
    %c0_5 = arith.constant 0 : index
    %13 = vector.load %arg2[%c0_4, %c0_5] : memref<5120x512xbf16, #tpu.memory_space<vmem>>, vector<5120x512xbf16>
    %cst_6 = arith.constant dense<0.000000e+00> : vector<8x512xf32>
    %14 = tpu.matmul %11, %13, %cst_6 {dimension_numbers = #tpu.dot_dimension_numbers<[1], [0], [0], [1], [0, 0, 1, 1], [], []>} : vector<8x5120xbf16>, vector<5120x512xbf16>, vector<8x512xf32> -> vector<8x512xf32>
    %15 = arith.addf %12, %14 : vector<8x512xf32>
    %c0_7 = arith.constant 0 : index
    %c0_8 = arith.constant 0 : index
    %16 = vector.load %arg11[%c0_7, %c0_8] : memref<8x512xf32, #tpu.memory_space<vmem>>, vector<8x512xf32>
    tpu.vector_store %arg11[%c0_7, %c0_8], %15 {strides = array<i32>} : memref<8x512xf32, #tpu.memory_space<vmem>>, vector<8x512xf32>,
    %c1_i32 = arith.constant 1 : i32
    %17 = arith.cmpi eq, %arg0, %c1_i32 : i32
    %18 = arith.extui %17 : i1 to i32
    %c0_i32_9 = arith.constant 0 : i32
    %19 = arith.cmpi ne, %18, %c0_i32_9 : i32
    scf.if %19 {
      %c0_10 = arith.constant 0 : index
      %c0_11 = arith.constant 0 : index
      %20 = vector.load %arg11[%c0_10, %c0_11] : memref<8x512xf32, #tpu.memory_space<vmem>>, vector<8x512xf32>
      %c0_12 = arith.constant 0 : index
      %c0_13 = arith.constant 0 : index
      %21 = vector.load %arg3[%c0_12, %c0_13] : memref<1x512xf32, #tpu.memory_space<vmem>>, vector<1x512xf32>
      %22 = vector.broadcast %21 : vector<1x512xf32> to vector<8x512xf32>
      %23 = arith.addf %20, %22 : vector<8x512xf32>
      %cst_14 = arith.constant 0.000000e+00 : f32
      %24 = vector.broadcast %cst_14 : f32 to vector<8x512xf32>
      %25 = arith.maximumf %23, %24 : vector<8x512xf32>
      %c0_15 = arith.constant 0 : index
      %c0_16 = arith.constant 0 : index
      %26 = vector.load %arg4[%c0_15, %c0_16] : memref<512x128xf32, #tpu.memory_space<vmem>>, vector<512x128xf32>
      %cst_17 = arith.constant dense<0.000000e+00> : vector<8x128xf32>
      %27 = tpu.matmul %25, %26, %cst_17 {dimension_numbers = #tpu.dot_dimension_numbers<[1], [0], [0], [1], [0, 0, 1, 1], [], []>} : vector<8x512xf32>, vector<512x128xf32>, vector<8x128xf32> -> vector<8x128xf32>
      %c0_18 = arith.constant 0 : index
      %c0_19 = arith.constant 0 : index
      %28 = vector.load %arg5[%c0_18, %c0_19] : memref<1x128xf32, #tpu.memory_space<vmem>>, vector<1x128xf32>
      %29 = vector.broadcast %28 : vector<1x128xf32> to vector<8x128xf32>
      %30 = arith.addf %27, %29 : vector<8x128xf32>
      %cst_20 = arith.constant 0.000000e+00 : f32
      %31 = vector.broadcast %cst_20 : f32 to vector<8x128xf32>
      %32 = arith.maximumf %30, %31 : vector<8x128xf32>
      %c0_21 = arith.constant 0 : index
      %c0_22 = arith.constant 0 : index
      %33 = vector.load %arg6[%c0_21, %c0_22] : memref<128x32xf32, #tpu.memory_space<vmem>>, vector<128x32xf32>
      %cst_23 = arith.constant dense<0.000000e+00> : vector<8x32xf32>
      %34 = tpu.matmul %32, %33, %cst_23 {dimension_numbers = #tpu.dot_dimension_numbers<[1], [0], [0], [1], [0, 0, 1, 1], [], []>} : vector<8x128xf32>, vector<128x32xf32>, vector<8x32xf32> -> vector<8x32xf32>
      %c0_24 = arith.constant 0 : index
      %c0_25 = arith.constant 0 : index
      %35 = vector.load %arg7[%c0_24, %c0_25] : memref<1x32xf32, #tpu.memory_space<vmem>>, vector<1x32xf32>
      %36 = vector.broadcast %35 : vector<1x32xf32> to vector<8x32xf32>
      %37 = arith.addf %34, %36 : vector<8x32xf32>
      %cst_26 = arith.constant 0.000000e+00 : f32
      %38 = vector.broadcast %cst_26 : f32 to vector<8x32xf32>
      %39 = arith.maximumf %37, %38 : vector<8x32xf32>
      %c0_27 = arith.constant 0 : index
      %c0_28 = arith.constant 0 : index
      %40 = vector.load %arg8[%c0_27, %c0_28] : memref<32x1xf32, #tpu.memory_space<vmem>>, vector<32x1xf32>
      %cst_29 = arith.constant dense<0.000000e+00> : vector<8x1xf32>
      %41 = tpu.matmul %39, %40, %cst_29 {dimension_numbers = #tpu.dot_dimension_numbers<[1], [0], [0], [1], [0, 0, 1, 1], [], []>} : vector<8x32xf32>, vector<32x1xf32>, vector<8x1xf32> -> vector<8x1xf32>
      %c0_30 = arith.constant 0 : index
      %c0_31 = arith.constant 0 : index
      %42 = vector.load %arg9[%c0_30, %c0_31] : memref<1x1xf32, #tpu.memory_space<vmem>>, vector<1x1xf32>
      %43 = vector.broadcast %42 : vector<1x1xf32> to vector<8x1xf32>
      %44 = arith.addf %41, %43 : vector<8x1xf32>
      %cst_32 = arith.constant 0.000000e+00 : f32
      %45 = vector.broadcast %cst_32 : f32 to vector<8x1xf32>
      %46 = arith.subf %45, %44 : vector<8x1xf32>
      %47 = math.exp %46 : vector<8x1xf32>
      %cst_33 = arith.constant 1.000000e+00 : f32
      %48 = vector.broadcast %cst_33 : f32 to vector<8x1xf32>
      %49 = arith.addf %48, %47 : vector<8x1xf32>
      %cst_34 = arith.constant 1.000000e+00 : f32
      %50 = vector.broadcast %cst_34 : f32 to vector<8x1xf32>
      %51 = arith.divf %50, %49 : vector<8x1xf32>
      %c0_35 = arith.constant 0 : index
      %c0_36 = arith.constant 0 : index
      %52 = vector.load %arg10[%c0_35, %c0_36] : memref<8x1xf32, #tpu.memory_space<vmem>>, vector<8x1xf32>
      tpu.vector_store %arg10[%c0_35, %c0_36], %51 {strides = array<i32>} : memref<8x1xf32, #tpu.memory_space<vmem>>, vector<8x1xf32>,
    } else {
    }
    return
  }
  func.func @transform_0(%arg0: i32) -> (i32, i32) {
    %c0_i32 = arith.constant 0 : i32
    %c0_i32_0 = arith.constant 0 : i32
    return %c0_i32, %arg0 : i32, i32
  }
  func.func @transform_1(%arg0: i32) -> (i32, i32) {
    %c0_i32 = arith.constant 0 : i32
    %c0_i32_0 = arith.constant 0 : i32
    return %arg0, %c0_i32 : i32, i32
  }
  func.func @transform_2(%arg0: i32) -> (i32, i32) {
    %c0_i32 = arith.constant 0 : i32
    %c0_i32_0 = arith.constant 0 : i32
    %c0_i32_1 = arith.constant 0 : i32
    return %c0_i32, %c0_i32_0 : i32, i32
  }
  func.func @transform_3(%arg0: i32) -> (i32, i32) {
    %c0_i32 = arith.constant 0 : i32
    %c0_i32_0 = arith.constant 0 : i32
    %c0_i32_1 = arith.constant 0 : i32
    return %c0_i32, %c0_i32_0 : i32, i32
  }
  func.func @transform_4(%arg0: i32) -> (i32, i32) {
    %c0_i32 = arith.constant 0 : i32
    %c0_i32_0 = arith.constant 0 : i32
    %c0_i32_1 = arith.constant 0 : i32
    return %c0_i32, %c0_i32_0 : i32, i32
  }
  func.func @transform_5(%arg0: i32) -> (i32, i32) {
    %c0_i32 = arith.constant 0 : i32
    %c0_i32_0 = arith.constant 0 : i32
    %c0_i32_1 = arith.constant 0 : i32
    return %c0_i32, %c0_i32_0 : i32, i32
  }
  func.func @transform_6(%arg0: i32) -> (i32, i32) {
    %c0_i32 = arith.constant 0 : i32
    %c0_i32_0 = arith.constant 0 : i32
    %c0_i32_1 = arith.constant 0 : i32
    return %c0_i32, %c0_i32_0 : i32, i32
  }
  func.func @transform_7(%arg0: i32) -> (i32, i32) {
    %c0_i32 = arith.constant 0 : i32
    %c0_i32_0 = arith.constant 0 : i32
    %c0_i32_1 = arith.constant 0 : i32
    return %c0_i32, %c0_i32_0 : i32, i32
  }
  func.func @transform_8(%arg0: i32) -> (i32, i32) {
    %c0_i32 = arith.constant 0 : i32
    %c0_i32_0 = arith.constant 0 : i32
    %c0_i32_1 = arith.constant 0 : i32
    return %c0_i32, %c0_i32_0 : i32, i32
  }
  func.func @transform_9(%arg0: i32) -> (i32, i32) {
    %c0_i32 = arith.constant 0 : i32
    %c0_i32_0 = arith.constant 0 : i32
    %c0_i32_1 = arith.constant 0 : i32
    return %c0_i32, %c0_i32_0 : i32, i32
  }
}

</mosaic_0001>

<llo_original>
// kernel: fake_news_detector_forward.1
$region0: #{fake_news_detector_forward.1}
  #allocation0 [shape = 'u32[]', space=smem, size = 0x4, offset = 0x4, fixed_abs, tag = 'smem constant byte address 0x4 - core index']
  #allocation1 [shape = 'u32[72,128]{1,0:T(1,128)}', space=vmem, size = 0x9000, scoped, tag = 'internal scratch']
  #allocation2 [shape = 'f32[8,512]{1,0:T(8,128)}', space=vmem, size = 0x4000, scoped, tag = 'scratch operand']
  #allocation3 [shape = 'f32[1,1]{1,0:T(1,128)S(1)}', space=vmem, size = 0x200, scoped, tag = 'scoped memory for fake_news_detector_forward.1']
  %s0 = inlined_call_operand.hbm [shape: f32[8,10000], index: 0, kind: input, shape index: {}]
  %s1 = inlined_call_operand.hbm [shape: bf16[10240,512], index: 1, kind: input, shape index: {}]
  %s2 = inlined_call_operand.hbm [shape: f32[1,512], index: 2, kind: input, shape index: {}]
  %s3 = inlined_call_operand.hbm [shape: f32[512,128], index: 3, kind: input, shape index: {}]
  %s4 = inlined_call_operand.hbm [shape: f32[1,128], index: 4, kind: input, shape index: {}]
  %s5 = inlined_call_operand.vmem [shape: f32[128,32], index: 5, kind: input, shape index: {}]
  %s6 = inlined_call_operand.hbm [shape: f32[1,32], index: 6, kind: input, shape index: {}]
  %s7 = inlined_call_operand.vmem [shape: f32[32,1], index: 7, kind: input, shape index: {}]
  %s8 = inlined_call_operand.<no memory space> [shape: f32[1,1], index: 8, kind: input, shape index: {}]
  %s9 = inlined_call_operand.vmem [shape: f32[8,1], index: 9, kind: output, shape index: {}]
  %s10 = sld [smem:[#allocation0]]
  $region101: #{fake_news_detector_forward.1} parent=0
    _
  %s12 = ssub.s32 1, %s10
  %s13 = scalar_select 0, %s12, %s10
  %v14 = vstv %s8
  %15 = vst [vmem:[#allocation3] sm:$0x1] %v14
  $region1: #{fake_news_detector_forward.1} parent=0
    #allocation4 [shape = 'u8[327680]{0}', space=vmem, size = 0x50000, scoped, tag = 'input window, operand 0']
    #allocation5 [shape = 's32[2]{0}', space=sflag, size = 0x8, scoped, tag = 'scoped memory for fake_news_detector_forward.1']
    #allocation6 [shape = 'u8[10485760]{0}', space=vmem, size = 0xa00000, scoped, tag = 'input window, operand 1']
    #allocation7 [shape = 's32[2]{0}', space=sflag, size = 0x8, scoped, tag = 'scoped memory for fake_news_detector_forward.1']
    #allocation8 [shape = 'u8[2048]{0}', space=vmem, size = 0x800, scoped, tag = 'input window, operand 2, single buffered']
    #allocation9 [shape = 'u8[262144]{0}', space=vmem, size = 0x40000, scoped, tag = 'input window, operand 3, single buffered']
    #allocation10 [shape = 's32[1]{0}', space=sflag, size = 0x4, scoped, tag = 'scoped memory for fake_news_detector_forward.1']
    #allocation11 [shape = 'u8[512]{0}', space=vmem, size = 0x400, scoped, tag = 'input window, operand 4, single buffered']
    #allocation12 [shape = 'u8[512]{0}', space=vmem, size = 0x400, scoped, tag = 'input window, operand 6, single buffered']
    #allocation13 [shape = 's32[1]{0}', space=sflag, size = 0x4, scoped, tag = 'scoped memory for fake_news_detector_forward.1']
    %16 = vsyncpa [#allocation5], 0
    %s17 = scalar_lea.sflag [#allocation5], 1
    %18 = vsyncpa %s17, 0
    %19 = vsyncpa [#allocation7], 0
    %s20 = scalar_lea.sflag [#allocation7], 1
    %21 = vsyncpa %s20, 0
    %22 = vsyncpa [#allocation10], 0
    %23 = vsyncpa [#allocation13], 0
    loop: start=0, step=1, limit=4
    $region2: #{fake_news_detector_forward.1} parent=1 // loop_pre_header
      _
    $region3: #{fake_news_detector_forward.1} parent=1 // loop_header
      %s25 = sphi 0, %s29
      %p26 = scmp.ge.s32.totalorder %s25, 4
      %s35 = sphi 0, %s37
      %s38 = sphi 0, %s35
      %s39 = sphi 0, %s38
      %s55 = sphi 0, %s39
      %s61 = sphi 0, %s63
      %s64 = sphi 0, %s61
      %s65 = sphi 0, %s64
      %s81 = sphi 0, %s65
      %s85 = sphi 0, %s85
      %s87 = sphi 0, %s85
      %s88 = sphi 0, %s87
      %s102 = sphi 0, %s88
      %s106 = sphi 0, %s106
      %s108 = sphi 0, %s106
      %s109 = sphi 0, %s108
      %s123 = sphi 0, %s109
      %s127 = sphi 0, %s127
      %s129 = sphi 0, %s127
      %s130 = sphi 0, %s129
      %s144 = sphi 0, %s130
      %s148 = sphi 0, %s148
      %s150 = sphi 0, %s148
      %s151 = sphi 0, %s150
      %s165 = sphi 0, %s151
      %s169 = sphi 0, %s169
      %s171 = sphi 0, %s169
      %s172 = sphi 0, %s171
      %s186 = sphi 0, %s172
      %s190 = sphi 0, %s190
      %s192 = sphi 0, %s190
      %s193 = sphi 0, %s192
      %s207 = sphi 0, %s193
      %s211 = sphi 0, %s211
      %s213 = sphi 0, %s211
      %s214 = sphi 0, %s213
      %s228 = sphi 0, %s214
      %s232 = sphi 0, %s232
      %s234 = sphi 0, %s232
      %s235 = sphi 0, %s234
      %s249 = sphi 0, %s235
    $region4: #{fake_news_detector_forward.1} parent=1 // loop_header_branch
      %28 = sbr.rel (%p26) target = $region8
    $region5: #{fake_news_detector_forward.1} parent=1 // loop_body
      %s30 = ssub.s32 %s25, 1
      %s31 = ssub.s32 %s25, 2
      %s32 = sadd.s32 %s25, 1
      %s33 = ssub.s32 %s25, %s32
      %p34 = scmp.eq.s32.totalorder %s33, 0
      %s36 = sadd.s32 %s35, 1
      %s37 = scalar_select %p34, %s35, %s36
      %p40 = pneg %p34
      %p41 = scmp.eq.s32.totalorder %s25, 1
      %p42 = por %p40, %p41
      %p43 = scmp.ne.s32.totalorder %s35, %s38
      %p44 = scmp.eq.s32.totalorder %s25, 0
      %p45 = por %p43, %p44
      %p46 = scmp.ne.s32.totalorder %s35, %s38
      %p47 = scmp.eq.s32.totalorder %s30, 1
      %p48 = por %p46, %p47
      %p49 = scmp.ne.s32.totalorder %s38, %s39
      %p50 = scmp.eq.s32.totalorder %s30, 0
      %p51 = por %p49, %p50
      %p52 = scmp.ne.s32.totalorder %s38, %s39
      %p53 = scmp.eq.s32.totalorder %s31, 1
      %p54 = por %p52, %p53
      %p56 = scmp.ne.s32.totalorder %s39, %s55
      %p57 = scmp.eq.s32.totalorder %s31, 0
      %p58 = por %p56, %p57
      %s59 = ssub.s32 %s25, %s32
      %p60 = scmp.eq.s32.totalorder %s59, 0
      %s62 = sadd.s32 %s61, 1
      %s63 = scalar_select %p60, %s61, %s62
      %p66 = pneg %p60
      %p67 = scmp.eq.s32.totalorder %s25, 1
      %p68 = por %p66, %p67
      %p69 = scmp.ne.s32.totalorder %s61, %s64
      %p70 = scmp.eq.s32.totalorder %s25, 0
      %p71 = por %p69, %p70
      %p72 = scmp.ne.s32.totalorder %s61, %s64
      %p73 = scmp.eq.s32.totalorder %s30, 1
      %p74 = por %p72, %p73
      %p75 = scmp.ne.s32.totalorder %s64, %s65
      %p76 = scmp.eq.s32.totalorder %s30, 0
      %p77 = por %p75, %p76
      %p78 = scmp.ne.s32.totalorder %s64, %s65
      %p79 = scmp.eq.s32.totalorder %s31, 1
      %p80 = por %p78, %p79
      %p82 = scmp.ne.s32.totalorder %s65, %s81
      %p83 = scmp.eq.s32.totalorder %s31, 0
      %p84 = por %p82, %p83
      %s86 = sadd.s32 %s85, 1
      %p89 = scmp.eq.s32.totalorder %s25, 1
      %p90 = scmp.ne.s32.totalorder %s85, %s87
      %p91 = scmp.eq.s32.totalorder %s25, 0
      %p92 = por %p90, %p91
      %p93 = scmp.ne.s32.totalorder %s85, %s87
      %p94 = scmp.eq.s32.totalorder %s30, 1
      %p95 = por %p93, %p94
      %p96 = scmp.ne.s32.totalorder %s87, %s88
      %p97 = scmp.eq.s32.totalorder %s30, 0
      %p98 = por %p96, %p97
      %p99 = scmp.ne.s32.totalorder %s87, %s88
      %p100 = scmp.eq.s32.totalorder %s31, 1
      %p101 = por %p99, %p100
      %p103 = scmp.ne.s32.totalorder %s88, %s102
      %p104 = scmp.eq.s32.totalorder %s31, 0
      %p105 = por %p103, %p104
      %s107 = sadd.s32 %s106, 1
      %p110 = scmp.eq.s32.totalorder %s25, 1
      %p111 = scmp.ne.s32.totalorder %s106, %s108
      %p112 = scmp.eq.s32.totalorder %s25, 0
      %p113 = por %p111, %p112
      %p114 = scmp.ne.s32.totalorder %s106, %s108
      %p115 = scmp.eq.s32.totalorder %s30, 1
      %p116 = por %p114, %p115
      %p117 = scmp.ne.s32.totalorder %s108, %s109
      %p118 = scmp.eq.s32.totalorder %s30, 0
      %p119 = por %p117, %p118
      %p120 = scmp.ne.s32.totalorder %s108, %s109
      %p121 = scmp.eq.s32.totalorder %s31, 1
      %p122 = por %p120, %p121
      %p124 = scmp.ne.s32.totalorder %s109, %s123
      %p125 = scmp.eq.s32.totalorder %s31, 0
      %p126 = por %p124, %p125
      %s128 = sadd.s32 %s127, 1
      %p131 = scmp.eq.s32.totalorder %s25, 1
      %p132 = scmp.ne.s32.totalorder %s127, %s129
      %p133 = scmp.eq.s32.totalorder %s25, 0
      %p134 = por %p132, %p133
      %p135 = scmp.ne.s32.totalorder %s127, %s129
      %p136 = scmp.eq.s32.totalorder %s30, 1
      %p137 = por %p135, %p136
      %p138 = scmp.ne.s32.totalorder %s129, %s130
      %p139 = scmp.eq.s32.totalorder %s30, 0
      %p140 = por %p138, %p139
      %p141 = scmp.ne.s32.totalorder %s129, %s130
      %p142 = scmp.eq.s32.totalorder %s31, 1
      %p143 = por %p141, %p142
      %p145 = scmp.ne.s32.totalorder %s130, %s144
      %p146 = scmp.eq.s32.totalorder %s31, 0
      %p147 = por %p145, %p146
      %s149 = sadd.s32 %s148, 1
      %p152 = scmp.eq.s32.totalorder %s25, 1
      %p153 = scmp.ne.s32.totalorder %s148, %s150
      %p154 = scmp.eq.s32.totalorder %s25, 0
      %p155 = por %p153, %p154
      %p156 = scmp.ne.s32.totalorder %s148, %s150
      %p157 = scmp.eq.s32.totalorder %s30, 1
      %p158 = por %p156, %p157
      %p159 = scmp.ne.s32.totalorder %s150, %s151
      %p160 = scmp.eq.s32.totalorder %s30, 0
      %p161 = por %p159, %p160
      %p162 = scmp.ne.s32.totalorder %s150, %s151
      %p163 = scmp.eq.s32.totalorder %s31, 1
      %p164 = por %p162, %p163
      %p166 = scmp.ne.s32.totalorder %s151, %s165
      %p167 = scmp.eq.s32.totalorder %s31, 0
      %p168 = por %p166, %p167
      %s170 = sadd.s32 %s169, 1
      %p173 = scmp.eq.s32.totalorder %s25, 1
      %p174 = scmp.ne.s32.totalorder %s169, %s171
      %p175 = scmp.eq.s32.totalorder %s25, 0
      %p176 = por %p174, %p175
      %p177 = scmp.ne.s32.totalorder %s169, %s171
      %p178 = scmp.eq.s32.totalorder %s30, 1
      %p179 = por %p177, %p178
      %p180 = scmp.ne.s32.totalorder %s171, %s172
      %p181 = scmp.eq.s32.totalorder %s30, 0
      %p182 = por %p180, %p181
      %p183 = scmp.ne.s32.totalorder %s171, %s172
      %p184 = scmp.eq.s32.totalorder %s31, 1
      %p185 = por %p183, %p184
      %p187 = scmp.ne.s32.totalorder %s172, %s186
      %p188 = scmp.eq.s32.totalorder %s31, 0
      %p189 = por %p187, %p188
      %s191 = sadd.s32 %s190, 1
      %p194 = scmp.eq.s32.totalorder %s25, 1
      %p195 = scmp.ne.s32.totalorder %s190, %s192
      %p196 = scmp.eq.s32.totalorder %s25, 0
      %p197 = por %p195, %p196
      %p198 = scmp.ne.s32.totalorder %s190, %s192
      %p199 = scmp.eq.s32.totalorder %s30, 1
      %p200 = por %p198, %p199
      %p201 = scmp.ne.s32.totalorder %s192, %s193
      %p202 = scmp.eq.s32.totalorder %s30, 0
      %p203 = por %p201, %p202
      %p204 = scmp.ne.s32.totalorder %s192, %s193
      %p205 = scmp.eq.s32.totalorder %s31, 1
      %p206 = por %p204, %p205
      %p208 = scmp.ne.s32.totalorder %s193, %s207
      %p209 = scmp.eq.s32.totalorder %s31, 0
      %p210 = por %p208, %p209
      %s212 = sadd.s32 %s211, 1
      %p215 = scmp.eq.s32.totalorder %s25, 1
      %p216 = scmp.ne.s32.totalorder %s211, %s213
      %p217 = scmp.eq.s32.totalorder %s25, 0
      %p218 = por %p216, %p217
      %p219 = scmp.ne.s32.totalorder %s211, %s213
      %p220 = scmp.eq.s32.totalorder %s30, 1
      %p221 = por %p219, %p220
      %p222 = scmp.ne.s32.totalorder %s213, %s214
      %p223 = scmp.eq.s32.totalorder %s30, 0
      %p224 = por %p222, %p223
      %p225 = scmp.ne.s32.totalorder %s213, %s214
      %p226 = scmp.eq.s32.totalorder %s31, 1
      %p227 = por %p225, %p226
      %p229 = scmp.ne.s32.totalorder %s214, %s228
      %p230 = scmp.eq.s32.totalorder %s31, 0
      %p231 = por %p229, %p230
      %s233 = sadd.s32 %s232, 1
      %p236 = scmp.eq.s32.totalorder %s25, 1
      %p237 = scmp.ne.s32.totalorder %s232, %s234
      %p238 = scmp.eq.s32.totalorder %s25, 0
      %p239 = por %p237, %p238
      %p240 = scmp.ne.s32.totalorder %s232, %s234
      %p241 = scmp.eq.s32.totalorder %s30, 1
      %p242 = por %p240, %p241
      %p243 = scmp.ne.s32.totalorder %s234, %s235
      %p244 = scmp.eq.s32.totalorder %s30, 0
      %p245 = por %p243, %p244
      %p246 = scmp.ne.s32.totalorder %s234, %s235
      %p247 = scmp.eq.s32.totalorder %s31, 1
      %p248 = por %p246, %p247
      %p250 = scmp.ne.s32.totalorder %s235, %s249
      %p251 = scmp.eq.s32.totalorder %s31, 0
      %p252 = por %p250, %p251
      %p253 = scmp.le.s32.totalorder 1, %s25
      %p254 = scmp.lt.s32.totalorder %s25, 3
      %p255 = pnand %p253, %p254
      %p256 = pneg %p255
      // Predicated region
      $region9: #{fake_news_detector_forward.1} parent=5 // pred_check
        _
      $region10: #{fake_news_detector_forward.1} parent=5 // pred_check_branch
        %258 = sbr.rel (%p255) target = $region12
      $region11: #{fake_news_detector_forward.1} parent=5 // pred_region
        %s259 = ssub.s32 %s25, 1
        // Predicated region
        $region13: #{fake_news_detector_forward.1} parent=11 // pred_check
          %p260 = pneg %p98
        $region14: #{fake_news_detector_forward.1} parent=11 // pred_check_branch
          %262 = sbr.rel (%p260) target = $region16
        $region15: #{fake_news_detector_forward.1} parent=11 // pred_region
          %264 = vsyncadd [#allocation7], 0
          %s266 = sshll.u32 %s2, 4
          %s267 = int_to_ptr.hbm [resolvable:$true] %s266
          %s268 = sshll.u32 [#allocation8], 4
          %s269 = int_to_ptr.vmem [resolvable:$true] %s268
          %271 = dma.hbm_to_vmem [thread:$0]  %s267, 64, %s269, [#allocation7]
        $region16: #{fake_news_detector_forward.1} parent=11 // pred_fallthru
          _
        // Predicated region
        $region17: #{fake_news_detector_forward.1} parent=11 // pred_check
          %p272 = pneg %p119
        $region18: #{fake_news_detector_forward.1} parent=11 // pred_check_branch
          %274 = sbr.rel (%p272) target = $region20
        $region19: #{fake_news_detector_forward.1} parent=11 // pred_region
          %276 = vsyncadd [#allocation10], 0
          %s277 = sshll.u32 %s3, 4
          %s278 = int_to_ptr.hbm [resolvable:$true] %s277
          %s279 = sshll.u32 [#allocation9], 4
          %s280 = int_to_ptr.vmem [resolvable:$true] %s279
          %285 = dma.hbm_to_vmem [thread:$0]  %s278, 8192, %s280, [#allocation10], 128, 128, 8
        $region20: #{fake_news_detector_forward.1} parent=11 // pred_fallthru
          _
        // Predicated region
        $region21: #{fake_news_detector_forward.1} parent=11 // pred_check
          %p286 = pneg %p140
        $region22: #{fake_news_detector_forward.1} parent=11 // pred_check_branch
          %288 = sbr.rel (%p286) target = $region24
        $region23: #{fake_news_detector_forward.1} parent=11 // pred_region
          %290 = vsyncadd [#allocation10], 0
          %s292 = sshll.u32 %s4, 4
          %s293 = int_to_ptr.hbm [resolvable:$true] %s292
          %s294 = sshll.u32 [#allocation11], 4
          %s295 = int_to_ptr.vmem [resolvable:$true] %s294
          %297 = dma.hbm_to_vmem [thread:$0]  %s293, 16, %s295, [#allocation10]
        $region24: #{fake_news_detector_forward.1} parent=11 // pred_fallthru
          _
        // Predicated region
        $region25: #{fake_news_detector_forward.1} parent=11 // pred_check
          %p298 = pneg %p161
        $region26: #{fake_news_detector_forward.1} parent=11 // pred_check_branch
          %300 = sbr.rel (%p298) target = $region28
        $region27: #{fake_news_detector_forward.1} parent=11 // pred_region
          _
        $region28: #{fake_news_detector_forward.1} parent=11 // pred_fallthru
          _
        // Predicated region
        $region29: #{fake_news_detector_forward.1} parent=11 // pred_check
          %p301 = pneg %p182
        $region30: #{fake_news_detector_forward.1} parent=11 // pred_check_branch
          %303 = sbr.rel (%p301) target = $region32
        $region31: #{fake_news_detector_forward.1} parent=11 // pred_region
          %305 = vsyncadd [#allocation13], 0
          %s307 = sshll.u32 %s6, 4
          %s308 = int_to_ptr.hbm [resolvable:$true] %s307
          %s309 = sshll.u32 [#allocation12], 4
          %s310 = int_to_ptr.vmem [resolvable:$true] %s309
          %312 = dma.hbm_to_vmem [thread:$0]  %s308, 16, %s310, [#allocation13]
        $region32: #{fake_news_detector_forward.1} parent=11 // pred_fallthru
          _
        // Predicated region
        $region33: #{fake_news_detector_forward.1} parent=11 // pred_check
          %p313 = pneg %p203
        $region34: #{fake_news_detector_forward.1} parent=11 // pred_check_branch
          %315 = sbr.rel (%p313) target = $region36
        $region35: #{fake_news_detector_forward.1} parent=11 // pred_region
          _
        $region36: #{fake_news_detector_forward.1} parent=11 // pred_fallthru
          _
        // Predicated region
        $region37: #{fake_news_detector_forward.1} parent=11 // pred_check
          %p316 = pneg %p224
        $region38: #{fake_news_detector_forward.1} parent=11 // pred_check_branch
          %318 = sbr.rel (%p316) target = $region40
        $region39: #{fake_news_detector_forward.1} parent=11 // pred_region
          _
        $region40: #{fake_news_detector_forward.1} parent=11 // pred_fallthru
          _
      $region12: #{fake_news_detector_forward.1} parent=5 // pred_fallthru
        _
      %p319 = scmp.lt.s32.totalorder %s25, 2
      // Predicated region
      $region41: #{fake_news_detector_forward.1} parent=5 // pred_check
        %p320 = pneg %p319
      $region42: #{fake_news_detector_forward.1} parent=5 // pred_check_branch
        %322 = sbr.rel (%p320) target = $region44
      $region43: #{fake_news_detector_forward.1} parent=5 // pred_region
        // Predicated region
        $region45: #{fake_news_detector_forward.1} parent=43 // pred_check
          %p323 = pneg %p45
        $region46: #{fake_news_detector_forward.1} parent=43 // pred_check_branch
          %325 = sbr.rel (%p323) target = $region48
        $region47: #{fake_news_detector_forward.1} parent=43 // pred_region
          %s326 = sand.u32 %s35, 1
          %s327 = scalar_lea.sflag [#allocation5], %s326
          %s328 = sand.u32 %s35, 1
          %s329 = smul.addr %s328, 320
          %s330 = scalar_lea.vmem [#allocation4], %s329
          %s331 = smul.u32 40, %s25
          %s332 = ssub.s32 79, %s331
          %p333 = scmp.lt.s32.totalorder %s332, 40
          %s334 = scalar_select %p333, %s332, 40
          %s335 = smul.u32 8, %s334
          %s336 = ssub.s32 320, %s335
          %s337 = sshll.u32 %s336, 4
          %338 = vsyncadd %s327, %s337
          %p339 = scmp.ne.s32.totalorder 0, %s335
          %s340 = smul.addr %s331, 8
          %s341 = scalar_lea.hbm %s0, %s340
          %s342 = smul.u32 %s334, 8
          %s343 = sshll.u32 %s342, 4
          %s344 = sshll.u32 %s341, 4
          %s345 = int_to_ptr.hbm [resolvable:$true] %s344
          %s346 = sshll.u32 %s330, 4
          %s347 = int_to_ptr.vmem [resolvable:$true] %s346
          %349 = dma.hbm_to_vmem [thread:$0]  (%p339), %s345, %s343, %s347, %s327
        $region48: #{fake_news_detector_forward.1} parent=43 // pred_fallthru
          _
        // Predicated region
        $region49: #{fake_news_detector_forward.1} parent=43 // pred_check
          %p350 = pneg %p71
        $region50: #{fake_news_detector_forward.1} parent=43 // pred_check_branch
          %352 = sbr.rel (%p350) target = $region52
        $region51: #{fake_news_detector_forward.1} parent=43 // pred_region
          %s353 = sand.u32 %s25, 1
          %s354 = scalar_lea.sflag [#allocation7], %s353
          %s355 = sand.u32 %s61, 1
          %s356 = smul.addr %s355, 10240
          %s357 = scalar_lea.vmem [#allocation6], %s356
          %s358 = smul.u32 640, %s25
          %360 = vsyncadd %s354, 0
          %s361 = smul.addr %s358, 4
          %s362 = smul.addr %s361, 4
          %s363 = scalar_lea.hbm %s1, %s362
          %s364 = sshll.u32 %s363, 4
          %s365 = int_to_ptr.hbm [resolvable:$true] %s364
          %s366 = sshll.u32 %s357, 4
          %s367 = int_to_ptr.vmem [resolvable:$true] %s366
          %372 = dma.hbm_to_vmem [thread:$0]  %s365, 163840, %s367, %s354, 256, 256, 16
        $region52: #{fake_news_detector_forward.1} parent=43 // pred_fallthru
          _
      $region44: #{fake_news_detector_forward.1} parent=5 // pred_fallthru
        _
      %p373 = scmp.le.s32.totalorder 1, %s25
      %p374 = scmp.lt.s32.totalorder %s25, 3
      %p375 = pnand %p373, %p374
      %p376 = pneg %p375
      // Predicated region
      $region53: #{fake_news_detector_forward.1} parent=5 // pred_check
        _
      $region54: #{fake_news_detector_forward.1} parent=5 // pred_check_branch
        %378 = sbr.rel (%p375) target = $region56
      $region55: #{fake_news_detector_forward.1} parent=5 // pred_region
        %s379 = ssub.s32 %s25, 1
        %s380 = sand.u32 %s38, 1
        %s381 = scalar_lea.sflag [#allocation5], %s380
        %s382 = sand.u32 %s38, 1
        %s383 = smul.addr %s382, 320
        %s384 = scalar_lea.vmem [#allocation4], %s383
        // Predicated region
        $region57: #{fake_news_detector_forward.1} parent=55 // pred_check
          %p385 = pneg %p51
        $region58: #{fake_news_detector_forward.1} parent=55 // pred_check_branch
          %387 = sbr.rel (%p385) target = $region60
        $region59: #{fake_news_detector_forward.1} parent=55 // pred_region
          %389 = dma.done %s381, 5120
        $region60: #{fake_news_detector_forward.1} parent=55 // pred_fallthru
          _
        %s390 = sand.u32 %s30, 1
        %s391 = scalar_lea.sflag [#allocation7], %s390
        %s392 = sand.u32 %s64, 1
        %s393 = smul.addr %s392, 10240
        %s394 = scalar_lea.vmem [#allocation6], %s393
        // Predicated region
        $region61: #{fake_news_detector_forward.1} parent=55 // pred_check
          %p395 = pneg %p77
        $region62: #{fake_news_detector_forward.1} parent=55 // pred_check_branch
          %397 = sbr.rel (%p395) target = $region64
        $region63: #{fake_news_detector_forward.1} parent=55 // pred_region
          %399 = dma.done %s391, 163840
        $region64: #{fake_news_detector_forward.1} parent=55 // pred_fallthru
          _
        // Predicated region
        $region65: #{fake_news_detector_forward.1} parent=55 // pred_check
          %p400 = pneg %p98
        $region66: #{fake_news_detector_forward.1} parent=55 // pred_check_branch
          %402 = sbr.rel (%p400) target = $region68
        $region67: #{fake_news_detector_forward.1} parent=55 // pred_region
          %404 = dma.done [#allocation7], 64
        $region68: #{fake_news_detector_forward.1} parent=55 // pred_fallthru
          _
        // Predicated region
        $region69: #{fake_news_detector_forward.1} parent=55 // pred_check
          %p405 = pneg %p119
        $region70: #{fake_news_detector_forward.1} parent=55 // pred_check_branch
          %407 = sbr.rel (%p405) target = $region72
        $region71: #{fake_news_detector_forward.1} parent=55 // pred_region
          %409 = dma.done [#allocation10], 8192
        $region72: #{fake_news_detector_forward.1} parent=55 // pred_fallthru
          _
        // Predicated region
        $region73: #{fake_news_detector_forward.1} parent=55 // pred_check
          %p410 = pneg %p140
        $region74: #{fake_news_detector_forward.1} parent=55 // pred_check_branch
          %412 = sbr.rel (%p410) target = $region76
        $region75: #{fake_news_detector_forward.1} parent=55 // pred_region
          %414 = dma.done [#allocation10], 16
        $region76: #{fake_news_detector_forward.1} parent=55 // pred_fallthru
          _
        // Predicated region
        $region77: #{fake_news_detector_forward.1} parent=55 // pred_check
          %p415 = pneg %p182
        $region78: #{fake_news_detector_forward.1} parent=55 // pred_check_branch
          %417 = sbr.rel (%p415) target = $region80
        $region79: #{fake_news_detector_forward.1} parent=55 // pred_region
          %419 = dma.done [#allocation13], 16
        $region80: #{fake_news_detector_forward.1} parent=55 // pred_fallthru
          _
        %s420 = sand.u32 %s38, 1
        %s421 = scalar_lea.sflag [#allocation5], %s420
        %s422 = sand.u32 %s38, 1
        %s423 = smul.addr %s422, 320
        %s424 = scalar_lea.vmem [#allocation4], %s423
        %p425 = pneg %p51
        %p426 = pneg %p48
        %s427 = sand.u32 %s30, 1
        %s428 = scalar_lea.sflag [#allocation7], %s427
        %s429 = sand.u32 %s64, 1
        %s430 = smul.addr %s429, 10240
        %s431 = scalar_lea.vmem [#allocation6], %s430
        %p432 = pneg %p77
        %p433 = pneg %p74
        %p434 = pneg %p98
        %p435 = pneg %p95
        %p436 = pneg %p119
        %p437 = pneg %p116
        %p438 = pneg %p140
        %p439 = pneg %p137
        %p440 = pneg %p161
        %p441 = pneg %p158
        %p442 = pneg %p182
        %p443 = pneg %p179
        %p444 = pneg %p203
        %p445 = pneg %p200
        %p446 = pneg %p224
        %p447 = pneg %p221
        %p448 = pneg %p245
        %p449 = pneg %p242
        %s450 = smul.u32 40, %s30
        %s451 = ssub.s32 79, %s450
        %p452 = scmp.lt.s32.totalorder %s451, 40
        %s453 = scalar_select %p452, %s451, 40
        %s454 = smul.u32 8, %s453
        %s455 = smul.u32 640, %s30
        %p456 = scmp.eq.s32.totalorder %s30, 0
        // Predicated region
        $region81: #{fake_news_detector_forward.1} parent=55 // pred_check
          %p457 = pneg %p456
        $region82: #{fake_news_detector_forward.1} parent=55 // pred_check_branch
          %459 = sbr.rel (%p457) target = $region84
        $region83: #{fake_news_detector_forward.1} parent=55 // pred_region
          %460 = vst [vmem:[#allocation2] sm:$0xff] 0.0
          %461 = vst [vmem:[#allocation2 + $0x8] sm:$0xff] 0.0
          %462 = vst [vmem:[#allocation2 + $0x10] sm:$0xff] 0.0
          %463 = vst [vmem:[#allocation2 + $0x18] sm:$0xff] 0.0
        $region84: #{fake_news_detector_forward.1} parent=55 // pred_fallthru
          _
        %s464 = smul.u32 %s30, 5120
        %s465 = ssub.s32 10000, %s464
        %v466 = vlaneseq
        %v467 = vand.u32 %v466, 127
        %v468 = vadd.s32 %v467, 128
        %v469 = vadd.s32 %v467, 256
        %v470 = vadd.s32 %v467, 384
        %v471 = vadd.s32 %v467, 512
        %v472 = vadd.s32 %v467, 640
        %v473 = vadd.s32 %v467, 768
        %v474 = vadd.s32 %v467, 896
        %v475 = vadd.s32 %v467, 1024
        %v476 = vadd.s32 %v467, 1152
        %v477 = vadd.s32 %v467, 1280
        %v478 = vadd.s32 %v467, 1408
        %v479 = vadd.s32 %v467, 1536
        %v480 = vadd.s32 %v467, 1664
        %v481 = vadd.s32 %v467, 1792
        %v482 = vadd.s32 %v467, 1920
        %v483 = vadd.s32 %v467, 2048
        %v484 = vadd.s32 %v467, 2176
        %v485 = vadd.s32 %v467, 2304
        %v486 = vadd.s32 %v467, 2432
        %v487 = vadd.s32 %v467, 2560
        %v488 = vadd.s32 %v467, 2688
        %v489 = vadd.s32 %v467, 2816
        %v490 = vadd.s32 %v467, 2944
        %v491 = vadd.s32 %v467, 3072
        %v492 = vadd.s32 %v467, 3200
        %v493 = vadd.s32 %v467, 3328
        %v494 = vadd.s32 %v467, 3456
        %v495 = vadd.s32 %v467, 3584
        %v496 = vadd.s32 %v467, 3712
        %v497 = vadd.s32 %v467, 3840
        %v498 = vadd.s32 %v467, 3968
        %v499 = vadd.s32 %v467, 4096
        %v500 = vadd.s32 %v467, 4224
        %v501 = vadd.s32 %v467, 4352
        %v502 = vadd.s32 %v467, 4480
        %v503 = vadd.s32 %v467, 4608
        %v504 = vadd.s32 %v467, 4736
        %v505 = vadd.s32 %v467, 4864
        %v506 = vadd.s32 %v467, 4992
        %v507 = vstv %s465
        %vm508 = vcmp.lt.s32.totalorder %v467, %v507
        %vm509 = vcmp.lt.s32.totalorder %v468, %v507
        %vm510 = vcmp.lt.s32.totalorder %v469, %v507
        %vm511 = vcmp.lt.s32.totalorder %v470, %v507
        %vm512 = vcmp.lt.s32.totalorder %v471, %v507
        %vm513 = vcmp.lt.s32.totalorder %v472, %v507
        %vm514 = vcmp.lt.s32.totalorder %v473, %v507
        %vm515 = vcmp.lt.s32.totalorder %v474, %v507
        %vm516 = vcmp.lt.s32.totalorder %v475, %v507
        %vm517 = vcmp.lt.s32.totalorder %v476, %v507
        %vm518 = vcmp.lt.s32.totalorder %v477, %v507
        %vm519 = vcmp.lt.s32.totalorder %v478, %v507
        %vm520 = vcmp.lt.s32.totalorder %v479, %v507
        %vm521 = vcmp.lt.s32.totalorder %v480, %v507
        %vm522 = vcmp.lt.s32.totalorder %v481, %v507
        %vm523 = vcmp.lt.s32.totalorder %v482, %v507
        %vm524 = vcmp.lt.s32.totalorder %v483, %v507
        %vm525 = vcmp.lt.s32.totalorder %v484, %v507
        %vm526 = vcmp.lt.s32.totalorder %v485, %v507
        %vm527 = vcmp.lt.s32.totalorder %v486, %v507
        %vm528 = vcmp.lt.s32.totalorder %v487, %v507
        %vm529 = vcmp.lt.s32.totalorder %v488, %v507
        %vm530 = vcmp.lt.s32.totalorder %v489, %v507
        %vm531 = vcmp.lt.s32.totalorder %v490, %v507
        %vm532 = vcmp.lt.s32.totalorder %v491, %v507
        %vm533 = vcmp.lt.s32.totalorder %v492, %v507
        %vm534 = vcmp.lt.s32.totalorder %v493, %v507
        %vm535 = vcmp.lt.s32.totalorder %v494, %v507
        %vm536 = vcmp.lt.s32.totalorder %v495, %v507
        %vm537 = vcmp.lt.s32.totalorder %v496, %v507
        %vm538 = vcmp.lt.s32.totalorder %v497, %v507
        %vm539 = vcmp.lt.s32.totalorder %v498, %v507
        %vm540 = vcmp.lt.s32.totalorder %v499, %v507
        %vm541 = vcmp.lt.s32.totalorder %v500, %v507
        %vm542 = vcmp.lt.s32.totalorder %v501, %v507
        %vm543 = vcmp.lt.s32.totalorder %v502, %v507
        %vm544 = vcmp.lt.s32.totalorder %v503, %v507
        %vm545 = vcmp.lt.s32.totalorder %v504, %v507
        %vm546 = vcmp.lt.s32.totalorder %v505, %v507
        %vm547 = vcmp.lt.s32.totalorder %v506, %v507
        %v548 = vld [vmem:[%s384] sm:$0xff]
        %v549 = vld [vmem:[%s384 + $0x8] sm:$0xff]
        %v550 = vld [vmem:[%s384 + $0x10] sm:$0xff]
        %v551 = vld [vmem:[%s384 + $0x18] sm:$0xff]
        %v552 = vld [vmem:[%s384 + $0x20] sm:$0xff]
        %v553 = vld [vmem:[%s384 + $0x28] sm:$0xff]
        %v554 = vld [vmem:[%s384 + $0x30] sm:$0xff]
        %v555 = vld [vmem:[%s384 + $0x38] sm:$0xff]
        %v556 = vld [vmem:[%s384 + $0x40] sm:$0xff]
        %v557 = vld [vmem:[%s384 + $0x48] sm:$0xff]
        %v558 = vld [vmem:[%s384 + $0x50] sm:$0xff]
        %v559 = vld [vmem:[%s384 + $0x58] sm:$0xff]
        %v560 = vld [vmem:[%s384 + $0x60] sm:$0xff]
        %v561 = vld [vmem:[%s384 + $0x68] sm:$0xff]
        %v562 = vld [vmem:[%s384 + $0x70] sm:$0xff]
        %v563 = vld [vmem:[%s384 + $0x78] sm:$0xff]
        %v564 = vld [vmem:[%s384 + $0x80] sm:$0xff]
        %v565 = vld [vmem:[%s384 + $0x88] sm:$0xff]
        %v566 = vld [vmem:[%s384 + $0x90] sm:$0xff]
        %v567 = vld [vmem:[%s384 + $0x98] sm:$0xff]
        %v568 = vld [vmem:[%s384 + $0xa0] sm:$0xff]
        %v569 = vld [vmem:[%s384 + $0xa8] sm:$0xff]
        %v570 = vld [vmem:[%s384 + $0xb0] sm:$0xff]
        %v571 = vld [vmem:[%s384 + $0xb8] sm:$0xff]
        %v572 = vld [vmem:[%s384 + $0xc0] sm:$0xff]
        %v573 = vld [vmem:[%s384 + $0xc8] sm:$0xff]
        %v574 = vld [vmem:[%s384 + $0xd0] sm:$0xff]
        %v575 = vld [vmem:[%s384 + $0xd8] sm:$0xff]
        %v576 = vld [vmem:[%s384 + $0xe0] sm:$0xff]
        %v577 = vld [vmem:[%s384 + $0xe8] sm:$0xff]
        %v578 = vld [vmem:[%s384 + $0xf0] sm:$0xff]
        %v579 = vld [vmem:[%s384 + $0xf8] sm:$0xff]
        %v580 = vld [vmem:[%s384 + $0x100] sm:$0xff]
        %v581 = vld [vmem:[%s384 + $0x108] sm:$0xff]
        %v582 = vld [vmem:[%s384 + $0x110] sm:$0xff]
        %v583 = vld [vmem:[%s384 + $0x118] sm:$0xff]
        %v584 = vld [vmem:[%s384 + $0x120] sm:$0xff]
        %v585 = vld [vmem:[%s384 + $0x128] sm:$0xff]
        %v586 = vld [vmem:[%s384 + $0x130] sm:$0xff]
        %v587 = vld [vmem:[%s384 + $0x138] sm:$0xff]
        %v588 = vsel %vm508, %v548, 0.0
        %v589 = vsel %vm509, %v549, 0.0
        %v590 = vsel %vm510, %v550, 0.0
        %v591 = vsel %vm511, %v551, 0.0
        %v592 = vsel %vm512, %v552, 0.0
        %v593 = vsel %vm513, %v553, 0.0
        %v594 = vsel %vm514, %v554, 0.0
        %v595 = vsel %vm515, %v555, 0.0
        %v596 = vsel %vm516, %v556, 0.0
        %v597 = vsel %vm517, %v557, 0.0
        %v598 = vsel %vm518, %v558, 0.0
        %v599 = vsel %vm519, %v559, 0.0
        %v600 = vsel %vm520, %v560, 0.0
        %v601 = vsel %vm521, %v561, 0.0
        %v602 = vsel %vm522, %v562, 0.0
        %v603 = vsel %vm523, %v563, 0.0
        %v604 = vsel %vm524, %v564, 0.0
        %v605 = vsel %vm525, %v565, 0.0
        %v606 = vsel %vm526, %v566, 0.0
        %v607 = vsel %vm527, %v567, 0.0
        %v608 = vsel %vm528, %v568, 0.0
        %v609 = vsel %vm529, %v569, 0.0
        %v610 = vsel %vm530, %v570, 0.0
        %v611 = vsel %vm531, %v571, 0.0
        %v612 = vsel %vm532, %v572, 0.0
        %v613 = vsel %vm533, %v573, 0.0
        %v614 = vsel %vm534, %v574, 0.0
        %v615 = vsel %vm535, %v575, 0.0
        %v616 = vsel %vm536, %v576, 0.0
        %v617 = vsel %vm537, %v577, 0.0
        %v618 = vsel %vm538, %v578, 0.0
        %v619 = vsel %vm539, %v579, 0.0
        %v620 = vsel %vm540, %v580, 0.0
        %v621 = vsel %vm541, %v581, 0.0
        %v622 = vsel %vm542, %v582, 0.0
        %v623 = vsel %vm543, %v583, 0.0
        %v624 = vsel %vm544, %v584, 0.0
        %v625 = vsel %vm545, %v585, 0.0
        %v626 = vsel %vm546, %v586, 0.0
        %v627 = vsel %vm547, %v587, 0.0
        %v628 = vpack.c.bf16 %v588, %v588
        %v629 = vpack.c.bf16 %v589, %v589
        %v630 = vpack.c.bf16 %v590, %v590
        %v631 = vpack.c.bf16 %v591, %v591
        %v632 = vpack.c.bf16 %v592, %v592
        %v633 = vpack.c.bf16 %v593, %v593
        %v634 = vpack.c.bf16 %v594, %v594
        %v635 = vpack.c.bf16 %v595, %v595
        %v636 = vpack.c.bf16 %v596, %v596
        %v637 = vpack.c.bf16 %v597, %v597
        %v638 = vpack.c.bf16 %v598, %v598
        %v639 = vpack.c.bf16 %v599, %v599
        %v640 = vpack.c.bf16 %v600, %v600
        %v641 = vpack.c.bf16 %v601, %v601
        %v642 = vpack.c.bf16 %v602, %v602
        %v643 = vpack.c.bf16 %v603, %v603
        %v644 = vpack.c.bf16 %v604, %v604
        %v645 = vpack.c.bf16 %v605, %v605
        %v646 = vpack.c.bf16 %v606, %v606
        %v647 = vpack.c.bf16 %v607, %v607
        %v648 = vpack.c.bf16 %v608, %v608
        %v649 = vpack.c.bf16 %v609, %v609
        %v650 = vpack.c.bf16 %v610, %v610
        %v651 = vpack.c.bf16 %v611, %v611
        %v652 = vpack.c.bf16 %v612, %v612
        %v653 = vpack.c.bf16 %v613, %v613
        %v654 = vpack.c.bf16 %v614, %v614
        %v655 = vpack.c.bf16 %v615, %v615
        %v656 = vpack.c.bf16 %v616, %v616
        %v657 = vpack.c.bf16 %v617, %v617
        %v658 = vpack.c.bf16 %v618, %v618
        %v659 = vpack.c.bf16 %v619, %v619
        %v660 = vpack.c.bf16 %v620, %v620
        %v661 = vpack.c.bf16 %v621, %v621
        %v662 = vpack.c.bf16 %v622, %v622
        %v663 = vpack.c.bf16 %v623, %v623
        %v664 = vpack.c.bf16 %v624, %v624
        %v665 = vpack.c.bf16 %v625, %v625
        %v666 = vpack.c.bf16 %v626, %v626
        %v667 = vpack.c.bf16 %v627, %v627
        %v668 = vld [vmem:[#allocation2] sm:$0xff]
        %v669 = vld [vmem:[#allocation2 + $0x8] sm:$0xff]
        %v670 = vld [vmem:[#allocation2 + $0x10] sm:$0xff]
        %v671 = vld [vmem:[#allocation2 + $0x18] sm:$0xff]
        %v672 = vld [vmem:[%s394] sm:$0xff]
        %v673 = vld [vmem:[%s394 + $0x8] sm:$0xff]
        %v674 = vld [vmem:[%s394 + $0x10] sm:$0xff]
        %v675 = vld [vmem:[%s394 + $0x18] sm:$0xff]
        %v676 = vld [vmem:[%s394 + $0x20] sm:$0xff]
        %v677 = vld [vmem:[%s394 + $0x28] sm:$0xff]
        %v678 = vld [vmem:[%s394 + $0x30] sm:$0xff]
        %v679 = vld [vmem:[%s394 + $0x38] sm:$0xff]
        %v680 = vld [vmem:[%s394 + $0x40] sm:$0xff]
        %v681 = vld [vmem:[%s394 + $0x48] sm:$0xff]
        %v682 = vld [vmem:[%s394 + $0x50] sm:$0xff]
        %v683 = vld [vmem:[%s394 + $0x58] sm:$0xff]
        %v684 = vld [vmem:[%s394 + $0x60] sm:$0xff]
        %v685 = vld [vmem:[%s394 + $0x68] sm:$0xff]
        %v686 = vld [vmem:[%s394 + $0x70] sm:$0xff]
        %v687 = vld [vmem:[%s394 + $0x78] sm:$0xff]
        %v688 = vld [vmem:[%s394 + $0x80] sm:$0xff]
        %v689 = vld [vmem:[%s394 + $0x88] sm:$0xff]
        %v690 = vld [vmem:[%s394 + $0x90] sm:$0xff]
        %v691 = vld [vmem:[%s394 + $0x98] sm:$0xff]
        %v692 = vld [vmem:[%s394 + $0xa0] sm:$0xff]
        %v693 = vld [vmem:[%s394 + $0xa8] sm:$0xff]
        %v694 = vld [vmem:[%s394 + $0xb0] sm:$0xff]
        %v695 = vld [vmem:[%s394 + $0xb8] sm:$0xff]
        %v696 = vld [vmem:[%s394 + $0xc0] sm:$0xff]
        %v697 = vld [vmem:[%s394 + $0xc8] sm:$0xff]
        %v698 = vld [vmem:[%s394 + $0xd0] sm:$0xff]
        %v699 = vld [vmem:[%s394 + $0xd8] sm:$0xff]
        %v700 = vld [vmem:[%s394 + $0xe0] sm:$0xff]
        %v701 = vld [vmem:[%s394 + $0xe8] sm:$0xff]
        %v702 = vld [vmem:[%s394 + $0xf0] sm:$0xff]
        %v703 = vld [vmem:[%s394 + $0xf8] sm:$0xff]
        %v704 = vld [vmem:[%s394 + $0x100] sm:$0xff]
        %v705 = vld [vmem:[%s394 + $0x108] sm:$0xff]
        %v706 = vld [vmem:[%s394 + $0x110] sm:$0xff]
        %v707 = vld [vmem:[%s394 + $0x118] sm:$0xff]
        %v708 = vld [vmem:[%s394 + $0x120] sm:$0xff]
        %v709 = vld [vmem:[%s394 + $0x128] sm:$0xff]
        %v710 = vld [vmem:[%s394 + $0x130] sm:$0xff]
        %v711 = vld [vmem:[%s394 + $0x138] sm:$0xff]
        %v712 = vld [vmem:[%s394 + $0x140] sm:$0xff]
        %v713 = vld [vmem:[%s394 + $0x148] sm:$0xff]
        %v714 = vld [vmem:[%s394 + $0x150] sm:$0xff]
        %v715 = vld [vmem:[%s394 + $0x158] sm:$0xff]
        %v716 = vld [vmem:[%s394 + $0x160] sm:$0xff]
        %v717 = vld [vmem:[%s394 + $0x168] sm:$0xff]
        %v718 = vld [vmem:[%s394 + $0x170] sm:$0xff]
        %v719 = vld [vmem:[%s394 + $0x178] sm:$0xff]
        %v720 = vld [vmem:[%s394 + $0x180] sm:$0xff]
        %v721 = vld [vmem:[%s394 + $0x188] sm:$0xff]
        %v722 = vld [vmem:[%s394 + $0x190] sm:$0xff]
        %v723 = vld [vmem:[%s394 + $0x198] sm:$0xff]
        %v724 = vld [vmem:[%s394 + $0x1a0] sm:$0xff]
        %v725 = vld [vmem:[%s394 + $0x1a8] sm:$0xff]
        %v726 = vld [vmem:[%s394 + $0x1b0] sm:$0xff]
        %v727 = vld [vmem:[%s394 + $0x1b8] sm:$0xff]
        %v728 = vld [vmem:[%s394 + $0x1c0] sm:$0xff]
        %v729 = vld [vmem:[%s394 + $0x1c8] sm:$0xff]
        %v730 = vld [vmem:[%s394 + $0x1d0] sm:$0xff]
        %v731 = vld [vmem:[%s394 + $0x1d8] sm:$0xff]
        %v732 = vld [vmem:[%s394 + $0x1e0] sm:$0xff]
        %v733 = vld [vmem:[%s394 + $0x1e8] sm:$0xff]
        %v734 = vld [vmem:[%s394 + $0x1f0] sm:$0xff]
        %v735 = vld [vmem:[%s394 + $0x1f8] sm:$0xff]
        %v736 = vld [vmem:[%s394 + $0x200] sm:$0xff]
        %v737 = vld [vmem:[%s394 + $0x208] sm:$0xff]
        %v738 = vld [vmem:[%s394 + $0x210] sm:$0xff]
        %v739 = vld [vmem:[%s394 + $0x218] sm:$0xff]
        %v740 = vld [vmem:[%s394 + $0x220] sm:$0xff]
        %v741 = vld [vmem:[%s394 + $0x228] sm:$0xff]
        %v742 = vld [vmem:[%s394 + $0x230] sm:$0xff]
        %v743 = vld [vmem:[%s394 + $0x238] sm:$0xff]
        %v744 = vld [vmem:[%s394 + $0x240] sm:$0xff]
        %v745 = vld [vmem:[%s394 + $0x248] sm:$0xff]
        %v746 = vld [vmem:[%s394 + $0x250] sm:$0xff]
        %v747 = vld [vmem:[%s394 + $0x258] sm:$0xff]
        %v748 = vld [vmem:[%s394 + $0x260] sm:$0xff]
        %v749 = vld [vmem:[%s394 + $0x268] sm:$0xff]
        %v750 = vld [vmem:[%s394 + $0x270] sm:$0xff]
        %v751 = vld [vmem:[%s394 + $0x278] sm:$0xff]
        %v752 = vld [vmem:[%s394 + $0x280] sm:$0xff]
        %v753 = vld [vmem:[%s394 + $0x288] sm:$0xff]
        %v754 = vld [vmem:[%s394 + $0x290] sm:$0xff]
        %v755 = vld [vmem:[%s394 + $0x298] sm:$0xff]
        %v756 = vld [vmem:[%s394 + $0x2a0] sm:$0xff]
        %v757 = vld [vmem:[%s394 + $0x2a8] sm:$0xff]
        %v758 = vld [vmem:[%s394 + $0x2b0] sm:$0xff]
        %v759 = vld [vmem:[%s394 + $0x2b8] sm:$0xff]
        %v760 = vld [vmem:[%s394 + $0x2c0] sm:$0xff]
        %v761 = vld [vmem:[%s394 + $0x2c8] sm:$0xff]
        %v762 = vld [vmem:[%s394 + $0x2d0] sm:$0xff]
        %v763 = vld [vmem:[%s394 + $0x2d8] sm:$0xff]
        %v764 = vld [vmem:[%s394 + $0x2e0] sm:$0xff]
        %v765 = vld [vmem:[%s394 + $0x2e8] sm:$0xff]
        %v766 = vld [vmem:[%s394 + $0x2f0] sm:$0xff]
        %v767 = vld [vmem:[%s394 + $0x2f8] sm:$0xff]
        %v768 = vld [vmem:[%s394 + $0x300] sm:$0xff]
        %v769 = vld [vmem:[%s394 + $0x308] sm:$0xff]
        %v770 = vld [vmem:[%s394 + $0x310] sm:$0xff]
        %v771 = vld [vmem:[%s394 + $0x318] sm:$0xff]
        %v772 = vld [vmem:[%s394 + $0x320] sm:$0xff]
        %v773 = vld [vmem:[%s394 + $0x328] sm:$0xff]
        %v774 = vld [vmem:[%s394 + $0x330] sm:$0xff]
        %v775 = vld [vmem:[%s394 + $0x338] sm:$0xff]
        %v776 = vld [vmem:[%s394 + $0x340] sm:$0xff]
        %v777 = vld [vmem:[%s394 + $0x348] sm:$0xff]
        %v778 = vld [vmem:[%s394 + $0x350] sm:$0xff]
        %v779 = vld [vmem:[%s394 + $0x358] sm:$0xff]
        %v780 = vld [vmem:[%s394 + $0x360] sm:$0xff]
        %v781 = vld [vmem:[%s394 + $0x368] sm:$0xff]
        %v782 = vld [vmem:[%s394 + $0x370] sm:$0xff]
        %v783 = vld [vmem:[%s394 + $0x378] sm:$0xff]
        %v784 = vld [vmem:[%s394 + $0x380] sm:$0xff]
        %v785 = vld [vmem:[%s394 + $0x388] sm:$0xff]
        %v786 = vld [vmem:[%s394 + $0x390] sm:$0xff]
        %v787 = vld [vmem:[%s394 + $0x398] sm:$0xff]
        %v788 = vld [vmem:[%s394 + $0x3a0] sm:$0xff]
        %v789 = vld [vmem:[%s394 + $0x3a8] sm:$0xff]
        %v790 = vld [vmem:[%s394 + $0x3b0] sm:$0xff]
        %v791 = vld [vmem:[%s394 + $0x3b8] sm:$0xff]
        %v792 = vld [vmem:[%s394 + $0x3c0] sm:$0xff]
        %v793 = vld [vmem:[%s394 + $0x3c8] sm:$0xff]
        %v794 = vld [vmem:[%s394 + $0x3d0] sm:$0xff]
        %v795 = vld [vmem:[%s394 + $0x3d8] sm:$0xff]
        %v796 = vld [vmem:[%s394 + $0x3e0] sm:$0xff]
        %v797 = vld [vmem:[%s394 + $0x3e8] sm:$0xff]
        %v798 = vld [vmem:[%s394 + $0x3f0] sm:$0xff]
        %v799 = vld [vmem:[%s394 + $0x3f8] sm:$0xff]
        %v800 = vld [vmem:[%s394 + $0x400] sm:$0xff]
        %v801 = vld [vmem:[%s394 + $0x408] sm:$0xff]
        %v802 = vld [vmem:[%s394 + $0x410] sm:$0xff]
        %v803 = vld [vmem:[%s394 + $0x418] sm:$0xff]
        %v804 = vld [vmem:[%s394 + $0x420] sm:$0xff]
        %v805 = vld [vmem:[%s394 + $0x428] sm:$0xff]
        %v806 = vld [vmem:[%s394 + $0x430] sm:$0xff]
        %v807 = vld [vmem:[%s394 + $0x438] sm:$0xff]
        %v808 = vld [vmem:[%s394 + $0x440] sm:$0xff]
        %v809 = vld [vmem:[%s394 + $0x448] sm:$0xff]
        %v810 = vld [vmem:[%s394 + $0x450] sm:$0xff]
        %v811 = vld [vmem:[%s394 + $0x458] sm:$0xff]
        %v812 = vld [vmem:[%s394 + $0x460] sm:$0xff]
        %v813 = vld [vmem:[%s394 + $0x468] sm:$0xff]
        %v814 = vld [vmem:[%s394 + $0x470] sm:$0xff]
        %v815 = vld [vmem:[%s394 + $0x478] sm:$0xff]
        %v816 = vld [vmem:[%s394 + $0x480] sm:$0xff]
        %v817 = vld [vmem:[%s394 + $0x488] sm:$0xff]
        %v818 = vld [vmem:[%s394 + $0x490] sm:$0xff]
        %v819 = vld [vmem:[%s394 + $0x498] sm:$0xff]
        %v820 = vld [vmem:[%s394 + $0x4a0] sm:$0xff]
        %v821 = vld [vmem:[%s394 + $0x4a8] sm:$0xff]
        %v822 = vld [vmem:[%s394 + $0x4b0] sm:$0xff]
        %v823 = vld [vmem:[%s394 + $0x4b8] sm:$0xff]
        %v824 = vld [vmem:[%s394 + $0x4c0] sm:$0xff]
        %v825 = vld [vmem:[%s394 + $0x4c8] sm:$0xff]
        %v826 = vld [vmem:[%s394 + $0x4d0] sm:$0xff]
        %v827 = vld [vmem:[%s394 + $0x4d8] sm:$0xff]
        %v828 = vld [vmem:[%s394 + $0x4e0] sm:$0xff]
        %v829 = vld [vmem:[%s394 + $0x4e8] sm:$0xff]
        %v830 = vld [vmem:[%s394 + $0x4f0] sm:$0xff]
        %v831 = vld [vmem:[%s394 + $0x4f8] sm:$0xff]
        %v832 = vld [vmem:[%s394 + $0x500] sm:$0xff]
        %v833 = vld [vmem:[%s394 + $0x508] sm:$0xff]
        %v834 = vld [vmem:[%s394 + $0x510] sm:$0xff]
        %v835 = vld [vmem:[%s394 + $0x518] sm:$0xff]
        %v836 = vld [vmem:[%s394 + $0x520] sm:$0xff]
        %v837 = vld [vmem:[%s394 + $0x528] sm:$0xff]
        %v838 = vld [vmem:[%s394 + $0x530] sm:$0xff]
        %v839 = vld [vmem:[%s394 + $0x538] sm:$0xff]
        %v840 = vld [vmem:[%s394 + $0x540] sm:$0xff]
        %v841 = vld [vmem:[%s394 + $0x548] sm:$0xff]
        %v842 = vld [vmem:[%s394 + $0x550] sm:$0xff]
        %v843 = vld [vmem:[%s394 + $0x558] sm:$0xff]
        %v844 = vld [vmem:[%s394 + $0x560] sm:$0xff]
        %v845 = vld [vmem:[%s394 + $0x568] sm:$0xff]
        %v846 = vld [vmem:[%s394 + $0x570] sm:$0xff]
        %v847 = vld [vmem:[%s394 + $0x578] sm:$0xff]
        %v848 = vld [vmem:[%s394 + $0x580] sm:$0xff]
        %v849 = vld [vmem:[%s394 + $0x588] sm:$0xff]
        %v850 = vld [vmem:[%s394 + $0x590] sm:$0xff]
        %v851 = vld [vmem:[%s394 + $0x598] sm:$0xff]
        %v852 = vld [vmem:[%s394 + $0x5a0] sm:$0xff]
        %v853 = vld [vmem:[%s394 + $0x5a8] sm:$0xff]
        %v854 = vld [vmem:[%s394 + $0x5b0] sm:$0xff]
        %v855 = vld [vmem:[%s394 + $0x5b8] sm:$0xff]
        %v856 = vld [vmem:[%s394 + $0x5c0] sm:$0xff]
        %v857 = vld [vmem:[%s394 + $0x5c8] sm:$0xff]
        %v858 = vld [vmem:[%s394 + $0x5d0] sm:$0xff]
        %v859 = vld [vmem:[%s394 + $0x5d8] sm:$0xff]
        %v860 = vld [vmem:[%s394 + $0x5e0] sm:$0xff]
        %v861 = vld [vmem:[%s394 + $0x5e8] sm:$0xff]
        %v862 = vld [vmem:[%s394 + $0x5f0] sm:$0xff]
        %v863 = vld [vmem:[%s394 + $0x5f8] sm:$0xff]
        %v864 = vld [vmem:[%s394 + $0x600] sm:$0xff]
        %v865 = vld [vmem:[%s394 + $0x608] sm:$0xff]
        %v866 = vld [vmem:[%s394 + $0x610] sm:$0xff]
        %v867 = vld [vmem:[%s394 + $0x618] sm:$0xff]
        %v868 = vld [vmem:[%s394 + $0x620] sm:$0xff]
        %v869 = vld [vmem:[%s394 + $0x628] sm:$0xff]
        %v870 = vld [vmem:[%s394 + $0x630] sm:$0xff]
        %v871 = vld [vmem:[%s394 + $0x638] sm:$0xff]
        %v872 = vld [vmem:[%s394 + $0x640] sm:$0xff]
        %v873 = vld [vmem:[%s394 + $0x648] sm:$0xff]
        %v874 = vld [vmem:[%s394 + $0x650] sm:$0xff]
        %v875 = vld [vmem:[%s394 + $0x658] sm:$0xff]
        %v876 = vld [vmem:[%s394 + $0x660] sm:$0xff]
        %v877 = vld [vmem:[%s394 + $0x668] sm:$0xff]
        %v878 = vld [vmem:[%s394 + $0x670] sm:$0xff]
        %v879 = vld [vmem:[%s394 + $0x678] sm:$0xff]
        %v880 = vld [vmem:[%s394 + $0x680] sm:$0xff]
        %v881 = vld [vmem:[%s394 + $0x688] sm:$0xff]
        %v882 = vld [vmem:[%s394 + $0x690] sm:$0xff]
        %v883 = vld [vmem:[%s394 + $0x698] sm:$0xff]
        %v884 = vld [vmem:[%s394 + $0x6a0] sm:$0xff]
        %v885 = vld [vmem:[%s394 + $0x6a8] sm:$0xff]
        %v886 = vld [vmem:[%s394 + $0x6b0] sm:$0xff]
        %v887 = vld [vmem:[%s394 + $0x6b8] sm:$0xff]
        %v888 = vld [vmem:[%s394 + $0x6c0] sm:$0xff]
        %v889 = vld [vmem:[%s394 + $0x6c8] sm:$0xff]
        %v890 = vld [vmem:[%s394 + $0x6d0] sm:$0xff]
        %v891 = vld [vmem:[%s394 + $0x6d8] sm:$0xff]
        %v892 = vld [vmem:[%s394 + $0x6e0] sm:$0xff]
        %v893 = vld [vmem:[%s394 + $0x6e8] sm:$0xff]
        %v894 = vld [vmem:[%s394 + $0x6f0] sm:$0xff]
        %v895 = vld [vmem:[%s394 + $0x6f8] sm:$0xff]
        %v896 = vld [vmem:[%s394 + $0x700] sm:$0xff]
        %v897 = vld [vmem:[%s394 + $0x708] sm:$0xff]
        %v898 = vld [vmem:[%s394 + $0x710] sm:$0xff]
        %v899 = vld [vmem:[%s394 + $0x718] sm:$0xff]
        %v900 = vld [vmem:[%s394 + $0x720] sm:$0xff]
        %v901 = vld [vmem:[%s394 + $0x728] sm:$0xff]
        %v902 = vld [vmem:[%s394 + $0x730] sm:$0xff]
        %v903 = vld [vmem:[%s394 + $0x738] sm:$0xff]
        %v904 = vld [vmem:[%s394 + $0x740] sm:$0xff]
        %v905 = vld [vmem:[%s394 + $0x748] sm:$0xff]
        %v906 = vld [vmem:[%s394 + $0x750] sm:$0xff]
        %v907 = vld [vmem:[%s394 + $0x758] sm:$0xff]
        %v908 = vld [vmem:[%s394 + $0x760] sm:$0xff]
        %v909 = vld [vmem:[%s394 + $0x768] sm:$0xff]
        %v910 = vld [vmem:[%s394 + $0x770] sm:$0xff]
        %v911 = vld [vmem:[%s394 + $0x778] sm:$0xff]
        %v912 = vld [vmem:[%s394 + $0x780] sm:$0xff]
        %v913 = vld [vmem:[%s394 + $0x788] sm:$0xff]
        %v914 = vld [vmem:[%s394 + $0x790] sm:$0xff]
        %v915 = vld [vmem:[%s394 + $0x798] sm:$0xff]
        %v916 = vld [vmem:[%s394 + $0x7a0] sm:$0xff]
        %v917 = vld [vmem:[%s394 + $0x7a8] sm:$0xff]
        %v918 = vld [vmem:[%s394 + $0x7b0] sm:$0xff]
        %v919 = vld [vmem:[%s394 + $0x7b8] sm:$0xff]
        %v920 = vld [vmem:[%s394 + $0x7c0] sm:$0xff]
        %v921 = vld [vmem:[%s394 + $0x7c8] sm:$0xff]
        %v922 = vld [vmem:[%s394 + $0x7d0] sm:$0xff]
        %v923 = vld [vmem:[%s394 + $0x7d8] sm:$0xff]
        %v924 = vld [vmem:[%s394 + $0x7e0] sm:$0xff]
        %v925 = vld [vmem:[%s394 + $0x7e8] sm:$0xff]
        %v926 = vld [vmem:[%s394 + $0x7f0] sm:$0xff]
        %v927 = vld [vmem:[%s394 + $0x7f8] sm:$0xff]
        %v928 = vld [vmem:[%s394 + $0x800] sm:$0xff]
        %v929 = vld [vmem:[%s394 + $0x808] sm:$0xff]
        %v930 = vld [vmem:[%s394 + $0x810] sm:$0xff]
        %v931 = vld [vmem:[%s394 + $0x818] sm:$0xff]
        %v932 = vld [vmem:[%s394 + $0x820] sm:$0xff]
        %v933 = vld [vmem:[%s394 + $0x828] sm:$0xff]
        %v934 = vld [vmem:[%s394 + $0x830] sm:$0xff]
        %v935 = vld [vmem:[%s394 + $0x838] sm:$0xff]
        %v936 = vld [vmem:[%s394 + $0x840] sm:$0xff]
        %v937 = vld [vmem:[%s394 + $0x848] sm:$0xff]
        %v938 = vld [vmem:[%s394 + $0x850] sm:$0xff]
        %v939 = vld [vmem:[%s394 + $0x858] sm:$0xff]
        %v940 = vld [vmem:[%s394 + $0x860] sm:$0xff]
        %v941 = vld [vmem:[%s394 + $0x868] sm:$0xff]
        %v942 = vld [vmem:[%s394 + $0x870] sm:$0xff]
        %v943 = vld [vmem:[%s394 + $0x878] sm:$0xff]
        %v944 = vld [vmem:[%s394 + $0x880] sm:$0xff]
        %v945 = vld [vmem:[%s394 + $0x888] sm:$0xff]
        %v946 = vld [vmem:[%s394 + $0x890] sm:$0xff]
        %v947 = vld [vmem:[%s394 + $0x898] sm:$0xff]
        %v948 = vld [vmem:[%s394 + $0x8a0] sm:$0xff]
        %v949 = vld [vmem:[%s394 + $0x8a8] sm:$0xff]
        %v950 = vld [vmem:[%s394 + $0x8b0] sm:$0xff]
        %v951 = vld [vmem:[%s394 + $0x8b8] sm:$0xff]
        %v952 = vld [vmem:[%s394 + $0x8c0] sm:$0xff]
        %v953 = vld [vmem:[%s394 + $0x8c8] sm:$0xff]
        %v954 = vld [vmem:[%s394 + $0x8d0] sm:$0xff]
        %v955 = vld [vmem:[%s394 + $0x8d8] sm:$0xff]
        %v956 = vld [vmem:[%s394 + $0x8e0] sm:$0xff]
        %v957 = vld [vmem:[%s394 + $0x8e8] sm:$0xff]
        %v958 = vld [vmem:[%s394 + $0x8f0] sm:$0xff]
        %v959 = vld [vmem:[%s394 + $0x8f8] sm:$0xff]
        %v960 = vld [vmem:[%s394 + $0x900] sm:$0xff]
        %v961 = vld [vmem:[%s394 + $0x908] sm:$0xff]
        %v962 = vld [vmem:[%s394 + $0x910] sm:$0xff]
        %v963 = vld [vmem:[%s394 + $0x918] sm:$0xff]
        %v964 = vld [vmem:[%s394 + $0x920] sm:$0xff]
        %v965 = vld [vmem:[%s394 + $0x928] sm:$0xff]
        %v966 = vld [vmem:[%s394 + $0x930] sm:$0xff]
        %v967 = vld [vmem:[%s394 + $0x938] sm:$0xff]
        %v968 = vld [vmem:[%s394 + $0x940] sm:$0xff]
        %v969 = vld [vmem:[%s394 + $0x948] sm:$0xff]
        %v970 = vld [vmem:[%s394 + $0x950] sm:$0xff]
        %v971 = vld [vmem:[%s394 + $0x958] sm:$0xff]
        %v972 = vld [vmem:[%s394 + $0x960] sm:$0xff]
        %v973 = vld [vmem:[%s394 + $0x968] sm:$0xff]
        %v974 = vld [vmem:[%s394 + $0x970] sm:$0xff]
        %v975 = vld [vmem:[%s394 + $0x978] sm:$0xff]
        %v976 = vld [vmem:[%s394 + $0x980] sm:$0xff]
        %v977 = vld [vmem:[%s394 + $0x988] sm:$0xff]
        %v978 = vld [vmem:[%s394 + $0x990] sm:$0xff]
        %v979 = vld [vmem:[%s394 + $0x998] sm:$0xff]
        %v980 = vld [vmem:[%s394 + $0x9a0] sm:$0xff]
        %v981 = vld [vmem:[%s394 + $0x9a8] sm:$0xff]
        %v982 = vld [vmem:[%s394 + $0x9b0] sm:$0xff]
        %v983 = vld [vmem:[%s394 + $0x9b8] sm:$0xff]
        %v984 = vld [vmem:[%s394 + $0x9c0] sm:$0xff]
        %v985 = vld [vmem:[%s394 + $0x9c8] sm:$0xff]
        %v986 = vld [vmem:[%s394 + $0x9d0] sm:$0xff]
        %v987 = vld [vmem:[%s394 + $0x9d8] sm:$0xff]
        %v988 = vld [vmem:[%s394 + $0x9e0] sm:$0xff]
        %v989 = vld [vmem:[%s394 + $0x9e8] sm:$0xff]
        %v990 = vld [vmem:[%s394 + $0x9f0] sm:$0xff]
        %v991 = vld [vmem:[%s394 + $0x9f8] sm:$0xff]
        %v992 = vld [vmem:[%s394 + $0xa00] sm:$0xff]
        %v993 = vld [vmem:[%s394 + $0xa08] sm:$0xff]
        %v994 = vld [vmem:[%s394 + $0xa10] sm:$0xff]
        %v995 = vld [vmem:[%s394 + $0xa18] sm:$0xff]
        %v996 = vld [vmem:[%s394 + $0xa20] sm:$0xff]
        %v997 = vld [vmem:[%s394 + $0xa28] sm:$0xff]
        %v998 = vld [vmem:[%s394 + $0xa30] sm:$0xff]
        %v999 = vld [vmem:[%s394 + $0xa38] sm:$0xff]
        %v1000 = vld [vmem:[%s394 + $0xa40] sm:$0xff]
        %v1001 = vld [vmem:[%s394 + $0xa48] sm:$0xff]
        %v1002 = vld [vmem:[%s394 + $0xa50] sm:$0xff]
        %v1003 = vld [vmem:[%s394 + $0xa58] sm:$0xff]
        %v1004 = vld [vmem:[%s394 + $0xa60] sm:$0xff]
        %v1005 = vld [vmem:[%s394 + $0xa68] sm:$0xff]
        %v1006 = vld [vmem:[%s394 + $0xa70] sm:$0xff]
        %v1007 = vld [vmem:[%s394 + $0xa78] sm:$0xff]
        %v1008 = vld [vmem:[%s394 + $0xa80] sm:$0xff]
        %v1009 = vld [vmem:[%s394 + $0xa88] sm:$0xff]
        %v1010 = vld [vmem:[%s394 + $0xa90] sm:$0xff]
        %v1011 = vld [vmem:[%s394 + $0xa98] sm:$0xff]
        %v1012 = vld [vmem:[%s394 + $0xaa0] sm:$0xff]
        %v1013 = vld [vmem:[%s394 + $0xaa8] sm:$0xff]
        %v1014 = vld [vmem:[%s394 + $0xab0] sm:$0xff]
        %v1015 = vld [vmem:[%s394 + $0xab8] sm:$0xff]
        %v1016 = vld [vmem:[%s394 + $0xac0] sm:$0xff]
        %v1017 = vld [vmem:[%s394 + $0xac8] sm:$0xff]
        %v1018 = vld [vmem:[%s394 + $0xad0] sm:$0xff]
        %v1019 = vld [vmem:[%s394 + $0xad8] sm:$0xff]
        %v1020 = vld [vmem:[%s394 + $0xae0] sm:$0xff]
        %v1021 = vld [vmem:[%s394 + $0xae8] sm:$0xff]
        %v1022 = vld [vmem:[%s394 + $0xaf0] sm:$0xff]
        %v1023 = vld [vmem:[%s394 + $0xaf8] sm:$0xff]
        %v1024 = vld [vmem:[%s394 + $0xb00] sm:$0xff]
        %v1025 = vld [vmem:[%s394 + $0xb08] sm:$0xff]
        %v1026 = vld [vmem:[%s394 + $0xb10] sm:$0xff]
        %v1027 = vld [vmem:[%s394 + $0xb18] sm:$0xff]
        %v1028 = vld [vmem:[%s394 + $0xb20] sm:$0xff]
        %v1029 = vld [vmem:[%s394 + $0xb28] sm:$0xff]
        %v1030 = vld [vmem:[%s394 + $0xb30] sm:$0xff]
        %v1031 = vld [vmem:[%s394 + $0xb38] sm:$0xff]
        %v1032 = vld [vmem:[%s394 + $0xb40] sm:$0xff]
        %v1033 = vld [vmem:[%s394 + $0xb48] sm:$0xff]
        %v1034 = vld [vmem:[%s394 + $0xb50] sm:$0xff]
        %v1035 = vld [vmem:[%s394 + $0xb58] sm:$0xff]
        %v1036 = vld [vmem:[%s394 + $0xb60] sm:$0xff]
        %v1037 = vld [vmem:[%s394 + $0xb68] sm:$0xff]
        %v1038 = vld [vmem:[%s394 + $0xb70] sm:$0xff]
        %v1039 = vld [vmem:[%s394 + $0xb78] sm:$0xff]
        %v1040 = vld [vmem:[%s394 + $0xb80] sm:$0xff]
        %v1041 = vld [vmem:[%s394 + $0xb88] sm:$0xff]
        %v1042 = vld [vmem:[%s394 + $0xb90] sm:$0xff]
        %v1043 = vld [vmem:[%s394 + $0xb98] sm:$0xff]
        %v1044 = vld [vmem:[%s394 + $0xba0] sm:$0xff]
        %v1045 = vld [vmem:[%s394 + $0xba8] sm:$0xff]
        %v1046 = vld [vmem:[%s394 + $0xbb0] sm:$0xff]
        %v1047 = vld [vmem:[%s394 + $0xbb8] sm:$0xff]
        %v1048 = vld [vmem:[%s394 + $0xbc0] sm:$0xff]
        %v1049 = vld [vmem:[%s394 + $0xbc8] sm:$0xff]
        %v1050 = vld [vmem:[%s394 + $0xbd0] sm:$0xff]
        %v1051 = vld [vmem:[%s394 + $0xbd8] sm:$0xff]
        %v1052 = vld [vmem:[%s394 + $0xbe0] sm:$0xff]
        %v1053 = vld [vmem:[%s394 + $0xbe8] sm:$0xff]
        %v1054 = vld [vmem:[%s394 + $0xbf0] sm:$0xff]
        %v1055 = vld [vmem:[%s394 + $0xbf8] sm:$0xff]
        %v1056 = vld [vmem:[%s394 + $0xc00] sm:$0xff]
        %v1057 = vld [vmem:[%s394 + $0xc08] sm:$0xff]
        %v1058 = vld [vmem:[%s394 + $0xc10] sm:$0xff]
        %v1059 = vld [vmem:[%s394 + $0xc18] sm:$0xff]
        %v1060 = vld [vmem:[%s394 + $0xc20] sm:$0xff]
        %v1061 = vld [vmem:[%s394 + $0xc28] sm:$0xff]
        %v1062 = vld [vmem:[%s394 + $0xc30] sm:$0xff]
        %v1063 = vld [vmem:[%s394 + $0xc38] sm:$0xff]
        %v1064 = vld [vmem:[%s394 + $0xc40] sm:$0xff]
        %v1065 = vld [vmem:[%s394 + $0xc48] sm:$0xff]
        %v1066 = vld [vmem:[%s394 + $0xc50] sm:$0xff]
        %v1067 = vld [vmem:[%s394 + $0xc58] sm:$0xff]
        %v1068 = vld [vmem:[%s394 + $0xc60] sm:$0xff]
        %v1069 = vld [vmem:[%s394 + $0xc68] sm:$0xff]
        %v1070 = vld [vmem:[%s394 + $0xc70] sm:$0xff]
        %v1071 = vld [vmem:[%s394 + $0xc78] sm:$0xff]
        %v1072 = vld [vmem:[%s394 + $0xc80] sm:$0xff]
        %v1073 = vld [vmem:[%s394 + $0xc88] sm:$0xff]
        %v1074 = vld [vmem:[%s394 + $0xc90] sm:$0xff]
        %v1075 = vld [vmem:[%s394 + $0xc98] sm:$0xff]
        %v1076 = vld [vmem:[%s394 + $0xca0] sm:$0xff]
        %v1077 = vld [vmem:[%s394 + $0xca8] sm:$0xff]
        %v1078 = vld [vmem:[%s394 + $0xcb0] sm:$0xff]
        %v1079 = vld [vmem:[%s394 + $0xcb8] sm:$0xff]
        %v1080 = vld [vmem:[%s394 + $0xcc0] sm:$0xff]
        %v1081 = vld [vmem:[%s394 + $0xcc8] sm:$0xff]
        %v1082 = vld [vmem:[%s394 + $0xcd0] sm:$0xff]
        %v1083 = vld [vmem:[%s394 + $0xcd8] sm:$0xff]
        %v1084 = vld [vmem:[%s394 + $0xce0] sm:$0xff]
        %v1085 = vld [vmem:[%s394 + $0xce8] sm:$0xff]
        %v1086 = vld [vmem:[%s394 + $0xcf0] sm:$0xff]
        %v1087 = vld [vmem:[%s394 + $0xcf8] sm:$0xff]
        %v1088 = vld [vmem:[%s394 + $0xd00] sm:$0xff]
        %v1089 = vld [vmem:[%s394 + $0xd08] sm:$0xff]
        %v1090 = vld [vmem:[%s394 + $0xd10] sm:$0xff]
        %v1091 = vld [vmem:[%s394 + $0xd18] sm:$0xff]
        %v1092 = vld [vmem:[%s394 + $0xd20] sm:$0xff]
        %v1093 = vld [vmem:[%s394 + $0xd28] sm:$0xff]
        %v1094 = vld [vmem:[%s394 + $0xd30] sm:$0xff]
        %v1095 = vld [vmem:[%s394 + $0xd38] sm:$0xff]
        %v1096 = vld [vmem:[%s394 + $0xd40] sm:$0xff]
        %v1097 = vld [vmem:[%s394 + $0xd48] sm:$0xff]
        %v1098 = vld [vmem:[%s394 + $0xd50] sm:$0xff]
        %v1099 = vld [vmem:[%s394 + $0xd58] sm:$0xff]
        %v1100 = vld [vmem:[%s394 + $0xd60] sm:$0xff]
        %v1101 = vld [vmem:[%s394 + $0xd68] sm:$0xff]
        %v1102 = vld [vmem:[%s394 + $0xd70] sm:$0xff]
        %v1103 = vld [vmem:[%s394 + $0xd78] sm:$0xff]
        %v1104 = vld [vmem:[%s394 + $0xd80] sm:$0xff]
        %v1105 = vld [vmem:[%s394 + $0xd88] sm:$0xff]
        %v1106 = vld [vmem:[%s394 + $0xd90] sm:$0xff]
        %v1107 = vld [vmem:[%s394 + $0xd98] sm:$0xff]
        %v1108 = vld [vmem:[%s394 + $0xda0] sm:$0xff]
        %v1109 = vld [vmem:[%s394 + $0xda8] sm:$0xff]
        %v1110 = vld [vmem:[%s394 + $0xdb0] sm:$0xff]
        %v1111 = vld [vmem:[%s394 + $0xdb8] sm:$0xff]
        %v1112 = vld [vmem:[%s394 + $0xdc0] sm:$0xff]
        %v1113 = vld [vmem:[%s394 + $0xdc8] sm:$0xff]
        %v1114 = vld [vmem:[%s394 + $0xdd0] sm:$0xff]
        %v1115 = vld [vmem:[%s394 + $0xdd8] sm:$0xff]
        %v1116 = vld [vmem:[%s394 + $0xde0] sm:$0xff]
        %v1117 = vld [vmem:[%s394 + $0xde8] sm:$0xff]
        %v1118 = vld [vmem:[%s394 + $0xdf0] sm:$0xff]
        %v1119 = vld [vmem:[%s394 + $0xdf8] sm:$0xff]
        %v1120 = vld [vmem:[%s394 + $0xe00] sm:$0xff]
        %v1121 = vld [vmem:[%s394 + $0xe08] sm:$0xff]
        %v1122 = vld [vmem:[%s394 + $0xe10] sm:$0xff]
        %v1123 = vld [vmem:[%s394 + $0xe18] sm:$0xff]
        %v1124 = vld [vmem:[%s394 + $0xe20] sm:$0xff]
        %v1125 = vld [vmem:[%s394 + $0xe28] sm:$0xff]
        %v1126 = vld [vmem:[%s394 + $0xe30] sm:$0xff]
        %v1127 = vld [vmem:[%s394 + $0xe38] sm:$0xff]
        %v1128 = vld [vmem:[%s394 + $0xe40] sm:$0xff]
        %v1129 = vld [vmem:[%s394 + $0xe48] sm:$0xff]
        %v1130 = vld [vmem:[%s394 + $0xe50] sm:$0xff]
        %v1131 = vld [vmem:[%s394 + $0xe58] sm:$0xff]
        %v1132 = vld [vmem:[%s394 + $0xe60] sm:$0xff]
        %v1133 = vld [vmem:[%s394 + $0xe68] sm:$0xff]
        %v1134 = vld [vmem:[%s394 + $0xe70] sm:$0xff]
        %v1135 = vld [vmem:[%s394 + $0xe78] sm:$0xff]
        %v1136 = vld [vmem:[%s394 + $0xe80] sm:$0xff]
        %v1137 = vld [vmem:[%s394 + $0xe88] sm:$0xff]
        %v1138 = vld [vmem:[%s394 + $0xe90] sm:$0xff]
        %v1139 = vld [vmem:[%s394 + $0xe98] sm:$0xff]
        %v1140 = vld [vmem:[%s394 + $0xea0] sm:$0xff]
        %v1141 = vld [vmem:[%s394 + $0xea8] sm:$0xff]
        %v1142 = vld [vmem:[%s394 + $0xeb0] sm:$0xff]
        %v1143 = vld [vmem:[%s394 + $0xeb8] sm:$0xff]
        %v1144 = vld [vmem:[%s394 + $0xec0] sm:$0xff]
        %v1145 = vld [vmem:[%s394 + $0xec8] sm:$0xff]
        %v1146 = vld [vmem:[%s394 + $0xed0] sm:$0xff]
        %v1147 = vld [vmem:[%s394 + $0xed8] sm:$0xff]
        %v1148 = vld [vmem:[%s394 + $0xee0] sm:$0xff]
        %v1149 = vld [vmem:[%s394 + $0xee8] sm:$0xff]
        %v1150 = vld [vmem:[%s394 + $0xef0] sm:$0xff]
        %v1151 = vld [vmem:[%s394 + $0xef8] sm:$0xff]
        %v1152 = vld [vmem:[%s394 + $0xf00] sm:$0xff]
        %v1153 = vld [vmem:[%s394 + $0xf08] sm:$0xff]
        %v1154 = vld [vmem:[%s394 + $0xf10] sm:$0xff]
        %v1155 = vld [vmem:[%s394 + $0xf18] sm:$0xff]
        %v1156 = vld [vmem:[%s394 + $0xf20] sm:$0xff]
        %v1157 = vld [vmem:[%s394 + $0xf28] sm:$0xff]
        %v1158 = vld [vmem:[%s394 + $0xf30] sm:$0xff]
        %v1159 = vld [vmem:[%s394 + $0xf38] sm:$0xff]
        %v1160 = vld [vmem:[%s394 + $0xf40] sm:$0xff]
        %v1161 = vld [vmem:[%s394 + $0xf48] sm:$0xff]
        %v1162 = vld [vmem:[%s394 + $0xf50] sm:$0xff]
        %v1163 = vld [vmem:[%s394 + $0xf58] sm:$0xff]
        %v1164 = vld [vmem:[%s394 + $0xf60] sm:$0xff]
        %v1165 = vld [vmem:[%s394 + $0xf68] sm:$0xff]
        %v1166 = vld [vmem:[%s394 + $0xf70] sm:$0xff]
        %v1167 = vld [vmem:[%s394 + $0xf78] sm:$0xff]
        %v1168 = vld [vmem:[%s394 + $0xf80] sm:$0xff]
        %v1169 = vld [vmem:[%s394 + $0xf88] sm:$0xff]
        %v1170 = vld [vmem:[%s394 + $0xf90] sm:$0xff]
        %v1171 = vld [vmem:[%s394 + $0xf98] sm:$0xff]
        %v1172 = vld [vmem:[%s394 + $0xfa0] sm:$0xff]
        %v1173 = vld [vmem:[%s394 + $0xfa8] sm:$0xff]
        %v1174 = vld [vmem:[%s394 + $0xfb0] sm:$0xff]
        %v1175 = vld [vmem:[%s394 + $0xfb8] sm:$0xff]
        %v1176 = vld [vmem:[%s394 + $0xfc0] sm:$0xff]
        %v1177 = vld [vmem:[%s394 + $0xfc8] sm:$0xff]
        %v1178 = vld [vmem:[%s394 + $0xfd0] sm:$0xff]
        %v1179 = vld [vmem:[%s394 + $0xfd8] sm:$0xff]
        %v1180 = vld [vmem:[%s394 + $0xfe0] sm:$0xff]
        %v1181 = vld [vmem:[%s394 + $0xfe8] sm:$0xff]
        %v1182 = vld [vmem:[%s394 + $0xff0] sm:$0xff]
        %v1183 = vld [vmem:[%s394 + $0xff8] sm:$0xff]
        %v1184 = vld [vmem:[%s394 + $0x1000] sm:$0xff]
        %v1185 = vld [vmem:[%s394 + $0x1008] sm:$0xff]
        %v1186 = vld [vmem:[%s394 + $0x1010] sm:$0xff]
        %v1187 = vld [vmem:[%s394 + $0x1018] sm:$0xff]
        %v1188 = vld [vmem:[%s394 + $0x1020] sm:$0xff]
        %v1189 = vld [vmem:[%s394 + $0x1028] sm:$0xff]
        %v1190 = vld [vmem:[%s394 + $0x1030] sm:$0xff]
        %v1191 = vld [vmem:[%s394 + $0x1038] sm:$0xff]
        %v1192 = vld [vmem:[%s394 + $0x1040] sm:$0xff]
        %v1193 = vld [vmem:[%s394 + $0x1048] sm:$0xff]
        %v1194 = vld [vmem:[%s394 + $0x1050] sm:$0xff]
        %v1195 = vld [vmem:[%s394 + $0x1058] sm:$0xff]
        %v1196 = vld [vmem:[%s394 + $0x1060] sm:$0xff]
        %v1197 = vld [vmem:[%s394 + $0x1068] sm:$0xff]
        %v1198 = vld [vmem:[%s394 + $0x1070] sm:$0xff]
        %v1199 = vld [vmem:[%s394 + $0x1078] sm:$0xff]
        %v1200 = vld [vmem:[%s394 + $0x1080] sm:$0xff]
        %v1201 = vld [vmem:[%s394 + $0x1088] sm:$0xff]
        %v1202 = vld [vmem:[%s394 + $0x1090] sm:$0xff]
        %v1203 = vld [vmem:[%s394 + $0x1098] sm:$0xff]
        %v1204 = vld [vmem:[%s394 + $0x10a0] sm:$0xff]
        %v1205 = vld [vmem:[%s394 + $0x10a8] sm:$0xff]
        %v1206 = vld [vmem:[%s394 + $0x10b0] sm:$0xff]
        %v1207 = vld [vmem:[%s394 + $0x10b8] sm:$0xff]
        %v1208 = vld [vmem:[%s394 + $0x10c0] sm:$0xff]
        %v1209 = vld [vmem:[%s394 + $0x10c8] sm:$0xff]
        %v1210 = vld [vmem:[%s394 + $0x10d0] sm:$0xff]
        %v1211 = vld [vmem:[%s394 + $0x10d8] sm:$0xff]
        %v1212 = vld [vmem:[%s394 + $0x10e0] sm:$0xff]
        %v1213 = vld [vmem:[%s394 + $0x10e8] sm:$0xff]
        %v1214 = vld [vmem:[%s394 + $0x10f0] sm:$0xff]
        %v1215 = vld [vmem:[%s394 + $0x10f8] sm:$0xff]
        %v1216 = vld [vmem:[%s394 + $0x1100] sm:$0xff]
        %v1217 = vld [vmem:[%s394 + $0x1108] sm:$0xff]
        %v1218 = vld [vmem:[%s394 + $0x1110] sm:$0xff]
        %v1219 = vld [vmem:[%s394 + $0x1118] sm:$0xff]
        %v1220 = vld [vmem:[%s394 + $0x1120] sm:$0xff]
        %v1221 = vld [vmem:[%s394 + $0x1128] sm:$0xff]
        %v1222 = vld [vmem:[%s394 + $0x1130] sm:$0xff]
        %v1223 = vld [vmem:[%s394 + $0x1138] sm:$0xff]
        %v1224 = vld [vmem:[%s394 + $0x1140] sm:$0xff]
        %v1225 = vld [vmem:[%s394 + $0x1148] sm:$0xff]
        %v1226 = vld [vmem:[%s394 + $0x1150] sm:$0xff]
        %v1227 = vld [vmem:[%s394 + $0x1158] sm:$0xff]
        %v1228 = vld [vmem:[%s394 + $0x1160] sm:$0xff]
        %v1229 = vld [vmem:[%s394 + $0x1168] sm:$0xff]
        %v1230 = vld [vmem:[%s394 + $0x1170] sm:$0xff]
        %v1231 = vld [vmem:[%s394 + $0x1178] sm:$0xff]
        %v1232 = vld [vmem:[%s394 + $0x1180] sm:$0xff]
        %v1233 = vld [vmem:[%s394 + $0x1188] sm:$0xff]
        %v1234 = vld [vmem:[%s394 + $0x1190] sm:$0xff]
        %v1235 = vld [vmem:[%s394 + $0x1198] sm:$0xff]
        %v1236 = vld [vmem:[%s394 + $0x11a0] sm:$0xff]
        %v1237 = vld [vmem:[%s394 + $0x11a8] sm:$0xff]
        %v1238 = vld [vmem:[%s394 + $0x11b0] sm:$0xff]
        %v1239 = vld [vmem:[%s394 + $0x11b8] sm:$0xff]
        %v1240 = vld [vmem:[%s394 + $0x11c0] sm:$0xff]
        %v1241 = vld [vmem:[%s394 + $0x11c8] sm:$0xff]
        %v1242 = vld [vmem:[%s394 + $0x11d0] sm:$0xff]
        %v1243 = vld [vmem:[%s394 + $0x11d8] sm:$0xff]
        %v1244 = vld [vmem:[%s394 + $0x11e0] sm:$0xff]
        %v1245 = vld [vmem:[%s394 + $0x11e8] sm:$0xff]
        %v1246 = vld [vmem:[%s394 + $0x11f0] sm:$0xff]
        %v1247 = vld [vmem:[%s394 + $0x11f8] sm:$0xff]
        %v1248 = vld [vmem:[%s394 + $0x1200] sm:$0xff]
        %v1249 = vld [vmem:[%s394 + $0x1208] sm:$0xff]
        %v1250 = vld [vmem:[%s394 + $0x1210] sm:$0xff]
        %v1251 = vld [vmem:[%s394 + $0x1218] sm:$0xff]
        %v1252 = vld [vmem:[%s394 + $0x1220] sm:$0xff]
        %v1253 = vld [vmem:[%s394 + $0x1228] sm:$0xff]
        %v1254 = vld [vmem:[%s394 + $0x1230] sm:$0xff]
        %v1255 = vld [vmem:[%s394 + $0x1238] sm:$0xff]
        %v1256 = vld [vmem:[%s394 + $0x1240] sm:$0xff]
        %v1257 = vld [vmem:[%s394 + $0x1248] sm:$0xff]
        %v1258 = vld [vmem:[%s394 + $0x1250] sm:$0xff]
        %v1259 = vld [vmem:[%s394 + $0x1258] sm:$0xff]
        %v1260 = vld [vmem:[%s394 + $0x1260] sm:$0xff]
        %v1261 = vld [vmem:[%s394 + $0x1268] sm:$0xff]
        %v1262 = vld [vmem:[%s394 + $0x1270] sm:$0xff]
        %v1263 = vld [vmem:[%s394 + $0x1278] sm:$0xff]
        %v1264 = vld [vmem:[%s394 + $0x1280] sm:$0xff]
        %v1265 = vld [vmem:[%s394 + $0x1288] sm:$0xff]
        %v1266 = vld [vmem:[%s394 + $0x1290] sm:$0xff]
        %v1267 = vld [vmem:[%s394 + $0x1298] sm:$0xff]
        %v1268 = vld [vmem:[%s394 + $0x12a0] sm:$0xff]
        %v1269 = vld [vmem:[%s394 + $0x12a8] sm:$0xff]
        %v1270 = vld [vmem:[%s394 + $0x12b0] sm:$0xff]
        %v1271 = vld [vmem:[%s394 + $0x12b8] sm:$0xff]
        %v1272 = vld [vmem:[%s394 + $0x12c0] sm:$0xff]
        %v1273 = vld [vmem:[%s394 + $0x12c8] sm:$0xff]
        %v1274 = vld [vmem:[%s394 + $0x12d0] sm:$0xff]
        %v1275 = vld [vmem:[%s394 + $0x12d8] sm:$0xff]
        %v1276 = vld [vmem:[%s394 + $0x12e0] sm:$0xff]
        %v1277 = vld [vmem:[%s394 + $0x12e8] sm:$0xff]
        %v1278 = vld [vmem:[%s394 + $0x12f0] sm:$0xff]
        %v1279 = vld [vmem:[%s394 + $0x12f8] sm:$0xff]
        %v1280 = vld [vmem:[%s394 + $0x1300] sm:$0xff]
        %v1281 = vld [vmem:[%s394 + $0x1308] sm:$0xff]
        %v1282 = vld [vmem:[%s394 + $0x1310] sm:$0xff]
        %v1283 = vld [vmem:[%s394 + $0x1318] sm:$0xff]
        %v1284 = vld [vmem:[%s394 + $0x1320] sm:$0xff]
        %v1285 = vld [vmem:[%s394 + $0x1328] sm:$0xff]
        %v1286 = vld [vmem:[%s394 + $0x1330] sm:$0xff]
        %v1287 = vld [vmem:[%s394 + $0x1338] sm:$0xff]
        %v1288 = vld [vmem:[%s394 + $0x1340] sm:$0xff]
        %v1289 = vld [vmem:[%s394 + $0x1348] sm:$0xff]
        %v1290 = vld [vmem:[%s394 + $0x1350] sm:$0xff]
        %v1291 = vld [vmem:[%s394 + $0x1358] sm:$0xff]
        %v1292 = vld [vmem:[%s394 + $0x1360] sm:$0xff]
        %v1293 = vld [vmem:[%s394 + $0x1368] sm:$0xff]
        %v1294 = vld [vmem:[%s394 + $0x1370] sm:$0xff]
        %v1295 = vld [vmem:[%s394 + $0x1378] sm:$0xff]
        %v1296 = vld [vmem:[%s394 + $0x1380] sm:$0xff]
        %v1297 = vld [vmem:[%s394 + $0x1388] sm:$0xff]
        %v1298 = vld [vmem:[%s394 + $0x1390] sm:$0xff]
        %v1299 = vld [vmem:[%s394 + $0x1398] sm:$0xff]
        %v1300 = vld [vmem:[%s394 + $0x13a0] sm:$0xff]
        %v1301 = vld [vmem:[%s394 + $0x13a8] sm:$0xff]
        %v1302 = vld [vmem:[%s394 + $0x13b0] sm:$0xff]
        %v1303 = vld [vmem:[%s394 + $0x13b8] sm:$0xff]
        %v1304 = vld [vmem:[%s394 + $0x13c0] sm:$0xff]
        %v1305 = vld [vmem:[%s394 + $0x13c8] sm:$0xff]
        %v1306 = vld [vmem:[%s394 + $0x13d0] sm:$0xff]
        %v1307 = vld [vmem:[%s394 + $0x13d8] sm:$0xff]
        %v1308 = vld [vmem:[%s394 + $0x13e0] sm:$0xff]
        %v1309 = vld [vmem:[%s394 + $0x13e8] sm:$0xff]
        %v1310 = vld [vmem:[%s394 + $0x13f0] sm:$0xff]
        %v1311 = vld [vmem:[%s394 + $0x13f8] sm:$0xff]
        %v1312 = vld [vmem:[%s394 + $0x1400] sm:$0xff]
        %v1313 = vld [vmem:[%s394 + $0x1408] sm:$0xff]
        %v1314 = vld [vmem:[%s394 + $0x1410] sm:$0xff]
        %v1315 = vld [vmem:[%s394 + $0x1418] sm:$0xff]
        %v1316 = vld [vmem:[%s394 + $0x1420] sm:$0xff]
        %v1317 = vld [vmem:[%s394 + $0x1428] sm:$0xff]
        %v1318 = vld [vmem:[%s394 + $0x1430] sm:$0xff]
        %v1319 = vld [vmem:[%s394 + $0x1438] sm:$0xff]
        %v1320 = vld [vmem:[%s394 + $0x1440] sm:$0xff]
        %v1321 = vld [vmem:[%s394 + $0x1448] sm:$0xff]
        %v1322 = vld [vmem:[%s394 + $0x1450] sm:$0xff]
        %v1323 = vld [vmem:[%s394 + $0x1458] sm:$0xff]
        %v1324 = vld [vmem:[%s394 + $0x1460] sm:$0xff]
        %v1325 = vld [vmem:[%s394 + $0x1468] sm:$0xff]
        %v1326 = vld [vmem:[%s394 + $0x1470] sm:$0xff]
        %v1327 = vld [vmem:[%s394 + $0x1478] sm:$0xff]
        %v1328 = vld [vmem:[%s394 + $0x1480] sm:$0xff]
        %v1329 = vld [vmem:[%s394 + $0x1488] sm:$0xff]
        %v1330 = vld [vmem:[%s394 + $0x1490] sm:$0xff]
        %v1331 = vld [vmem:[%s394 + $0x1498] sm:$0xff]
        %v1332 = vld [vmem:[%s394 + $0x14a0] sm:$0xff]
        %v1333 = vld [vmem:[%s394 + $0x14a8] sm:$0xff]
        %v1334 = vld [vmem:[%s394 + $0x14b0] sm:$0xff]
        %v1335 = vld [vmem:[%s394 + $0x14b8] sm:$0xff]
        %v1336 = vld [vmem:[%s394 + $0x14c0] sm:$0xff]
        %v1337 = vld [vmem:[%s394 + $0x14c8] sm:$0xff]
        %v1338 = vld [vmem:[%s394 + $0x14d0] sm:$0xff]
        %v1339 = vld [vmem:[%s394 + $0x14d8] sm:$0xff]
        %v1340 = vld [vmem:[%s394 + $0x14e0] sm:$0xff]
        %v1341 = vld [vmem:[%s394 + $0x14e8] sm:$0xff]
        %v1342 = vld [vmem:[%s394 + $0x14f0] sm:$0xff]
        %v1343 = vld [vmem:[%s394 + $0x14f8] sm:$0xff]
        %v1344 = vld [vmem:[%s394 + $0x1500] sm:$0xff]
        %v1345 = vld [vmem:[%s394 + $0x1508] sm:$0xff]
        %v1346 = vld [vmem:[%s394 + $0x1510] sm:$0xff]
        %v1347 = vld [vmem:[%s394 + $0x1518] sm:$0xff]
        %v1348 = vld [vmem:[%s394 + $0x1520] sm:$0xff]
        %v1349 = vld [vmem:[%s394 + $0x1528] sm:$0xff]
        %v1350 = vld [vmem:[%s394 + $0x1530] sm:$0xff]
        %v1351 = vld [vmem:[%s394 + $0x1538] sm:$0xff]
        %v1352 = vld [vmem:[%s394 + $0x1540] sm:$0xff]
        %v1353 = vld [vmem:[%s394 + $0x1548] sm:$0xff]
        %v1354 = vld [vmem:[%s394 + $0x1550] sm:$0xff]
        %v1355 = vld [vmem:[%s394 + $0x1558] sm:$0xff]
        %v1356 = vld [vmem:[%s394 + $0x1560] sm:$0xff]
        %v1357 = vld [vmem:[%s394 + $0x1568] sm:$0xff]
        %v1358 = vld [vmem:[%s394 + $0x1570] sm:$0xff]
        %v1359 = vld [vmem:[%s394 + $0x1578] sm:$0xff]
        %v1360 = vld [vmem:[%s394 + $0x1580] sm:$0xff]
        %v1361 = vld [vmem:[%s394 + $0x1588] sm:$0xff]
        %v1362 = vld [vmem:[%s394 + $0x1590] sm:$0xff]
        %v1363 = vld [vmem:[%s394 + $0x1598] sm:$0xff]
        %v1364 = vld [vmem:[%s394 + $0x15a0] sm:$0xff]
        %v1365 = vld [vmem:[%s394 + $0x15a8] sm:$0xff]
        %v1366 = vld [vmem:[%s394 + $0x15b0] sm:$0xff]
        %v1367 = vld [vmem:[%s394 + $0x15b8] sm:$0xff]
        %v1368 = vld [vmem:[%s394 + $0x15c0] sm:$0xff]
        %v1369 = vld [vmem:[%s394 + $0x15c8] sm:$0xff]
        %v1370 = vld [vmem:[%s394 + $0x15d0] sm:$0xff]
        %v1371 = vld [vmem:[%s394 + $0x15d8] sm:$0xff]
        %v1372 = vld [vmem:[%s394 + $0x15e0] sm:$0xff]
        %v1373 = vld [vmem:[%s394 + $0x15e8] sm:$0xff]
        %v1374 = vld [vmem:[%s394 + $0x15f0] sm:$0xff]
        %v1375 = vld [vmem:[%s394 + $0x15f8] sm:$0xff]
        %v1376 = vld [vmem:[%s394 + $0x1600] sm:$0xff]
        %v1377 = vld [vmem:[%s394 + $0x1608] sm:$0xff]
        %v1378 = vld [vmem:[%s394 + $0x1610] sm:$0xff]
        %v1379 = vld [vmem:[%s394 + $0x1618] sm:$0xff]
        %v1380 = vld [vmem:[%s394 + $0x1620] sm:$0xff]
        %v1381 = vld [vmem:[%s394 + $0x1628] sm:$0xff]
        %v1382 = vld [vmem:[%s394 + $0x1630] sm:$0xff]
        %v1383 = vld [vmem:[%s394 + $0x1638] sm:$0xff]
        %v1384 = vld [vmem:[%s394 + $0x1640] sm:$0xff]
        %v1385 = vld [vmem:[%s394 + $0x1648] sm:$0xff]
        %v1386 = vld [vmem:[%s394 + $0x1650] sm:$0xff]
        %v1387 = vld [vmem:[%s394 + $0x1658] sm:$0xff]
        %v1388 = vld [vmem:[%s394 + $0x1660] sm:$0xff]
        %v1389 = vld [vmem:[%s394 + $0x1668] sm:$0xff]
        %v1390 = vld [vmem:[%s394 + $0x1670] sm:$0xff]
        %v1391 = vld [vmem:[%s394 + $0x1678] sm:$0xff]
        %v1392 = vld [vmem:[%s394 + $0x1680] sm:$0xff]
        %v1393 = vld [vmem:[%s394 + $0x1688] sm:$0xff]
        %v1394 = vld [vmem:[%s394 + $0x1690] sm:$0xff]
        %v1395 = vld [vmem:[%s394 + $0x1698] sm:$0xff]
        %v1396 = vld [vmem:[%s394 + $0x16a0] sm:$0xff]
        %v1397 = vld [vmem:[%s394 + $0x16a8] sm:$0xff]
        %v1398 = vld [vmem:[%s394 + $0x16b0] sm:$0xff]
        %v1399 = vld [vmem:[%s394 + $0x16b8] sm:$0xff]
        %v1400 = vld [vmem:[%s394 + $0x16c0] sm:$0xff]
        %v1401 = vld [vmem:[%s394 + $0x16c8] sm:$0xff]
        %v1402 = vld [vmem:[%s394 + $0x16d0] sm:$0xff]
        %v1403 = vld [vmem:[%s394 + $0x16d8] sm:$0xff]
        %v1404 = vld [vmem:[%s394 + $0x16e0] sm:$0xff]
        %v1405 = vld [vmem:[%s394 + $0x16e8] sm:$0xff]
        %v1406 = vld [vmem:[%s394 + $0x16f0] sm:$0xff]
        %v1407 = vld [vmem:[%s394 + $0x16f8] sm:$0xff]
        %v1408 = vld [vmem:[%s394 + $0x1700] sm:$0xff]
        %v1409 = vld [vmem:[%s394 + $0x1708] sm:$0xff]
        %v1410 = vld [vmem:[%s394 + $0x1710] sm:$0xff]
        %v1411 = vld [vmem:[%s394 + $0x1718] sm:$0xff]
        %v1412 = vld [vmem:[%s394 + $0x1720] sm:$0xff]
        %v1413 = vld [vmem:[%s394 + $0x1728] sm:$0xff]
        %v1414 = vld [vmem:[%s394 + $0x1730] sm:$0xff]
        %v1415 = vld [vmem:[%s394 + $0x1738] sm:$0xff]
        %v1416 = vld [vmem:[%s394 + $0x1740] sm:$0xff]
        %v1417 = vld [vmem:[%s394 + $0x1748] sm:$0xff]
        %v1418 = vld [vmem:[%s394 + $0x1750] sm:$0xff]
        %v1419 = vld [vmem:[%s394 + $0x1758] sm:$0xff]
        %v1420 = vld [vmem:[%s394 + $0x1760] sm:$0xff]
        %v1421 = vld [vmem:[%s394 + $0x1768] sm:$0xff]
        %v1422 = vld [vmem:[%s394 + $0x1770] sm:$0xff]
        %v1423 = vld [vmem:[%s394 + $0x1778] sm:$0xff]
        %v1424 = vld [vmem:[%s394 + $0x1780] sm:$0xff]
        %v1425 = vld [vmem:[%s394 + $0x1788] sm:$0xff]
        %v1426 = vld [vmem:[%s394 + $0x1790] sm:$0xff]
        %v1427 = vld [vmem:[%s394 + $0x1798] sm:$0xff]
        %v1428 = vld [vmem:[%s394 + $0x17a0] sm:$0xff]
        %v1429 = vld [vmem:[%s394 + $0x17a8] sm:$0xff]
        %v1430 = vld [vmem:[%s394 + $0x17b0] sm:$0xff]
        %v1431 = vld [vmem:[%s394 + $0x17b8] sm:$0xff]
        %v1432 = vld [vmem:[%s394 + $0x17c0] sm:$0xff]
        %v1433 = vld [vmem:[%s394 + $0x17c8] sm:$0xff]
        %v1434 = vld [vmem:[%s394 + $0x17d0] sm:$0xff]
        %v1435 = vld [vmem:[%s394 + $0x17d8] sm:$0xff]
        %v1436 = vld [vmem:[%s394 + $0x17e0] sm:$0xff]
        %v1437 = vld [vmem:[%s394 + $0x17e8] sm:$0xff]
        %v1438 = vld [vmem:[%s394 + $0x17f0] sm:$0xff]
        %v1439 = vld [vmem:[%s394 + $0x17f8] sm:$0xff]
        %v1440 = vld [vmem:[%s394 + $0x1800] sm:$0xff]
        %v1441 = vld [vmem:[%s394 + $0x1808] sm:$0xff]
        %v1442 = vld [vmem:[%s394 + $0x1810] sm:$0xff]
        %v1443 = vld [vmem:[%s394 + $0x1818] sm:$0xff]
        %v1444 = vld [vmem:[%s394 + $0x1820] sm:$0xff]
        %v1445 = vld [vmem:[%s394 + $0x1828] sm:$0xff]
        %v1446 = vld [vmem:[%s394 + $0x1830] sm:$0xff]
        %v1447 = vld [vmem:[%s394 + $0x1838] sm:$0xff]
        %v1448 = vld [vmem:[%s394 + $0x1840] sm:$0xff]
        %v1449 = vld [vmem:[%s394 + $0x1848] sm:$0xff]
        %v1450 = vld [vmem:[%s394 + $0x1850] sm:$0xff]
        %v1451 = vld [vmem:[%s394 + $0x1858] sm:$0xff]
        %v1452 = vld [vmem:[%s394 + $0x1860] sm:$0xff]
        %v1453 = vld [vmem:[%s394 + $0x1868] sm:$0xff]
        %v1454 = vld [vmem:[%s394 + $0x1870] sm:$0xff]
        %v1455 = vld [vmem:[%s394 + $0x1878] sm:$0xff]
        %v1456 = vld [vmem:[%s394 + $0x1880] sm:$0xff]
        %v1457 = vld [vmem:[%s394 + $0x1888] sm:$0xff]
        %v1458 = vld [vmem:[%s394 + $0x1890] sm:$0xff]
        %v1459 = vld [vmem:[%s394 + $0x1898] sm:$0xff]
        %v1460 = vld [vmem:[%s394 + $0x18a0] sm:$0xff]
        %v1461 = vld [vmem:[%s394 + $0x18a8] sm:$0xff]
        %v1462 = vld [vmem:[%s394 + $0x18b0] sm:$0xff]
        %v1463 = vld [vmem:[%s394 + $0x18b8] sm:$0xff]
        %v1464 = vld [vmem:[%s394 + $0x18c0] sm:$0xff]
        %v1465 = vld [vmem:[%s394 + $0x18c8] sm:$0xff]
        %v1466 = vld [vmem:[%s394 + $0x18d0] sm:$0xff]
        %v1467 = vld [vmem:[%s394 + $0x18d8] sm:$0xff]
        %v1468 = vld [vmem:[%s394 + $0x18e0] sm:$0xff]
        %v1469 = vld [vmem:[%s394 + $0x18e8] sm:$0xff]
        %v1470 = vld [vmem:[%s394 + $0x18f0] sm:$0xff]
        %v1471 = vld [vmem:[%s394 + $0x18f8] sm:$0xff]
        %v1472 = vld [vmem:[%s394 + $0x1900] sm:$0xff]
        %v1473 = vld [vmem:[%s394 + $0x1908] sm:$0xff]
        %v1474 = vld [vmem:[%s394 + $0x1910] sm:$0xff]
        %v1475 = vld [vmem:[%s394 + $0x1918] sm:$0xff]
        %v1476 = vld [vmem:[%s394 + $0x1920] sm:$0xff]
        %v1477 = vld [vmem:[%s394 + $0x1928] sm:$0xff]
        %v1478 = vld [vmem:[%s394 + $0x1930] sm:$0xff]
        %v1479 = vld [vmem:[%s394 + $0x1938] sm:$0xff]
        %v1480 = vld [vmem:[%s394 + $0x1940] sm:$0xff]
        %v1481 = vld [vmem:[%s394 + $0x1948] sm:$0xff]
        %v1482 = vld [vmem:[%s394 + $0x1950] sm:$0xff]
        %v1483 = vld [vmem:[%s394 + $0x1958] sm:$0xff]
        %v1484 = vld [vmem:[%s394 + $0x1960] sm:$0xff]
        %v1485 = vld [vmem:[%s394 + $0x1968] sm:$0xff]
        %v1486 = vld [vmem:[%s394 + $0x1970] sm:$0xff]
        %v1487 = vld [vmem:[%s394 + $0x1978] sm:$0xff]
        %v1488 = vld [vmem:[%s394 + $0x1980] sm:$0xff]
        %v1489 = vld [vmem:[%s394 + $0x1988] sm:$0xff]
        %v1490 = vld [vmem:[%s394 + $0x1990] sm:$0xff]
        %v1491 = vld [vmem:[%s394 + $0x1998] sm:$0xff]
        %v1492 = vld [vmem:[%s394 + $0x19a0] sm:$0xff]
        %v1493 = vld [vmem:[%s394 + $0x19a8] sm:$0xff]
        %v1494 = vld [vmem:[%s394 + $0x19b0] sm:$0xff]
        %v1495 = vld [vmem:[%s394 + $0x19b8] sm:$0xff]
        %v1496 = vld [vmem:[%s394 + $0x19c0] sm:$0xff]
        %v1497 = vld [vmem:[%s394 + $0x19c8] sm:$0xff]
        %v1498 = vld [vmem:[%s394 + $0x19d0] sm:$0xff]
        %v1499 = vld [vmem:[%s394 + $0x19d8] sm:$0xff]
        %v1500 = vld [vmem:[%s394 + $0x19e0] sm:$0xff]
        %v1501 = vld [vmem:[%s394 + $0x19e8] sm:$0xff]
        %v1502 = vld [vmem:[%s394 + $0x19f0] sm:$0xff]
        %v1503 = vld [vmem:[%s394 + $0x19f8] sm:$0xff]
        %v1504 = vld [vmem:[%s394 + $0x1a00] sm:$0xff]
        %v1505 = vld [vmem:[%s394 + $0x1a08] sm:$0xff]
        %v1506 = vld [vmem:[%s394 + $0x1a10] sm:$0xff]
        %v1507 = vld [vmem:[%s394 + $0x1a18] sm:$0xff]
        %v1508 = vld [vmem:[%s394 + $0x1a20] sm:$0xff]
        %v1509 = vld [vmem:[%s394 + $0x1a28] sm:$0xff]
        %v1510 = vld [vmem:[%s394 + $0x1a30] sm:$0xff]
        %v1511 = vld [vmem:[%s394 + $0x1a38] sm:$0xff]
        %v1512 = vld [vmem:[%s394 + $0x1a40] sm:$0xff]
        %v1513 = vld [vmem:[%s394 + $0x1a48] sm:$0xff]
        %v1514 = vld [vmem:[%s394 + $0x1a50] sm:$0xff]
        %v1515 = vld [vmem:[%s394 + $0x1a58] sm:$0xff]
        %v1516 = vld [vmem:[%s394 + $0x1a60] sm:$0xff]
        %v1517 = vld [vmem:[%s394 + $0x1a68] sm:$0xff]
        %v1518 = vld [vmem:[%s394 + $0x1a70] sm:$0xff]
        %v1519 = vld [vmem:[%s394 + $0x1a78] sm:$0xff]
        %v1520 = vld [vmem:[%s394 + $0x1a80] sm:$0xff]
        %v1521 = vld [vmem:[%s394 + $0x1a88] sm:$0xff]
        %v1522 = vld [vmem:[%s394 + $0x1a90] sm:$0xff]
        %v1523 = vld [vmem:[%s394 + $0x1a98] sm:$0xff]
        %v1524 = vld [vmem:[%s394 + $0x1aa0] sm:$0xff]
        %v1525 = vld [vmem:[%s394 + $0x1aa8] sm:$0xff]
        %v1526 = vld [vmem:[%s394 + $0x1ab0] sm:$0xff]
        %v1527 = vld [vmem:[%s394 + $0x1ab8] sm:$0xff]
        %v1528 = vld [vmem:[%s394 + $0x1ac0] sm:$0xff]
        %v1529 = vld [vmem:[%s394 + $0x1ac8] sm:$0xff]
        %v1530 = vld [vmem:[%s394 + $0x1ad0] sm:$0xff]
        %v1531 = vld [vmem:[%s394 + $0x1ad8] sm:$0xff]
        %v1532 = vld [vmem:[%s394 + $0x1ae0] sm:$0xff]
        %v1533 = vld [vmem:[%s394 + $0x1ae8] sm:$0xff]
        %v1534 = vld [vmem:[%s394 + $0x1af0] sm:$0xff]
        %v1535 = vld [vmem:[%s394 + $0x1af8] sm:$0xff]
        %v1536 = vld [vmem:[%s394 + $0x1b00] sm:$0xff]
        %v1537 = vld [vmem:[%s394 + $0x1b08] sm:$0xff]
        %v1538 = vld [vmem:[%s394 + $0x1b10] sm:$0xff]
        %v1539 = vld [vmem:[%s394 + $0x1b18] sm:$0xff]
        %v1540 = vld [vmem:[%s394 + $0x1b20] sm:$0xff]
        %v1541 = vld [vmem:[%s394 + $0x1b28] sm:$0xff]
        %v1542 = vld [vmem:[%s394 + $0x1b30] sm:$0xff]
        %v1543 = vld [vmem:[%s394 + $0x1b38] sm:$0xff]
        %v1544 = vld [vmem:[%s394 + $0x1b40] sm:$0xff]
        %v1545 = vld [vmem:[%s394 + $0x1b48] sm:$0xff]
        %v1546 = vld [vmem:[%s394 + $0x1b50] sm:$0xff]
        %v1547 = vld [vmem:[%s394 + $0x1b58] sm:$0xff]
        %v1548 = vld [vmem:[%s394 + $0x1b60] sm:$0xff]
        %v1549 = vld [vmem:[%s394 + $0x1b68] sm:$0xff]
        %v1550 = vld [vmem:[%s394 + $0x1b70] sm:$0xff]
        %v1551 = vld [vmem:[%s394 + $0x1b78] sm:$0xff]
        %v1552 = vld [vmem:[%s394 + $0x1b80] sm:$0xff]
        %v1553 = vld [vmem:[%s394 + $0x1b88] sm:$0xff]
        %v1554 = vld [vmem:[%s394 + $0x1b90] sm:$0xff]
        %v1555 = vld [vmem:[%s394 + $0x1b98] sm:$0xff]
        %v1556 = vld [vmem:[%s394 + $0x1ba0] sm:$0xff]
        %v1557 = vld [vmem:[%s394 + $0x1ba8] sm:$0xff]
        %v1558 = vld [vmem:[%s394 + $0x1bb0] sm:$0xff]
        %v1559 = vld [vmem:[%s394 + $0x1bb8] sm:$0xff]
        %v1560 = vld [vmem:[%s394 + $0x1bc0] sm:$0xff]
        %v1561 = vld [vmem:[%s394 + $0x1bc8] sm:$0xff]
        %v1562 = vld [vmem:[%s394 + $0x1bd0] sm:$0xff]
        %v1563 = vld [vmem:[%s394 + $0x1bd8] sm:$0xff]
        %v1564 = vld [vmem:[%s394 + $0x1be0] sm:$0xff]
        %v1565 = vld [vmem:[%s394 + $0x1be8] sm:$0xff]
        %v1566 = vld [vmem:[%s394 + $0x1bf0] sm:$0xff]
        %v1567 = vld [vmem:[%s394 + $0x1bf8] sm:$0xff]
        %v1568 = vld [vmem:[%s394 + $0x1c00] sm:$0xff]
        %v1569 = vld [vmem:[%s394 + $0x1c08] sm:$0xff]
        %v1570 = vld [vmem:[%s394 + $0x1c10] sm:$0xff]
        %v1571 = vld [vmem:[%s394 + $0x1c18] sm:$0xff]
        %v1572 = vld [vmem:[%s394 + $0x1c20] sm:$0xff]
        %v1573 = vld [vmem:[%s394 + $0x1c28] sm:$0xff]
        %v1574 = vld [vmem:[%s394 + $0x1c30] sm:$0xff]
        %v1575 = vld [vmem:[%s394 + $0x1c38] sm:$0xff]
        %v1576 = vld [vmem:[%s394 + $0x1c40] sm:$0xff]
        %v1577 = vld [vmem:[%s394 + $0x1c48] sm:$0xff]
        %v1578 = vld [vmem:[%s394 + $0x1c50] sm:$0xff]
        %v1579 = vld [vmem:[%s394 + $0x1c58] sm:$0xff]
        %v1580 = vld [vmem:[%s394 + $0x1c60] sm:$0xff]
        %v1581 = vld [vmem:[%s394 + $0x1c68] sm:$0xff]
        %v1582 = vld [vmem:[%s394 + $0x1c70] sm:$0xff]
        %v1583 = vld [vmem:[%s394 + $0x1c78] sm:$0xff]
        %v1584 = vld [vmem:[%s394 + $0x1c80] sm:$0xff]
        %v1585 = vld [vmem:[%s394 + $0x1c88] sm:$0xff]
        %v1586 = vld [vmem:[%s394 + $0x1c90] sm:$0xff]
        %v1587 = vld [vmem:[%s394 + $0x1c98] sm:$0xff]
        %v1588 = vld [vmem:[%s394 + $0x1ca0] sm:$0xff]
        %v1589 = vld [vmem:[%s394 + $0x1ca8] sm:$0xff]
        %v1590 = vld [vmem:[%s394 + $0x1cb0] sm:$0xff]
        %v1591 = vld [vmem:[%s394 + $0x1cb8] sm:$0xff]
        %v1592 = vld [vmem:[%s394 + $0x1cc0] sm:$0xff]
        %v1593 = vld [vmem:[%s394 + $0x1cc8] sm:$0xff]
        %v1594 = vld [vmem:[%s394 + $0x1cd0] sm:$0xff]
        %v1595 = vld [vmem:[%s394 + $0x1cd8] sm:$0xff]
        %v1596 = vld [vmem:[%s394 + $0x1ce0] sm:$0xff]
        %v1597 = vld [vmem:[%s394 + $0x1ce8] sm:$0xff]
        %v1598 = vld [vmem:[%s394 + $0x1cf0] sm:$0xff]
        %v1599 = vld [vmem:[%s394 + $0x1cf8] sm:$0xff]
        %v1600 = vld [vmem:[%s394 + $0x1d00] sm:$0xff]
        %v1601 = vld [vmem:[%s394 + $0x1d08] sm:$0xff]
        %v1602 = vld [vmem:[%s394 + $0x1d10] sm:$0xff]
        %v1603 = vld [vmem:[%s394 + $0x1d18] sm:$0xff]
        %v1604 = vld [vmem:[%s394 + $0x1d20] sm:$0xff]
        %v1605 = vld [vmem:[%s394 + $0x1d28] sm:$0xff]
        %v1606 = vld [vmem:[%s394 + $0x1d30] sm:$0xff]
        %v1607 = vld [vmem:[%s394 + $0x1d38] sm:$0xff]
        %v1608 = vld [vmem:[%s394 + $0x1d40] sm:$0xff]
        %v1609 = vld [vmem:[%s394 + $0x1d48] sm:$0xff]
        %v1610 = vld [vmem:[%s394 + $0x1d50] sm:$0xff]
        %v1611 = vld [vmem:[%s394 + $0x1d58] sm:$0xff]
        %v1612 = vld [vmem:[%s394 + $0x1d60] sm:$0xff]
        %v1613 = vld [vmem:[%s394 + $0x1d68] sm:$0xff]
        %v1614 = vld [vmem:[%s394 + $0x1d70] sm:$0xff]
        %v1615 = vld [vmem:[%s394 + $0x1d78] sm:$0xff]
        %v1616 = vld [vmem:[%s394 + $0x1d80] sm:$0xff]
        %v1617 = vld [vmem:[%s394 + $0x1d88] sm:$0xff]
        %v1618 = vld [vmem:[%s394 + $0x1d90] sm:$0xff]
        %v1619 = vld [vmem:[%s394 + $0x1d98] sm:$0xff]
        %v1620 = vld [vmem:[%s394 + $0x1da0] sm:$0xff]
        %v1621 = vld [vmem:[%s394 + $0x1da8] sm:$0xff]
        %v1622 = vld [vmem:[%s394 + $0x1db0] sm:$0xff]
        %v1623 = vld [vmem:[%s394 + $0x1db8] sm:$0xff]
        %v1624 = vld [vmem:[%s394 + $0x1dc0] sm:$0xff]
        %v1625 = vld [vmem:[%s394 + $0x1dc8] sm:$0xff]
        %v1626 = vld [vmem:[%s394 + $0x1dd0] sm:$0xff]
        %v1627 = vld [vmem:[%s394 + $0x1dd8] sm:$0xff]
        %v1628 = vld [vmem:[%s394 + $0x1de0] sm:$0xff]
        %v1629 = vld [vmem:[%s394 + $0x1de8] sm:$0xff]
        %v1630 = vld [vmem:[%s394 + $0x1df0] sm:$0xff]
        %v1631 = vld [vmem:[%s394 + $0x1df8] sm:$0xff]
        %v1632 = vld [vmem:[%s394 + $0x1e00] sm:$0xff]
        %v1633 = vld [vmem:[%s394 + $0x1e08] sm:$0xff]
        %v1634 = vld [vmem:[%s394 + $0x1e10] sm:$0xff]
        %v1635 = vld [vmem:[%s394 + $0x1e18] sm:$0xff]
        %v1636 = vld [vmem:[%s394 + $0x1e20] sm:$0xff]
        %v1637 = vld [vmem:[%s394 + $0x1e28] sm:$0xff]
        %v1638 = vld [vmem:[%s394 + $0x1e30] sm:$0xff]
        %v1639 = vld [vmem:[%s394 + $0x1e38] sm:$0xff]
        %v1640 = vld [vmem:[%s394 + $0x1e40] sm:$0xff]
        %v1641 = vld [vmem:[%s394 + $0x1e48] sm:$0xff]
        %v1642 = vld [vmem:[%s394 + $0x1e50] sm:$0xff]
        %v1643 = vld [vmem:[%s394 + $0x1e58] sm:$0xff]
        %v1644 = vld [vmem:[%s394 + $0x1e60] sm:$0xff]
        %v1645 = vld [vmem:[%s394 + $0x1e68] sm:$0xff]
        %v1646 = vld [vmem:[%s394 + $0x1e70] sm:$0xff]
        %v1647 = vld [vmem:[%s394 + $0x1e78] sm:$0xff]
        %v1648 = vld [vmem:[%s394 + $0x1e80] sm:$0xff]
        %v1649 = vld [vmem:[%s394 + $0x1e88] sm:$0xff]
        %v1650 = vld [vmem:[%s394 + $0x1e90] sm:$0xff]
        %v1651 = vld [vmem:[%s394 + $0x1e98] sm:$0xff]
        %v1652 = vld [vmem:[%s394 + $0x1ea0] sm:$0xff]
        %v1653 = vld [vmem:[%s394 + $0x1ea8] sm:$0xff]
        %v1654 = vld [vmem:[%s394 + $0x1eb0] sm:$0xff]
        %v1655 = vld [vmem:[%s394 + $0x1eb8] sm:$0xff]
        %v1656 = vld [vmem:[%s394 + $0x1ec0] sm:$0xff]
        %v1657 = vld [vmem:[%s394 + $0x1ec8] sm:$0xff]
        %v1658 = vld [vmem:[%s394 + $0x1ed0] sm:$0xff]
        %v1659 = vld [vmem:[%s394 + $0x1ed8] sm:$0xff]
        %v1660 = vld [vmem:[%s394 + $0x1ee0] sm:$0xff]
        %v1661 = vld [vmem:[%s394 + $0x1ee8] sm:$0xff]
        %v1662 = vld [vmem:[%s394 + $0x1ef0] sm:$0xff]
        %v1663 = vld [vmem:[%s394 + $0x1ef8] sm:$0xff]
        %v1664 = vld [vmem:[%s394 + $0x1f00] sm:$0xff]
        %v1665 = vld [vmem:[%s394 + $0x1f08] sm:$0xff]
        %v1666 = vld [vmem:[%s394 + $0x1f10] sm:$0xff]
        %v1667 = vld [vmem:[%s394 + $0x1f18] sm:$0xff]
        %v1668 = vld [vmem:[%s394 + $0x1f20] sm:$0xff]
        %v1669 = vld [vmem:[%s394 + $0x1f28] sm:$0xff]
        %v1670 = vld [vmem:[%s394 + $0x1f30] sm:$0xff]
        %v1671 = vld [vmem:[%s394 + $0x1f38] sm:$0xff]
        %v1672 = vld [vmem:[%s394 + $0x1f40] sm:$0xff]
        %v1673 = vld [vmem:[%s394 + $0x1f48] sm:$0xff]
        %v1674 = vld [vmem:[%s394 + $0x1f50] sm:$0xff]
        %v1675 = vld [vmem:[%s394 + $0x1f58] sm:$0xff]
        %v1676 = vld [vmem:[%s394 + $0x1f60] sm:$0xff]
        %v1677 = vld [vmem:[%s394 + $0x1f68] sm:$0xff]
        %v1678 = vld [vmem:[%s394 + $0x1f70] sm:$0xff]
        %v1679 = vld [vmem:[%s394 + $0x1f78] sm:$0xff]
        %v1680 = vld [vmem:[%s394 + $0x1f80] sm:$0xff]
        %v1681 = vld [vmem:[%s394 + $0x1f88] sm:$0xff]
        %v1682 = vld [vmem:[%s394 + $0x1f90] sm:$0xff]
        %v1683 = vld [vmem:[%s394 + $0x1f98] sm:$0xff]
        %v1684 = vld [vmem:[%s394 + $0x1fa0] sm:$0xff]
        %v1685 = vld [vmem:[%s394 + $0x1fa8] sm:$0xff]
        %v1686 = vld [vmem:[%s394 + $0x1fb0] sm:$0xff]
        %v1687 = vld [vmem:[%s394 + $0x1fb8] sm:$0xff]
        %v1688 = vld [vmem:[%s394 + $0x1fc0] sm:$0xff]
        %v1689 = vld [vmem:[%s394 + $0x1fc8] sm:$0xff]
        %v1690 = vld [vmem:[%s394 + $0x1fd0] sm:$0xff]
        %v1691 = vld [vmem:[%s394 + $0x1fd8] sm:$0xff]
        %v1692 = vld [vmem:[%s394 + $0x1fe0] sm:$0xff]
        %v1693 = vld [vmem:[%s394 + $0x1fe8] sm:$0xff]
        %v1694 = vld [vmem:[%s394 + $0x1ff0] sm:$0xff]
        %v1695 = vld [vmem:[%s394 + $0x1ff8] sm:$0xff]
        %v1696 = vld [vmem:[%s394 + $0x2000] sm:$0xff]
        %v1697 = vld [vmem:[%s394 + $0x2008] sm:$0xff]
        %v1698 = vld [vmem:[%s394 + $0x2010] sm:$0xff]
        %v1699 = vld [vmem:[%s394 + $0x2018] sm:$0xff]
        %v1700 = vld [vmem:[%s394 + $0x2020] sm:$0xff]
        %v1701 = vld [vmem:[%s394 + $0x2028] sm:$0xff]
        %v1702 = vld [vmem:[%s394 + $0x2030] sm:$0xff]
        %v1703 = vld [vmem:[%s394 + $0x2038] sm:$0xff]
        %v1704 = vld [vmem:[%s394 + $0x2040] sm:$0xff]
        %v1705 = vld [vmem:[%s394 + $0x2048] sm:$0xff]
        %v1706 = vld [vmem:[%s394 + $0x2050] sm:$0xff]
        %v1707 = vld [vmem:[%s394 + $0x2058] sm:$0xff]
        %v1708 = vld [vmem:[%s394 + $0x2060] sm:$0xff]
        %v1709 = vld [vmem:[%s394 + $0x2068] sm:$0xff]
        %v1710 = vld [vmem:[%s394 + $0x2070] sm:$0xff]
        %v1711 = vld [vmem:[%s394 + $0x2078] sm:$0xff]
        %v1712 = vld [vmem:[%s394 + $0x2080] sm:$0xff]
        %v1713 = vld [vmem:[%s394 + $0x2088] sm:$0xff]
        %v1714 = vld [vmem:[%s394 + $0x2090] sm:$0xff]
        %v1715 = vld [vmem:[%s394 + $0x2098] sm:$0xff]
        %v1716 = vld [vmem:[%s394 + $0x20a0] sm:$0xff]
        %v1717 = vld [vmem:[%s394 + $0x20a8] sm:$0xff]
        %v1718 = vld [vmem:[%s394 + $0x20b0] sm:$0xff]
        %v1719 = vld [vmem:[%s394 + $0x20b8] sm:$0xff]
        %v1720 = vld [vmem:[%s394 + $0x20c0] sm:$0xff]
        %v1721 = vld [vmem:[%s394 + $0x20c8] sm:$0xff]
        %v1722 = vld [vmem:[%s394 + $0x20d0] sm:$0xff]
        %v1723 = vld [vmem:[%s394 + $0x20d8] sm:$0xff]
        %v1724 = vld [vmem:[%s394 + $0x20e0] sm:$0xff]
        %v1725 = vld [vmem:[%s394 + $0x20e8] sm:$0xff]
        %v1726 = vld [vmem:[%s394 + $0x20f0] sm:$0xff]
        %v1727 = vld [vmem:[%s394 + $0x20f8] sm:$0xff]
        %v1728 = vld [vmem:[%s394 + $0x2100] sm:$0xff]
        %v1729 = vld [vmem:[%s394 + $0x2108] sm:$0xff]
        %v1730 = vld [vmem:[%s394 + $0x2110] sm:$0xff]
        %v1731 = vld [vmem:[%s394 + $0x2118] sm:$0xff]
        %v1732 = vld [vmem:[%s394 + $0x2120] sm:$0xff]
        %v1733 = vld [vmem:[%s394 + $0x2128] sm:$0xff]
        %v1734 = vld [vmem:[%s394 + $0x2130] sm:$0xff]
        %v1735 = vld [vmem:[%s394 + $0x2138] sm:$0xff]
        %v1736 = vld [vmem:[%s394 + $0x2140] sm:$0xff]
        %v1737 = vld [vmem:[%s394 + $0x2148] sm:$0xff]
        %v1738 = vld [vmem:[%s394 + $0x2150] sm:$0xff]
        %v1739 = vld [vmem:[%s394 + $0x2158] sm:$0xff]
        %v1740 = vld [vmem:[%s394 + $0x2160] sm:$0xff]
        %v1741 = vld [vmem:[%s394 + $0x2168] sm:$0xff]
        %v1742 = vld [vmem:[%s394 + $0x2170] sm:$0xff]
        %v1743 = vld [vmem:[%s394 + $0x2178] sm:$0xff]
        %v1744 = vld [vmem:[%s394 + $0x2180] sm:$0xff]
        %v1745 = vld [vmem:[%s394 + $0x2188] sm:$0xff]
        %v1746 = vld [vmem:[%s394 + $0x2190] sm:$0xff]
        %v1747 = vld [vmem:[%s394 + $0x2198] sm:$0xff]
        %v1748 = vld [vmem:[%s394 + $0x21a0] sm:$0xff]
        %v1749 = vld [vmem:[%s394 + $0x21a8] sm:$0xff]
        %v1750 = vld [vmem:[%s394 + $0x21b0] sm:$0xff]
        %v1751 = vld [vmem:[%s394 + $0x21b8] sm:$0xff]
        %v1752 = vld [vmem:[%s394 + $0x21c0] sm:$0xff]
        %v1753 = vld [vmem:[%s394 + $0x21c8] sm:$0xff]
        %v1754 = vld [vmem:[%s394 + $0x21d0] sm:$0xff]
        %v1755 = vld [vmem:[%s394 + $0x21d8] sm:$0xff]
        %v1756 = vld [vmem:[%s394 + $0x21e0] sm:$0xff]
        %v1757 = vld [vmem:[%s394 + $0x21e8] sm:$0xff]
        %v1758 = vld [vmem:[%s394 + $0x21f0] sm:$0xff]
        %v1759 = vld [vmem:[%s394 + $0x21f8] sm:$0xff]
        %v1760 = vld [vmem:[%s394 + $0x2200] sm:$0xff]
        %v1761 = vld [vmem:[%s394 + $0x2208] sm:$0xff]
        %v1762 = vld [vmem:[%s394 + $0x2210] sm:$0xff]
        %v1763 = vld [vmem:[%s394 + $0x2218] sm:$0xff]
        %v1764 = vld [vmem:[%s394 + $0x2220] sm:$0xff]
        %v1765 = vld [vmem:[%s394 + $0x2228] sm:$0xff]
        %v1766 = vld [vmem:[%s394 + $0x2230] sm:$0xff]
        %v1767 = vld [vmem:[%s394 + $0x2238] sm:$0xff]
        %v1768 = vld [vmem:[%s394 + $0x2240] sm:$0xff]
        %v1769 = vld [vmem:[%s394 + $0x2248] sm:$0xff]
        %v1770 = vld [vmem:[%s394 + $0x2250] sm:$0xff]
        %v1771 = vld [vmem:[%s394 + $0x2258] sm:$0xff]
        %v1772 = vld [vmem:[%s394 + $0x2260] sm:$0xff]
        %v1773 = vld [vmem:[%s394 + $0x2268] sm:$0xff]
        %v1774 = vld [vmem:[%s394 + $0x2270] sm:$0xff]
        %v1775 = vld [vmem:[%s394 + $0x2278] sm:$0xff]
        %v1776 = vld [vmem:[%s394 + $0x2280] sm:$0xff]
        %v1777 = vld [vmem:[%s394 + $0x2288] sm:$0xff]
        %v1778 = vld [vmem:[%s394 + $0x2290] sm:$0xff]
        %v1779 = vld [vmem:[%s394 + $0x2298] sm:$0xff]
        %v1780 = vld [vmem:[%s394 + $0x22a0] sm:$0xff]
        %v1781 = vld [vmem:[%s394 + $0x22a8] sm:$0xff]
        %v1782 = vld [vmem:[%s394 + $0x22b0] sm:$0xff]
        %v1783 = vld [vmem:[%s394 + $0x22b8] sm:$0xff]
        %v1784 = vld [vmem:[%s394 + $0x22c0] sm:$0xff]
        %v1785 = vld [vmem:[%s394 + $0x22c8] sm:$0xff]
        %v1786 = vld [vmem:[%s394 + $0x22d0] sm:$0xff]
        %v1787 = vld [vmem:[%s394 + $0x22d8] sm:$0xff]
        %v1788 = vld [vmem:[%s394 + $0x22e0] sm:$0xff]
        %v1789 = vld [vmem:[%s394 + $0x22e8] sm:$0xff]
        %v1790 = vld [vmem:[%s394 + $0x22f0] sm:$0xff]
        %v1791 = vld [vmem:[%s394 + $0x22f8] sm:$0xff]
        %v1792 = vld [vmem:[%s394 + $0x2300] sm:$0xff]
        %v1793 = vld [vmem:[%s394 + $0x2308] sm:$0xff]
        %v1794 = vld [vmem:[%s394 + $0x2310] sm:$0xff]
        %v1795 = vld [vmem:[%s394 + $0x2318] sm:$0xff]
        %v1796 = vld [vmem:[%s394 + $0x2320] sm:$0xff]
        %v1797 = vld [vmem:[%s394 + $0x2328] sm:$0xff]
        %v1798 = vld [vmem:[%s394 + $0x2330] sm:$0xff]
        %v1799 = vld [vmem:[%s394 + $0x2338] sm:$0xff]
        %v1800 = vld [vmem:[%s394 + $0x2340] sm:$0xff]
        %v1801 = vld [vmem:[%s394 + $0x2348] sm:$0xff]
        %v1802 = vld [vmem:[%s394 + $0x2350] sm:$0xff]
        %v1803 = vld [vmem:[%s394 + $0x2358] sm:$0xff]
        %v1804 = vld [vmem:[%s394 + $0x2360] sm:$0xff]
        %v1805 = vld [vmem:[%s394 + $0x2368] sm:$0xff]
        %v1806 = vld [vmem:[%s394 + $0x2370] sm:$0xff]
        %v1807 = vld [vmem:[%s394 + $0x2378] sm:$0xff]
        %v1808 = vld [vmem:[%s394 + $0x2380] sm:$0xff]
        %v1809 = vld [vmem:[%s394 + $0x2388] sm:$0xff]
        %v1810 = vld [vmem:[%s394 + $0x2390] sm:$0xff]
        %v1811 = vld [vmem:[%s394 + $0x2398] sm:$0xff]
        %v1812 = vld [vmem:[%s394 + $0x23a0] sm:$0xff]
        %v1813 = vld [vmem:[%s394 + $0x23a8] sm:$0xff]
        %v1814 = vld [vmem:[%s394 + $0x23b0] sm:$0xff]
        %v1815 = vld [vmem:[%s394 + $0x23b8] sm:$0xff]
        %v1816 = vld [vmem:[%s394 + $0x23c0] sm:$0xff]
        %v1817 = vld [vmem:[%s394 + $0x23c8] sm:$0xff]
        %v1818 = vld [vmem:[%s394 + $0x23d0] sm:$0xff]
        %v1819 = vld [vmem:[%s394 + $0x23d8] sm:$0xff]
        %v1820 = vld [vmem:[%s394 + $0x23e0] sm:$0xff]
        %v1821 = vld [vmem:[%s394 + $0x23e8] sm:$0xff]
        %v1822 = vld [vmem:[%s394 + $0x23f0] sm:$0xff]
        %v1823 = vld [vmem:[%s394 + $0x23f8] sm:$0xff]
        %v1824 = vld [vmem:[%s394 + $0x2400] sm:$0xff]
        %v1825 = vld [vmem:[%s394 + $0x2408] sm:$0xff]
        %v1826 = vld [vmem:[%s394 + $0x2410] sm:$0xff]
        %v1827 = vld [vmem:[%s394 + $0x2418] sm:$0xff]
        %v1828 = vld [vmem:[%s394 + $0x2420] sm:$0xff]
        %v1829 = vld [vmem:[%s394 + $0x2428] sm:$0xff]
        %v1830 = vld [vmem:[%s394 + $0x2430] sm:$0xff]
        %v1831 = vld [vmem:[%s394 + $0x2438] sm:$0xff]
        %v1832 = vld [vmem:[%s394 + $0x2440] sm:$0xff]
        %v1833 = vld [vmem:[%s394 + $0x2448] sm:$0xff]
        %v1834 = vld [vmem:[%s394 + $0x2450] sm:$0xff]
        %v1835 = vld [vmem:[%s394 + $0x2458] sm:$0xff]
        %v1836 = vld [vmem:[%s394 + $0x2460] sm:$0xff]
        %v1837 = vld [vmem:[%s394 + $0x2468] sm:$0xff]
        %v1838 = vld [vmem:[%s394 + $0x2470] sm:$0xff]
        %v1839 = vld [vmem:[%s394 + $0x2478] sm:$0xff]
        %v1840 = vld [vmem:[%s394 + $0x2480] sm:$0xff]
        %v1841 = vld [vmem:[%s394 + $0x2488] sm:$0xff]
        %v1842 = vld [vmem:[%s394 + $0x2490] sm:$0xff]
        %v1843 = vld [vmem:[%s394 + $0x2498] sm:$0xff]
        %v1844 = vld [vmem:[%s394 + $0x24a0] sm:$0xff]
        %v1845 = vld [vmem:[%s394 + $0x24a8] sm:$0xff]
        %v1846 = vld [vmem:[%s394 + $0x24b0] sm:$0xff]
        %v1847 = vld [vmem:[%s394 + $0x24b8] sm:$0xff]
        %v1848 = vld [vmem:[%s394 + $0x24c0] sm:$0xff]
        %v1849 = vld [vmem:[%s394 + $0x24c8] sm:$0xff]
        %v1850 = vld [vmem:[%s394 + $0x24d0] sm:$0xff]
        %v1851 = vld [vmem:[%s394 + $0x24d8] sm:$0xff]
        %v1852 = vld [vmem:[%s394 + $0x24e0] sm:$0xff]
        %v1853 = vld [vmem:[%s394 + $0x24e8] sm:$0xff]
        %v1854 = vld [vmem:[%s394 + $0x24f0] sm:$0xff]
        %v1855 = vld [vmem:[%s394 + $0x24f8] sm:$0xff]
        %v1856 = vld [vmem:[%s394 + $0x2500] sm:$0xff]
        %v1857 = vld [vmem:[%s394 + $0x2508] sm:$0xff]
        %v1858 = vld [vmem:[%s394 + $0x2510] sm:$0xff]
        %v1859 = vld [vmem:[%s394 + $0x2518] sm:$0xff]
        %v1860 = vld [vmem:[%s394 + $0x2520] sm:$0xff]
        %v1861 = vld [vmem:[%s394 + $0x2528] sm:$0xff]
        %v1862 = vld [vmem:[%s394 + $0x2530] sm:$0xff]
        %v1863 = vld [vmem:[%s394 + $0x2538] sm:$0xff]
        %v1864 = vld [vmem:[%s394 + $0x2540] sm:$0xff]
        %v1865 = vld [vmem:[%s394 + $0x2548] sm:$0xff]
        %v1866 = vld [vmem:[%s394 + $0x2550] sm:$0xff]
        %v1867 = vld [vmem:[%s394 + $0x2558] sm:$0xff]
        %v1868 = vld [vmem:[%s394 + $0x2560] sm:$0xff]
        %v1869 = vld [vmem:[%s394 + $0x2568] sm:$0xff]
        %v1870 = vld [vmem:[%s394 + $0x2570] sm:$0xff]
        %v1871 = vld [vmem:[%s394 + $0x2578] sm:$0xff]
        %v1872 = vld [vmem:[%s394 + $0x2580] sm:$0xff]
        %v1873 = vld [vmem:[%s394 + $0x2588] sm:$0xff]
        %v1874 = vld [vmem:[%s394 + $0x2590] sm:$0xff]
        %v1875 = vld [vmem:[%s394 + $0x2598] sm:$0xff]
        %v1876 = vld [vmem:[%s394 + $0x25a0] sm:$0xff]
        %v1877 = vld [vmem:[%s394 + $0x25a8] sm:$0xff]
        %v1878 = vld [vmem:[%s394 + $0x25b0] sm:$0xff]
        %v1879 = vld [vmem:[%s394 + $0x25b8] sm:$0xff]
        %v1880 = vld [vmem:[%s394 + $0x25c0] sm:$0xff]
        %v1881 = vld [vmem:[%s394 + $0x25c8] sm:$0xff]
        %v1882 = vld [vmem:[%s394 + $0x25d0] sm:$0xff]
        %v1883 = vld [vmem:[%s394 + $0x25d8] sm:$0xff]
        %v1884 = vld [vmem:[%s394 + $0x25e0] sm:$0xff]
        %v1885 = vld [vmem:[%s394 + $0x25e8] sm:$0xff]
        %v1886 = vld [vmem:[%s394 + $0x25f0] sm:$0xff]
        %v1887 = vld [vmem:[%s394 + $0x25f8] sm:$0xff]
        %v1888 = vld [vmem:[%s394 + $0x2600] sm:$0xff]
        %v1889 = vld [vmem:[%s394 + $0x2608] sm:$0xff]
        %v1890 = vld [vmem:[%s394 + $0x2610] sm:$0xff]
        %v1891 = vld [vmem:[%s394 + $0x2618] sm:$0xff]
        %v1892 = vld [vmem:[%s394 + $0x2620] sm:$0xff]
        %v1893 = vld [vmem:[%s394 + $0x2628] sm:$0xff]
        %v1894 = vld [vmem:[%s394 + $0x2630] sm:$0xff]
        %v1895 = vld [vmem:[%s394 + $0x2638] sm:$0xff]
        %v1896 = vld [vmem:[%s394 + $0x2640] sm:$0xff]
        %v1897 = vld [vmem:[%s394 + $0x2648] sm:$0xff]
        %v1898 = vld [vmem:[%s394 + $0x2650] sm:$0xff]
        %v1899 = vld [vmem:[%s394 + $0x2658] sm:$0xff]
        %v1900 = vld [vmem:[%s394 + $0x2660] sm:$0xff]
        %v1901 = vld [vmem:[%s394 + $0x2668] sm:$0xff]
        %v1902 = vld [vmem:[%s394 + $0x2670] sm:$0xff]
        %v1903 = vld [vmem:[%s394 + $0x2678] sm:$0xff]
        %v1904 = vld [vmem:[%s394 + $0x2680] sm:$0xff]
        %v1905 = vld [vmem:[%s394 + $0x2688] sm:$0xff]
        %v1906 = vld [vmem:[%s394 + $0x2690] sm:$0xff]
        %v1907 = vld [vmem:[%s394 + $0x2698] sm:$0xff]
        %v1908 = vld [vmem:[%s394 + $0x26a0] sm:$0xff]
        %v1909 = vld [vmem:[%s394 + $0x26a8] sm:$0xff]
        %v1910 = vld [vmem:[%s394 + $0x26b0] sm:$0xff]
        %v1911 = vld [vmem:[%s394 + $0x26b8] sm:$0xff]
        %v1912 = vld [vmem:[%s394 + $0x26c0] sm:$0xff]
        %v1913 = vld [vmem:[%s394 + $0x26c8] sm:$0xff]
        %v1914 = vld [vmem:[%s394 + $0x26d0] sm:$0xff]
        %v1915 = vld [vmem:[%s394 + $0x26d8] sm:$0xff]
        %v1916 = vld [vmem:[%s394 + $0x26e0] sm:$0xff]
        %v1917 = vld [vmem:[%s394 + $0x26e8] sm:$0xff]
        %v1918 = vld [vmem:[%s394 + $0x26f0] sm:$0xff]
        %v1919 = vld [vmem:[%s394 + $0x26f8] sm:$0xff]
        %v1920 = vld [vmem:[%s394 + $0x2700] sm:$0xff]
        %v1921 = vld [vmem:[%s394 + $0x2708] sm:$0xff]
        %v1922 = vld [vmem:[%s394 + $0x2710] sm:$0xff]
        %v1923 = vld [vmem:[%s394 + $0x2718] sm:$0xff]
        %v1924 = vld [vmem:[%s394 + $0x2720] sm:$0xff]
        %v1925 = vld [vmem:[%s394 + $0x2728] sm:$0xff]
        %v1926 = vld [vmem:[%s394 + $0x2730] sm:$0xff]
        %v1927 = vld [vmem:[%s394 + $0x2738] sm:$0xff]
        %v1928 = vld [vmem:[%s394 + $0x2740] sm:$0xff]
        %v1929 = vld [vmem:[%s394 + $0x2748] sm:$0xff]
        %v1930 = vld [vmem:[%s394 + $0x2750] sm:$0xff]
        %v1931 = vld [vmem:[%s394 + $0x2758] sm:$0xff]
        %v1932 = vld [vmem:[%s394 + $0x2760] sm:$0xff]
        %v1933 = vld [vmem:[%s394 + $0x2768] sm:$0xff]
        %v1934 = vld [vmem:[%s394 + $0x2770] sm:$0xff]
        %v1935 = vld [vmem:[%s394 + $0x2778] sm:$0xff]
        %v1936 = vld [vmem:[%s394 + $0x2780] sm:$0xff]
        %v1937 = vld [vmem:[%s394 + $0x2788] sm:$0xff]
        %v1938 = vld [vmem:[%s394 + $0x2790] sm:$0xff]
        %v1939 = vld [vmem:[%s394 + $0x2798] sm:$0xff]
        %v1940 = vld [vmem:[%s394 + $0x27a0] sm:$0xff]
        %v1941 = vld [vmem:[%s394 + $0x27a8] sm:$0xff]
        %v1942 = vld [vmem:[%s394 + $0x27b0] sm:$0xff]
        %v1943 = vld [vmem:[%s394 + $0x27b8] sm:$0xff]
        %v1944 = vld [vmem:[%s394 + $0x27c0] sm:$0xff]
        %v1945 = vld [vmem:[%s394 + $0x27c8] sm:$0xff]
        %v1946 = vld [vmem:[%s394 + $0x27d0] sm:$0xff]
        %v1947 = vld [vmem:[%s394 + $0x27d8] sm:$0xff]
        %v1948 = vld [vmem:[%s394 + $0x27e0] sm:$0xff]
        %v1949 = vld [vmem:[%s394 + $0x27e8] sm:$0xff]
        %v1950 = vld [vmem:[%s394 + $0x27f0] sm:$0xff]
        %v1951 = vld [vmem:[%s394 + $0x27f8] sm:$0xff]
        %v3232 = vunpack.c.l.b16 %v672
        %v3233 = vunpack.c.h.b16 %v672
        %v3234 = vunpack.c.l.b16 %v673
        %v3235 = vunpack.c.h.b16 %v673
        %v3236 = vunpack.c.l.b16 %v674
        %v3237 = vunpack.c.h.b16 %v674
        %v3238 = vunpack.c.l.b16 %v675
        %v3239 = vunpack.c.h.b16 %v675
        %v3240 = vunpack.c.l.b16 %v676
        %v3241 = vunpack.c.h.b16 %v676
        %v3242 = vunpack.c.l.b16 %v677
        %v3243 = vunpack.c.h.b16 %v677
        %v3244 = vunpack.c.l.b16 %v678
        %v3245 = vunpack.c.h.b16 %v678
        %v3246 = vunpack.c.l.b16 %v679
        %v3247 = vunpack.c.h.b16 %v679
        %v3248 = vunpack.c.l.b16 %v680
        %v3249 = vunpack.c.h.b16 %v680
        %v3250 = vunpack.c.l.b16 %v681
        %v3251 = vunpack.c.h.b16 %v681
        %v3252 = vunpack.c.l.b16 %v682
        %v3253 = vunpack.c.h.b16 %v682
        %v3254 = vunpack.c.l.b16 %v683
        %v3255 = vunpack.c.h.b16 %v683
        %v3256 = vunpack.c.l.b16 %v684
        %v3257 = vunpack.c.h.b16 %v684
        %v3258 = vunpack.c.l.b16 %v685
        %v3259 = vunpack.c.h.b16 %v685
        %v3260 = vunpack.c.l.b16 %v686
        %v3261 = vunpack.c.h.b16 %v686
        %v3262 = vunpack.c.l.b16 %v687
        %v3263 = vunpack.c.h.b16 %v687
        %v3264 = vunpack.c.l.b16 %v688
        %v3265 = vunpack.c.h.b16 %v688
        %v3266 = vunpack.c.l.b16 %v689
        %v3267 = vunpack.c.h.b16 %v689
        %v3268 = vunpack.c.l.b16 %v690
        %v3269 = vunpack.c.h.b16 %v690
        %v3270 = vunpack.c.l.b16 %v691
        %v3271 = vunpack.c.h.b16 %v691
        %v3272 = vunpack.c.l.b16 %v692
        %v3273 = vunpack.c.h.b16 %v692
        %v3274 = vunpack.c.l.b16 %v693
        %v3275 = vunpack.c.h.b16 %v693
        %v3276 = vunpack.c.l.b16 %v694
        %v3277 = vunpack.c.h.b16 %v694
        %v3278 = vunpack.c.l.b16 %v695
        %v3279 = vunpack.c.h.b16 %v695
        %v3280 = vunpack.c.l.b16 %v696
        %v3281 = vunpack.c.h.b16 %v696
        %v3282 = vunpack.c.l.b16 %v697
        %v3283 = vunpack.c.h.b16 %v697
        %v3284 = vunpack.c.l.b16 %v698
        %v3285 = vunpack.c.h.b16 %v698
        %v3286 = vunpack.c.l.b16 %v699
        %v3287 = vunpack.c.h.b16 %v699
        %v3288 = vunpack.c.l.b16 %v700
        %v3289 = vunpack.c.h.b16 %v700
        %v3290 = vunpack.c.l.b16 %v701
        %v3291 = vunpack.c.h.b16 %v701
        %v3292 = vunpack.c.l.b16 %v702
        %v3293 = vunpack.c.h.b16 %v702
        %v3294 = vunpack.c.l.b16 %v703
        %v3295 = vunpack.c.h.b16 %v703
        %v3296 = vunpack.c.l.b16 %v704
        %v3297 = vunpack.c.h.b16 %v704
        %v3298 = vunpack.c.l.b16 %v705
        %v3299 = vunpack.c.h.b16 %v705
        %v3300 = vunpack.c.l.b16 %v706
        %v3301 = vunpack.c.h.b16 %v706
        %v3302 = vunpack.c.l.b16 %v707
        %v3303 = vunpack.c.h.b16 %v707
        %v3304 = vunpack.c.l.b16 %v708
        %v3305 = vunpack.c.h.b16 %v708
        %v3306 = vunpack.c.l.b16 %v709
        %v3307 = vunpack.c.h.b16 %v709
        %v3308 = vunpack.c.l.b16 %v710
        %v3309 = vunpack.c.h.b16 %v710
        %v3310 = vunpack.c.l.b16 %v711
        %v3311 = vunpack.c.h.b16 %v711
        %v3312 = vunpack.c.l.b16 %v712
        %v3313 = vunpack.c.h.b16 %v712
        %v3314 = vunpack.c.l.b16 %v713
        %v3315 = vunpack.c.h.b16 %v713
        %v3316 = vunpack.c.l.b16 %v714
        %v3317 = vunpack.c.h.b16 %v714
        %v3318 = vunpack.c.l.b16 %v715
        %v3319 = vunpack.c.h.b16 %v715
        %v3320 = vunpack.c.l.b16 %v716
        %v3321 = vunpack.c.h.b16 %v716
        %v3322 = vunpack.c.l.b16 %v717
        %v3323 = vunpack.c.h.b16 %v717
        %v3324 = vunpack.c.l.b16 %v718
        %v3325 = vunpack.c.h.b16 %v718
        %v3326 = vunpack.c.l.b16 %v719
        %v3327 = vunpack.c.h.b16 %v719
        %v3328 = vunpack.c.l.b16 %v720
        %v3329 = vunpack.c.h.b16 %v720
        %v3330 = vunpack.c.l.b16 %v721
        %v3331 = vunpack.c.h.b16 %v721
        %v3332 = vunpack.c.l.b16 %v722
        %v3333 = vunpack.c.h.b16 %v722
        %v3334 = vunpack.c.l.b16 %v723
        %v3335 = vunpack.c.h.b16 %v723
        %v3336 = vunpack.c.l.b16 %v724
        %v3337 = vunpack.c.h.b16 %v724
        %v3338 = vunpack.c.l.b16 %v725
        %v3339 = vunpack.c.h.b16 %v725
        %v3340 = vunpack.c.l.b16 %v726
        %v3341 = vunpack.c.h.b16 %v726
        %v3342 = vunpack.c.l.b16 %v727
        %v3343 = vunpack.c.h.b16 %v727
        %v3344 = vunpack.c.l.b16 %v728
        %v3345 = vunpack.c.h.b16 %v728
        %v3346 = vunpack.c.l.b16 %v729
        %v3347 = vunpack.c.h.b16 %v729
        %v3348 = vunpack.c.l.b16 %v730
        %v3349 = vunpack.c.h.b16 %v730
        %v3350 = vunpack.c.l.b16 %v731
        %v3351 = vunpack.c.h.b16 %v731
        %v3352 = vunpack.c.l.b16 %v732
        %v3353 = vunpack.c.h.b16 %v732
        %v3354 = vunpack.c.l.b16 %v733
        %v3355 = vunpack.c.h.b16 %v733
        %v3356 = vunpack.c.l.b16 %v734
        %v3357 = vunpack.c.h.b16 %v734
        %v3358 = vunpack.c.l.b16 %v735
        %v3359 = vunpack.c.h.b16 %v735
        %v3360 = vunpack.c.l.b16 %v736
        %v3361 = vunpack.c.h.b16 %v736
        %v3362 = vunpack.c.l.b16 %v737
        %v3363 = vunpack.c.h.b16 %v737
        %v3364 = vunpack.c.l.b16 %v738
        %v3365 = vunpack.c.h.b16 %v738
        %v3366 = vunpack.c.l.b16 %v739
        %v3367 = vunpack.c.h.b16 %v739
        %v3368 = vunpack.c.l.b16 %v740
        %v3369 = vunpack.c.h.b16 %v740
        %v3370 = vunpack.c.l.b16 %v741
        %v3371 = vunpack.c.h.b16 %v741
        %v3372 = vunpack.c.l.b16 %v742
        %v3373 = vunpack.c.h.b16 %v742
        %v3374 = vunpack.c.l.b16 %v743
        %v3375 = vunpack.c.h.b16 %v743
        %v3376 = vunpack.c.l.b16 %v744
        %v3377 = vunpack.c.h.b16 %v744
        %v3378 = vunpack.c.l.b16 %v745
        %v3379 = vunpack.c.h.b16 %v745
        %v3380 = vunpack.c.l.b16 %v746
        %v3381 = vunpack.c.h.b16 %v746
        %v3382 = vunpack.c.l.b16 %v747
        %v3383 = vunpack.c.h.b16 %v747
        %v3384 = vunpack.c.l.b16 %v748
        %v3385 = vunpack.c.h.b16 %v748
        %v3386 = vunpack.c.l.b16 %v749
        %v3387 = vunpack.c.h.b16 %v749
        %v3388 = vunpack.c.l.b16 %v750
        %v3389 = vunpack.c.h.b16 %v750
        %v3390 = vunpack.c.l.b16 %v751
        %v3391 = vunpack.c.h.b16 %v751
        %v3392 = vunpack.c.l.b16 %v752
        %v3393 = vunpack.c.h.b16 %v752
        %v3394 = vunpack.c.l.b16 %v753
        %v3395 = vunpack.c.h.b16 %v753
        %v3396 = vunpack.c.l.b16 %v754
        %v3397 = vunpack.c.h.b16 %v754
        %v3398 = vunpack.c.l.b16 %v755
        %v3399 = vunpack.c.h.b16 %v755
        %v3400 = vunpack.c.l.b16 %v756
        %v3401 = vunpack.c.h.b16 %v756
        %v3402 = vunpack.c.l.b16 %v757
        %v3403 = vunpack.c.h.b16 %v757
        %v3404 = vunpack.c.l.b16 %v758
        %v3405 = vunpack.c.h.b16 %v758
        %v3406 = vunpack.c.l.b16 %v759
        %v3407 = vunpack.c.h.b16 %v759
        %v3408 = vunpack.c.l.b16 %v760
        %v3409 = vunpack.c.h.b16 %v760
        %v3410 = vunpack.c.l.b16 %v761
        %v3411 = vunpack.c.h.b16 %v761
        %v3412 = vunpack.c.l.b16 %v762
        %v3413 = vunpack.c.h.b16 %v762
        %v3414 = vunpack.c.l.b16 %v763
        %v3415 = vunpack.c.h.b16 %v763
        %v3416 = vunpack.c.l.b16 %v764
        %v3417 = vunpack.c.h.b16 %v764
        %v3418 = vunpack.c.l.b16 %v765
        %v3419 = vunpack.c.h.b16 %v765
        %v3420 = vunpack.c.l.b16 %v766
        %v3421 = vunpack.c.h.b16 %v766
        %v3422 = vunpack.c.l.b16 %v767
        %v3423 = vunpack.c.h.b16 %v767
        %v3424 = vunpack.c.l.b16 %v768
        %v3425 = vunpack.c.h.b16 %v768
        %v3426 = vunpack.c.l.b16 %v769
        %v3427 = vunpack.c.h.b16 %v769
        %v3428 = vunpack.c.l.b16 %v770
        %v3429 = vunpack.c.h.b16 %v770
        %v3430 = vunpack.c.l.b16 %v771
        %v3431 = vunpack.c.h.b16 %v771
        %v3432 = vunpack.c.l.b16 %v772
        %v3433 = vunpack.c.h.b16 %v772
        %v3434 = vunpack.c.l.b16 %v773
        %v3435 = vunpack.c.h.b16 %v773
        %v3436 = vunpack.c.l.b16 %v774
        %v3437 = vunpack.c.h.b16 %v774
        %v3438 = vunpack.c.l.b16 %v775
        %v3439 = vunpack.c.h.b16 %v775
        %v3440 = vunpack.c.l.b16 %v776
        %v3441 = vunpack.c.h.b16 %v776
        %v3442 = vunpack.c.l.b16 %v777
        %v3443 = vunpack.c.h.b16 %v777
        %v3444 = vunpack.c.l.b16 %v778
        %v3445 = vunpack.c.h.b16 %v778
        %v3446 = vunpack.c.l.b16 %v779
        %v3447 = vunpack.c.h.b16 %v779
        %v3448 = vunpack.c.l.b16 %v780
        %v3449 = vunpack.c.h.b16 %v780
        %v3450 = vunpack.c.l.b16 %v781
        %v3451 = vunpack.c.h.b16 %v781
        %v3452 = vunpack.c.l.b16 %v782
        %v3453 = vunpack.c.h.b16 %v782
        %v3454 = vunpack.c.l.b16 %v783
        %v3455 = vunpack.c.h.b16 %v783
        %v3456 = vunpack.c.l.b16 %v784
        %v3457 = vunpack.c.h.b16 %v784
        %v3458 = vunpack.c.l.b16 %v785
        %v3459 = vunpack.c.h.b16 %v785
        %v3460 = vunpack.c.l.b16 %v786
        %v3461 = vunpack.c.h.b16 %v786
        %v3462 = vunpack.c.l.b16 %v787
        %v3463 = vunpack.c.h.b16 %v787
        %v3464 = vunpack.c.l.b16 %v788
        %v3465 = vunpack.c.h.b16 %v788
        %v3466 = vunpack.c.l.b16 %v789
        %v3467 = vunpack.c.h.b16 %v789
        %v3468 = vunpack.c.l.b16 %v790
        %v3469 = vunpack.c.h.b16 %v790
        %v3470 = vunpack.c.l.b16 %v791
        %v3471 = vunpack.c.h.b16 %v791
        %v3472 = vunpack.c.l.b16 %v792
        %v3473 = vunpack.c.h.b16 %v792
        %v3474 = vunpack.c.l.b16 %v793
        %v3475 = vunpack.c.h.b16 %v793
        %v3476 = vunpack.c.l.b16 %v794
        %v3477 = vunpack.c.h.b16 %v794
        %v3478 = vunpack.c.l.b16 %v795
        %v3479 = vunpack.c.h.b16 %v795
        %v3480 = vunpack.c.l.b16 %v796
        %v3481 = vunpack.c.h.b16 %v796
        %v3482 = vunpack.c.l.b16 %v797
        %v3483 = vunpack.c.h.b16 %v797
        %v3484 = vunpack.c.l.b16 %v798
        %v3485 = vunpack.c.h.b16 %v798
        %v3486 = vunpack.c.l.b16 %v799
        %v3487 = vunpack.c.h.b16 %v799
        %v3488 = vunpack.c.l.b16 %v800
        %v3489 = vunpack.c.h.b16 %v800
        %v3490 = vunpack.c.l.b16 %v801
        %v3491 = vunpack.c.h.b16 %v801
        %v3492 = vunpack.c.l.b16 %v802
        %v3493 = vunpack.c.h.b16 %v802
        %v3494 = vunpack.c.l.b16 %v803
        %v3495 = vunpack.c.h.b16 %v803
        %v3496 = vunpack.c.l.b16 %v804
        %v3497 = vunpack.c.h.b16 %v804
        %v3498 = vunpack.c.l.b16 %v805
        %v3499 = vunpack.c.h.b16 %v805
        %v3500 = vunpack.c.l.b16 %v806
        %v3501 = vunpack.c.h.b16 %v806
        %v3502 = vunpack.c.l.b16 %v807
        %v3503 = vunpack.c.h.b16 %v807
        %v3504 = vunpack.c.l.b16 %v808
        %v3505 = vunpack.c.h.b16 %v808
        %v3506 = vunpack.c.l.b16 %v809
        %v3507 = vunpack.c.h.b16 %v809
        %v3508 = vunpack.c.l.b16 %v810
        %v3509 = vunpack.c.h.b16 %v810
        %v3510 = vunpack.c.l.b16 %v811
        %v3511 = vunpack.c.h.b16 %v811
        %v3512 = vunpack.c.l.b16 %v812
        %v3513 = vunpack.c.h.b16 %v812
        %v3514 = vunpack.c.l.b16 %v813
        %v3515 = vunpack.c.h.b16 %v813
        %v3516 = vunpack.c.l.b16 %v814
        %v3517 = vunpack.c.h.b16 %v814
        %v3518 = vunpack.c.l.b16 %v815
        %v3519 = vunpack.c.h.b16 %v815
        %v3520 = vunpack.c.l.b16 %v816
        %v3521 = vunpack.c.h.b16 %v816
        %v3522 = vunpack.c.l.b16 %v817
        %v3523 = vunpack.c.h.b16 %v817
        %v3524 = vunpack.c.l.b16 %v818
        %v3525 = vunpack.c.h.b16 %v818
        %v3526 = vunpack.c.l.b16 %v819
        %v3527 = vunpack.c.h.b16 %v819
        %v3528 = vunpack.c.l.b16 %v820
        %v3529 = vunpack.c.h.b16 %v820
        %v3530 = vunpack.c.l.b16 %v821
        %v3531 = vunpack.c.h.b16 %v821
        %v3532 = vunpack.c.l.b16 %v822
        %v3533 = vunpack.c.h.b16 %v822
        %v3534 = vunpack.c.l.b16 %v823
        %v3535 = vunpack.c.h.b16 %v823
        %v3536 = vunpack.c.l.b16 %v824
        %v3537 = vunpack.c.h.b16 %v824
        %v3538 = vunpack.c.l.b16 %v825
        %v3539 = vunpack.c.h.b16 %v825
        %v3540 = vunpack.c.l.b16 %v826
        %v3541 = vunpack.c.h.b16 %v826
        %v3542 = vunpack.c.l.b16 %v827
        %v3543 = vunpack.c.h.b16 %v827
        %v3544 = vunpack.c.l.b16 %v828
        %v3545 = vunpack.c.h.b16 %v828
        %v3546 = vunpack.c.l.b16 %v829
        %v3547 = vunpack.c.h.b16 %v829
        %v3548 = vunpack.c.l.b16 %v830
        %v3549 = vunpack.c.h.b16 %v830
        %v3550 = vunpack.c.l.b16 %v831
        %v3551 = vunpack.c.h.b16 %v831
        %v3552 = vunpack.c.l.b16 %v832
        %v3553 = vunpack.c.h.b16 %v832
        %v3554 = vunpack.c.l.b16 %v833
        %v3555 = vunpack.c.h.b16 %v833
        %v3556 = vunpack.c.l.b16 %v834
        %v3557 = vunpack.c.h.b16 %v834
        %v3558 = vunpack.c.l.b16 %v835
        %v3559 = vunpack.c.h.b16 %v835
        %v3560 = vunpack.c.l.b16 %v836
        %v3561 = vunpack.c.h.b16 %v836
        %v3562 = vunpack.c.l.b16 %v837
        %v3563 = vunpack.c.h.b16 %v837
        %v3564 = vunpack.c.l.b16 %v838
        %v3565 = vunpack.c.h.b16 %v838
        %v3566 = vunpack.c.l.b16 %v839
        %v3567 = vunpack.c.h.b16 %v839
        %v3568 = vunpack.c.l.b16 %v840
        %v3569 = vunpack.c.h.b16 %v840
        %v3570 = vunpack.c.l.b16 %v841
        %v3571 = vunpack.c.h.b16 %v841
        %v3572 = vunpack.c.l.b16 %v842
        %v3573 = vunpack.c.h.b16 %v842
        %v3574 = vunpack.c.l.b16 %v843
        %v3575 = vunpack.c.h.b16 %v843
        %v3576 = vunpack.c.l.b16 %v844
        %v3577 = vunpack.c.h.b16 %v844
        %v3578 = vunpack.c.l.b16 %v845
        %v3579 = vunpack.c.h.b16 %v845
        %v3580 = vunpack.c.l.b16 %v846
        %v3581 = vunpack.c.h.b16 %v846
        %v3582 = vunpack.c.l.b16 %v847
        %v3583 = vunpack.c.h.b16 %v847
        %v3584 = vunpack.c.l.b16 %v848
        %v3585 = vunpack.c.h.b16 %v848
        %v3586 = vunpack.c.l.b16 %v849
        %v3587 = vunpack.c.h.b16 %v849
        %v3588 = vunpack.c.l.b16 %v850
        %v3589 = vunpack.c.h.b16 %v850
        %v3590 = vunpack.c.l.b16 %v851
        %v3591 = vunpack.c.h.b16 %v851
        %v3592 = vunpack.c.l.b16 %v852
        %v3593 = vunpack.c.h.b16 %v852
        %v3594 = vunpack.c.l.b16 %v853
        %v3595 = vunpack.c.h.b16 %v853
        %v3596 = vunpack.c.l.b16 %v854
        %v3597 = vunpack.c.h.b16 %v854
        %v3598 = vunpack.c.l.b16 %v855
        %v3599 = vunpack.c.h.b16 %v855
        %v3600 = vunpack.c.l.b16 %v856
        %v3601 = vunpack.c.h.b16 %v856
        %v3602 = vunpack.c.l.b16 %v857
        %v3603 = vunpack.c.h.b16 %v857
        %v3604 = vunpack.c.l.b16 %v858
        %v3605 = vunpack.c.h.b16 %v858
        %v3606 = vunpack.c.l.b16 %v859
        %v3607 = vunpack.c.h.b16 %v859
        %v3608 = vunpack.c.l.b16 %v860
        %v3609 = vunpack.c.h.b16 %v860
        %v3610 = vunpack.c.l.b16 %v861
        %v3611 = vunpack.c.h.b16 %v861
        %v3612 = vunpack.c.l.b16 %v862
        %v3613 = vunpack.c.h.b16 %v862
        %v3614 = vunpack.c.l.b16 %v863
        %v3615 = vunpack.c.h.b16 %v863
        %v3616 = vunpack.c.l.b16 %v864
        %v3617 = vunpack.c.h.b16 %v864
        %v3618 = vunpack.c.l.b16 %v865
        %v3619 = vunpack.c.h.b16 %v865
        %v3620 = vunpack.c.l.b16 %v866
        %v3621 = vunpack.c.h.b16 %v866
        %v3622 = vunpack.c.l.b16 %v867
        %v3623 = vunpack.c.h.b16 %v867
        %v3624 = vunpack.c.l.b16 %v868
        %v3625 = vunpack.c.h.b16 %v868
        %v3626 = vunpack.c.l.b16 %v869
        %v3627 = vunpack.c.h.b16 %v869
        %v3628 = vunpack.c.l.b16 %v870
        %v3629 = vunpack.c.h.b16 %v870
        %v3630 = vunpack.c.l.b16 %v871
        %v3631 = vunpack.c.h.b16 %v871
        %v3632 = vunpack.c.l.b16 %v872
        %v3633 = vunpack.c.h.b16 %v872
        %v3634 = vunpack.c.l.b16 %v873
        %v3635 = vunpack.c.h.b16 %v873
        %v3636 = vunpack.c.l.b16 %v874
        %v3637 = vunpack.c.h.b16 %v874
        %v3638 = vunpack.c.l.b16 %v875
        %v3639 = vunpack.c.h.b16 %v875
        %v3640 = vunpack.c.l.b16 %v876
        %v3641 = vunpack.c.h.b16 %v876
        %v3642 = vunpack.c.l.b16 %v877
        %v3643 = vunpack.c.h.b16 %v877
        %v3644 = vunpack.c.l.b16 %v878
        %v3645 = vunpack.c.h.b16 %v878
        %v3646 = vunpack.c.l.b16 %v879
        %v3647 = vunpack.c.h.b16 %v879
        %v3648 = vunpack.c.l.b16 %v880
        %v3649 = vunpack.c.h.b16 %v880
        %v3650 = vunpack.c.l.b16 %v881
        %v3651 = vunpack.c.h.b16 %v881
        %v3652 = vunpack.c.l.b16 %v882
        %v3653 = vunpack.c.h.b16 %v882
        %v3654 = vunpack.c.l.b16 %v883
        %v3655 = vunpack.c.h.b16 %v883
        %v3656 = vunpack.c.l.b16 %v884
        %v3657 = vunpack.c.h.b16 %v884
        %v3658 = vunpack.c.l.b16 %v885
        %v3659 = vunpack.c.h.b16 %v885
        %v3660 = vunpack.c.l.b16 %v886
        %v3661 = vunpack.c.h.b16 %v886
        %v3662 = vunpack.c.l.b16 %v887
        %v3663 = vunpack.c.h.b16 %v887
        %v3664 = vunpack.c.l.b16 %v888
        %v3665 = vunpack.c.h.b16 %v888
        %v3666 = vunpack.c.l.b16 %v889
        %v3667 = vunpack.c.h.b16 %v889
        %v3668 = vunpack.c.l.b16 %v890
        %v3669 = vunpack.c.h.b16 %v890
        %v3670 = vunpack.c.l.b16 %v891
        %v3671 = vunpack.c.h.b16 %v891
        %v3672 = vunpack.c.l.b16 %v892
        %v3673 = vunpack.c.h.b16 %v892
        %v3674 = vunpack.c.l.b16 %v893
        %v3675 = vunpack.c.h.b16 %v893
        %v3676 = vunpack.c.l.b16 %v894
        %v3677 = vunpack.c.h.b16 %v894
        %v3678 = vunpack.c.l.b16 %v895
        %v3679 = vunpack.c.h.b16 %v895
        %v3680 = vunpack.c.l.b16 %v896
        %v3681 = vunpack.c.h.b16 %v896
        %v3682 = vunpack.c.l.b16 %v897
        %v3683 = vunpack.c.h.b16 %v897
        %v3684 = vunpack.c.l.b16 %v898
        %v3685 = vunpack.c.h.b16 %v898
        %v3686 = vunpack.c.l.b16 %v899
        %v3687 = vunpack.c.h.b16 %v899
        %v3688 = vunpack.c.l.b16 %v900
        %v3689 = vunpack.c.h.b16 %v900
        %v3690 = vunpack.c.l.b16 %v901
        %v3691 = vunpack.c.h.b16 %v901
        %v3692 = vunpack.c.l.b16 %v902
        %v3693 = vunpack.c.h.b16 %v902
        %v3694 = vunpack.c.l.b16 %v903
        %v3695 = vunpack.c.h.b16 %v903
        %v3696 = vunpack.c.l.b16 %v904
        %v3697 = vunpack.c.h.b16 %v904
        %v3698 = vunpack.c.l.b16 %v905
        %v3699 = vunpack.c.h.b16 %v905
        %v3700 = vunpack.c.l.b16 %v906
        %v3701 = vunpack.c.h.b16 %v906
        %v3702 = vunpack.c.l.b16 %v907
        %v3703 = vunpack.c.h.b16 %v907
        %v3704 = vunpack.c.l.b16 %v908
        %v3705 = vunpack.c.h.b16 %v908
        %v3706 = vunpack.c.l.b16 %v909
        %v3707 = vunpack.c.h.b16 %v909
        %v3708 = vunpack.c.l.b16 %v910
        %v3709 = vunpack.c.h.b16 %v910
        %v3710 = vunpack.c.l.b16 %v911
        %v3711 = vunpack.c.h.b16 %v911
        %v3712 = vunpack.c.l.b16 %v912
        %v3713 = vunpack.c.h.b16 %v912
        %v3714 = vunpack.c.l.b16 %v913
        %v3715 = vunpack.c.h.b16 %v913
        %v3716 = vunpack.c.l.b16 %v914
        %v3717 = vunpack.c.h.b16 %v914
        %v3718 = vunpack.c.l.b16 %v915
        %v3719 = vunpack.c.h.b16 %v915
        %v3720 = vunpack.c.l.b16 %v916
        %v3721 = vunpack.c.h.b16 %v916
        %v3722 = vunpack.c.l.b16 %v917
        %v3723 = vunpack.c.h.b16 %v917
        %v3724 = vunpack.c.l.b16 %v918
        %v3725 = vunpack.c.h.b16 %v918
        %v3726 = vunpack.c.l.b16 %v919
        %v3727 = vunpack.c.h.b16 %v919
        %v3728 = vunpack.c.l.b16 %v920
        %v3729 = vunpack.c.h.b16 %v920
        %v3730 = vunpack.c.l.b16 %v921
        %v3731 = vunpack.c.h.b16 %v921
        %v3732 = vunpack.c.l.b16 %v922
        %v3733 = vunpack.c.h.b16 %v922
        %v3734 = vunpack.c.l.b16 %v923
        %v3735 = vunpack.c.h.b16 %v923
        %v3736 = vunpack.c.l.b16 %v924
        %v3737 = vunpack.c.h.b16 %v924
        %v3738 = vunpack.c.l.b16 %v925
        %v3739 = vunpack.c.h.b16 %v925
        %v3740 = vunpack.c.l.b16 %v926
        %v3741 = vunpack.c.h.b16 %v926
        %v3742 = vunpack.c.l.b16 %v927
        %v3743 = vunpack.c.h.b16 %v927
        %v3744 = vunpack.c.l.b16 %v928
        %v3745 = vunpack.c.h.b16 %v928
        %v3746 = vunpack.c.l.b16 %v929
        %v3747 = vunpack.c.h.b16 %v929
        %v3748 = vunpack.c.l.b16 %v930
        %v3749 = vunpack.c.h.b16 %v930
        %v3750 = vunpack.c.l.b16 %v931
        %v3751 = vunpack.c.h.b16 %v931
        %v3752 = vunpack.c.l.b16 %v932
        %v3753 = vunpack.c.h.b16 %v932
        %v3754 = vunpack.c.l.b16 %v933
        %v3755 = vunpack.c.h.b16 %v933
        %v3756 = vunpack.c.l.b16 %v934
        %v3757 = vunpack.c.h.b16 %v934
        %v3758 = vunpack.c.l.b16 %v935
        %v3759 = vunpack.c.h.b16 %v935
        %v3760 = vunpack.c.l.b16 %v936
        %v3761 = vunpack.c.h.b16 %v936
        %v3762 = vunpack.c.l.b16 %v937
        %v3763 = vunpack.c.h.b16 %v937
        %v3764 = vunpack.c.l.b16 %v938
        %v3765 = vunpack.c.h.b16 %v938
        %v3766 = vunpack.c.l.b16 %v939
        %v3767 = vunpack.c.h.b16 %v939
        %v3768 = vunpack.c.l.b16 %v940
        %v3769 = vunpack.c.h.b16 %v940
        %v3770 = vunpack.c.l.b16 %v941
        %v3771 = vunpack.c.h.b16 %v941
        %v3772 = vunpack.c.l.b16 %v942
        %v3773 = vunpack.c.h.b16 %v942
        %v3774 = vunpack.c.l.b16 %v943
        %v3775 = vunpack.c.h.b16 %v943
        %v3776 = vunpack.c.l.b16 %v944
        %v3777 = vunpack.c.h.b16 %v944
        %v3778 = vunpack.c.l.b16 %v945
        %v3779 = vunpack.c.h.b16 %v945
        %v3780 = vunpack.c.l.b16 %v946
        %v3781 = vunpack.c.h.b16 %v946
        %v3782 = vunpack.c.l.b16 %v947
        %v3783 = vunpack.c.h.b16 %v947
        %v3784 = vunpack.c.l.b16 %v948
        %v3785 = vunpack.c.h.b16 %v948
        %v3786 = vunpack.c.l.b16 %v949
        %v3787 = vunpack.c.h.b16 %v949
        %v3788 = vunpack.c.l.b16 %v950
        %v3789 = vunpack.c.h.b16 %v950
        %v3790 = vunpack.c.l.b16 %v951
        %v3791 = vunpack.c.h.b16 %v951
        %v3792 = vunpack.c.l.b16 %v952
        %v3793 = vunpack.c.h.b16 %v952
        %v3794 = vunpack.c.l.b16 %v953
        %v3795 = vunpack.c.h.b16 %v953
        %v3796 = vunpack.c.l.b16 %v954
        %v3797 = vunpack.c.h.b16 %v954
        %v3798 = vunpack.c.l.b16 %v955
        %v3799 = vunpack.c.h.b16 %v955
        %v3800 = vunpack.c.l.b16 %v956
        %v3801 = vunpack.c.h.b16 %v956
        %v3802 = vunpack.c.l.b16 %v957
        %v3803 = vunpack.c.h.b16 %v957
        %v3804 = vunpack.c.l.b16 %v958
        %v3805 = vunpack.c.h.b16 %v958
        %v3806 = vunpack.c.l.b16 %v959
        %v3807 = vunpack.c.h.b16 %v959
        %v3808 = vunpack.c.l.b16 %v960
        %v3809 = vunpack.c.h.b16 %v960
        %v3810 = vunpack.c.l.b16 %v961
        %v3811 = vunpack.c.h.b16 %v961
        %v3812 = vunpack.c.l.b16 %v962
        %v3813 = vunpack.c.h.b16 %v962
        %v3814 = vunpack.c.l.b16 %v963
        %v3815 = vunpack.c.h.b16 %v963
        %v3816 = vunpack.c.l.b16 %v964
        %v3817 = vunpack.c.h.b16 %v964
        %v3818 = vunpack.c.l.b16 %v965
        %v3819 = vunpack.c.h.b16 %v965
        %v3820 = vunpack.c.l.b16 %v966
        %v3821 = vunpack.c.h.b16 %v966
        %v3822 = vunpack.c.l.b16 %v967
        %v3823 = vunpack.c.h.b16 %v967
        %v3824 = vunpack.c.l.b16 %v968
        %v3825 = vunpack.c.h.b16 %v968
        %v3826 = vunpack.c.l.b16 %v969
        %v3827 = vunpack.c.h.b16 %v969
        %v3828 = vunpack.c.l.b16 %v970
        %v3829 = vunpack.c.h.b16 %v970
        %v3830 = vunpack.c.l.b16 %v971
        %v3831 = vunpack.c.h.b16 %v971
        %v3832 = vunpack.c.l.b16 %v972
        %v3833 = vunpack.c.h.b16 %v972
        %v3834 = vunpack.c.l.b16 %v973
        %v3835 = vunpack.c.h.b16 %v973
        %v3836 = vunpack.c.l.b16 %v974
        %v3837 = vunpack.c.h.b16 %v974
        %v3838 = vunpack.c.l.b16 %v975
        %v3839 = vunpack.c.h.b16 %v975
        %v3840 = vunpack.c.l.b16 %v976
        %v3841 = vunpack.c.h.b16 %v976
        %v3842 = vunpack.c.l.b16 %v977
        %v3843 = vunpack.c.h.b16 %v977
        %v3844 = vunpack.c.l.b16 %v978
        %v3845 = vunpack.c.h.b16 %v978
        %v3846 = vunpack.c.l.b16 %v979
        %v3847 = vunpack.c.h.b16 %v979
        %v3848 = vunpack.c.l.b16 %v980
        %v3849 = vunpack.c.h.b16 %v980
        %v3850 = vunpack.c.l.b16 %v981
        %v3851 = vunpack.c.h.b16 %v981
        %v3852 = vunpack.c.l.b16 %v982
        %v3853 = vunpack.c.h.b16 %v982
        %v3854 = vunpack.c.l.b16 %v983
        %v3855 = vunpack.c.h.b16 %v983
        %v3856 = vunpack.c.l.b16 %v984
        %v3857 = vunpack.c.h.b16 %v984
        %v3858 = vunpack.c.l.b16 %v985
        %v3859 = vunpack.c.h.b16 %v985
        %v3860 = vunpack.c.l.b16 %v986
        %v3861 = vunpack.c.h.b16 %v986
        %v3862 = vunpack.c.l.b16 %v987
        %v3863 = vunpack.c.h.b16 %v987
        %v3864 = vunpack.c.l.b16 %v988
        %v3865 = vunpack.c.h.b16 %v988
        %v3866 = vunpack.c.l.b16 %v989
        %v3867 = vunpack.c.h.b16 %v989
        %v3868 = vunpack.c.l.b16 %v990
        %v3869 = vunpack.c.h.b16 %v990
        %v3870 = vunpack.c.l.b16 %v991
        %v3871 = vunpack.c.h.b16 %v991
        %v3872 = vunpack.c.l.b16 %v992
        %v3873 = vunpack.c.h.b16 %v992
        %v3874 = vunpack.c.l.b16 %v993
        %v3875 = vunpack.c.h.b16 %v993
        %v3876 = vunpack.c.l.b16 %v994
        %v3877 = vunpack.c.h.b16 %v994
        %v3878 = vunpack.c.l.b16 %v995
        %v3879 = vunpack.c.h.b16 %v995
        %v3880 = vunpack.c.l.b16 %v996
        %v3881 = vunpack.c.h.b16 %v996
        %v3882 = vunpack.c.l.b16 %v997
        %v3883 = vunpack.c.h.b16 %v997
        %v3884 = vunpack.c.l.b16 %v998
        %v3885 = vunpack.c.h.b16 %v998
        %v3886 = vunpack.c.l.b16 %v999
        %v3887 = vunpack.c.h.b16 %v999
        %v3888 = vunpack.c.l.b16 %v1000
        %v3889 = vunpack.c.h.b16 %v1000
        %v3890 = vunpack.c.l.b16 %v1001
        %v3891 = vunpack.c.h.b16 %v1001
        %v3892 = vunpack.c.l.b16 %v1002
        %v3893 = vunpack.c.h.b16 %v1002
        %v3894 = vunpack.c.l.b16 %v1003
        %v3895 = vunpack.c.h.b16 %v1003
        %v3896 = vunpack.c.l.b16 %v1004
        %v3897 = vunpack.c.h.b16 %v1004
        %v3898 = vunpack.c.l.b16 %v1005
        %v3899 = vunpack.c.h.b16 %v1005
        %v3900 = vunpack.c.l.b16 %v1006
        %v3901 = vunpack.c.h.b16 %v1006
        %v3902 = vunpack.c.l.b16 %v1007
        %v3903 = vunpack.c.h.b16 %v1007
        %v3904 = vunpack.c.l.b16 %v1008
        %v3905 = vunpack.c.h.b16 %v1008
        %v3906 = vunpack.c.l.b16 %v1009
        %v3907 = vunpack.c.h.b16 %v1009
        %v3908 = vunpack.c.l.b16 %v1010
        %v3909 = vunpack.c.h.b16 %v1010
        %v3910 = vunpack.c.l.b16 %v1011
        %v3911 = vunpack.c.h.b16 %v1011
        %v3912 = vunpack.c.l.b16 %v1012
        %v3913 = vunpack.c.h.b16 %v1012
        %v3914 = vunpack.c.l.b16 %v1013
        %v3915 = vunpack.c.h.b16 %v1013
        %v3916 = vunpack.c.l.b16 %v1014
        %v3917 = vunpack.c.h.b16 %v1014
        %v3918 = vunpack.c.l.b16 %v1015
        %v3919 = vunpack.c.h.b16 %v1015
        %v3920 = vunpack.c.l.b16 %v1016
        %v3921 = vunpack.c.h.b16 %v1016
        %v3922 = vunpack.c.l.b16 %v1017
        %v3923 = vunpack.c.h.b16 %v1017
        %v3924 = vunpack.c.l.b16 %v1018
        %v3925 = vunpack.c.h.b16 %v1018
        %v3926 = vunpack.c.l.b16 %v1019
        %v3927 = vunpack.c.h.b16 %v1019
        %v3928 = vunpack.c.l.b16 %v1020
        %v3929 = vunpack.c.h.b16 %v1020
        %v3930 = vunpack.c.l.b16 %v1021
        %v3931 = vunpack.c.h.b16 %v1021
        %v3932 = vunpack.c.l.b16 %v1022
        %v3933 = vunpack.c.h.b16 %v1022
        %v3934 = vunpack.c.l.b16 %v1023
        %v3935 = vunpack.c.h.b16 %v1023
        %v3936 = vunpack.c.l.b16 %v1024
        %v3937 = vunpack.c.h.b16 %v1024
        %v3938 = vunpack.c.l.b16 %v1025
        %v3939 = vunpack.c.h.b16 %v1025
        %v3940 = vunpack.c.l.b16 %v1026
        %v3941 = vunpack.c.h.b16 %v1026
        %v3942 = vunpack.c.l.b16 %v1027
        %v3943 = vunpack.c.h.b16 %v1027
        %v3944 = vunpack.c.l.b16 %v1028
        %v3945 = vunpack.c.h.b16 %v1028
        %v3946 = vunpack.c.l.b16 %v1029
        %v3947 = vunpack.c.h.b16 %v1029
        %v3948 = vunpack.c.l.b16 %v1030
        %v3949 = vunpack.c.h.b16 %v1030
        %v3950 = vunpack.c.l.b16 %v1031
        %v3951 = vunpack.c.h.b16 %v1031
        %v3952 = vunpack.c.l.b16 %v1032
        %v3953 = vunpack.c.h.b16 %v1032
        %v3954 = vunpack.c.l.b16 %v1033
        %v3955 = vunpack.c.h.b16 %v1033
        %v3956 = vunpack.c.l.b16 %v1034
        %v3957 = vunpack.c.h.b16 %v1034
        %v3958 = vunpack.c.l.b16 %v1035
        %v3959 = vunpack.c.h.b16 %v1035
        %v3960 = vunpack.c.l.b16 %v1036
        %v3961 = vunpack.c.h.b16 %v1036
        %v3962 = vunpack.c.l.b16 %v1037
        %v3963 = vunpack.c.h.b16 %v1037
        %v3964 = vunpack.c.l.b16 %v1038
        %v3965 = vunpack.c.h.b16 %v1038
        %v3966 = vunpack.c.l.b16 %v1039
        %v3967 = vunpack.c.h.b16 %v1039
        %v3968 = vunpack.c.l.b16 %v1040
        %v3969 = vunpack.c.h.b16 %v1040
        %v3970 = vunpack.c.l.b16 %v1041
        %v3971 = vunpack.c.h.b16 %v1041
        %v3972 = vunpack.c.l.b16 %v1042
        %v3973 = vunpack.c.h.b16 %v1042
        %v3974 = vunpack.c.l.b16 %v1043
        %v3975 = vunpack.c.h.b16 %v1043
        %v3976 = vunpack.c.l.b16 %v1044
        %v3977 = vunpack.c.h.b16 %v1044
        %v3978 = vunpack.c.l.b16 %v1045
        %v3979 = vunpack.c.h.b16 %v1045
        %v3980 = vunpack.c.l.b16 %v1046
        %v3981 = vunpack.c.h.b16 %v1046
        %v3982 = vunpack.c.l.b16 %v1047
        %v3983 = vunpack.c.h.b16 %v1047
        %v3984 = vunpack.c.l.b16 %v1048
        %v3985 = vunpack.c.h.b16 %v1048
        %v3986 = vunpack.c.l.b16 %v1049
        %v3987 = vunpack.c.h.b16 %v1049
        %v3988 = vunpack.c.l.b16 %v1050
        %v3989 = vunpack.c.h.b16 %v1050
        %v3990 = vunpack.c.l.b16 %v1051
        %v3991 = vunpack.c.h.b16 %v1051
        %v3992 = vunpack.c.l.b16 %v1052
        %v3993 = vunpack.c.h.b16 %v1052
        %v3994 = vunpack.c.l.b16 %v1053
        %v3995 = vunpack.c.h.b16 %v1053
        %v3996 = vunpack.c.l.b16 %v1054
        %v3997 = vunpack.c.h.b16 %v1054
        %v3998 = vunpack.c.l.b16 %v1055
        %v3999 = vunpack.c.h.b16 %v1055
        %v4000 = vunpack.c.l.b16 %v1056
        %v4001 = vunpack.c.h.b16 %v1056
        %v4002 = vunpack.c.l.b16 %v1057
        %v4003 = vunpack.c.h.b16 %v1057
        %v4004 = vunpack.c.l.b16 %v1058
        %v4005 = vunpack.c.h.b16 %v1058
        %v4006 = vunpack.c.l.b16 %v1059
        %v4007 = vunpack.c.h.b16 %v1059
        %v4008 = vunpack.c.l.b16 %v1060
        %v4009 = vunpack.c.h.b16 %v1060
        %v4010 = vunpack.c.l.b16 %v1061
        %v4011 = vunpack.c.h.b16 %v1061
        %v4012 = vunpack.c.l.b16 %v1062
        %v4013 = vunpack.c.h.b16 %v1062
        %v4014 = vunpack.c.l.b16 %v1063
        %v4015 = vunpack.c.h.b16 %v1063
        %v4016 = vunpack.c.l.b16 %v1064
        %v4017 = vunpack.c.h.b16 %v1064
        %v4018 = vunpack.c.l.b16 %v1065
        %v4019 = vunpack.c.h.b16 %v1065
        %v4020 = vunpack.c.l.b16 %v1066
        %v4021 = vunpack.c.h.b16 %v1066
        %v4022 = vunpack.c.l.b16 %v1067
        %v4023 = vunpack.c.h.b16 %v1067
        %v4024 = vunpack.c.l.b16 %v1068
        %v4025 = vunpack.c.h.b16 %v1068
        %v4026 = vunpack.c.l.b16 %v1069
        %v4027 = vunpack.c.h.b16 %v1069
        %v4028 = vunpack.c.l.b16 %v1070
        %v4029 = vunpack.c.h.b16 %v1070
        %v4030 = vunpack.c.l.b16 %v1071
        %v4031 = vunpack.c.h.b16 %v1071
        %v4032 = vunpack.c.l.b16 %v1072
        %v4033 = vunpack.c.h.b16 %v1072
        %v4034 = vunpack.c.l.b16 %v1073
        %v4035 = vunpack.c.h.b16 %v1073
        %v4036 = vunpack.c.l.b16 %v1074
        %v4037 = vunpack.c.h.b16 %v1074
        %v4038 = vunpack.c.l.b16 %v1075
        %v4039 = vunpack.c.h.b16 %v1075
        %v4040 = vunpack.c.l.b16 %v1076
        %v4041 = vunpack.c.h.b16 %v1076
        %v4042 = vunpack.c.l.b16 %v1077
        %v4043 = vunpack.c.h.b16 %v1077
        %v4044 = vunpack.c.l.b16 %v1078
        %v4045 = vunpack.c.h.b16 %v1078
        %v4046 = vunpack.c.l.b16 %v1079
        %v4047 = vunpack.c.h.b16 %v1079
        %v4048 = vunpack.c.l.b16 %v1080
        %v4049 = vunpack.c.h.b16 %v1080
        %v4050 = vunpack.c.l.b16 %v1081
        %v4051 = vunpack.c.h.b16 %v1081
        %v4052 = vunpack.c.l.b16 %v1082
        %v4053 = vunpack.c.h.b16 %v1082
        %v4054 = vunpack.c.l.b16 %v1083
        %v4055 = vunpack.c.h.b16 %v1083
        %v4056 = vunpack.c.l.b16 %v1084
        %v4057 = vunpack.c.h.b16 %v1084
        %v4058 = vunpack.c.l.b16 %v1085
        %v4059 = vunpack.c.h.b16 %v1085
        %v4060 = vunpack.c.l.b16 %v1086
        %v4061 = vunpack.c.h.b16 %v1086
        %v4062 = vunpack.c.l.b16 %v1087
        %v4063 = vunpack.c.h.b16 %v1087
        %v4064 = vunpack.c.l.b16 %v1088
        %v4065 = vunpack.c.h.b16 %v1088
        %v4066 = vunpack.c.l.b16 %v1089
        %v4067 = vunpack.c.h.b16 %v1089
        %v4068 = vunpack.c.l.b16 %v1090
        %v4069 = vunpack.c.h.b16 %v1090
        %v4070 = vunpack.c.l.b16 %v1091
        %v4071 = vunpack.c.h.b16 %v1091
        %v4072 = vunpack.c.l.b16 %v1092
        %v4073 = vunpack.c.h.b16 %v1092
        %v4074 = vunpack.c.l.b16 %v1093
        %v4075 = vunpack.c.h.b16 %v1093
        %v4076 = vunpack.c.l.b16 %v1094
        %v4077 = vunpack.c.h.b16 %v1094
        %v4078 = vunpack.c.l.b16 %v1095
        %v4079 = vunpack.c.h.b16 %v1095
        %v4080 = vunpack.c.l.b16 %v1096
        %v4081 = vunpack.c.h.b16 %v1096
        %v4082 = vunpack.c.l.b16 %v1097
        %v4083 = vunpack.c.h.b16 %v1097
        %v4084 = vunpack.c.l.b16 %v1098
        %v4085 = vunpack.c.h.b16 %v1098
        %v4086 = vunpack.c.l.b16 %v1099
        %v4087 = vunpack.c.h.b16 %v1099
        %v4088 = vunpack.c.l.b16 %v1100
        %v4089 = vunpack.c.h.b16 %v1100
        %v4090 = vunpack.c.l.b16 %v1101
        %v4091 = vunpack.c.h.b16 %v1101
        %v4092 = vunpack.c.l.b16 %v1102
        %v4093 = vunpack.c.h.b16 %v1102
        %v4094 = vunpack.c.l.b16 %v1103
        %v4095 = vunpack.c.h.b16 %v1103
        %v4096 = vunpack.c.l.b16 %v1104
        %v4097 = vunpack.c.h.b16 %v1104
        %v4098 = vunpack.c.l.b16 %v1105
        %v4099 = vunpack.c.h.b16 %v1105
        %v4100 = vunpack.c.l.b16 %v1106
        %v4101 = vunpack.c.h.b16 %v1106
        %v4102 = vunpack.c.l.b16 %v1107
        %v4103 = vunpack.c.h.b16 %v1107
        %v4104 = vunpack.c.l.b16 %v1108
        %v4105 = vunpack.c.h.b16 %v1108
        %v4106 = vunpack.c.l.b16 %v1109
        %v4107 = vunpack.c.h.b16 %v1109
        %v4108 = vunpack.c.l.b16 %v1110
        %v4109 = vunpack.c.h.b16 %v1110
        %v4110 = vunpack.c.l.b16 %v1111
        %v4111 = vunpack.c.h.b16 %v1111
        %v4112 = vunpack.c.l.b16 %v1112
        %v4113 = vunpack.c.h.b16 %v1112
        %v4114 = vunpack.c.l.b16 %v1113
        %v4115 = vunpack.c.h.b16 %v1113
        %v4116 = vunpack.c.l.b16 %v1114
        %v4117 = vunpack.c.h.b16 %v1114
        %v4118 = vunpack.c.l.b16 %v1115
        %v4119 = vunpack.c.h.b16 %v1115
        %v4120 = vunpack.c.l.b16 %v1116
        %v4121 = vunpack.c.h.b16 %v1116
        %v4122 = vunpack.c.l.b16 %v1117
        %v4123 = vunpack.c.h.b16 %v1117
        %v4124 = vunpack.c.l.b16 %v1118
        %v4125 = vunpack.c.h.b16 %v1118
        %v4126 = vunpack.c.l.b16 %v1119
        %v4127 = vunpack.c.h.b16 %v1119
        %v4128 = vunpack.c.l.b16 %v1120
        %v4129 = vunpack.c.h.b16 %v1120
        %v4130 = vunpack.c.l.b16 %v1121
        %v4131 = vunpack.c.h.b16 %v1121
        %v4132 = vunpack.c.l.b16 %v1122
        %v4133 = vunpack.c.h.b16 %v1122
        %v4134 = vunpack.c.l.b16 %v1123
        %v4135 = vunpack.c.h.b16 %v1123
        %v4136 = vunpack.c.l.b16 %v1124
        %v4137 = vunpack.c.h.b16 %v1124
        %v4138 = vunpack.c.l.b16 %v1125
        %v4139 = vunpack.c.h.b16 %v1125
        %v4140 = vunpack.c.l.b16 %v1126
        %v4141 = vunpack.c.h.b16 %v1126
        %v4142 = vunpack.c.l.b16 %v1127
        %v4143 = vunpack.c.h.b16 %v1127
        %v4144 = vunpack.c.l.b16 %v1128
        %v4145 = vunpack.c.h.b16 %v1128
        %v4146 = vunpack.c.l.b16 %v1129
        %v4147 = vunpack.c.h.b16 %v1129
        %v4148 = vunpack.c.l.b16 %v1130
        %v4149 = vunpack.c.h.b16 %v1130
        %v4150 = vunpack.c.l.b16 %v1131
        %v4151 = vunpack.c.h.b16 %v1131
        %v4152 = vunpack.c.l.b16 %v1132
        %v4153 = vunpack.c.h.b16 %v1132
        %v4154 = vunpack.c.l.b16 %v1133
        %v4155 = vunpack.c.h.b16 %v1133
        %v4156 = vunpack.c.l.b16 %v1134
        %v4157 = vunpack.c.h.b16 %v1134
        %v4158 = vunpack.c.l.b16 %v1135
        %v4159 = vunpack.c.h.b16 %v1135
        %v4160 = vunpack.c.l.b16 %v1136
        %v4161 = vunpack.c.h.b16 %v1136
        %v4162 = vunpack.c.l.b16 %v1137
        %v4163 = vunpack.c.h.b16 %v1137
        %v4164 = vunpack.c.l.b16 %v1138
        %v4165 = vunpack.c.h.b16 %v1138
        %v4166 = vunpack.c.l.b16 %v1139
        %v4167 = vunpack.c.h.b16 %v1139
        %v4168 = vunpack.c.l.b16 %v1140
        %v4169 = vunpack.c.h.b16 %v1140
        %v4170 = vunpack.c.l.b16 %v1141
        %v4171 = vunpack.c.h.b16 %v1141
        %v4172 = vunpack.c.l.b16 %v1142
        %v4173 = vunpack.c.h.b16 %v1142
        %v4174 = vunpack.c.l.b16 %v1143
        %v4175 = vunpack.c.h.b16 %v1143
        %v4176 = vunpack.c.l.b16 %v1144
        %v4177 = vunpack.c.h.b16 %v1144
        %v4178 = vunpack.c.l.b16 %v1145
        %v4179 = vunpack.c.h.b16 %v1145
        %v4180 = vunpack.c.l.b16 %v1146
        %v4181 = vunpack.c.h.b16 %v1146
        %v4182 = vunpack.c.l.b16 %v1147
        %v4183 = vunpack.c.h.b16 %v1147
        %v4184 = vunpack.c.l.b16 %v1148
        %v4185 = vunpack.c.h.b16 %v1148
        %v4186 = vunpack.c.l.b16 %v1149
        %v4187 = vunpack.c.h.b16 %v1149
        %v4188 = vunpack.c.l.b16 %v1150
        %v4189 = vunpack.c.h.b16 %v1150
        %v4190 = vunpack.c.l.b16 %v1151
        %v4191 = vunpack.c.h.b16 %v1151
        %v4192 = vunpack.c.l.b16 %v1152
        %v4193 = vunpack.c.h.b16 %v1152
        %v4194 = vunpack.c.l.b16 %v1153
        %v4195 = vunpack.c.h.b16 %v1153
        %v4196 = vunpack.c.l.b16 %v1154
        %v4197 = vunpack.c.h.b16 %v1154
        %v4198 = vunpack.c.l.b16 %v1155
        %v4199 = vunpack.c.h.b16 %v1155
        %v4200 = vunpack.c.l.b16 %v1156
        %v4201 = vunpack.c.h.b16 %v1156
        %v4202 = vunpack.c.l.b16 %v1157
        %v4203 = vunpack.c.h.b16 %v1157
        %v4204 = vunpack.c.l.b16 %v1158
        %v4205 = vunpack.c.h.b16 %v1158
        %v4206 = vunpack.c.l.b16 %v1159
        %v4207 = vunpack.c.h.b16 %v1159
        %v4208 = vunpack.c.l.b16 %v1160
        %v4209 = vunpack.c.h.b16 %v1160
        %v4210 = vunpack.c.l.b16 %v1161
        %v4211 = vunpack.c.h.b16 %v1161
        %v4212 = vunpack.c.l.b16 %v1162
        %v4213 = vunpack.c.h.b16 %v1162
        %v4214 = vunpack.c.l.b16 %v1163
        %v4215 = vunpack.c.h.b16 %v1163
        %v4216 = vunpack.c.l.b16 %v1164
        %v4217 = vunpack.c.h.b16 %v1164
        %v4218 = vunpack.c.l.b16 %v1165
        %v4219 = vunpack.c.h.b16 %v1165
        %v4220 = vunpack.c.l.b16 %v1166
        %v4221 = vunpack.c.h.b16 %v1166
        %v4222 = vunpack.c.l.b16 %v1167
        %v4223 = vunpack.c.h.b16 %v1167
        %v4224 = vunpack.c.l.b16 %v1168
        %v4225 = vunpack.c.h.b16 %v1168
        %v4226 = vunpack.c.l.b16 %v1169
        %v4227 = vunpack.c.h.b16 %v1169
        %v4228 = vunpack.c.l.b16 %v1170
        %v4229 = vunpack.c.h.b16 %v1170
        %v4230 = vunpack.c.l.b16 %v1171
        %v4231 = vunpack.c.h.b16 %v1171
        %v4232 = vunpack.c.l.b16 %v1172
        %v4233 = vunpack.c.h.b16 %v1172
        %v4234 = vunpack.c.l.b16 %v1173
        %v4235 = vunpack.c.h.b16 %v1173
        %v4236 = vunpack.c.l.b16 %v1174
        %v4237 = vunpack.c.h.b16 %v1174
        %v4238 = vunpack.c.l.b16 %v1175
        %v4239 = vunpack.c.h.b16 %v1175
        %v4240 = vunpack.c.l.b16 %v1176
        %v4241 = vunpack.c.h.b16 %v1176
        %v4242 = vunpack.c.l.b16 %v1177
        %v4243 = vunpack.c.h.b16 %v1177
        %v4244 = vunpack.c.l.b16 %v1178
        %v4245 = vunpack.c.h.b16 %v1178
        %v4246 = vunpack.c.l.b16 %v1179
        %v4247 = vunpack.c.h.b16 %v1179
        %v4248 = vunpack.c.l.b16 %v1180
        %v4249 = vunpack.c.h.b16 %v1180
        %v4250 = vunpack.c.l.b16 %v1181
        %v4251 = vunpack.c.h.b16 %v1181
        %v4252 = vunpack.c.l.b16 %v1182
        %v4253 = vunpack.c.h.b16 %v1182
        %v4254 = vunpack.c.l.b16 %v1183
        %v4255 = vunpack.c.h.b16 %v1183
        %v4256 = vunpack.c.l.b16 %v1184
        %v4257 = vunpack.c.h.b16 %v1184
        %v4258 = vunpack.c.l.b16 %v1185
        %v4259 = vunpack.c.h.b16 %v1185
        %v4260 = vunpack.c.l.b16 %v1186
        %v4261 = vunpack.c.h.b16 %v1186
        %v4262 = vunpack.c.l.b16 %v1187
        %v4263 = vunpack.c.h.b16 %v1187
        %v4264 = vunpack.c.l.b16 %v1188
        %v4265 = vunpack.c.h.b16 %v1188
        %v4266 = vunpack.c.l.b16 %v1189
        %v4267 = vunpack.c.h.b16 %v1189
        %v4268 = vunpack.c.l.b16 %v1190
        %v4269 = vunpack.c.h.b16 %v1190
        %v4270 = vunpack.c.l.b16 %v1191
        %v4271 = vunpack.c.h.b16 %v1191
        %v4272 = vunpack.c.l.b16 %v1192
        %v4273 = vunpack.c.h.b16 %v1192
        %v4274 = vunpack.c.l.b16 %v1193
        %v4275 = vunpack.c.h.b16 %v1193
        %v4276 = vunpack.c.l.b16 %v1194
        %v4277 = vunpack.c.h.b16 %v1194
        %v4278 = vunpack.c.l.b16 %v1195
        %v4279 = vunpack.c.h.b16 %v1195
        %v4280 = vunpack.c.l.b16 %v1196
        %v4281 = vunpack.c.h.b16 %v1196
        %v4282 = vunpack.c.l.b16 %v1197
        %v4283 = vunpack.c.h.b16 %v1197
        %v4284 = vunpack.c.l.b16 %v1198
        %v4285 = vunpack.c.h.b16 %v1198
        %v4286 = vunpack.c.l.b16 %v1199
        %v4287 = vunpack.c.h.b16 %v1199
        %v4288 = vunpack.c.l.b16 %v1200
        %v4289 = vunpack.c.h.b16 %v1200
        %v4290 = vunpack.c.l.b16 %v1201
        %v4291 = vunpack.c.h.b16 %v1201
        %v4292 = vunpack.c.l.b16 %v1202
        %v4293 = vunpack.c.h.b16 %v1202
        %v4294 = vunpack.c.l.b16 %v1203
        %v4295 = vunpack.c.h.b16 %v1203
        %v4296 = vunpack.c.l.b16 %v1204
        %v4297 = vunpack.c.h.b16 %v1204
        %v4298 = vunpack.c.l.b16 %v1205
        %v4299 = vunpack.c.h.b16 %v1205
        %v4300 = vunpack.c.l.b16 %v1206
        %v4301 = vunpack.c.h.b16 %v1206
        %v4302 = vunpack.c.l.b16 %v1207
        %v4303 = vunpack.c.h.b16 %v1207
        %v4304 = vunpack.c.l.b16 %v1208
        %v4305 = vunpack.c.h.b16 %v1208
        %v4306 = vunpack.c.l.b16 %v1209
        %v4307 = vunpack.c.h.b16 %v1209
        %v4308 = vunpack.c.l.b16 %v1210
        %v4309 = vunpack.c.h.b16 %v1210
        %v4310 = vunpack.c.l.b16 %v1211
        %v4311 = vunpack.c.h.b16 %v1211
        %v4312 = vunpack.c.l.b16 %v1212
        %v4313 = vunpack.c.h.b16 %v1212
        %v4314 = vunpack.c.l.b16 %v1213
        %v4315 = vunpack.c.h.b16 %v1213
        %v4316 = vunpack.c.l.b16 %v1214
        %v4317 = vunpack.c.h.b16 %v1214
        %v4318 = vunpack.c.l.b16 %v1215
        %v4319 = vunpack.c.h.b16 %v1215
        %v4320 = vunpack.c.l.b16 %v1216
        %v4321 = vunpack.c.h.b16 %v1216
        %v4322 = vunpack.c.l.b16 %v1217
        %v4323 = vunpack.c.h.b16 %v1217
        %v4324 = vunpack.c.l.b16 %v1218
        %v4325 = vunpack.c.h.b16 %v1218
        %v4326 = vunpack.c.l.b16 %v1219
        %v4327 = vunpack.c.h.b16 %v1219
        %v4328 = vunpack.c.l.b16 %v1220
        %v4329 = vunpack.c.h.b16 %v1220
        %v4330 = vunpack.c.l.b16 %v1221
        %v4331 = vunpack.c.h.b16 %v1221
        %v4332 = vunpack.c.l.b16 %v1222
        %v4333 = vunpack.c.h.b16 %v1222
        %v4334 = vunpack.c.l.b16 %v1223
        %v4335 = vunpack.c.h.b16 %v1223
        %v4336 = vunpack.c.l.b16 %v1224
        %v4337 = vunpack.c.h.b16 %v1224
        %v4338 = vunpack.c.l.b16 %v1225
        %v4339 = vunpack.c.h.b16 %v1225
        %v4340 = vunpack.c.l.b16 %v1226
        %v4341 = vunpack.c.h.b16 %v1226
        %v4342 = vunpack.c.l.b16 %v1227
        %v4343 = vunpack.c.h.b16 %v1227
        %v4344 = vunpack.c.l.b16 %v1228
        %v4345 = vunpack.c.h.b16 %v1228
        %v4346 = vunpack.c.l.b16 %v1229
        %v4347 = vunpack.c.h.b16 %v1229
        %v4348 = vunpack.c.l.b16 %v1230
        %v4349 = vunpack.c.h.b16 %v1230
        %v4350 = vunpack.c.l.b16 %v1231
        %v4351 = vunpack.c.h.b16 %v1231
        %v4352 = vunpack.c.l.b16 %v1232
        %v4353 = vunpack.c.h.b16 %v1232
        %v4354 = vunpack.c.l.b16 %v1233
        %v4355 = vunpack.c.h.b16 %v1233
        %v4356 = vunpack.c.l.b16 %v1234
        %v4357 = vunpack.c.h.b16 %v1234
        %v4358 = vunpack.c.l.b16 %v1235
        %v4359 = vunpack.c.h.b16 %v1235
        %v4360 = vunpack.c.l.b16 %v1236
        %v4361 = vunpack.c.h.b16 %v1236
        %v4362 = vunpack.c.l.b16 %v1237
        %v4363 = vunpack.c.h.b16 %v1237
        %v4364 = vunpack.c.l.b16 %v1238
        %v4365 = vunpack.c.h.b16 %v1238
        %v4366 = vunpack.c.l.b16 %v1239
        %v4367 = vunpack.c.h.b16 %v1239
        %v4368 = vunpack.c.l.b16 %v1240
        %v4369 = vunpack.c.h.b16 %v1240
        %v4370 = vunpack.c.l.b16 %v1241
        %v4371 = vunpack.c.h.b16 %v1241
        %v4372 = vunpack.c.l.b16 %v1242
        %v4373 = vunpack.c.h.b16 %v1242
        %v4374 = vunpack.c.l.b16 %v1243
        %v4375 = vunpack.c.h.b16 %v1243
        %v4376 = vunpack.c.l.b16 %v1244
        %v4377 = vunpack.c.h.b16 %v1244
        %v4378 = vunpack.c.l.b16 %v1245
        %v4379 = vunpack.c.h.b16 %v1245
        %v4380 = vunpack.c.l.b16 %v1246
        %v4381 = vunpack.c.h.b16 %v1246
        %v4382 = vunpack.c.l.b16 %v1247
        %v4383 = vunpack.c.h.b16 %v1247
        %v4384 = vunpack.c.l.b16 %v1248
        %v4385 = vunpack.c.h.b16 %v1248
        %v4386 = vunpack.c.l.b16 %v1249
        %v4387 = vunpack.c.h.b16 %v1249
        %v4388 = vunpack.c.l.b16 %v1250
        %v4389 = vunpack.c.h.b16 %v1250
        %v4390 = vunpack.c.l.b16 %v1251
        %v4391 = vunpack.c.h.b16 %v1251
        %v4392 = vunpack.c.l.b16 %v1252
        %v4393 = vunpack.c.h.b16 %v1252
        %v4394 = vunpack.c.l.b16 %v1253
        %v4395 = vunpack.c.h.b16 %v1253
        %v4396 = vunpack.c.l.b16 %v1254
        %v4397 = vunpack.c.h.b16 %v1254
        %v4398 = vunpack.c.l.b16 %v1255
        %v4399 = vunpack.c.h.b16 %v1255
        %v4400 = vunpack.c.l.b16 %v1256
        %v4401 = vunpack.c.h.b16 %v1256
        %v4402 = vunpack.c.l.b16 %v1257
        %v4403 = vunpack.c.h.b16 %v1257
        %v4404 = vunpack.c.l.b16 %v1258
        %v4405 = vunpack.c.h.b16 %v1258
        %v4406 = vunpack.c.l.b16 %v1259
        %v4407 = vunpack.c.h.b16 %v1259
        %v4408 = vunpack.c.l.b16 %v1260
        %v4409 = vunpack.c.h.b16 %v1260
        %v4410 = vunpack.c.l.b16 %v1261
        %v4411 = vunpack.c.h.b16 %v1261
        %v4412 = vunpack.c.l.b16 %v1262
        %v4413 = vunpack.c.h.b16 %v1262
        %v4414 = vunpack.c.l.b16 %v1263
        %v4415 = vunpack.c.h.b16 %v1263
        %v4416 = vunpack.c.l.b16 %v1264
        %v4417 = vunpack.c.h.b16 %v1264
        %v4418 = vunpack.c.l.b16 %v1265
        %v4419 = vunpack.c.h.b16 %v1265
        %v4420 = vunpack.c.l.b16 %v1266
        %v4421 = vunpack.c.h.b16 %v1266
        %v4422 = vunpack.c.l.b16 %v1267
        %v4423 = vunpack.c.h.b16 %v1267
        %v4424 = vunpack.c.l.b16 %v1268
        %v4425 = vunpack.c.h.b16 %v1268
        %v4426 = vunpack.c.l.b16 %v1269
        %v4427 = vunpack.c.h.b16 %v1269
        %v4428 = vunpack.c.l.b16 %v1270
        %v4429 = vunpack.c.h.b16 %v1270
        %v4430 = vunpack.c.l.b16 %v1271
        %v4431 = vunpack.c.h.b16 %v1271
        %v4432 = vunpack.c.l.b16 %v1272
        %v4433 = vunpack.c.h.b16 %v1272
        %v4434 = vunpack.c.l.b16 %v1273
        %v4435 = vunpack.c.h.b16 %v1273
        %v4436 = vunpack.c.l.b16 %v1274
        %v4437 = vunpack.c.h.b16 %v1274
        %v4438 = vunpack.c.l.b16 %v1275
        %v4439 = vunpack.c.h.b16 %v1275
        %v4440 = vunpack.c.l.b16 %v1276
        %v4441 = vunpack.c.h.b16 %v1276
        %v4442 = vunpack.c.l.b16 %v1277
        %v4443 = vunpack.c.h.b16 %v1277
        %v4444 = vunpack.c.l.b16 %v1278
        %v4445 = vunpack.c.h.b16 %v1278
        %v4446 = vunpack.c.l.b16 %v1279
        %v4447 = vunpack.c.h.b16 %v1279
        %v4448 = vunpack.c.l.b16 %v1280
        %v4449 = vunpack.c.h.b16 %v1280
        %v4450 = vunpack.c.l.b16 %v1281
        %v4451 = vunpack.c.h.b16 %v1281
        %v4452 = vunpack.c.l.b16 %v1282
        %v4453 = vunpack.c.h.b16 %v1282
        %v4454 = vunpack.c.l.b16 %v1283
        %v4455 = vunpack.c.h.b16 %v1283
        %v4456 = vunpack.c.l.b16 %v1284
        %v4457 = vunpack.c.h.b16 %v1284
        %v4458 = vunpack.c.l.b16 %v1285
        %v4459 = vunpack.c.h.b16 %v1285
        %v4460 = vunpack.c.l.b16 %v1286
        %v4461 = vunpack.c.h.b16 %v1286
        %v4462 = vunpack.c.l.b16 %v1287
        %v4463 = vunpack.c.h.b16 %v1287
        %v4464 = vunpack.c.l.b16 %v1288
        %v4465 = vunpack.c.h.b16 %v1288
        %v4466 = vunpack.c.l.b16 %v1289
        %v4467 = vunpack.c.h.b16 %v1289
        %v4468 = vunpack.c.l.b16 %v1290
        %v4469 = vunpack.c.h.b16 %v1290
        %v4470 = vunpack.c.l.b16 %v1291
        %v4471 = vunpack.c.h.b16 %v1291
        %v4472 = vunpack.c.l.b16 %v1292
        %v4473 = vunpack.c.h.b16 %v1292
        %v4474 = vunpack.c.l.b16 %v1293
        %v4475 = vunpack.c.h.b16 %v1293
        %v4476 = vunpack.c.l.b16 %v1294
        %v4477 = vunpack.c.h.b16 %v1294
        %v4478 = vunpack.c.l.b16 %v1295
        %v4479 = vunpack.c.h.b16 %v1295
        %v4480 = vunpack.c.l.b16 %v1296
        %v4481 = vunpack.c.h.b16 %v1296
        %v4482 = vunpack.c.l.b16 %v1297
        %v4483 = vunpack.c.h.b16 %v1297
        %v4484 = vunpack.c.l.b16 %v1298
        %v4485 = vunpack.c.h.b16 %v1298
        %v4486 = vunpack.c.l.b16 %v1299
        %v4487 = vunpack.c.h.b16 %v1299
        %v4488 = vunpack.c.l.b16 %v1300
        %v4489 = vunpack.c.h.b16 %v1300
        %v4490 = vunpack.c.l.b16 %v1301
        %v4491 = vunpack.c.h.b16 %v1301
        %v4492 = vunpack.c.l.b16 %v1302
        %v4493 = vunpack.c.h.b16 %v1302
        %v4494 = vunpack.c.l.b16 %v1303
        %v4495 = vunpack.c.h.b16 %v1303
        %v4496 = vunpack.c.l.b16 %v1304
        %v4497 = vunpack.c.h.b16 %v1304
        %v4498 = vunpack.c.l.b16 %v1305
        %v4499 = vunpack.c.h.b16 %v1305
        %v4500 = vunpack.c.l.b16 %v1306
        %v4501 = vunpack.c.h.b16 %v1306
        %v4502 = vunpack.c.l.b16 %v1307
        %v4503 = vunpack.c.h.b16 %v1307
        %v4504 = vunpack.c.l.b16 %v1308
        %v4505 = vunpack.c.h.b16 %v1308
        %v4506 = vunpack.c.l.b16 %v1309
        %v4507 = vunpack.c.h.b16 %v1309
        %v4508 = vunpack.c.l.b16 %v1310
        %v4509 = vunpack.c.h.b16 %v1310
        %v4510 = vunpack.c.l.b16 %v1311
        %v4511 = vunpack.c.h.b16 %v1311
        %v4512 = vunpack.c.l.b16 %v1312
        %v4513 = vunpack.c.h.b16 %v1312
        %v4514 = vunpack.c.l.b16 %v1313
        %v4515 = vunpack.c.h.b16 %v1313
        %v4516 = vunpack.c.l.b16 %v1314
        %v4517 = vunpack.c.h.b16 %v1314
        %v4518 = vunpack.c.l.b16 %v1315
        %v4519 = vunpack.c.h.b16 %v1315
        %v4520 = vunpack.c.l.b16 %v1316
        %v4521 = vunpack.c.h.b16 %v1316
        %v4522 = vunpack.c.l.b16 %v1317
        %v4523 = vunpack.c.h.b16 %v1317
        %v4524 = vunpack.c.l.b16 %v1318
        %v4525 = vunpack.c.h.b16 %v1318
        %v4526 = vunpack.c.l.b16 %v1319
        %v4527 = vunpack.c.h.b16 %v1319
        %v4528 = vunpack.c.l.b16 %v1320
        %v4529 = vunpack.c.h.b16 %v1320
        %v4530 = vunpack.c.l.b16 %v1321
        %v4531 = vunpack.c.h.b16 %v1321
        %v4532 = vunpack.c.l.b16 %v1322
        %v4533 = vunpack.c.h.b16 %v1322
        %v4534 = vunpack.c.l.b16 %v1323
        %v4535 = vunpack.c.h.b16 %v1323
        %v4536 = vunpack.c.l.b16 %v1324
        %v4537 = vunpack.c.h.b16 %v1324
        %v4538 = vunpack.c.l.b16 %v1325
        %v4539 = vunpack.c.h.b16 %v1325
        %v4540 = vunpack.c.l.b16 %v1326
        %v4541 = vunpack.c.h.b16 %v1326
        %v4542 = vunpack.c.l.b16 %v1327
        %v4543 = vunpack.c.h.b16 %v1327
        %v4544 = vunpack.c.l.b16 %v1328
        %v4545 = vunpack.c.h.b16 %v1328
        %v4546 = vunpack.c.l.b16 %v1329
        %v4547 = vunpack.c.h.b16 %v1329
        %v4548 = vunpack.c.l.b16 %v1330
        %v4549 = vunpack.c.h.b16 %v1330
        %v4550 = vunpack.c.l.b16 %v1331
        %v4551 = vunpack.c.h.b16 %v1331
        %v4552 = vunpack.c.l.b16 %v1332
        %v4553 = vunpack.c.h.b16 %v1332
        %v4554 = vunpack.c.l.b16 %v1333
        %v4555 = vunpack.c.h.b16 %v1333
        %v4556 = vunpack.c.l.b16 %v1334
        %v4557 = vunpack.c.h.b16 %v1334
        %v4558 = vunpack.c.l.b16 %v1335
        %v4559 = vunpack.c.h.b16 %v1335
        %v4560 = vunpack.c.l.b16 %v1336
        %v4561 = vunpack.c.h.b16 %v1336
        %v4562 = vunpack.c.l.b16 %v1337
        %v4563 = vunpack.c.h.b16 %v1337
        %v4564 = vunpack.c.l.b16 %v1338
        %v4565 = vunpack.c.h.b16 %v1338
        %v4566 = vunpack.c.l.b16 %v1339
        %v4567 = vunpack.c.h.b16 %v1339
        %v4568 = vunpack.c.l.b16 %v1340
        %v4569 = vunpack.c.h.b16 %v1340
        %v4570 = vunpack.c.l.b16 %v1341
        %v4571 = vunpack.c.h.b16 %v1341
        %v4572 = vunpack.c.l.b16 %v1342
        %v4573 = vunpack.c.h.b16 %v1342
        %v4574 = vunpack.c.l.b16 %v1343
        %v4575 = vunpack.c.h.b16 %v1343
        %v4576 = vunpack.c.l.b16 %v1344
        %v4577 = vunpack.c.h.b16 %v1344
        %v4578 = vunpack.c.l.b16 %v1345
        %v4579 = vunpack.c.h.b16 %v1345
        %v4580 = vunpack.c.l.b16 %v1346
        %v4581 = vunpack.c.h.b16 %v1346
        %v4582 = vunpack.c.l.b16 %v1347
        %v4583 = vunpack.c.h.b16 %v1347
        %v4584 = vunpack.c.l.b16 %v1348
        %v4585 = vunpack.c.h.b16 %v1348
        %v4586 = vunpack.c.l.b16 %v1349
        %v4587 = vunpack.c.h.b16 %v1349
        %v4588 = vunpack.c.l.b16 %v1350
        %v4589 = vunpack.c.h.b16 %v1350
        %v4590 = vunpack.c.l.b16 %v1351
        %v4591 = vunpack.c.h.b16 %v1351
        %v4592 = vunpack.c.l.b16 %v1352
        %v4593 = vunpack.c.h.b16 %v1352
        %v4594 = vunpack.c.l.b16 %v1353
        %v4595 = vunpack.c.h.b16 %v1353
        %v4596 = vunpack.c.l.b16 %v1354
        %v4597 = vunpack.c.h.b16 %v1354
        %v4598 = vunpack.c.l.b16 %v1355
        %v4599 = vunpack.c.h.b16 %v1355
        %v4600 = vunpack.c.l.b16 %v1356
        %v4601 = vunpack.c.h.b16 %v1356
        %v4602 = vunpack.c.l.b16 %v1357
        %v4603 = vunpack.c.h.b16 %v1357
        %v4604 = vunpack.c.l.b16 %v1358
        %v4605 = vunpack.c.h.b16 %v1358
        %v4606 = vunpack.c.l.b16 %v1359
        %v4607 = vunpack.c.h.b16 %v1359
        %v4608 = vunpack.c.l.b16 %v1360
        %v4609 = vunpack.c.h.b16 %v1360
        %v4610 = vunpack.c.l.b16 %v1361
        %v4611 = vunpack.c.h.b16 %v1361
        %v4612 = vunpack.c.l.b16 %v1362
        %v4613 = vunpack.c.h.b16 %v1362
        %v4614 = vunpack.c.l.b16 %v1363
        %v4615 = vunpack.c.h.b16 %v1363
        %v4616 = vunpack.c.l.b16 %v1364
        %v4617 = vunpack.c.h.b16 %v1364
        %v4618 = vunpack.c.l.b16 %v1365
        %v4619 = vunpack.c.h.b16 %v1365
        %v4620 = vunpack.c.l.b16 %v1366
        %v4621 = vunpack.c.h.b16 %v1366
        %v4622 = vunpack.c.l.b16 %v1367
        %v4623 = vunpack.c.h.b16 %v1367
        %v4624 = vunpack.c.l.b16 %v1368
        %v4625 = vunpack.c.h.b16 %v1368
        %v4626 = vunpack.c.l.b16 %v1369
        %v4627 = vunpack.c.h.b16 %v1369
        %v4628 = vunpack.c.l.b16 %v1370
        %v4629 = vunpack.c.h.b16 %v1370
        %v4630 = vunpack.c.l.b16 %v1371
        %v4631 = vunpack.c.h.b16 %v1371
        %v4632 = vunpack.c.l.b16 %v1372
        %v4633 = vunpack.c.h.b16 %v1372
        %v4634 = vunpack.c.l.b16 %v1373
        %v4635 = vunpack.c.h.b16 %v1373
        %v4636 = vunpack.c.l.b16 %v1374
        %v4637 = vunpack.c.h.b16 %v1374
        %v4638 = vunpack.c.l.b16 %v1375
        %v4639 = vunpack.c.h.b16 %v1375
        %v4640 = vunpack.c.l.b16 %v1376
        %v4641 = vunpack.c.h.b16 %v1376
        %v4642 = vunpack.c.l.b16 %v1377
        %v4643 = vunpack.c.h.b16 %v1377
        %v4644 = vunpack.c.l.b16 %v1378
        %v4645 = vunpack.c.h.b16 %v1378
        %v4646 = vunpack.c.l.b16 %v1379
        %v4647 = vunpack.c.h.b16 %v1379
        %v4648 = vunpack.c.l.b16 %v1380
        %v4649 = vunpack.c.h.b16 %v1380
        %v4650 = vunpack.c.l.b16 %v1381
        %v4651 = vunpack.c.h.b16 %v1381
        %v4652 = vunpack.c.l.b16 %v1382
        %v4653 = vunpack.c.h.b16 %v1382
        %v4654 = vunpack.c.l.b16 %v1383
        %v4655 = vunpack.c.h.b16 %v1383
        %v4656 = vunpack.c.l.b16 %v1384
        %v4657 = vunpack.c.h.b16 %v1384
        %v4658 = vunpack.c.l.b16 %v1385
        %v4659 = vunpack.c.h.b16 %v1385
        %v4660 = vunpack.c.l.b16 %v1386
        %v4661 = vunpack.c.h.b16 %v1386
        %v4662 = vunpack.c.l.b16 %v1387
        %v4663 = vunpack.c.h.b16 %v1387
        %v4664 = vunpack.c.l.b16 %v1388
        %v4665 = vunpack.c.h.b16 %v1388
        %v4666 = vunpack.c.l.b16 %v1389
        %v4667 = vunpack.c.h.b16 %v1389
        %v4668 = vunpack.c.l.b16 %v1390
        %v4669 = vunpack.c.h.b16 %v1390
        %v4670 = vunpack.c.l.b16 %v1391
        %v4671 = vunpack.c.h.b16 %v1391
        %v4672 = vunpack.c.l.b16 %v1392
        %v4673 = vunpack.c.h.b16 %v1392
        %v4674 = vunpack.c.l.b16 %v1393
        %v4675 = vunpack.c.h.b16 %v1393
        %v4676 = vunpack.c.l.b16 %v1394
        %v4677 = vunpack.c.h.b16 %v1394
        %v4678 = vunpack.c.l.b16 %v1395
        %v4679 = vunpack.c.h.b16 %v1395
        %v4680 = vunpack.c.l.b16 %v1396
        %v4681 = vunpack.c.h.b16 %v1396
        %v4682 = vunpack.c.l.b16 %v1397
        %v4683 = vunpack.c.h.b16 %v1397
        %v4684 = vunpack.c.l.b16 %v1398
        %v4685 = vunpack.c.h.b16 %v1398
        %v4686 = vunpack.c.l.b16 %v1399
        %v4687 = vunpack.c.h.b16 %v1399
        %v4688 = vunpack.c.l.b16 %v1400
        %v4689 = vunpack.c.h.b16 %v1400
        %v4690 = vunpack.c.l.b16 %v1401
        %v4691 = vunpack.c.h.b16 %v1401
        %v4692 = vunpack.c.l.b16 %v1402
        %v4693 = vunpack.c.h.b16 %v1402
        %v4694 = vunpack.c.l.b16 %v1403
        %v4695 = vunpack.c.h.b16 %v1403
        %v4696 = vunpack.c.l.b16 %v1404
        %v4697 = vunpack.c.h.b16 %v1404
        %v4698 = vunpack.c.l.b16 %v1405
        %v4699 = vunpack.c.h.b16 %v1405
        %v4700 = vunpack.c.l.b16 %v1406
        %v4701 = vunpack.c.h.b16 %v1406
        %v4702 = vunpack.c.l.b16 %v1407
        %v4703 = vunpack.c.h.b16 %v1407
        %v4704 = vunpack.c.l.b16 %v1408
        %v4705 = vunpack.c.h.b16 %v1408
        %v4706 = vunpack.c.l.b16 %v1409
        %v4707 = vunpack.c.h.b16 %v1409
        %v4708 = vunpack.c.l.b16 %v1410
        %v4709 = vunpack.c.h.b16 %v1410
        %v4710 = vunpack.c.l.b16 %v1411
        %v4711 = vunpack.c.h.b16 %v1411
        %v4712 = vunpack.c.l.b16 %v1412
        %v4713 = vunpack.c.h.b16 %v1412
        %v4714 = vunpack.c.l.b16 %v1413
        %v4715 = vunpack.c.h.b16 %v1413
        %v4716 = vunpack.c.l.b16 %v1414
        %v4717 = vunpack.c.h.b16 %v1414
        %v4718 = vunpack.c.l.b16 %v1415
        %v4719 = vunpack.c.h.b16 %v1415
        %v4720 = vunpack.c.l.b16 %v1416
        %v4721 = vunpack.c.h.b16 %v1416
        %v4722 = vunpack.c.l.b16 %v1417
        %v4723 = vunpack.c.h.b16 %v1417
        %v4724 = vunpack.c.l.b16 %v1418
        %v4725 = vunpack.c.h.b16 %v1418
        %v4726 = vunpack.c.l.b16 %v1419
        %v4727 = vunpack.c.h.b16 %v1419
        %v4728 = vunpack.c.l.b16 %v1420
        %v4729 = vunpack.c.h.b16 %v1420
        %v4730 = vunpack.c.l.b16 %v1421
        %v4731 = vunpack.c.h.b16 %v1421
        %v4732 = vunpack.c.l.b16 %v1422
        %v4733 = vunpack.c.h.b16 %v1422
        %v4734 = vunpack.c.l.b16 %v1423
        %v4735 = vunpack.c.h.b16 %v1423
        %v4736 = vunpack.c.l.b16 %v1424
        %v4737 = vunpack.c.h.b16 %v1424
        %v4738 = vunpack.c.l.b16 %v1425
        %v4739 = vunpack.c.h.b16 %v1425
        %v4740 = vunpack.c.l.b16 %v1426
        %v4741 = vunpack.c.h.b16 %v1426
        %v4742 = vunpack.c.l.b16 %v1427
        %v4743 = vunpack.c.h.b16 %v1427
        %v4744 = vunpack.c.l.b16 %v1428
        %v4745 = vunpack.c.h.b16 %v1428
        %v4746 = vunpack.c.l.b16 %v1429
        %v4747 = vunpack.c.h.b16 %v1429
        %v4748 = vunpack.c.l.b16 %v1430
        %v4749 = vunpack.c.h.b16 %v1430
        %v4750 = vunpack.c.l.b16 %v1431
        %v4751 = vunpack.c.h.b16 %v1431
        %v4752 = vunpack.c.l.b16 %v1432
        %v4753 = vunpack.c.h.b16 %v1432
        %v4754 = vunpack.c.l.b16 %v1433
        %v4755 = vunpack.c.h.b16 %v1433
        %v4756 = vunpack.c.l.b16 %v1434
        %v4757 = vunpack.c.h.b16 %v1434
        %v4758 = vunpack.c.l.b16 %v1435
        %v4759 = vunpack.c.h.b16 %v1435
        %v4760 = vunpack.c.l.b16 %v1436
        %v4761 = vunpack.c.h.b16 %v1436
        %v4762 = vunpack.c.l.b16 %v1437
        %v4763 = vunpack.c.h.b16 %v1437
        %v4764 = vunpack.c.l.b16 %v1438
        %v4765 = vunpack.c.h.b16 %v1438
        %v4766 = vunpack.c.l.b16 %v1439
        %v4767 = vunpack.c.h.b16 %v1439
        %v4768 = vunpack.c.l.b16 %v1440
        %v4769 = vunpack.c.h.b16 %v1440
        %v4770 = vunpack.c.l.b16 %v1441
        %v4771 = vunpack.c.h.b16 %v1441
        %v4772 = vunpack.c.l.b16 %v1442
        %v4773 = vunpack.c.h.b16 %v1442
        %v4774 = vunpack.c.l.b16 %v1443
        %v4775 = vunpack.c.h.b16 %v1443
        %v4776 = vunpack.c.l.b16 %v1444
        %v4777 = vunpack.c.h.b16 %v1444
        %v4778 = vunpack.c.l.b16 %v1445
        %v4779 = vunpack.c.h.b16 %v1445
        %v4780 = vunpack.c.l.b16 %v1446
        %v4781 = vunpack.c.h.b16 %v1446
        %v4782 = vunpack.c.l.b16 %v1447
        %v4783 = vunpack.c.h.b16 %v1447
        %v4784 = vunpack.c.l.b16 %v1448
        %v4785 = vunpack.c.h.b16 %v1448
        %v4786 = vunpack.c.l.b16 %v1449
        %v4787 = vunpack.c.h.b16 %v1449
        %v4788 = vunpack.c.l.b16 %v1450
        %v4789 = vunpack.c.h.b16 %v1450
        %v4790 = vunpack.c.l.b16 %v1451
        %v4791 = vunpack.c.h.b16 %v1451
        %v4792 = vunpack.c.l.b16 %v1452
        %v4793 = vunpack.c.h.b16 %v1452
        %v4794 = vunpack.c.l.b16 %v1453
        %v4795 = vunpack.c.h.b16 %v1453
        %v4796 = vunpack.c.l.b16 %v1454
        %v4797 = vunpack.c.h.b16 %v1454
        %v4798 = vunpack.c.l.b16 %v1455
        %v4799 = vunpack.c.h.b16 %v1455
        %v4800 = vunpack.c.l.b16 %v1456
        %v4801 = vunpack.c.h.b16 %v1456
        %v4802 = vunpack.c.l.b16 %v1457
        %v4803 = vunpack.c.h.b16 %v1457
        %v4804 = vunpack.c.l.b16 %v1458
        %v4805 = vunpack.c.h.b16 %v1458
        %v4806 = vunpack.c.l.b16 %v1459
        %v4807 = vunpack.c.h.b16 %v1459
        %v4808 = vunpack.c.l.b16 %v1460
        %v4809 = vunpack.c.h.b16 %v1460
        %v4810 = vunpack.c.l.b16 %v1461
        %v4811 = vunpack.c.h.b16 %v1461
        %v4812 = vunpack.c.l.b16 %v1462
        %v4813 = vunpack.c.h.b16 %v1462
        %v4814 = vunpack.c.l.b16 %v1463
        %v4815 = vunpack.c.h.b16 %v1463
        %v4816 = vunpack.c.l.b16 %v1464
        %v4817 = vunpack.c.h.b16 %v1464
        %v4818 = vunpack.c.l.b16 %v1465
        %v4819 = vunpack.c.h.b16 %v1465
        %v4820 = vunpack.c.l.b16 %v1466
        %v4821 = vunpack.c.h.b16 %v1466
        %v4822 = vunpack.c.l.b16 %v1467
        %v4823 = vunpack.c.h.b16 %v1467
        %v4824 = vunpack.c.l.b16 %v1468
        %v4825 = vunpack.c.h.b16 %v1468
        %v4826 = vunpack.c.l.b16 %v1469
        %v4827 = vunpack.c.h.b16 %v1469
        %v4828 = vunpack.c.l.b16 %v1470
        %v4829 = vunpack.c.h.b16 %v1470
        %v4830 = vunpack.c.l.b16 %v1471
        %v4831 = vunpack.c.h.b16 %v1471
        %v4832 = vunpack.c.l.b16 %v1472
        %v4833 = vunpack.c.h.b16 %v1472
        %v4834 = vunpack.c.l.b16 %v1473
        %v4835 = vunpack.c.h.b16 %v1473
        %v4836 = vunpack.c.l.b16 %v1474
        %v4837 = vunpack.c.h.b16 %v1474
        %v4838 = vunpack.c.l.b16 %v1475
        %v4839 = vunpack.c.h.b16 %v1475
        %v4840 = vunpack.c.l.b16 %v1476
        %v4841 = vunpack.c.h.b16 %v1476
        %v4842 = vunpack.c.l.b16 %v1477
        %v4843 = vunpack.c.h.b16 %v1477
        %v4844 = vunpack.c.l.b16 %v1478
        %v4845 = vunpack.c.h.b16 %v1478
        %v4846 = vunpack.c.l.b16 %v1479
        %v4847 = vunpack.c.h.b16 %v1479
        %v4848 = vunpack.c.l.b16 %v1480
        %v4849 = vunpack.c.h.b16 %v1480
        %v4850 = vunpack.c.l.b16 %v1481
        %v4851 = vunpack.c.h.b16 %v1481
        %v4852 = vunpack.c.l.b16 %v1482
        %v4853 = vunpack.c.h.b16 %v1482
        %v4854 = vunpack.c.l.b16 %v1483
        %v4855 = vunpack.c.h.b16 %v1483
        %v4856 = vunpack.c.l.b16 %v1484
        %v4857 = vunpack.c.h.b16 %v1484
        %v4858 = vunpack.c.l.b16 %v1485
        %v4859 = vunpack.c.h.b16 %v1485
        %v4860 = vunpack.c.l.b16 %v1486
        %v4861 = vunpack.c.h.b16 %v1486
        %v4862 = vunpack.c.l.b16 %v1487
        %v4863 = vunpack.c.h.b16 %v1487
        %v4864 = vunpack.c.l.b16 %v1488
        %v4865 = vunpack.c.h.b16 %v1488
        %v4866 = vunpack.c.l.b16 %v1489
        %v4867 = vunpack.c.h.b16 %v1489
        %v4868 = vunpack.c.l.b16 %v1490
        %v4869 = vunpack.c.h.b16 %v1490
        %v4870 = vunpack.c.l.b16 %v1491
        %v4871 = vunpack.c.h.b16 %v1491
        %v4872 = vunpack.c.l.b16 %v1492
        %v4873 = vunpack.c.h.b16 %v1492
        %v4874 = vunpack.c.l.b16 %v1493
        %v4875 = vunpack.c.h.b16 %v1493
        %v4876 = vunpack.c.l.b16 %v1494
        %v4877 = vunpack.c.h.b16 %v1494
        %v4878 = vunpack.c.l.b16 %v1495
        %v4879 = vunpack.c.h.b16 %v1495
        %v4880 = vunpack.c.l.b16 %v1496
        %v4881 = vunpack.c.h.b16 %v1496
        %v4882 = vunpack.c.l.b16 %v1497
        %v4883 = vunpack.c.h.b16 %v1497
        %v4884 = vunpack.c.l.b16 %v1498
        %v4885 = vunpack.c.h.b16 %v1498
        %v4886 = vunpack.c.l.b16 %v1499
        %v4887 = vunpack.c.h.b16 %v1499
        %v4888 = vunpack.c.l.b16 %v1500
        %v4889 = vunpack.c.h.b16 %v1500
        %v4890 = vunpack.c.l.b16 %v1501
        %v4891 = vunpack.c.h.b16 %v1501
        %v4892 = vunpack.c.l.b16 %v1502
        %v4893 = vunpack.c.h.b16 %v1502
        %v4894 = vunpack.c.l.b16 %v1503
        %v4895 = vunpack.c.h.b16 %v1503
        %v4896 = vunpack.c.l.b16 %v1504
        %v4897 = vunpack.c.h.b16 %v1504
        %v4898 = vunpack.c.l.b16 %v1505
        %v4899 = vunpack.c.h.b16 %v1505
        %v4900 = vunpack.c.l.b16 %v1506
        %v4901 = vunpack.c.h.b16 %v1506
        %v4902 = vunpack.c.l.b16 %v1507
        %v4903 = vunpack.c.h.b16 %v1507
        %v4904 = vunpack.c.l.b16 %v1508
        %v4905 = vunpack.c.h.b16 %v1508
        %v4906 = vunpack.c.l.b16 %v1509
        %v4907 = vunpack.c.h.b16 %v1509
        %v4908 = vunpack.c.l.b16 %v1510
        %v4909 = vunpack.c.h.b16 %v1510
        %v4910 = vunpack.c.l.b16 %v1511
        %v4911 = vunpack.c.h.b16 %v1511
        %v4912 = vunpack.c.l.b16 %v1512
        %v4913 = vunpack.c.h.b16 %v1512
        %v4914 = vunpack.c.l.b16 %v1513
        %v4915 = vunpack.c.h.b16 %v1513
        %v4916 = vunpack.c.l.b16 %v1514
        %v4917 = vunpack.c.h.b16 %v1514
        %v4918 = vunpack.c.l.b16 %v1515
        %v4919 = vunpack.c.h.b16 %v1515
        %v4920 = vunpack.c.l.b16 %v1516
        %v4921 = vunpack.c.h.b16 %v1516
        %v4922 = vunpack.c.l.b16 %v1517
        %v4923 = vunpack.c.h.b16 %v1517
        %v4924 = vunpack.c.l.b16 %v1518
        %v4925 = vunpack.c.h.b16 %v1518
        %v4926 = vunpack.c.l.b16 %v1519
        %v4927 = vunpack.c.h.b16 %v1519
        %v4928 = vunpack.c.l.b16 %v1520
        %v4929 = vunpack.c.h.b16 %v1520
        %v4930 = vunpack.c.l.b16 %v1521
        %v4931 = vunpack.c.h.b16 %v1521
        %v4932 = vunpack.c.l.b16 %v1522
        %v4933 = vunpack.c.h.b16 %v1522
        %v4934 = vunpack.c.l.b16 %v1523
        %v4935 = vunpack.c.h.b16 %v1523
        %v4936 = vunpack.c.l.b16 %v1524
        %v4937 = vunpack.c.h.b16 %v1524
        %v4938 = vunpack.c.l.b16 %v1525
        %v4939 = vunpack.c.h.b16 %v1525
        %v4940 = vunpack.c.l.b16 %v1526
        %v4941 = vunpack.c.h.b16 %v1526
        %v4942 = vunpack.c.l.b16 %v1527
        %v4943 = vunpack.c.h.b16 %v1527
        %v4944 = vunpack.c.l.b16 %v1528
        %v4945 = vunpack.c.h.b16 %v1528
        %v4946 = vunpack.c.l.b16 %v1529
        %v4947 = vunpack.c.h.b16 %v1529
        %v4948 = vunpack.c.l.b16 %v1530
        %v4949 = vunpack.c.h.b16 %v1530
        %v4950 = vunpack.c.l.b16 %v1531
        %v4951 = vunpack.c.h.b16 %v1531
        %v4952 = vunpack.c.l.b16 %v1532
        %v4953 = vunpack.c.h.b16 %v1532
        %v4954 = vunpack.c.l.b16 %v1533
        %v4955 = vunpack.c.h.b16 %v1533
        %v4956 = vunpack.c.l.b16 %v1534
        %v4957 = vunpack.c.h.b16 %v1534
        %v4958 = vunpack.c.l.b16 %v1535
        %v4959 = vunpack.c.h.b16 %v1535
        %v4960 = vunpack.c.l.b16 %v1536
        %v4961 = vunpack.c.h.b16 %v1536
        %v4962 = vunpack.c.l.b16 %v1537
        %v4963 = vunpack.c.h.b16 %v1537
        %v4964 = vunpack.c.l.b16 %v1538
        %v4965 = vunpack.c.h.b16 %v1538
        %v4966 = vunpack.c.l.b16 %v1539
        %v4967 = vunpack.c.h.b16 %v1539
        %v4968 = vunpack.c.l.b16 %v1540
        %v4969 = vunpack.c.h.b16 %v1540
        %v4970 = vunpack.c.l.b16 %v1541
        %v4971 = vunpack.c.h.b16 %v1541
        %v4972 = vunpack.c.l.b16 %v1542
        %v4973 = vunpack.c.h.b16 %v1542
        %v4974 = vunpack.c.l.b16 %v1543
        %v4975 = vunpack.c.h.b16 %v1543
        %v4976 = vunpack.c.l.b16 %v1544
        %v4977 = vunpack.c.h.b16 %v1544
        %v4978 = vunpack.c.l.b16 %v1545
        %v4979 = vunpack.c.h.b16 %v1545
        %v4980 = vunpack.c.l.b16 %v1546
        %v4981 = vunpack.c.h.b16 %v1546
        %v4982 = vunpack.c.l.b16 %v1547
        %v4983 = vunpack.c.h.b16 %v1547
        %v4984 = vunpack.c.l.b16 %v1548
        %v4985 = vunpack.c.h.b16 %v1548
        %v4986 = vunpack.c.l.b16 %v1549
        %v4987 = vunpack.c.h.b16 %v1549
        %v4988 = vunpack.c.l.b16 %v1550
        %v4989 = vunpack.c.h.b16 %v1550
        %v4990 = vunpack.c.l.b16 %v1551
        %v4991 = vunpack.c.h.b16 %v1551
        %v4992 = vunpack.c.l.b16 %v1552
        %v4993 = vunpack.c.h.b16 %v1552
        %v4994 = vunpack.c.l.b16 %v1553
        %v4995 = vunpack.c.h.b16 %v1553
        %v4996 = vunpack.c.l.b16 %v1554
        %v4997 = vunpack.c.h.b16 %v1554
        %v4998 = vunpack.c.l.b16 %v1555
        %v4999 = vunpack.c.h.b16 %v1555
        %v5000 = vunpack.c.l.b16 %v1556
        %v5001 = vunpack.c.h.b16 %v1556
        %v5002 = vunpack.c.l.b16 %v1557
        %v5003 = vunpack.c.h.b16 %v1557
        %v5004 = vunpack.c.l.b16 %v1558
        %v5005 = vunpack.c.h.b16 %v1558
        %v5006 = vunpack.c.l.b16 %v1559
        %v5007 = vunpack.c.h.b16 %v1559
        %v5008 = vunpack.c.l.b16 %v1560
        %v5009 = vunpack.c.h.b16 %v1560
        %v5010 = vunpack.c.l.b16 %v1561
        %v5011 = vunpack.c.h.b16 %v1561
        %v5012 = vunpack.c.l.b16 %v1562
        %v5013 = vunpack.c.h.b16 %v1562
        %v5014 = vunpack.c.l.b16 %v1563
        %v5015 = vunpack.c.h.b16 %v1563
        %v5016 = vunpack.c.l.b16 %v1564
        %v5017 = vunpack.c.h.b16 %v1564
        %v5018 = vunpack.c.l.b16 %v1565
        %v5019 = vunpack.c.h.b16 %v1565
        %v5020 = vunpack.c.l.b16 %v1566
        %v5021 = vunpack.c.h.b16 %v1566
        %v5022 = vunpack.c.l.b16 %v1567
        %v5023 = vunpack.c.h.b16 %v1567
        %v5024 = vunpack.c.l.b16 %v1568
        %v5025 = vunpack.c.h.b16 %v1568
        %v5026 = vunpack.c.l.b16 %v1569
        %v5027 = vunpack.c.h.b16 %v1569
        %v5028 = vunpack.c.l.b16 %v1570
        %v5029 = vunpack.c.h.b16 %v1570
        %v5030 = vunpack.c.l.b16 %v1571
        %v5031 = vunpack.c.h.b16 %v1571
        %v5032 = vunpack.c.l.b16 %v1572
        %v5033 = vunpack.c.h.b16 %v1572
        %v5034 = vunpack.c.l.b16 %v1573
        %v5035 = vunpack.c.h.b16 %v1573
        %v5036 = vunpack.c.l.b16 %v1574
        %v5037 = vunpack.c.h.b16 %v1574
        %v5038 = vunpack.c.l.b16 %v1575
        %v5039 = vunpack.c.h.b16 %v1575
        %v5040 = vunpack.c.l.b16 %v1576
        %v5041 = vunpack.c.h.b16 %v1576
        %v5042 = vunpack.c.l.b16 %v1577
        %v5043 = vunpack.c.h.b16 %v1577
        %v5044 = vunpack.c.l.b16 %v1578
        %v5045 = vunpack.c.h.b16 %v1578
        %v5046 = vunpack.c.l.b16 %v1579
        %v5047 = vunpack.c.h.b16 %v1579
        %v5048 = vunpack.c.l.b16 %v1580
        %v5049 = vunpack.c.h.b16 %v1580
        %v5050 = vunpack.c.l.b16 %v1581
        %v5051 = vunpack.c.h.b16 %v1581
        %v5052 = vunpack.c.l.b16 %v1582
        %v5053 = vunpack.c.h.b16 %v1582
        %v5054 = vunpack.c.l.b16 %v1583
        %v5055 = vunpack.c.h.b16 %v1583
        %v5056 = vunpack.c.l.b16 %v1584
        %v5057 = vunpack.c.h.b16 %v1584
        %v5058 = vunpack.c.l.b16 %v1585
        %v5059 = vunpack.c.h.b16 %v1585
        %v5060 = vunpack.c.l.b16 %v1586
        %v5061 = vunpack.c.h.b16 %v1586
        %v5062 = vunpack.c.l.b16 %v1587
        %v5063 = vunpack.c.h.b16 %v1587
        %v5064 = vunpack.c.l.b16 %v1588
        %v5065 = vunpack.c.h.b16 %v1588
        %v5066 = vunpack.c.l.b16 %v1589
        %v5067 = vunpack.c.h.b16 %v1589
        %v5068 = vunpack.c.l.b16 %v1590
        %v5069 = vunpack.c.h.b16 %v1590
        %v5070 = vunpack.c.l.b16 %v1591
        %v5071 = vunpack.c.h.b16 %v1591
        %v5072 = vunpack.c.l.b16 %v1592
        %v5073 = vunpack.c.h.b16 %v1592
        %v5074 = vunpack.c.l.b16 %v1593
        %v5075 = vunpack.c.h.b16 %v1593
        %v5076 = vunpack.c.l.b16 %v1594
        %v5077 = vunpack.c.h.b16 %v1594
        %v5078 = vunpack.c.l.b16 %v1595
        %v5079 = vunpack.c.h.b16 %v1595
        %v5080 = vunpack.c.l.b16 %v1596
        %v5081 = vunpack.c.h.b16 %v1596
        %v5082 = vunpack.c.l.b16 %v1597
        %v5083 = vunpack.c.h.b16 %v1597
        %v5084 = vunpack.c.l.b16 %v1598
        %v5085 = vunpack.c.h.b16 %v1598
        %v5086 = vunpack.c.l.b16 %v1599
        %v5087 = vunpack.c.h.b16 %v1599
        %v5088 = vunpack.c.l.b16 %v1600
        %v5089 = vunpack.c.h.b16 %v1600
        %v5090 = vunpack.c.l.b16 %v1601
        %v5091 = vunpack.c.h.b16 %v1601
        %v5092 = vunpack.c.l.b16 %v1602
        %v5093 = vunpack.c.h.b16 %v1602
        %v5094 = vunpack.c.l.b16 %v1603
        %v5095 = vunpack.c.h.b16 %v1603
        %v5096 = vunpack.c.l.b16 %v1604
        %v5097 = vunpack.c.h.b16 %v1604
        %v5098 = vunpack.c.l.b16 %v1605
        %v5099 = vunpack.c.h.b16 %v1605
        %v5100 = vunpack.c.l.b16 %v1606
        %v5101 = vunpack.c.h.b16 %v1606
        %v5102 = vunpack.c.l.b16 %v1607
        %v5103 = vunpack.c.h.b16 %v1607
        %v5104 = vunpack.c.l.b16 %v1608
        %v5105 = vunpack.c.h.b16 %v1608
        %v5106 = vunpack.c.l.b16 %v1609
        %v5107 = vunpack.c.h.b16 %v1609
        %v5108 = vunpack.c.l.b16 %v1610
        %v5109 = vunpack.c.h.b16 %v1610
        %v5110 = vunpack.c.l.b16 %v1611
        %v5111 = vunpack.c.h.b16 %v1611
        %v5112 = vunpack.c.l.b16 %v1612
        %v5113 = vunpack.c.h.b16 %v1612
        %v5114 = vunpack.c.l.b16 %v1613
        %v5115 = vunpack.c.h.b16 %v1613
        %v5116 = vunpack.c.l.b16 %v1614
        %v5117 = vunpack.c.h.b16 %v1614
        %v5118 = vunpack.c.l.b16 %v1615
        %v5119 = vunpack.c.h.b16 %v1615
        %v5120 = vunpack.c.l.b16 %v1616
        %v5121 = vunpack.c.h.b16 %v1616
        %v5122 = vunpack.c.l.b16 %v1617
        %v5123 = vunpack.c.h.b16 %v1617
        %v5124 = vunpack.c.l.b16 %v1618
        %v5125 = vunpack.c.h.b16 %v1618
        %v5126 = vunpack.c.l.b16 %v1619
        %v5127 = vunpack.c.h.b16 %v1619
        %v5128 = vunpack.c.l.b16 %v1620
        %v5129 = vunpack.c.h.b16 %v1620
        %v5130 = vunpack.c.l.b16 %v1621
        %v5131 = vunpack.c.h.b16 %v1621
        %v5132 = vunpack.c.l.b16 %v1622
        %v5133 = vunpack.c.h.b16 %v1622
        %v5134 = vunpack.c.l.b16 %v1623
        %v5135 = vunpack.c.h.b16 %v1623
        %v5136 = vunpack.c.l.b16 %v1624
        %v5137 = vunpack.c.h.b16 %v1624
        %v5138 = vunpack.c.l.b16 %v1625
        %v5139 = vunpack.c.h.b16 %v1625
        %v5140 = vunpack.c.l.b16 %v1626
        %v5141 = vunpack.c.h.b16 %v1626
        %v5142 = vunpack.c.l.b16 %v1627
        %v5143 = vunpack.c.h.b16 %v1627
        %v5144 = vunpack.c.l.b16 %v1628
        %v5145 = vunpack.c.h.b16 %v1628
        %v5146 = vunpack.c.l.b16 %v1629
        %v5147 = vunpack.c.h.b16 %v1629
        %v5148 = vunpack.c.l.b16 %v1630
        %v5149 = vunpack.c.h.b16 %v1630
        %v5150 = vunpack.c.l.b16 %v1631
        %v5151 = vunpack.c.h.b16 %v1631
        %v5152 = vunpack.c.l.b16 %v1632
        %v5153 = vunpack.c.h.b16 %v1632
        %v5154 = vunpack.c.l.b16 %v1633
        %v5155 = vunpack.c.h.b16 %v1633
        %v5156 = vunpack.c.l.b16 %v1634
        %v5157 = vunpack.c.h.b16 %v1634
        %v5158 = vunpack.c.l.b16 %v1635
        %v5159 = vunpack.c.h.b16 %v1635
        %v5160 = vunpack.c.l.b16 %v1636
        %v5161 = vunpack.c.h.b16 %v1636
        %v5162 = vunpack.c.l.b16 %v1637
        %v5163 = vunpack.c.h.b16 %v1637
        %v5164 = vunpack.c.l.b16 %v1638
        %v5165 = vunpack.c.h.b16 %v1638
        %v5166 = vunpack.c.l.b16 %v1639
        %v5167 = vunpack.c.h.b16 %v1639
        %v5168 = vunpack.c.l.b16 %v1640
        %v5169 = vunpack.c.h.b16 %v1640
        %v5170 = vunpack.c.l.b16 %v1641
        %v5171 = vunpack.c.h.b16 %v1641
        %v5172 = vunpack.c.l.b16 %v1642
        %v5173 = vunpack.c.h.b16 %v1642
        %v5174 = vunpack.c.l.b16 %v1643
        %v5175 = vunpack.c.h.b16 %v1643
        %v5176 = vunpack.c.l.b16 %v1644
        %v5177 = vunpack.c.h.b16 %v1644
        %v5178 = vunpack.c.l.b16 %v1645
        %v5179 = vunpack.c.h.b16 %v1645
        %v5180 = vunpack.c.l.b16 %v1646
        %v5181 = vunpack.c.h.b16 %v1646
        %v5182 = vunpack.c.l.b16 %v1647
        %v5183 = vunpack.c.h.b16 %v1647
        %v5184 = vunpack.c.l.b16 %v1648
        %v5185 = vunpack.c.h.b16 %v1648
        %v5186 = vunpack.c.l.b16 %v1649
        %v5187 = vunpack.c.h.b16 %v1649
        %v5188 = vunpack.c.l.b16 %v1650
        %v5189 = vunpack.c.h.b16 %v1650
        %v5190 = vunpack.c.l.b16 %v1651
        %v5191 = vunpack.c.h.b16 %v1651
        %v5192 = vunpack.c.l.b16 %v1652
        %v5193 = vunpack.c.h.b16 %v1652
        %v5194 = vunpack.c.l.b16 %v1653
        %v5195 = vunpack.c.h.b16 %v1653
        %v5196 = vunpack.c.l.b16 %v1654
        %v5197 = vunpack.c.h.b16 %v1654
        %v5198 = vunpack.c.l.b16 %v1655
        %v5199 = vunpack.c.h.b16 %v1655
        %v5200 = vunpack.c.l.b16 %v1656
        %v5201 = vunpack.c.h.b16 %v1656
        %v5202 = vunpack.c.l.b16 %v1657
        %v5203 = vunpack.c.h.b16 %v1657
        %v5204 = vunpack.c.l.b16 %v1658
        %v5205 = vunpack.c.h.b16 %v1658
        %v5206 = vunpack.c.l.b16 %v1659
        %v5207 = vunpack.c.h.b16 %v1659
        %v5208 = vunpack.c.l.b16 %v1660
        %v5209 = vunpack.c.h.b16 %v1660
        %v5210 = vunpack.c.l.b16 %v1661
        %v5211 = vunpack.c.h.b16 %v1661
        %v5212 = vunpack.c.l.b16 %v1662
        %v5213 = vunpack.c.h.b16 %v1662
        %v5214 = vunpack.c.l.b16 %v1663
        %v5215 = vunpack.c.h.b16 %v1663
        %v5216 = vunpack.c.l.b16 %v1664
        %v5217 = vunpack.c.h.b16 %v1664
        %v5218 = vunpack.c.l.b16 %v1665
        %v5219 = vunpack.c.h.b16 %v1665
        %v5220 = vunpack.c.l.b16 %v1666
        %v5221 = vunpack.c.h.b16 %v1666
        %v5222 = vunpack.c.l.b16 %v1667
        %v5223 = vunpack.c.h.b16 %v1667
        %v5224 = vunpack.c.l.b16 %v1668
        %v5225 = vunpack.c.h.b16 %v1668
        %v5226 = vunpack.c.l.b16 %v1669
        %v5227 = vunpack.c.h.b16 %v1669
        %v5228 = vunpack.c.l.b16 %v1670
        %v5229 = vunpack.c.h.b16 %v1670
        %v5230 = vunpack.c.l.b16 %v1671
        %v5231 = vunpack.c.h.b16 %v1671
        %v5232 = vunpack.c.l.b16 %v1672
        %v5233 = vunpack.c.h.b16 %v1672
        %v5234 = vunpack.c.l.b16 %v1673
        %v5235 = vunpack.c.h.b16 %v1673
        %v5236 = vunpack.c.l.b16 %v1674
        %v5237 = vunpack.c.h.b16 %v1674
        %v5238 = vunpack.c.l.b16 %v1675
        %v5239 = vunpack.c.h.b16 %v1675
        %v5240 = vunpack.c.l.b16 %v1676
        %v5241 = vunpack.c.h.b16 %v1676
        %v5242 = vunpack.c.l.b16 %v1677
        %v5243 = vunpack.c.h.b16 %v1677
        %v5244 = vunpack.c.l.b16 %v1678
        %v5245 = vunpack.c.h.b16 %v1678
        %v5246 = vunpack.c.l.b16 %v1679
        %v5247 = vunpack.c.h.b16 %v1679
        %v5248 = vunpack.c.l.b16 %v1680
        %v5249 = vunpack.c.h.b16 %v1680
        %v5250 = vunpack.c.l.b16 %v1681
        %v5251 = vunpack.c.h.b16 %v1681
        %v5252 = vunpack.c.l.b16 %v1682
        %v5253 = vunpack.c.h.b16 %v1682
        %v5254 = vunpack.c.l.b16 %v1683
        %v5255 = vunpack.c.h.b16 %v1683
        %v5256 = vunpack.c.l.b16 %v1684
        %v5257 = vunpack.c.h.b16 %v1684
        %v5258 = vunpack.c.l.b16 %v1685
        %v5259 = vunpack.c.h.b16 %v1685
        %v5260 = vunpack.c.l.b16 %v1686
        %v5261 = vunpack.c.h.b16 %v1686
        %v5262 = vunpack.c.l.b16 %v1687
        %v5263 = vunpack.c.h.b16 %v1687
        %v5264 = vunpack.c.l.b16 %v1688
        %v5265 = vunpack.c.h.b16 %v1688
        %v5266 = vunpack.c.l.b16 %v1689
        %v5267 = vunpack.c.h.b16 %v1689
        %v5268 = vunpack.c.l.b16 %v1690
        %v5269 = vunpack.c.h.b16 %v1690
        %v5270 = vunpack.c.l.b16 %v1691
        %v5271 = vunpack.c.h.b16 %v1691
        %v5272 = vunpack.c.l.b16 %v1692
        %v5273 = vunpack.c.h.b16 %v1692
        %v5274 = vunpack.c.l.b16 %v1693
        %v5275 = vunpack.c.h.b16 %v1693
        %v5276 = vunpack.c.l.b16 %v1694
        %v5277 = vunpack.c.h.b16 %v1694
        %v5278 = vunpack.c.l.b16 %v1695
        %v5279 = vunpack.c.h.b16 %v1695
        %v5280 = vunpack.c.l.b16 %v1696
        %v5281 = vunpack.c.h.b16 %v1696
        %v5282 = vunpack.c.l.b16 %v1697
        %v5283 = vunpack.c.h.b16 %v1697
        %v5284 = vunpack.c.l.b16 %v1698
        %v5285 = vunpack.c.h.b16 %v1698
        %v5286 = vunpack.c.l.b16 %v1699
        %v5287 = vunpack.c.h.b16 %v1699
        %v5288 = vunpack.c.l.b16 %v1700
        %v5289 = vunpack.c.h.b16 %v1700
        %v5290 = vunpack.c.l.b16 %v1701
        %v5291 = vunpack.c.h.b16 %v1701
        %v5292 = vunpack.c.l.b16 %v1702
        %v5293 = vunpack.c.h.b16 %v1702
        %v5294 = vunpack.c.l.b16 %v1703
        %v5295 = vunpack.c.h.b16 %v1703
        %v5296 = vunpack.c.l.b16 %v1704
        %v5297 = vunpack.c.h.b16 %v1704
        %v5298 = vunpack.c.l.b16 %v1705
        %v5299 = vunpack.c.h.b16 %v1705
        %v5300 = vunpack.c.l.b16 %v1706
        %v5301 = vunpack.c.h.b16 %v1706
        %v5302 = vunpack.c.l.b16 %v1707
        %v5303 = vunpack.c.h.b16 %v1707
        %v5304 = vunpack.c.l.b16 %v1708
        %v5305 = vunpack.c.h.b16 %v1708
        %v5306 = vunpack.c.l.b16 %v1709
        %v5307 = vunpack.c.h.b16 %v1709
        %v5308 = vunpack.c.l.b16 %v1710
        %v5309 = vunpack.c.h.b16 %v1710
        %v5310 = vunpack.c.l.b16 %v1711
        %v5311 = vunpack.c.h.b16 %v1711
        %v5312 = vunpack.c.l.b16 %v1712
        %v5313 = vunpack.c.h.b16 %v1712
        %v5314 = vunpack.c.l.b16 %v1713
        %v5315 = vunpack.c.h.b16 %v1713
        %v5316 = vunpack.c.l.b16 %v1714
        %v5317 = vunpack.c.h.b16 %v1714
        %v5318 = vunpack.c.l.b16 %v1715
        %v5319 = vunpack.c.h.b16 %v1715
        %v5320 = vunpack.c.l.b16 %v1716
        %v5321 = vunpack.c.h.b16 %v1716
        %v5322 = vunpack.c.l.b16 %v1717
        %v5323 = vunpack.c.h.b16 %v1717
        %v5324 = vunpack.c.l.b16 %v1718
        %v5325 = vunpack.c.h.b16 %v1718
        %v5326 = vunpack.c.l.b16 %v1719
        %v5327 = vunpack.c.h.b16 %v1719
        %v5328 = vunpack.c.l.b16 %v1720
        %v5329 = vunpack.c.h.b16 %v1720
        %v5330 = vunpack.c.l.b16 %v1721
        %v5331 = vunpack.c.h.b16 %v1721
        %v5332 = vunpack.c.l.b16 %v1722
        %v5333 = vunpack.c.h.b16 %v1722
        %v5334 = vunpack.c.l.b16 %v1723
        %v5335 = vunpack.c.h.b16 %v1723
        %v5336 = vunpack.c.l.b16 %v1724
        %v5337 = vunpack.c.h.b16 %v1724
        %v5338 = vunpack.c.l.b16 %v1725
        %v5339 = vunpack.c.h.b16 %v1725
        %v5340 = vunpack.c.l.b16 %v1726
        %v5341 = vunpack.c.h.b16 %v1726
        %v5342 = vunpack.c.l.b16 %v1727
        %v5343 = vunpack.c.h.b16 %v1727
        %v5344 = vunpack.c.l.b16 %v1728
        %v5345 = vunpack.c.h.b16 %v1728
        %v5346 = vunpack.c.l.b16 %v1729
        %v5347 = vunpack.c.h.b16 %v1729
        %v5348 = vunpack.c.l.b16 %v1730
        %v5349 = vunpack.c.h.b16 %v1730
        %v5350 = vunpack.c.l.b16 %v1731
        %v5351 = vunpack.c.h.b16 %v1731
        %v5352 = vunpack.c.l.b16 %v1732
        %v5353 = vunpack.c.h.b16 %v1732
        %v5354 = vunpack.c.l.b16 %v1733
        %v5355 = vunpack.c.h.b16 %v1733
        %v5356 = vunpack.c.l.b16 %v1734
        %v5357 = vunpack.c.h.b16 %v1734
        %v5358 = vunpack.c.l.b16 %v1735
        %v5359 = vunpack.c.h.b16 %v1735
        %v5360 = vunpack.c.l.b16 %v1736
        %v5361 = vunpack.c.h.b16 %v1736
        %v5362 = vunpack.c.l.b16 %v1737
        %v5363 = vunpack.c.h.b16 %v1737
        %v5364 = vunpack.c.l.b16 %v1738
        %v5365 = vunpack.c.h.b16 %v1738
        %v5366 = vunpack.c.l.b16 %v1739
        %v5367 = vunpack.c.h.b16 %v1739
        %v5368 = vunpack.c.l.b16 %v1740
        %v5369 = vunpack.c.h.b16 %v1740
        %v5370 = vunpack.c.l.b16 %v1741
        %v5371 = vunpack.c.h.b16 %v1741
        %v5372 = vunpack.c.l.b16 %v1742
        %v5373 = vunpack.c.h.b16 %v1742
        %v5374 = vunpack.c.l.b16 %v1743
        %v5375 = vunpack.c.h.b16 %v1743
        %v5376 = vunpack.c.l.b16 %v1744
        %v5377 = vunpack.c.h.b16 %v1744
        %v5378 = vunpack.c.l.b16 %v1745
        %v5379 = vunpack.c.h.b16 %v1745
        %v5380 = vunpack.c.l.b16 %v1746
        %v5381 = vunpack.c.h.b16 %v1746
        %v5382 = vunpack.c.l.b16 %v1747
        %v5383 = vunpack.c.h.b16 %v1747
        %v5384 = vunpack.c.l.b16 %v1748
        %v5385 = vunpack.c.h.b16 %v1748
        %v5386 = vunpack.c.l.b16 %v1749
        %v5387 = vunpack.c.h.b16 %v1749
        %v5388 = vunpack.c.l.b16 %v1750
        %v5389 = vunpack.c.h.b16 %v1750
        %v5390 = vunpack.c.l.b16 %v1751
        %v5391 = vunpack.c.h.b16 %v1751
        %v5392 = vunpack.c.l.b16 %v1752
        %v5393 = vunpack.c.h.b16 %v1752
        %v5394 = vunpack.c.l.b16 %v1753
        %v5395 = vunpack.c.h.b16 %v1753
        %v5396 = vunpack.c.l.b16 %v1754
        %v5397 = vunpack.c.h.b16 %v1754
        %v5398 = vunpack.c.l.b16 %v1755
        %v5399 = vunpack.c.h.b16 %v1755
        %v5400 = vunpack.c.l.b16 %v1756
        %v5401 = vunpack.c.h.b16 %v1756
        %v5402 = vunpack.c.l.b16 %v1757
        %v5403 = vunpack.c.h.b16 %v1757
        %v5404 = vunpack.c.l.b16 %v1758
        %v5405 = vunpack.c.h.b16 %v1758
        %v5406 = vunpack.c.l.b16 %v1759
        %v5407 = vunpack.c.h.b16 %v1759
        %v5408 = vunpack.c.l.b16 %v1760
        %v5409 = vunpack.c.h.b16 %v1760
        %v5410 = vunpack.c.l.b16 %v1761
        %v5411 = vunpack.c.h.b16 %v1761
        %v5412 = vunpack.c.l.b16 %v1762
        %v5413 = vunpack.c.h.b16 %v1762
        %v5414 = vunpack.c.l.b16 %v1763
        %v5415 = vunpack.c.h.b16 %v1763
        %v5416 = vunpack.c.l.b16 %v1764
        %v5417 = vunpack.c.h.b16 %v1764
        %v5418 = vunpack.c.l.b16 %v1765
        %v5419 = vunpack.c.h.b16 %v1765
        %v5420 = vunpack.c.l.b16 %v1766
        %v5421 = vunpack.c.h.b16 %v1766
        %v5422 = vunpack.c.l.b16 %v1767
        %v5423 = vunpack.c.h.b16 %v1767
        %v5424 = vunpack.c.l.b16 %v1768
        %v5425 = vunpack.c.h.b16 %v1768
        %v5426 = vunpack.c.l.b16 %v1769
        %v5427 = vunpack.c.h.b16 %v1769
        %v5428 = vunpack.c.l.b16 %v1770
        %v5429 = vunpack.c.h.b16 %v1770
        %v5430 = vunpack.c.l.b16 %v1771
        %v5431 = vunpack.c.h.b16 %v1771
        %v5432 = vunpack.c.l.b16 %v1772
        %v5433 = vunpack.c.h.b16 %v1772
        %v5434 = vunpack.c.l.b16 %v1773
        %v5435 = vunpack.c.h.b16 %v1773
        %v5436 = vunpack.c.l.b16 %v1774
        %v5437 = vunpack.c.h.b16 %v1774
        %v5438 = vunpack.c.l.b16 %v1775
        %v5439 = vunpack.c.h.b16 %v1775
        %v5440 = vunpack.c.l.b16 %v1776
        %v5441 = vunpack.c.h.b16 %v1776
        %v5442 = vunpack.c.l.b16 %v1777
        %v5443 = vunpack.c.h.b16 %v1777
        %v5444 = vunpack.c.l.b16 %v1778
        %v5445 = vunpack.c.h.b16 %v1778
        %v5446 = vunpack.c.l.b16 %v1779
        %v5447 = vunpack.c.h.b16 %v1779
        %v5448 = vunpack.c.l.b16 %v1780
        %v5449 = vunpack.c.h.b16 %v1780
        %v5450 = vunpack.c.l.b16 %v1781
        %v5451 = vunpack.c.h.b16 %v1781
        %v5452 = vunpack.c.l.b16 %v1782
        %v5453 = vunpack.c.h.b16 %v1782
        %v5454 = vunpack.c.l.b16 %v1783
        %v5455 = vunpack.c.h.b16 %v1783
        %v5456 = vunpack.c.l.b16 %v1784
        %v5457 = vunpack.c.h.b16 %v1784
        %v5458 = vunpack.c.l.b16 %v1785
        %v5459 = vunpack.c.h.b16 %v1785
        %v5460 = vunpack.c.l.b16 %v1786
        %v5461 = vunpack.c.h.b16 %v1786
        %v5462 = vunpack.c.l.b16 %v1787
        %v5463 = vunpack.c.h.b16 %v1787
        %v5464 = vunpack.c.l.b16 %v1788
        %v5465 = vunpack.c.h.b16 %v1788
        %v5466 = vunpack.c.l.b16 %v1789
        %v5467 = vunpack.c.h.b16 %v1789
        %v5468 = vunpack.c.l.b16 %v1790
        %v5469 = vunpack.c.h.b16 %v1790
        %v5470 = vunpack.c.l.b16 %v1791
        %v5471 = vunpack.c.h.b16 %v1791
        %v5472 = vunpack.c.l.b16 %v1792
        %v5473 = vunpack.c.h.b16 %v1792
        %v5474 = vunpack.c.l.b16 %v1793
        %v5475 = vunpack.c.h.b16 %v1793
        %v5476 = vunpack.c.l.b16 %v1794
        %v5477 = vunpack.c.h.b16 %v1794
        %v5478 = vunpack.c.l.b16 %v1795
        %v5479 = vunpack.c.h.b16 %v1795
        %v5480 = vunpack.c.l.b16 %v1796
        %v5481 = vunpack.c.h.b16 %v1796
        %v5482 = vunpack.c.l.b16 %v1797
        %v5483 = vunpack.c.h.b16 %v1797
        %v5484 = vunpack.c.l.b16 %v1798
        %v5485 = vunpack.c.h.b16 %v1798
        %v5486 = vunpack.c.l.b16 %v1799
        %v5487 = vunpack.c.h.b16 %v1799
        %v5488 = vunpack.c.l.b16 %v1800
        %v5489 = vunpack.c.h.b16 %v1800
        %v5490 = vunpack.c.l.b16 %v1801
        %v5491 = vunpack.c.h.b16 %v1801
        %v5492 = vunpack.c.l.b16 %v1802
        %v5493 = vunpack.c.h.b16 %v1802
        %v5494 = vunpack.c.l.b16 %v1803
        %v5495 = vunpack.c.h.b16 %v1803
        %v5496 = vunpack.c.l.b16 %v1804
        %v5497 = vunpack.c.h.b16 %v1804
        %v5498 = vunpack.c.l.b16 %v1805
        %v5499 = vunpack.c.h.b16 %v1805
        %v5500 = vunpack.c.l.b16 %v1806
        %v5501 = vunpack.c.h.b16 %v1806
        %v5502 = vunpack.c.l.b16 %v1807
        %v5503 = vunpack.c.h.b16 %v1807
        %v5504 = vunpack.c.l.b16 %v1808
        %v5505 = vunpack.c.h.b16 %v1808
        %v5506 = vunpack.c.l.b16 %v1809
        %v5507 = vunpack.c.h.b16 %v1809
        %v5508 = vunpack.c.l.b16 %v1810
        %v5509 = vunpack.c.h.b16 %v1810
        %v5510 = vunpack.c.l.b16 %v1811
        %v5511 = vunpack.c.h.b16 %v1811
        %v5512 = vunpack.c.l.b16 %v1812
        %v5513 = vunpack.c.h.b16 %v1812
        %v5514 = vunpack.c.l.b16 %v1813
        %v5515 = vunpack.c.h.b16 %v1813
        %v5516 = vunpack.c.l.b16 %v1814
        %v5517 = vunpack.c.h.b16 %v1814
        %v5518 = vunpack.c.l.b16 %v1815
        %v5519 = vunpack.c.h.b16 %v1815
        %v5520 = vunpack.c.l.b16 %v1816
        %v5521 = vunpack.c.h.b16 %v1816
        %v5522 = vunpack.c.l.b16 %v1817
        %v5523 = vunpack.c.h.b16 %v1817
        %v5524 = vunpack.c.l.b16 %v1818
        %v5525 = vunpack.c.h.b16 %v1818
        %v5526 = vunpack.c.l.b16 %v1819
        %v5527 = vunpack.c.h.b16 %v1819
        %v5528 = vunpack.c.l.b16 %v1820
        %v5529 = vunpack.c.h.b16 %v1820
        %v5530 = vunpack.c.l.b16 %v1821
        %v5531 = vunpack.c.h.b16 %v1821
        %v5532 = vunpack.c.l.b16 %v1822
        %v5533 = vunpack.c.h.b16 %v1822
        %v5534 = vunpack.c.l.b16 %v1823
        %v5535 = vunpack.c.h.b16 %v1823
        %v5536 = vunpack.c.l.b16 %v1824
        %v5537 = vunpack.c.h.b16 %v1824
        %v5538 = vunpack.c.l.b16 %v1825
        %v5539 = vunpack.c.h.b16 %v1825
        %v5540 = vunpack.c.l.b16 %v1826
        %v5541 = vunpack.c.h.b16 %v1826
        %v5542 = vunpack.c.l.b16 %v1827
        %v5543 = vunpack.c.h.b16 %v1827
        %v5544 = vunpack.c.l.b16 %v1828
        %v5545 = vunpack.c.h.b16 %v1828
        %v5546 = vunpack.c.l.b16 %v1829
        %v5547 = vunpack.c.h.b16 %v1829
        %v5548 = vunpack.c.l.b16 %v1830
        %v5549 = vunpack.c.h.b16 %v1830
        %v5550 = vunpack.c.l.b16 %v1831
        %v5551 = vunpack.c.h.b16 %v1831
        %v5552 = vunpack.c.l.b16 %v1832
        %v5553 = vunpack.c.h.b16 %v1832
        %v5554 = vunpack.c.l.b16 %v1833
        %v5555 = vunpack.c.h.b16 %v1833
        %v5556 = vunpack.c.l.b16 %v1834
        %v5557 = vunpack.c.h.b16 %v1834
        %v5558 = vunpack.c.l.b16 %v1835
        %v5559 = vunpack.c.h.b16 %v1835
        %v5560 = vunpack.c.l.b16 %v1836
        %v5561 = vunpack.c.h.b16 %v1836
        %v5562 = vunpack.c.l.b16 %v1837
        %v5563 = vunpack.c.h.b16 %v1837
        %v5564 = vunpack.c.l.b16 %v1838
        %v5565 = vunpack.c.h.b16 %v1838
        %v5566 = vunpack.c.l.b16 %v1839
        %v5567 = vunpack.c.h.b16 %v1839
        %v5568 = vunpack.c.l.b16 %v1840
        %v5569 = vunpack.c.h.b16 %v1840
        %v5570 = vunpack.c.l.b16 %v1841
        %v5571 = vunpack.c.h.b16 %v1841
        %v5572 = vunpack.c.l.b16 %v1842
        %v5573 = vunpack.c.h.b16 %v1842
        %v5574 = vunpack.c.l.b16 %v1843
        %v5575 = vunpack.c.h.b16 %v1843
        %v5576 = vunpack.c.l.b16 %v1844
        %v5577 = vunpack.c.h.b16 %v1844
        %v5578 = vunpack.c.l.b16 %v1845
        %v5579 = vunpack.c.h.b16 %v1845
        %v5580 = vunpack.c.l.b16 %v1846
        %v5581 = vunpack.c.h.b16 %v1846
        %v5582 = vunpack.c.l.b16 %v1847
        %v5583 = vunpack.c.h.b16 %v1847
        %v5584 = vunpack.c.l.b16 %v1848
        %v5585 = vunpack.c.h.b16 %v1848
        %v5586 = vunpack.c.l.b16 %v1849
        %v5587 = vunpack.c.h.b16 %v1849
        %v5588 = vunpack.c.l.b16 %v1850
        %v5589 = vunpack.c.h.b16 %v1850
        %v5590 = vunpack.c.l.b16 %v1851
        %v5591 = vunpack.c.h.b16 %v1851
        %v5592 = vunpack.c.l.b16 %v1852
        %v5593 = vunpack.c.h.b16 %v1852
        %v5594 = vunpack.c.l.b16 %v1853
        %v5595 = vunpack.c.h.b16 %v1853
        %v5596 = vunpack.c.l.b16 %v1854
        %v5597 = vunpack.c.h.b16 %v1854
        %v5598 = vunpack.c.l.b16 %v1855
        %v5599 = vunpack.c.h.b16 %v1855
        %v5600 = vunpack.c.l.b16 %v1856
        %v5601 = vunpack.c.h.b16 %v1856
        %v5602 = vunpack.c.l.b16 %v1857
        %v5603 = vunpack.c.h.b16 %v1857
        %v5604 = vunpack.c.l.b16 %v1858
        %v5605 = vunpack.c.h.b16 %v1858
        %v5606 = vunpack.c.l.b16 %v1859
        %v5607 = vunpack.c.h.b16 %v1859
        %v5608 = vunpack.c.l.b16 %v1860
        %v5609 = vunpack.c.h.b16 %v1860
        %v5610 = vunpack.c.l.b16 %v1861
        %v5611 = vunpack.c.h.b16 %v1861
        %v5612 = vunpack.c.l.b16 %v1862
        %v5613 = vunpack.c.h.b16 %v1862
        %v5614 = vunpack.c.l.b16 %v1863
        %v5615 = vunpack.c.h.b16 %v1863
        %v5616 = vunpack.c.l.b16 %v1864
        %v5617 = vunpack.c.h.b16 %v1864
        %v5618 = vunpack.c.l.b16 %v1865
        %v5619 = vunpack.c.h.b16 %v1865
        %v5620 = vunpack.c.l.b16 %v1866
        %v5621 = vunpack.c.h.b16 %v1866
        %v5622 = vunpack.c.l.b16 %v1867
        %v5623 = vunpack.c.h.b16 %v1867
        %v5624 = vunpack.c.l.b16 %v1868
        %v5625 = vunpack.c.h.b16 %v1868
        %v5626 = vunpack.c.l.b16 %v1869
        %v5627 = vunpack.c.h.b16 %v1869
        %v5628 = vunpack.c.l.b16 %v1870
        %v5629 = vunpack.c.h.b16 %v1870
        %v5630 = vunpack.c.l.b16 %v1871
        %v5631 = vunpack.c.h.b16 %v1871
        %v5632 = vunpack.c.l.b16 %v1872
        %v5633 = vunpack.c.h.b16 %v1872
        %v5634 = vunpack.c.l.b16 %v1873
        %v5635 = vunpack.c.h.b16 %v1873
        %v5636 = vunpack.c.l.b16 %v1874
        %v5637 = vunpack.c.h.b16 %v1874
        %v5638 = vunpack.c.l.b16 %v1875
        %v5639 = vunpack.c.h.b16 %v1875
        %v5640 = vunpack.c.l.b16 %v1876
        %v5641 = vunpack.c.h.b16 %v1876
        %v5642 = vunpack.c.l.b16 %v1877
        %v5643 = vunpack.c.h.b16 %v1877
        %v5644 = vunpack.c.l.b16 %v1878
        %v5645 = vunpack.c.h.b16 %v1878
        %v5646 = vunpack.c.l.b16 %v1879
        %v5647 = vunpack.c.h.b16 %v1879
        %v5648 = vunpack.c.l.b16 %v1880
        %v5649 = vunpack.c.h.b16 %v1880
        %v5650 = vunpack.c.l.b16 %v1881
        %v5651 = vunpack.c.h.b16 %v1881
        %v5652 = vunpack.c.l.b16 %v1882
        %v5653 = vunpack.c.h.b16 %v1882
        %v5654 = vunpack.c.l.b16 %v1883
        %v5655 = vunpack.c.h.b16 %v1883
        %v5656 = vunpack.c.l.b16 %v1884
        %v5657 = vunpack.c.h.b16 %v1884
        %v5658 = vunpack.c.l.b16 %v1885
        %v5659 = vunpack.c.h.b16 %v1885
        %v5660 = vunpack.c.l.b16 %v1886
        %v5661 = vunpack.c.h.b16 %v1886
        %v5662 = vunpack.c.l.b16 %v1887
        %v5663 = vunpack.c.h.b16 %v1887
        %v5664 = vunpack.c.l.b16 %v1888
        %v5665 = vunpack.c.h.b16 %v1888
        %v5666 = vunpack.c.l.b16 %v1889
        %v5667 = vunpack.c.h.b16 %v1889
        %v5668 = vunpack.c.l.b16 %v1890
        %v5669 = vunpack.c.h.b16 %v1890
        %v5670 = vunpack.c.l.b16 %v1891
        %v5671 = vunpack.c.h.b16 %v1891
        %v5672 = vunpack.c.l.b16 %v1892
        %v5673 = vunpack.c.h.b16 %v1892
        %v5674 = vunpack.c.l.b16 %v1893
        %v5675 = vunpack.c.h.b16 %v1893
        %v5676 = vunpack.c.l.b16 %v1894
        %v5677 = vunpack.c.h.b16 %v1894
        %v5678 = vunpack.c.l.b16 %v1895
        %v5679 = vunpack.c.h.b16 %v1895
        %v5680 = vunpack.c.l.b16 %v1896
        %v5681 = vunpack.c.h.b16 %v1896
        %v5682 = vunpack.c.l.b16 %v1897
        %v5683 = vunpack.c.h.b16 %v1897
        %v5684 = vunpack.c.l.b16 %v1898
        %v5685 = vunpack.c.h.b16 %v1898
        %v5686 = vunpack.c.l.b16 %v1899
        %v5687 = vunpack.c.h.b16 %v1899
        %v5688 = vunpack.c.l.b16 %v1900
        %v5689 = vunpack.c.h.b16 %v1900
        %v5690 = vunpack.c.l.b16 %v1901
        %v5691 = vunpack.c.h.b16 %v1901
        %v5692 = vunpack.c.l.b16 %v1902
        %v5693 = vunpack.c.h.b16 %v1902
        %v5694 = vunpack.c.l.b16 %v1903
        %v5695 = vunpack.c.h.b16 %v1903
        %v5696 = vunpack.c.l.b16 %v1904
        %v5697 = vunpack.c.h.b16 %v1904
        %v5698 = vunpack.c.l.b16 %v1905
        %v5699 = vunpack.c.h.b16 %v1905
        %v5700 = vunpack.c.l.b16 %v1906
        %v5701 = vunpack.c.h.b16 %v1906
        %v5702 = vunpack.c.l.b16 %v1907
        %v5703 = vunpack.c.h.b16 %v1907
        %v5704 = vunpack.c.l.b16 %v1908
        %v5705 = vunpack.c.h.b16 %v1908
        %v5706 = vunpack.c.l.b16 %v1909
        %v5707 = vunpack.c.h.b16 %v1909
        %v5708 = vunpack.c.l.b16 %v1910
        %v5709 = vunpack.c.h.b16 %v1910
        %v5710 = vunpack.c.l.b16 %v1911
        %v5711 = vunpack.c.h.b16 %v1911
        %v5712 = vunpack.c.l.b16 %v1912
        %v5713 = vunpack.c.h.b16 %v1912
        %v5714 = vunpack.c.l.b16 %v1913
        %v5715 = vunpack.c.h.b16 %v1913
        %v5716 = vunpack.c.l.b16 %v1914
        %v5717 = vunpack.c.h.b16 %v1914
        %v5718 = vunpack.c.l.b16 %v1915
        %v5719 = vunpack.c.h.b16 %v1915
        %v5720 = vunpack.c.l.b16 %v1916
        %v5721 = vunpack.c.h.b16 %v1916
        %v5722 = vunpack.c.l.b16 %v1917
        %v5723 = vunpack.c.h.b16 %v1917
        %v5724 = vunpack.c.l.b16 %v1918
        %v5725 = vunpack.c.h.b16 %v1918
        %v5726 = vunpack.c.l.b16 %v1919
        %v5727 = vunpack.c.h.b16 %v1919
        %v5728 = vunpack.c.l.b16 %v1920
        %v5729 = vunpack.c.h.b16 %v1920
        %v5730 = vunpack.c.l.b16 %v1921
        %v5731 = vunpack.c.h.b16 %v1921
        %v5732 = vunpack.c.l.b16 %v1922
        %v5733 = vunpack.c.h.b16 %v1922
        %v5734 = vunpack.c.l.b16 %v1923
        %v5735 = vunpack.c.h.b16 %v1923
        %v5736 = vunpack.c.l.b16 %v1924
        %v5737 = vunpack.c.h.b16 %v1924
        %v5738 = vunpack.c.l.b16 %v1925
        %v5739 = vunpack.c.h.b16 %v1925
        %v5740 = vunpack.c.l.b16 %v1926
        %v5741 = vunpack.c.h.b16 %v1926
        %v5742 = vunpack.c.l.b16 %v1927
        %v5743 = vunpack.c.h.b16 %v1927
        %v5744 = vunpack.c.l.b16 %v1928
        %v5745 = vunpack.c.h.b16 %v1928
        %v5746 = vunpack.c.l.b16 %v1929
        %v5747 = vunpack.c.h.b16 %v1929
        %v5748 = vunpack.c.l.b16 %v1930
        %v5749 = vunpack.c.h.b16 %v1930
        %v5750 = vunpack.c.l.b16 %v1931
        %v5751 = vunpack.c.h.b16 %v1931
        %v5752 = vunpack.c.l.b16 %v1932
        %v5753 = vunpack.c.h.b16 %v1932
        %v5754 = vunpack.c.l.b16 %v1933
        %v5755 = vunpack.c.h.b16 %v1933
        %v5756 = vunpack.c.l.b16 %v1934
        %v5757 = vunpack.c.h.b16 %v1934
        %v5758 = vunpack.c.l.b16 %v1935
        %v5759 = vunpack.c.h.b16 %v1935
        %v5760 = vunpack.c.l.b16 %v1936
        %v5761 = vunpack.c.h.b16 %v1936
        %v5762 = vunpack.c.l.b16 %v1937
        %v5763 = vunpack.c.h.b16 %v1937
        %v5764 = vunpack.c.l.b16 %v1938
        %v5765 = vunpack.c.h.b16 %v1938
        %v5766 = vunpack.c.l.b16 %v1939
        %v5767 = vunpack.c.h.b16 %v1939
        %v5768 = vunpack.c.l.b16 %v1940
        %v5769 = vunpack.c.h.b16 %v1940
        %v5770 = vunpack.c.l.b16 %v1941
        %v5771 = vunpack.c.h.b16 %v1941
        %v5772 = vunpack.c.l.b16 %v1942
        %v5773 = vunpack.c.h.b16 %v1942
        %v5774 = vunpack.c.l.b16 %v1943
        %v5775 = vunpack.c.h.b16 %v1943
        %v5776 = vunpack.c.l.b16 %v1944
        %v5777 = vunpack.c.h.b16 %v1944
        %v5778 = vunpack.c.l.b16 %v1945
        %v5779 = vunpack.c.h.b16 %v1945
        %v5780 = vunpack.c.l.b16 %v1946
        %v5781 = vunpack.c.h.b16 %v1946
        %v5782 = vunpack.c.l.b16 %v1947
        %v5783 = vunpack.c.h.b16 %v1947
        %v5784 = vunpack.c.l.b16 %v1948
        %v5785 = vunpack.c.h.b16 %v1948
        %v5786 = vunpack.c.l.b16 %v1949
        %v5787 = vunpack.c.h.b16 %v1949
        %v5788 = vunpack.c.l.b16 %v1950
        %v5789 = vunpack.c.h.b16 %v1950
        %v5790 = vunpack.c.l.b16 %v1951
        %v5791 = vunpack.c.h.b16 %v1951
        %v5792 = vpack.c.b16 %v3236, %v3232
        %v5793 = vpack.c.b16 %v3237, %v3233
        %v5794 = vpack.c.b16 %v3238, %v3234
        %v5795 = vpack.c.b16 %v3239, %v3235
        %v5796 = vpack.c.b16 %v3244, %v3240
        %v5797 = vpack.c.b16 %v3245, %v3241
        %v5798 = vpack.c.b16 %v3246, %v3242
        %v5799 = vpack.c.b16 %v3247, %v3243
        %v5800 = vpack.c.b16 %v3252, %v3248
        %v5801 = vpack.c.b16 %v3253, %v3249
        %v5802 = vpack.c.b16 %v3254, %v3250
        %v5803 = vpack.c.b16 %v3255, %v3251
        %v5804 = vpack.c.b16 %v3260, %v3256
        %v5805 = vpack.c.b16 %v3261, %v3257
        %v5806 = vpack.c.b16 %v3262, %v3258
        %v5807 = vpack.c.b16 %v3263, %v3259
        %v5808 = vpack.c.b16 %v3268, %v3264
        %v5809 = vpack.c.b16 %v3269, %v3265
        %v5810 = vpack.c.b16 %v3270, %v3266
        %v5811 = vpack.c.b16 %v3271, %v3267
        %v5812 = vpack.c.b16 %v3276, %v3272
        %v5813 = vpack.c.b16 %v3277, %v3273
        %v5814 = vpack.c.b16 %v3278, %v3274
        %v5815 = vpack.c.b16 %v3279, %v3275
        %v5816 = vpack.c.b16 %v3284, %v3280
        %v5817 = vpack.c.b16 %v3285, %v3281
        %v5818 = vpack.c.b16 %v3286, %v3282
        %v5819 = vpack.c.b16 %v3287, %v3283
        %v5820 = vpack.c.b16 %v3292, %v3288
        %v5821 = vpack.c.b16 %v3293, %v3289
        %v5822 = vpack.c.b16 %v3294, %v3290
        %v5823 = vpack.c.b16 %v3295, %v3291
        %v5824 = vpack.c.b16 %v3300, %v3296
        %v5825 = vpack.c.b16 %v3301, %v3297
        %v5826 = vpack.c.b16 %v3302, %v3298
        %v5827 = vpack.c.b16 %v3303, %v3299
        %v5828 = vpack.c.b16 %v3308, %v3304
        %v5829 = vpack.c.b16 %v3309, %v3305
        %v5830 = vpack.c.b16 %v3310, %v3306
        %v5831 = vpack.c.b16 %v3311, %v3307
        %v5832 = vpack.c.b16 %v3316, %v3312
        %v5833 = vpack.c.b16 %v3317, %v3313
        %v5834 = vpack.c.b16 %v3318, %v3314
        %v5835 = vpack.c.b16 %v3319, %v3315
        %v5836 = vpack.c.b16 %v3324, %v3320
        %v5837 = vpack.c.b16 %v3325, %v3321
        %v5838 = vpack.c.b16 %v3326, %v3322
        %v5839 = vpack.c.b16 %v3327, %v3323
        %v5840 = vpack.c.b16 %v3332, %v3328
        %v5841 = vpack.c.b16 %v3333, %v3329
        %v5842 = vpack.c.b16 %v3334, %v3330
        %v5843 = vpack.c.b16 %v3335, %v3331
        %v5844 = vpack.c.b16 %v3340, %v3336
        %v5845 = vpack.c.b16 %v3341, %v3337
        %v5846 = vpack.c.b16 %v3342, %v3338
        %v5847 = vpack.c.b16 %v3343, %v3339
        %v5848 = vpack.c.b16 %v3348, %v3344
        %v5849 = vpack.c.b16 %v3349, %v3345
        %v5850 = vpack.c.b16 %v3350, %v3346
        %v5851 = vpack.c.b16 %v3351, %v3347
        %v5852 = vpack.c.b16 %v3356, %v3352
        %v5853 = vpack.c.b16 %v3357, %v3353
        %v5854 = vpack.c.b16 %v3358, %v3354
        %v5855 = vpack.c.b16 %v3359, %v3355
        %v5856 = vpack.c.b16 %v3364, %v3360
        %v5857 = vpack.c.b16 %v3365, %v3361
        %v5858 = vpack.c.b16 %v3366, %v3362
        %v5859 = vpack.c.b16 %v3367, %v3363
        %v5860 = vpack.c.b16 %v3372, %v3368
        %v5861 = vpack.c.b16 %v3373, %v3369
        %v5862 = vpack.c.b16 %v3374, %v3370
        %v5863 = vpack.c.b16 %v3375, %v3371
        %v5864 = vpack.c.b16 %v3380, %v3376
        %v5865 = vpack.c.b16 %v3381, %v3377
        %v5866 = vpack.c.b16 %v3382, %v3378
        %v5867 = vpack.c.b16 %v3383, %v3379
        %v5868 = vpack.c.b16 %v3388, %v3384
        %v5869 = vpack.c.b16 %v3389, %v3385
        %v5870 = vpack.c.b16 %v3390, %v3386
        %v5871 = vpack.c.b16 %v3391, %v3387
        %v5872 = vpack.c.b16 %v3396, %v3392
        %v5873 = vpack.c.b16 %v3397, %v3393
        %v5874 = vpack.c.b16 %v3398, %v3394
        %v5875 = vpack.c.b16 %v3399, %v3395
        %v5876 = vpack.c.b16 %v3404, %v3400
        %v5877 = vpack.c.b16 %v3405, %v3401
        %v5878 = vpack.c.b16 %v3406, %v3402
        %v5879 = vpack.c.b16 %v3407, %v3403
        %v5880 = vpack.c.b16 %v3412, %v3408
        %v5881 = vpack.c.b16 %v3413, %v3409
        %v5882 = vpack.c.b16 %v3414, %v3410
        %v5883 = vpack.c.b16 %v3415, %v3411
        %v5884 = vpack.c.b16 %v3420, %v3416
        %v5885 = vpack.c.b16 %v3421, %v3417
        %v5886 = vpack.c.b16 %v3422, %v3418
        %v5887 = vpack.c.b16 %v3423, %v3419
        %v5888 = vpack.c.b16 %v3428, %v3424
        %v5889 = vpack.c.b16 %v3429, %v3425
        %v5890 = vpack.c.b16 %v3430, %v3426
        %v5891 = vpack.c.b16 %v3431, %v3427
        %v5892 = vpack.c.b16 %v3436, %v3432
        %v5893 = vpack.c.b16 %v3437, %v3433
        %v5894 = vpack.c.b16 %v3438, %v3434
        %v5895 = vpack.c.b16 %v3439, %v3435
        %v5896 = vpack.c.b16 %v3444, %v3440
        %v5897 = vpack.c.b16 %v3445, %v3441
        %v5898 = vpack.c.b16 %v3446, %v3442
        %v5899 = vpack.c.b16 %v3447, %v3443
        %v5900 = vpack.c.b16 %v3452, %v3448
        %v5901 = vpack.c.b16 %v3453, %v3449
        %v5902 = vpack.c.b16 %v3454, %v3450
        %v5903 = vpack.c.b16 %v3455, %v3451
        %v5904 = vpack.c.b16 %v3460, %v3456
        %v5905 = vpack.c.b16 %v3461, %v3457
        %v5906 = vpack.c.b16 %v3462, %v3458
        %v5907 = vpack.c.b16 %v3463, %v3459
        %v5908 = vpack.c.b16 %v3468, %v3464
        %v5909 = vpack.c.b16 %v3469, %v3465
        %v5910 = vpack.c.b16 %v3470, %v3466
        %v5911 = vpack.c.b16 %v3471, %v3467
        %v5912 = vpack.c.b16 %v3476, %v3472
        %v5913 = vpack.c.b16 %v3477, %v3473
        %v5914 = vpack.c.b16 %v3478, %v3474
        %v5915 = vpack.c.b16 %v3479, %v3475
        %v5916 = vpack.c.b16 %v3484, %v3480
        %v5917 = vpack.c.b16 %v3485, %v3481
        %v5918 = vpack.c.b16 %v3486, %v3482
        %v5919 = vpack.c.b16 %v3487, %v3483
        %v5920 = vpack.c.b16 %v3492, %v3488
        %v5921 = vpack.c.b16 %v3493, %v3489
        %v5922 = vpack.c.b16 %v3494, %v3490
        %v5923 = vpack.c.b16 %v3495, %v3491
        %v5924 = vpack.c.b16 %v3500, %v3496
        %v5925 = vpack.c.b16 %v3501, %v3497
        %v5926 = vpack.c.b16 %v3502, %v3498
        %v5927 = vpack.c.b16 %v3503, %v3499
        %v5928 = vpack.c.b16 %v3508, %v3504
        %v5929 = vpack.c.b16 %v3509, %v3505
        %v5930 = vpack.c.b16 %v3510, %v3506
        %v5931 = vpack.c.b16 %v3511, %v3507
        %v5932 = vpack.c.b16 %v3516, %v3512
        %v5933 = vpack.c.b16 %v3517, %v3513
        %v5934 = vpack.c.b16 %v3518, %v3514
        %v5935 = vpack.c.b16 %v3519, %v3515
        %v5936 = vpack.c.b16 %v3524, %v3520
        %v5937 = vpack.c.b16 %v3525, %v3521
        %v5938 = vpack.c.b16 %v3526, %v3522
        %v5939 = vpack.c.b16 %v3527, %v3523
        %v5940 = vpack.c.b16 %v3532, %v3528
        %v5941 = vpack.c.b16 %v3533, %v3529
        %v5942 = vpack.c.b16 %v3534, %v3530
        %v5943 = vpack.c.b16 %v3535, %v3531
        %v5944 = vpack.c.b16 %v3540, %v3536
        %v5945 = vpack.c.b16 %v3541, %v3537
        %v5946 = vpack.c.b16 %v3542, %v3538
        %v5947 = vpack.c.b16 %v3543, %v3539
        %v5948 = vpack.c.b16 %v3548, %v3544
        %v5949 = vpack.c.b16 %v3549, %v3545
        %v5950 = vpack.c.b16 %v3550, %v3546
        %v5951 = vpack.c.b16 %v3551, %v3547
        %v5952 = vpack.c.b16 %v3556, %v3552
        %v5953 = vpack.c.b16 %v3557, %v3553
        %v5954 = vpack.c.b16 %v3558, %v3554
        %v5955 = vpack.c.b16 %v3559, %v3555
        %v5956 = vpack.c.b16 %v3564, %v3560
        %v5957 = vpack.c.b16 %v3565, %v3561
        %v5958 = vpack.c.b16 %v3566, %v3562
        %v5959 = vpack.c.b16 %v3567, %v3563
        %v5960 = vpack.c.b16 %v3572, %v3568
        %v5961 = vpack.c.b16 %v3573, %v3569
        %v5962 = vpack.c.b16 %v3574, %v3570
        %v5963 = vpack.c.b16 %v3575, %v3571
        %v5964 = vpack.c.b16 %v3580, %v3576
        %v5965 = vpack.c.b16 %v3581, %v3577
        %v5966 = vpack.c.b16 %v3582, %v3578
        %v5967 = vpack.c.b16 %v3583, %v3579
        %v5968 = vpack.c.b16 %v3588, %v3584
        %v5969 = vpack.c.b16 %v3589, %v3585
        %v5970 = vpack.c.b16 %v3590, %v3586
        %v5971 = vpack.c.b16 %v3591, %v3587
        %v5972 = vpack.c.b16 %v3596, %v3592
        %v5973 = vpack.c.b16 %v3597, %v3593
        %v5974 = vpack.c.b16 %v3598, %v3594
        %v5975 = vpack.c.b16 %v3599, %v3595
        %v5976 = vpack.c.b16 %v3604, %v3600
        %v5977 = vpack.c.b16 %v3605, %v3601
        %v5978 = vpack.c.b16 %v3606, %v3602
        %v5979 = vpack.c.b16 %v3607, %v3603
        %v5980 = vpack.c.b16 %v3612, %v3608
        %v5981 = vpack.c.b16 %v3613, %v3609
        %v5982 = vpack.c.b16 %v3614, %v3610
        %v5983 = vpack.c.b16 %v3615, %v3611
        %v5984 = vpack.c.b16 %v3620, %v3616
        %v5985 = vpack.c.b16 %v3621, %v3617
        %v5986 = vpack.c.b16 %v3622, %v3618
        %v5987 = vpack.c.b16 %v3623, %v3619
        %v5988 = vpack.c.b16 %v3628, %v3624
        %v5989 = vpack.c.b16 %v3629, %v3625
        %v5990 = vpack.c.b16 %v3630, %v3626
        %v5991 = vpack.c.b16 %v3631, %v3627
        %v5992 = vpack.c.b16 %v3636, %v3632
        %v5993 = vpack.c.b16 %v3637, %v3633
        %v5994 = vpack.c.b16 %v3638, %v3634
        %v5995 = vpack.c.b16 %v3639, %v3635
        %v5996 = vpack.c.b16 %v3644, %v3640
        %v5997 = vpack.c.b16 %v3645, %v3641
        %v5998 = vpack.c.b16 %v3646, %v3642
        %v5999 = vpack.c.b16 %v3647, %v3643
        %v6000 = vpack.c.b16 %v3652, %v3648
        %v6001 = vpack.c.b16 %v3653, %v3649
        %v6002 = vpack.c.b16 %v3654, %v3650
        %v6003 = vpack.c.b16 %v3655, %v3651
        %v6004 = vpack.c.b16 %v3660, %v3656
        %v6005 = vpack.c.b16 %v3661, %v3657
        %v6006 = vpack.c.b16 %v3662, %v3658
        %v6007 = vpack.c.b16 %v3663, %v3659
        %v6008 = vpack.c.b16 %v3668, %v3664
        %v6009 = vpack.c.b16 %v3669, %v3665
        %v6010 = vpack.c.b16 %v3670, %v3666
        %v6011 = vpack.c.b16 %v3671, %v3667
        %v6012 = vpack.c.b16 %v3676, %v3672
        %v6013 = vpack.c.b16 %v3677, %v3673
        %v6014 = vpack.c.b16 %v3678, %v3674
        %v6015 = vpack.c.b16 %v3679, %v3675
        %v6016 = vpack.c.b16 %v3684, %v3680
        %v6017 = vpack.c.b16 %v3685, %v3681
        %v6018 = vpack.c.b16 %v3686, %v3682
        %v6019 = vpack.c.b16 %v3687, %v3683
        %v6020 = vpack.c.b16 %v3692, %v3688
        %v6021 = vpack.c.b16 %v3693, %v3689
        %v6022 = vpack.c.b16 %v3694, %v3690
        %v6023 = vpack.c.b16 %v3695, %v3691
        %v6024 = vpack.c.b16 %v3700, %v3696
        %v6025 = vpack.c.b16 %v3701, %v3697
        %v6026 = vpack.c.b16 %v3702, %v3698
        %v6027 = vpack.c.b16 %v3703, %v3699
        %v6028 = vpack.c.b16 %v3708, %v3704
        %v6029 = vpack.c.b16 %v3709, %v3705
        %v6030 = vpack.c.b16 %v3710, %v3706
        %v6031 = vpack.c.b16 %v3711, %v3707
        %v6032 = vpack.c.b16 %v3716, %v3712
        %v6033 = vpack.c.b16 %v3717, %v3713
        %v6034 = vpack.c.b16 %v3718, %v3714
        %v6035 = vpack.c.b16 %v3719, %v3715
        %v6036 = vpack.c.b16 %v3724, %v3720
        %v6037 = vpack.c.b16 %v3725, %v3721
        %v6038 = vpack.c.b16 %v3726, %v3722
        %v6039 = vpack.c.b16 %v3727, %v3723
        %v6040 = vpack.c.b16 %v3732, %v3728
        %v6041 = vpack.c.b16 %v3733, %v3729
        %v6042 = vpack.c.b16 %v3734, %v3730
        %v6043 = vpack.c.b16 %v3735, %v3731
        %v6044 = vpack.c.b16 %v3740, %v3736
        %v6045 = vpack.c.b16 %v3741, %v3737
        %v6046 = vpack.c.b16 %v3742, %v3738
        %v6047 = vpack.c.b16 %v3743, %v3739
        %v6048 = vpack.c.b16 %v3748, %v3744
        %v6049 = vpack.c.b16 %v3749, %v3745
        %v6050 = vpack.c.b16 %v3750, %v3746
        %v6051 = vpack.c.b16 %v3751, %v3747
        %v6052 = vpack.c.b16 %v3756, %v3752
        %v6053 = vpack.c.b16 %v3757, %v3753
        %v6054 = vpack.c.b16 %v3758, %v3754
        %v6055 = vpack.c.b16 %v3759, %v3755
        %v6056 = vpack.c.b16 %v3764, %v3760
        %v6057 = vpack.c.b16 %v3765, %v3761
        %v6058 = vpack.c.b16 %v3766, %v3762
        %v6059 = vpack.c.b16 %v3767, %v3763
        %v6060 = vpack.c.b16 %v3772, %v3768
        %v6061 = vpack.c.b16 %v3773, %v3769
        %v6062 = vpack.c.b16 %v3774, %v3770
        %v6063 = vpack.c.b16 %v3775, %v3771
        %v6064 = vpack.c.b16 %v3780, %v3776
        %v6065 = vpack.c.b16 %v3781, %v3777
        %v6066 = vpack.c.b16 %v3782, %v3778
        %v6067 = vpack.c.b16 %v3783, %v3779
        %v6068 = vpack.c.b16 %v3788, %v3784
        %v6069 = vpack.c.b16 %v3789, %v3785
        %v6070 = vpack.c.b16 %v3790, %v3786
        %v6071 = vpack.c.b16 %v3791, %v3787
        %v6072 = vpack.c.b16 %v3796, %v3792
        %v6073 = vpack.c.b16 %v3797, %v3793
        %v6074 = vpack.c.b16 %v3798, %v3794
        %v6075 = vpack.c.b16 %v3799, %v3795
        %v6076 = vpack.c.b16 %v3804, %v3800
        %v6077 = vpack.c.b16 %v3805, %v3801
        %v6078 = vpack.c.b16 %v3806, %v3802
        %v6079 = vpack.c.b16 %v3807, %v3803
        %v6080 = vpack.c.b16 %v3812, %v3808
        %v6081 = vpack.c.b16 %v3813, %v3809
        %v6082 = vpack.c.b16 %v3814, %v3810
        %v6083 = vpack.c.b16 %v3815, %v3811
        %v6084 = vpack.c.b16 %v3820, %v3816
        %v6085 = vpack.c.b16 %v3821, %v3817
        %v6086 = vpack.c.b16 %v3822, %v3818
        %v6087 = vpack.c.b16 %v3823, %v3819
        %v6088 = vpack.c.b16 %v3828, %v3824
        %v6089 = vpack.c.b16 %v3829, %v3825
        %v6090 = vpack.c.b16 %v3830, %v3826
        %v6091 = vpack.c.b16 %v3831, %v3827
        %v6092 = vpack.c.b16 %v3836, %v3832
        %v6093 = vpack.c.b16 %v3837, %v3833
        %v6094 = vpack.c.b16 %v3838, %v3834
        %v6095 = vpack.c.b16 %v3839, %v3835
        %v6096 = vpack.c.b16 %v3844, %v3840
        %v6097 = vpack.c.b16 %v3845, %v3841
        %v6098 = vpack.c.b16 %v3846, %v3842
        %v6099 = vpack.c.b16 %v3847, %v3843
        %v6100 = vpack.c.b16 %v3852, %v3848
        %v6101 = vpack.c.b16 %v3853, %v3849
        %v6102 = vpack.c.b16 %v3854, %v3850
        %v6103 = vpack.c.b16 %v3855, %v3851
        %v6104 = vpack.c.b16 %v3860, %v3856
        %v6105 = vpack.c.b16 %v3861, %v3857
        %v6106 = vpack.c.b16 %v3862, %v3858
        %v6107 = vpack.c.b16 %v3863, %v3859
        %v6108 = vpack.c.b16 %v3868, %v3864
        %v6109 = vpack.c.b16 %v3869, %v3865
        %v6110 = vpack.c.b16 %v3870, %v3866
        %v6111 = vpack.c.b16 %v3871, %v3867
        %v6112 = vpack.c.b16 %v3876, %v3872
        %v6113 = vpack.c.b16 %v3877, %v3873
        %v6114 = vpack.c.b16 %v3878, %v3874
        %v6115 = vpack.c.b16 %v3879, %v3875
        %v6116 = vpack.c.b16 %v3884, %v3880
        %v6117 = vpack.c.b16 %v3885, %v3881
        %v6118 = vpack.c.b16 %v3886, %v3882
        %v6119 = vpack.c.b16 %v3887, %v3883
        %v6120 = vpack.c.b16 %v3892, %v3888
        %v6121 = vpack.c.b16 %v3893, %v3889
        %v6122 = vpack.c.b16 %v3894, %v3890
        %v6123 = vpack.c.b16 %v3895, %v3891
        %v6124 = vpack.c.b16 %v3900, %v3896
        %v6125 = vpack.c.b16 %v3901, %v3897
        %v6126 = vpack.c.b16 %v3902, %v3898
        %v6127 = vpack.c.b16 %v3903, %v3899
        %v6128 = vpack.c.b16 %v3908, %v3904
        %v6129 = vpack.c.b16 %v3909, %v3905
        %v6130 = vpack.c.b16 %v3910, %v3906
        %v6131 = vpack.c.b16 %v3911, %v3907
        %v6132 = vpack.c.b16 %v3916, %v3912
        %v6133 = vpack.c.b16 %v3917, %v3913
        %v6134 = vpack.c.b16 %v3918, %v3914
        %v6135 = vpack.c.b16 %v3919, %v3915
        %v6136 = vpack.c.b16 %v3924, %v3920
        %v6137 = vpack.c.b16 %v3925, %v3921
        %v6138 = vpack.c.b16 %v3926, %v3922
        %v6139 = vpack.c.b16 %v3927, %v3923
        %v6140 = vpack.c.b16 %v3932, %v3928
        %v6141 = vpack.c.b16 %v3933, %v3929
        %v6142 = vpack.c.b16 %v3934, %v3930
        %v6143 = vpack.c.b16 %v3935, %v3931
        %v6144 = vpack.c.b16 %v3940, %v3936
        %v6145 = vpack.c.b16 %v3941, %v3937
        %v6146 = vpack.c.b16 %v3942, %v3938
        %v6147 = vpack.c.b16 %v3943, %v3939
        %v6148 = vpack.c.b16 %v3948, %v3944
        %v6149 = vpack.c.b16 %v3949, %v3945
        %v6150 = vpack.c.b16 %v3950, %v3946
        %v6151 = vpack.c.b16 %v3951, %v3947
        %v6152 = vpack.c.b16 %v3956, %v3952
        %v6153 = vpack.c.b16 %v3957, %v3953
        %v6154 = vpack.c.b16 %v3958, %v3954
        %v6155 = vpack.c.b16 %v3959, %v3955
        %v6156 = vpack.c.b16 %v3964, %v3960
        %v6157 = vpack.c.b16 %v3965, %v3961
        %v6158 = vpack.c.b16 %v3966, %v3962
        %v6159 = vpack.c.b16 %v3967, %v3963
        %v6160 = vpack.c.b16 %v3972, %v3968
        %v6161 = vpack.c.b16 %v3973, %v3969
        %v6162 = vpack.c.b16 %v3974, %v3970
        %v6163 = vpack.c.b16 %v3975, %v3971
        %v6164 = vpack.c.b16 %v3980, %v3976
        %v6165 = vpack.c.b16 %v3981, %v3977
        %v6166 = vpack.c.b16 %v3982, %v3978
        %v6167 = vpack.c.b16 %v3983, %v3979
        %v6168 = vpack.c.b16 %v3988, %v3984
        %v6169 = vpack.c.b16 %v3989, %v3985
        %v6170 = vpack.c.b16 %v3990, %v3986
        %v6171 = vpack.c.b16 %v3991, %v3987
        %v6172 = vpack.c.b16 %v3996, %v3992
        %v6173 = vpack.c.b16 %v3997, %v3993
        %v6174 = vpack.c.b16 %v3998, %v3994
        %v6175 = vpack.c.b16 %v3999, %v3995
        %v6176 = vpack.c.b16 %v4004, %v4000
        %v6177 = vpack.c.b16 %v4005, %v4001
        %v6178 = vpack.c.b16 %v4006, %v4002
        %v6179 = vpack.c.b16 %v4007, %v4003
        %v6180 = vpack.c.b16 %v4012, %v4008
        %v6181 = vpack.c.b16 %v4013, %v4009
        %v6182 = vpack.c.b16 %v4014, %v4010
        %v6183 = vpack.c.b16 %v4015, %v4011
        %v6184 = vpack.c.b16 %v4020, %v4016
        %v6185 = vpack.c.b16 %v4021, %v4017
        %v6186 = vpack.c.b16 %v4022, %v4018
        %v6187 = vpack.c.b16 %v4023, %v4019
        %v6188 = vpack.c.b16 %v4028, %v4024
        %v6189 = vpack.c.b16 %v4029, %v4025
        %v6190 = vpack.c.b16 %v4030, %v4026
        %v6191 = vpack.c.b16 %v4031, %v4027
        %v6192 = vpack.c.b16 %v4036, %v4032
        %v6193 = vpack.c.b16 %v4037, %v4033
        %v6194 = vpack.c.b16 %v4038, %v4034
        %v6195 = vpack.c.b16 %v4039, %v4035
        %v6196 = vpack.c.b16 %v4044, %v4040
        %v6197 = vpack.c.b16 %v4045, %v4041
        %v6198 = vpack.c.b16 %v4046, %v4042
        %v6199 = vpack.c.b16 %v4047, %v4043
        %v6200 = vpack.c.b16 %v4052, %v4048
        %v6201 = vpack.c.b16 %v4053, %v4049
        %v6202 = vpack.c.b16 %v4054, %v4050
        %v6203 = vpack.c.b16 %v4055, %v4051
        %v6204 = vpack.c.b16 %v4060, %v4056
        %v6205 = vpack.c.b16 %v4061, %v4057
        %v6206 = vpack.c.b16 %v4062, %v4058
        %v6207 = vpack.c.b16 %v4063, %v4059
        %v6208 = vpack.c.b16 %v4068, %v4064
        %v6209 = vpack.c.b16 %v4069, %v4065
        %v6210 = vpack.c.b16 %v4070, %v4066
        %v6211 = vpack.c.b16 %v4071, %v4067
        %v6212 = vpack.c.b16 %v4076, %v4072
        %v6213 = vpack.c.b16 %v4077, %v4073
        %v6214 = vpack.c.b16 %v4078, %v4074
        %v6215 = vpack.c.b16 %v4079, %v4075
        %v6216 = vpack.c.b16 %v4084, %v4080
        %v6217 = vpack.c.b16 %v4085, %v4081
        %v6218 = vpack.c.b16 %v4086, %v4082
        %v6219 = vpack.c.b16 %v4087, %v4083
        %v6220 = vpack.c.b16 %v4092, %v4088
        %v6221 = vpack.c.b16 %v4093, %v4089
        %v6222 = vpack.c.b16 %v4094, %v4090
        %v6223 = vpack.c.b16 %v4095, %v4091
        %v6224 = vpack.c.b16 %v4100, %v4096
        %v6225 = vpack.c.b16 %v4101, %v4097
        %v6226 = vpack.c.b16 %v4102, %v4098
        %v6227 = vpack.c.b16 %v4103, %v4099
        %v6228 = vpack.c.b16 %v4108, %v4104
        %v6229 = vpack.c.b16 %v4109, %v4105
        %v6230 = vpack.c.b16 %v4110, %v4106
        %v6231 = vpack.c.b16 %v4111, %v4107
        %v6232 = vpack.c.b16 %v4116, %v4112
        %v6233 = vpack.c.b16 %v4117, %v4113
        %v6234 = vpack.c.b16 %v4118, %v4114
        %v6235 = vpack.c.b16 %v4119, %v4115
        %v6236 = vpack.c.b16 %v4124, %v4120
        %v6237 = vpack.c.b16 %v4125, %v4121
        %v6238 = vpack.c.b16 %v4126, %v4122
        %v6239 = vpack.c.b16 %v4127, %v4123
        %v6240 = vpack.c.b16 %v4132, %v4128
        %v6241 = vpack.c.b16 %v4133, %v4129
        %v6242 = vpack.c.b16 %v4134, %v4130
        %v6243 = vpack.c.b16 %v4135, %v4131
        %v6244 = vpack.c.b16 %v4140, %v4136
        %v6245 = vpack.c.b16 %v4141, %v4137
        %v6246 = vpack.c.b16 %v4142, %v4138
        %v6247 = vpack.c.b16 %v4143, %v4139
        %v6248 = vpack.c.b16 %v4148, %v4144
        %v6249 = vpack.c.b16 %v4149, %v4145
        %v6250 = vpack.c.b16 %v4150, %v4146
        %v6251 = vpack.c.b16 %v4151, %v4147
        %v6252 = vpack.c.b16 %v4156, %v4152
        %v6253 = vpack.c.b16 %v4157, %v4153
        %v6254 = vpack.c.b16 %v4158, %v4154
        %v6255 = vpack.c.b16 %v4159, %v4155
        %v6256 = vpack.c.b16 %v4164, %v4160
        %v6257 = vpack.c.b16 %v4165, %v4161
        %v6258 = vpack.c.b16 %v4166, %v4162
        %v6259 = vpack.c.b16 %v4167, %v4163
        %v6260 = vpack.c.b16 %v4172, %v4168
        %v6261 = vpack.c.b16 %v4173, %v4169
        %v6262 = vpack.c.b16 %v4174, %v4170
        %v6263 = vpack.c.b16 %v4175, %v4171
        %v6264 = vpack.c.b16 %v4180, %v4176
        %v6265 = vpack.c.b16 %v4181, %v4177
        %v6266 = vpack.c.b16 %v4182, %v4178
        %v6267 = vpack.c.b16 %v4183, %v4179
        %v6268 = vpack.c.b16 %v4188, %v4184
        %v6269 = vpack.c.b16 %v4189, %v4185
        %v6270 = vpack.c.b16 %v4190, %v4186
        %v6271 = vpack.c.b16 %v4191, %v4187
        %v6272 = vpack.c.b16 %v4196, %v4192
        %v6273 = vpack.c.b16 %v4197, %v4193
        %v6274 = vpack.c.b16 %v4198, %v4194
        %v6275 = vpack.c.b16 %v4199, %v4195
        %v6276 = vpack.c.b16 %v4204, %v4200
        %v6277 = vpack.c.b16 %v4205, %v4201
        %v6278 = vpack.c.b16 %v4206, %v4202
        %v6279 = vpack.c.b16 %v4207, %v4203
        %v6280 = vpack.c.b16 %v4212, %v4208
        %v6281 = vpack.c.b16 %v4213, %v4209
        %v6282 = vpack.c.b16 %v4214, %v4210
        %v6283 = vpack.c.b16 %v4215, %v4211
        %v6284 = vpack.c.b16 %v4220, %v4216
        %v6285 = vpack.c.b16 %v4221, %v4217
        %v6286 = vpack.c.b16 %v4222, %v4218
        %v6287 = vpack.c.b16 %v4223, %v4219
        %v6288 = vpack.c.b16 %v4228, %v4224
        %v6289 = vpack.c.b16 %v4229, %v4225
        %v6290 = vpack.c.b16 %v4230, %v4226
        %v6291 = vpack.c.b16 %v4231, %v4227
        %v6292 = vpack.c.b16 %v4236, %v4232
        %v6293 = vpack.c.b16 %v4237, %v4233
        %v6294 = vpack.c.b16 %v4238, %v4234
        %v6295 = vpack.c.b16 %v4239, %v4235
        %v6296 = vpack.c.b16 %v4244, %v4240
        %v6297 = vpack.c.b16 %v4245, %v4241
        %v6298 = vpack.c.b16 %v4246, %v4242
        %v6299 = vpack.c.b16 %v4247, %v4243
        %v6300 = vpack.c.b16 %v4252, %v4248
        %v6301 = vpack.c.b16 %v4253, %v4249
        %v6302 = vpack.c.b16 %v4254, %v4250
        %v6303 = vpack.c.b16 %v4255, %v4251
        %v6304 = vpack.c.b16 %v4260, %v4256
        %v6305 = vpack.c.b16 %v4261, %v4257
        %v6306 = vpack.c.b16 %v4262, %v4258
        %v6307 = vpack.c.b16 %v4263, %v4259
        %v6308 = vpack.c.b16 %v4268, %v4264
        %v6309 = vpack.c.b16 %v4269, %v4265
        %v6310 = vpack.c.b16 %v4270, %v4266
        %v6311 = vpack.c.b16 %v4271, %v4267
        %v6312 = vpack.c.b16 %v4276, %v4272
        %v6313 = vpack.c.b16 %v4277, %v4273
        %v6314 = vpack.c.b16 %v4278, %v4274
        %v6315 = vpack.c.b16 %v4279, %v4275
        %v6316 = vpack.c.b16 %v4284, %v4280
        %v6317 = vpack.c.b16 %v4285, %v4281
        %v6318 = vpack.c.b16 %v4286, %v4282
        %v6319 = vpack.c.b16 %v4287, %v4283
        %v6320 = vpack.c.b16 %v4292, %v4288
        %v6321 = vpack.c.b16 %v4293, %v4289
        %v6322 = vpack.c.b16 %v4294, %v4290
        %v6323 = vpack.c.b16 %v4295, %v4291
        %v6324 = vpack.c.b16 %v4300, %v4296
        %v6325 = vpack.c.b16 %v4301, %v4297
        %v6326 = vpack.c.b16 %v4302, %v4298
        %v6327 = vpack.c.b16 %v4303, %v4299
        %v6328 = vpack.c.b16 %v4308, %v4304
        %v6329 = vpack.c.b16 %v4309, %v4305
        %v6330 = vpack.c.b16 %v4310, %v4306
        %v6331 = vpack.c.b16 %v4311, %v4307
        %v6332 = vpack.c.b16 %v4316, %v4312
        %v6333 = vpack.c.b16 %v4317, %v4313
        %v6334 = vpack.c.b16 %v4318, %v4314
        %v6335 = vpack.c.b16 %v4319, %v4315
        %v6336 = vpack.c.b16 %v4324, %v4320
        %v6337 = vpack.c.b16 %v4325, %v4321
        %v6338 = vpack.c.b16 %v4326, %v4322
        %v6339 = vpack.c.b16 %v4327, %v4323
        %v6340 = vpack.c.b16 %v4332, %v4328
        %v6341 = vpack.c.b16 %v4333, %v4329
        %v6342 = vpack.c.b16 %v4334, %v4330
        %v6343 = vpack.c.b16 %v4335, %v4331
        %v6344 = vpack.c.b16 %v4340, %v4336
        %v6345 = vpack.c.b16 %v4341, %v4337
        %v6346 = vpack.c.b16 %v4342, %v4338
        %v6347 = vpack.c.b16 %v4343, %v4339
        %v6348 = vpack.c.b16 %v4348, %v4344
        %v6349 = vpack.c.b16 %v4349, %v4345
        %v6350 = vpack.c.b16 %v4350, %v4346
        %v6351 = vpack.c.b16 %v4351, %v4347
        %v6352 = vpack.c.b16 %v4356, %v4352
        %v6353 = vpack.c.b16 %v4357, %v4353
        %v6354 = vpack.c.b16 %v4358, %v4354
        %v6355 = vpack.c.b16 %v4359, %v4355
        %v6356 = vpack.c.b16 %v4364, %v4360
        %v6357 = vpack.c.b16 %v4365, %v4361
        %v6358 = vpack.c.b16 %v4366, %v4362
        %v6359 = vpack.c.b16 %v4367, %v4363
        %v6360 = vpack.c.b16 %v4372, %v4368
        %v6361 = vpack.c.b16 %v4373, %v4369
        %v6362 = vpack.c.b16 %v4374, %v4370
        %v6363 = vpack.c.b16 %v4375, %v4371
        %v6364 = vpack.c.b16 %v4380, %v4376
        %v6365 = vpack.c.b16 %v4381, %v4377
        %v6366 = vpack.c.b16 %v4382, %v4378
        %v6367 = vpack.c.b16 %v4383, %v4379
        %v6368 = vpack.c.b16 %v4388, %v4384
        %v6369 = vpack.c.b16 %v4389, %v4385
        %v6370 = vpack.c.b16 %v4390, %v4386
        %v6371 = vpack.c.b16 %v4391, %v4387
        %v6372 = vpack.c.b16 %v4396, %v4392
        %v6373 = vpack.c.b16 %v4397, %v4393
        %v6374 = vpack.c.b16 %v4398, %v4394
        %v6375 = vpack.c.b16 %v4399, %v4395
        %v6376 = vpack.c.b16 %v4404, %v4400
        %v6377 = vpack.c.b16 %v4405, %v4401
        %v6378 = vpack.c.b16 %v4406, %v4402
        %v6379 = vpack.c.b16 %v4407, %v4403
        %v6380 = vpack.c.b16 %v4412, %v4408
        %v6381 = vpack.c.b16 %v4413, %v4409
        %v6382 = vpack.c.b16 %v4414, %v4410
        %v6383 = vpack.c.b16 %v4415, %v4411
        %v6384 = vpack.c.b16 %v4420, %v4416
        %v6385 = vpack.c.b16 %v4421, %v4417
        %v6386 = vpack.c.b16 %v4422, %v4418
        %v6387 = vpack.c.b16 %v4423, %v4419
        %v6388 = vpack.c.b16 %v4428, %v4424
        %v6389 = vpack.c.b16 %v4429, %v4425
        %v6390 = vpack.c.b16 %v4430, %v4426
        %v6391 = vpack.c.b16 %v4431, %v4427
        %v6392 = vpack.c.b16 %v4436, %v4432
        %v6393 = vpack.c.b16 %v4437, %v4433
        %v6394 = vpack.c.b16 %v4438, %v4434
        %v6395 = vpack.c.b16 %v4439, %v4435
        %v6396 = vpack.c.b16 %v4444, %v4440
        %v6397 = vpack.c.b16 %v4445, %v4441
        %v6398 = vpack.c.b16 %v4446, %v4442
        %v6399 = vpack.c.b16 %v4447, %v4443
        %v6400 = vpack.c.b16 %v4452, %v4448
        %v6401 = vpack.c.b16 %v4453, %v4449
        %v6402 = vpack.c.b16 %v4454, %v4450
        %v6403 = vpack.c.b16 %v4455, %v4451
        %v6404 = vpack.c.b16 %v4460, %v4456
        %v6405 = vpack.c.b16 %v4461, %v4457
        %v6406 = vpack.c.b16 %v4462, %v4458
        %v6407 = vpack.c.b16 %v4463, %v4459
        %v6408 = vpack.c.b16 %v4468, %v4464
        %v6409 = vpack.c.b16 %v4469, %v4465
        %v6410 = vpack.c.b16 %v4470, %v4466
        %v6411 = vpack.c.b16 %v4471, %v4467
        %v6412 = vpack.c.b16 %v4476, %v4472
        %v6413 = vpack.c.b16 %v4477, %v4473
        %v6414 = vpack.c.b16 %v4478, %v4474
        %v6415 = vpack.c.b16 %v4479, %v4475
        %v6416 = vpack.c.b16 %v4484, %v4480
        %v6417 = vpack.c.b16 %v4485, %v4481
        %v6418 = vpack.c.b16 %v4486, %v4482
        %v6419 = vpack.c.b16 %v4487, %v4483
        %v6420 = vpack.c.b16 %v4492, %v4488
        %v6421 = vpack.c.b16 %v4493, %v4489
        %v6422 = vpack.c.b16 %v4494, %v4490
        %v6423 = vpack.c.b16 %v4495, %v4491
        %v6424 = vpack.c.b16 %v4500, %v4496
        %v6425 = vpack.c.b16 %v4501, %v4497
        %v6426 = vpack.c.b16 %v4502, %v4498
        %v6427 = vpack.c.b16 %v4503, %v4499
        %v6428 = vpack.c.b16 %v4508, %v4504
        %v6429 = vpack.c.b16 %v4509, %v4505
        %v6430 = vpack.c.b16 %v4510, %v4506
        %v6431 = vpack.c.b16 %v4511, %v4507
        %v6432 = vpack.c.b16 %v4516, %v4512
        %v6433 = vpack.c.b16 %v4517, %v4513
        %v6434 = vpack.c.b16 %v4518, %v4514
        %v6435 = vpack.c.b16 %v4519, %v4515
        %v6436 = vpack.c.b16 %v4524, %v4520
        %v6437 = vpack.c.b16 %v4525, %v4521
        %v6438 = vpack.c.b16 %v4526, %v4522
        %v6439 = vpack.c.b16 %v4527, %v4523
        %v6440 = vpack.c.b16 %v4532, %v4528
        %v6441 = vpack.c.b16 %v4533, %v4529
        %v6442 = vpack.c.b16 %v4534, %v4530
        %v6443 = vpack.c.b16 %v4535, %v4531
        %v6444 = vpack.c.b16 %v4540, %v4536
        %v6445 = vpack.c.b16 %v4541, %v4537
        %v6446 = vpack.c.b16 %v4542, %v4538
        %v6447 = vpack.c.b16 %v4543, %v4539
        %v6448 = vpack.c.b16 %v4548, %v4544
        %v6449 = vpack.c.b16 %v4549, %v4545
        %v6450 = vpack.c.b16 %v4550, %v4546
        %v6451 = vpack.c.b16 %v4551, %v4547
        %v6452 = vpack.c.b16 %v4556, %v4552
        %v6453 = vpack.c.b16 %v4557, %v4553
        %v6454 = vpack.c.b16 %v4558, %v4554
        %v6455 = vpack.c.b16 %v4559, %v4555
        %v6456 = vpack.c.b16 %v4564, %v4560
        %v6457 = vpack.c.b16 %v4565, %v4561
        %v6458 = vpack.c.b16 %v4566, %v4562
        %v6459 = vpack.c.b16 %v4567, %v4563
        %v6460 = vpack.c.b16 %v4572, %v4568
        %v6461 = vpack.c.b16 %v4573, %v4569
        %v6462 = vpack.c.b16 %v4574, %v4570
        %v6463 = vpack.c.b16 %v4575, %v4571
        %v6464 = vpack.c.b16 %v4580, %v4576
        %v6465 = vpack.c.b16 %v4581, %v4577
        %v6466 = vpack.c.b16 %v4582, %v4578
        %v6467 = vpack.c.b16 %v4583, %v4579
        %v6468 = vpack.c.b16 %v4588, %v4584
        %v6469 = vpack.c.b16 %v4589, %v4585
        %v6470 = vpack.c.b16 %v4590, %v4586
        %v6471 = vpack.c.b16 %v4591, %v4587
        %v6472 = vpack.c.b16 %v4596, %v4592
        %v6473 = vpack.c.b16 %v4597, %v4593
        %v6474 = vpack.c.b16 %v4598, %v4594
        %v6475 = vpack.c.b16 %v4599, %v4595
        %v6476 = vpack.c.b16 %v4604, %v4600
        %v6477 = vpack.c.b16 %v4605, %v4601
        %v6478 = vpack.c.b16 %v4606, %v4602
        %v6479 = vpack.c.b16 %v4607, %v4603
        %v6480 = vpack.c.b16 %v4612, %v4608
        %v6481 = vpack.c.b16 %v4613, %v4609
        %v6482 = vpack.c.b16 %v4614, %v4610
        %v6483 = vpack.c.b16 %v4615, %v4611
        %v6484 = vpack.c.b16 %v4620, %v4616
        %v6485 = vpack.c.b16 %v4621, %v4617
        %v6486 = vpack.c.b16 %v4622, %v4618
        %v6487 = vpack.c.b16 %v4623, %v4619
        %v6488 = vpack.c.b16 %v4628, %v4624
        %v6489 = vpack.c.b16 %v4629, %v4625
        %v6490 = vpack.c.b16 %v4630, %v4626
        %v6491 = vpack.c.b16 %v4631, %v4627
        %v6492 = vpack.c.b16 %v4636, %v4632
        %v6493 = vpack.c.b16 %v4637, %v4633
        %v6494 = vpack.c.b16 %v4638, %v4634
        %v6495 = vpack.c.b16 %v4639, %v4635
        %v6496 = vpack.c.b16 %v4644, %v4640
        %v6497 = vpack.c.b16 %v4645, %v4641
        %v6498 = vpack.c.b16 %v4646, %v4642
        %v6499 = vpack.c.b16 %v4647, %v4643
        %v6500 = vpack.c.b16 %v4652, %v4648
        %v6501 = vpack.c.b16 %v4653, %v4649
        %v6502 = vpack.c.b16 %v4654, %v4650
        %v6503 = vpack.c.b16 %v4655, %v4651
        %v6504 = vpack.c.b16 %v4660, %v4656
        %v6505 = vpack.c.b16 %v4661, %v4657
        %v6506 = vpack.c.b16 %v4662, %v4658
        %v6507 = vpack.c.b16 %v4663, %v4659
        %v6508 = vpack.c.b16 %v4668, %v4664
        %v6509 = vpack.c.b16 %v4669, %v4665
        %v6510 = vpack.c.b16 %v4670, %v4666
        %v6511 = vpack.c.b16 %v4671, %v4667
        %v6512 = vpack.c.b16 %v4676, %v4672
        %v6513 = vpack.c.b16 %v4677, %v4673
        %v6514 = vpack.c.b16 %v4678, %v4674
        %v6515 = vpack.c.b16 %v4679, %v4675
        %v6516 = vpack.c.b16 %v4684, %v4680
        %v6517 = vpack.c.b16 %v4685, %v4681
        %v6518 = vpack.c.b16 %v4686, %v4682
        %v6519 = vpack.c.b16 %v4687, %v4683
        %v6520 = vpack.c.b16 %v4692, %v4688
        %v6521 = vpack.c.b16 %v4693, %v4689
        %v6522 = vpack.c.b16 %v4694, %v4690
        %v6523 = vpack.c.b16 %v4695, %v4691
        %v6524 = vpack.c.b16 %v4700, %v4696
        %v6525 = vpack.c.b16 %v4701, %v4697
        %v6526 = vpack.c.b16 %v4702, %v4698
        %v6527 = vpack.c.b16 %v4703, %v4699
        %v6528 = vpack.c.b16 %v4708, %v4704
        %v6529 = vpack.c.b16 %v4709, %v4705
        %v6530 = vpack.c.b16 %v4710, %v4706
        %v6531 = vpack.c.b16 %v4711, %v4707
        %v6532 = vpack.c.b16 %v4716, %v4712
        %v6533 = vpack.c.b16 %v4717, %v4713
        %v6534 = vpack.c.b16 %v4718, %v4714
        %v6535 = vpack.c.b16 %v4719, %v4715
        %v6536 = vpack.c.b16 %v4724, %v4720
        %v6537 = vpack.c.b16 %v4725, %v4721
        %v6538 = vpack.c.b16 %v4726, %v4722
        %v6539 = vpack.c.b16 %v4727, %v4723
        %v6540 = vpack.c.b16 %v4732, %v4728
        %v6541 = vpack.c.b16 %v4733, %v4729
        %v6542 = vpack.c.b16 %v4734, %v4730
        %v6543 = vpack.c.b16 %v4735, %v4731
        %v6544 = vpack.c.b16 %v4740, %v4736
        %v6545 = vpack.c.b16 %v4741, %v4737
        %v6546 = vpack.c.b16 %v4742, %v4738
        %v6547 = vpack.c.b16 %v4743, %v4739
        %v6548 = vpack.c.b16 %v4748, %v4744
        %v6549 = vpack.c.b16 %v4749, %v4745
        %v6550 = vpack.c.b16 %v4750, %v4746
        %v6551 = vpack.c.b16 %v4751, %v4747
        %v6552 = vpack.c.b16 %v4756, %v4752
        %v6553 = vpack.c.b16 %v4757, %v4753
        %v6554 = vpack.c.b16 %v4758, %v4754
        %v6555 = vpack.c.b16 %v4759, %v4755
        %v6556 = vpack.c.b16 %v4764, %v4760
        %v6557 = vpack.c.b16 %v4765, %v4761
        %v6558 = vpack.c.b16 %v4766, %v4762
        %v6559 = vpack.c.b16 %v4767, %v4763
        %v6560 = vpack.c.b16 %v4772, %v4768
        %v6561 = vpack.c.b16 %v4773, %v4769
        %v6562 = vpack.c.b16 %v4774, %v4770
        %v6563 = vpack.c.b16 %v4775, %v4771
        %v6564 = vpack.c.b16 %v4780, %v4776
        %v6565 = vpack.c.b16 %v4781, %v4777
        %v6566 = vpack.c.b16 %v4782, %v4778
        %v6567 = vpack.c.b16 %v4783, %v4779
        %v6568 = vpack.c.b16 %v4788, %v4784
        %v6569 = vpack.c.b16 %v4789, %v4785
        %v6570 = vpack.c.b16 %v4790, %v4786
        %v6571 = vpack.c.b16 %v4791, %v4787
        %v6572 = vpack.c.b16 %v4796, %v4792
        %v6573 = vpack.c.b16 %v4797, %v4793
        %v6574 = vpack.c.b16 %v4798, %v4794
        %v6575 = vpack.c.b16 %v4799, %v4795
        %v6576 = vpack.c.b16 %v4804, %v4800
        %v6577 = vpack.c.b16 %v4805, %v4801
        %v6578 = vpack.c.b16 %v4806, %v4802
        %v6579 = vpack.c.b16 %v4807, %v4803
        %v6580 = vpack.c.b16 %v4812, %v4808
        %v6581 = vpack.c.b16 %v4813, %v4809
        %v6582 = vpack.c.b16 %v4814, %v4810
        %v6583 = vpack.c.b16 %v4815, %v4811
        %v6584 = vpack.c.b16 %v4820, %v4816
        %v6585 = vpack.c.b16 %v4821, %v4817
        %v6586 = vpack.c.b16 %v4822, %v4818
        %v6587 = vpack.c.b16 %v4823, %v4819
        %v6588 = vpack.c.b16 %v4828, %v4824
        %v6589 = vpack.c.b16 %v4829, %v4825
        %v6590 = vpack.c.b16 %v4830, %v4826
        %v6591 = vpack.c.b16 %v4831, %v4827
        %v6592 = vpack.c.b16 %v4836, %v4832
        %v6593 = vpack.c.b16 %v4837, %v4833
        %v6594 = vpack.c.b16 %v4838, %v4834
        %v6595 = vpack.c.b16 %v4839, %v4835
        %v6596 = vpack.c.b16 %v4844, %v4840
        %v6597 = vpack.c.b16 %v4845, %v4841
        %v6598 = vpack.c.b16 %v4846, %v4842
        %v6599 = vpack.c.b16 %v4847, %v4843
        %v6600 = vpack.c.b16 %v4852, %v4848
        %v6601 = vpack.c.b16 %v4853, %v4849
        %v6602 = vpack.c.b16 %v4854, %v4850
        %v6603 = vpack.c.b16 %v4855, %v4851
        %v6604 = vpack.c.b16 %v4860, %v4856
        %v6605 = vpack.c.b16 %v4861, %v4857
        %v6606 = vpack.c.b16 %v4862, %v4858
        %v6607 = vpack.c.b16 %v4863, %v4859
        %v6608 = vpack.c.b16 %v4868, %v4864
        %v6609 = vpack.c.b16 %v4869, %v4865
        %v6610 = vpack.c.b16 %v4870, %v4866
        %v6611 = vpack.c.b16 %v4871, %v4867
        %v6612 = vpack.c.b16 %v4876, %v4872
        %v6613 = vpack.c.b16 %v4877, %v4873
        %v6614 = vpack.c.b16 %v4878, %v4874
        %v6615 = vpack.c.b16 %v4879, %v4875
        %v6616 = vpack.c.b16 %v4884, %v4880
        %v6617 = vpack.c.b16 %v4885, %v4881
        %v6618 = vpack.c.b16 %v4886, %v4882
        %v6619 = vpack.c.b16 %v4887, %v4883
        %v6620 = vpack.c.b16 %v4892, %v4888
        %v6621 = vpack.c.b16 %v4893, %v4889
        %v6622 = vpack.c.b16 %v4894, %v4890
        %v6623 = vpack.c.b16 %v4895, %v4891
        %v6624 = vpack.c.b16 %v4900, %v4896
        %v6625 = vpack.c.b16 %v4901, %v4897
        %v6626 = vpack.c.b16 %v4902, %v4898
        %v6627 = vpack.c.b16 %v4903, %v4899
        %v6628 = vpack.c.b16 %v4908, %v4904
        %v6629 = vpack.c.b16 %v4909, %v4905
        %v6630 = vpack.c.b16 %v4910, %v4906
        %v6631 = vpack.c.b16 %v4911, %v4907
        %v6632 = vpack.c.b16 %v4916, %v4912
        %v6633 = vpack.c.b16 %v4917, %v4913
        %v6634 = vpack.c.b16 %v4918, %v4914
        %v6635 = vpack.c.b16 %v4919, %v4915
        %v6636 = vpack.c.b16 %v4924, %v4920
        %v6637 = vpack.c.b16 %v4925, %v4921
        %v6638 = vpack.c.b16 %v4926, %v4922
        %v6639 = vpack.c.b16 %v4927, %v4923
        %v6640 = vpack.c.b16 %v4932, %v4928
        %v6641 = vpack.c.b16 %v4933, %v4929
        %v6642 = vpack.c.b16 %v4934, %v4930
        %v6643 = vpack.c.b16 %v4935, %v4931
        %v6644 = vpack.c.b16 %v4940, %v4936
        %v6645 = vpack.c.b16 %v4941, %v4937
        %v6646 = vpack.c.b16 %v4942, %v4938
        %v6647 = vpack.c.b16 %v4943, %v4939
        %v6648 = vpack.c.b16 %v4948, %v4944
        %v6649 = vpack.c.b16 %v4949, %v4945
        %v6650 = vpack.c.b16 %v4950, %v4946
        %v6651 = vpack.c.b16 %v4951, %v4947
        %v6652 = vpack.c.b16 %v4956, %v4952
        %v6653 = vpack.c.b16 %v4957, %v4953
        %v6654 = vpack.c.b16 %v4958, %v4954
        %v6655 = vpack.c.b16 %v4959, %v4955
        %v6656 = vpack.c.b16 %v4964, %v4960
        %v6657 = vpack.c.b16 %v4965, %v4961
        %v6658 = vpack.c.b16 %v4966, %v4962
        %v6659 = vpack.c.b16 %v4967, %v4963
        %v6660 = vpack.c.b16 %v4972, %v4968
        %v6661 = vpack.c.b16 %v4973, %v4969
        %v6662 = vpack.c.b16 %v4974, %v4970
        %v6663 = vpack.c.b16 %v4975, %v4971
        %v6664 = vpack.c.b16 %v4980, %v4976
        %v6665 = vpack.c.b16 %v4981, %v4977
        %v6666 = vpack.c.b16 %v4982, %v4978
        %v6667 = vpack.c.b16 %v4983, %v4979
        %v6668 = vpack.c.b16 %v4988, %v4984
        %v6669 = vpack.c.b16 %v4989, %v4985
        %v6670 = vpack.c.b16 %v4990, %v4986
        %v6671 = vpack.c.b16 %v4991, %v4987
        %v6672 = vpack.c.b16 %v4996, %v4992
        %v6673 = vpack.c.b16 %v4997, %v4993
        %v6674 = vpack.c.b16 %v4998, %v4994
        %v6675 = vpack.c.b16 %v4999, %v4995
        %v6676 = vpack.c.b16 %v5004, %v5000
        %v6677 = vpack.c.b16 %v5005, %v5001
        %v6678 = vpack.c.b16 %v5006, %v5002
        %v6679 = vpack.c.b16 %v5007, %v5003
        %v6680 = vpack.c.b16 %v5012, %v5008
        %v6681 = vpack.c.b16 %v5013, %v5009
        %v6682 = vpack.c.b16 %v5014, %v5010
        %v6683 = vpack.c.b16 %v5015, %v5011
        %v6684 = vpack.c.b16 %v5020, %v5016
        %v6685 = vpack.c.b16 %v5021, %v5017
        %v6686 = vpack.c.b16 %v5022, %v5018
        %v6687 = vpack.c.b16 %v5023, %v5019
        %v6688 = vpack.c.b16 %v5028, %v5024
        %v6689 = vpack.c.b16 %v5029, %v5025
        %v6690 = vpack.c.b16 %v5030, %v5026
        %v6691 = vpack.c.b16 %v5031, %v5027
        %v6692 = vpack.c.b16 %v5036, %v5032
        %v6693 = vpack.c.b16 %v5037, %v5033
        %v6694 = vpack.c.b16 %v5038, %v5034
        %v6695 = vpack.c.b16 %v5039, %v5035
        %v6696 = vpack.c.b16 %v5044, %v5040
        %v6697 = vpack.c.b16 %v5045, %v5041
        %v6698 = vpack.c.b16 %v5046, %v5042
        %v6699 = vpack.c.b16 %v5047, %v5043
        %v6700 = vpack.c.b16 %v5052, %v5048
        %v6701 = vpack.c.b16 %v5053, %v5049
        %v6702 = vpack.c.b16 %v5054, %v5050
        %v6703 = vpack.c.b16 %v5055, %v5051
        %v6704 = vpack.c.b16 %v5060, %v5056
        %v6705 = vpack.c.b16 %v5061, %v5057
        %v6706 = vpack.c.b16 %v5062, %v5058
        %v6707 = vpack.c.b16 %v5063, %v5059
        %v6708 = vpack.c.b16 %v5068, %v5064
        %v6709 = vpack.c.b16 %v5069, %v5065
        %v6710 = vpack.c.b16 %v5070, %v5066
        %v6711 = vpack.c.b16 %v5071, %v5067
        %v6712 = vpack.c.b16 %v5076, %v5072
        %v6713 = vpack.c.b16 %v5077, %v5073
        %v6714 = vpack.c.b16 %v5078, %v5074
        %v6715 = vpack.c.b16 %v5079, %v5075
        %v6716 = vpack.c.b16 %v5084, %v5080
        %v6717 = vpack.c.b16 %v5085, %v5081
        %v6718 = vpack.c.b16 %v5086, %v5082
        %v6719 = vpack.c.b16 %v5087, %v5083
        %v6720 = vpack.c.b16 %v5092, %v5088
        %v6721 = vpack.c.b16 %v5093, %v5089
        %v6722 = vpack.c.b16 %v5094, %v5090
        %v6723 = vpack.c.b16 %v5095, %v5091
        %v6724 = vpack.c.b16 %v5100, %v5096
        %v6725 = vpack.c.b16 %v5101, %v5097
        %v6726 = vpack.c.b16 %v5102, %v5098
        %v6727 = vpack.c.b16 %v5103, %v5099
        %v6728 = vpack.c.b16 %v5108, %v5104
        %v6729 = vpack.c.b16 %v5109, %v5105
        %v6730 = vpack.c.b16 %v5110, %v5106
        %v6731 = vpack.c.b16 %v5111, %v5107
        %v6732 = vpack.c.b16 %v5116, %v5112
        %v6733 = vpack.c.b16 %v5117, %v5113
        %v6734 = vpack.c.b16 %v5118, %v5114
        %v6735 = vpack.c.b16 %v5119, %v5115
        %v6736 = vpack.c.b16 %v5124, %v5120
        %v6737 = vpack.c.b16 %v5125, %v5121
        %v6738 = vpack.c.b16 %v5126, %v5122
        %v6739 = vpack.c.b16 %v5127, %v5123
        %v6740 = vpack.c.b16 %v5132, %v5128
        %v6741 = vpack.c.b16 %v5133, %v5129
        %v6742 = vpack.c.b16 %v5134, %v5130
        %v6743 = vpack.c.b16 %v5135, %v5131
        %v6744 = vpack.c.b16 %v5140, %v5136
        %v6745 = vpack.c.b16 %v5141, %v5137
        %v6746 = vpack.c.b16 %v5142, %v5138
        %v6747 = vpack.c.b16 %v5143, %v5139
        %v6748 = vpack.c.b16 %v5148, %v5144
        %v6749 = vpack.c.b16 %v5149, %v5145
        %v6750 = vpack.c.b16 %v5150, %v5146
        %v6751 = vpack.c.b16 %v5151, %v5147
        %v6752 = vpack.c.b16 %v5156, %v5152
        %v6753 = vpack.c.b16 %v5157, %v5153
        %v6754 = vpack.c.b16 %v5158, %v5154
        %v6755 = vpack.c.b16 %v5159, %v5155
        %v6756 = vpack.c.b16 %v5164, %v5160
        %v6757 = vpack.c.b16 %v5165, %v5161
        %v6758 = vpack.c.b16 %v5166, %v5162
        %v6759 = vpack.c.b16 %v5167, %v5163
        %v6760 = vpack.c.b16 %v5172, %v5168
        %v6761 = vpack.c.b16 %v5173, %v5169
        %v6762 = vpack.c.b16 %v5174, %v5170
        %v6763 = vpack.c.b16 %v5175, %v5171
        %v6764 = vpack.c.b16 %v5180, %v5176
        %v6765 = vpack.c.b16 %v5181, %v5177
        %v6766 = vpack.c.b16 %v5182, %v5178
        %v6767 = vpack.c.b16 %v5183, %v5179
        %v6768 = vpack.c.b16 %v5188, %v5184
        %v6769 = vpack.c.b16 %v5189, %v5185
        %v6770 = vpack.c.b16 %v5190, %v5186
        %v6771 = vpack.c.b16 %v5191, %v5187
        %v6772 = vpack.c.b16 %v5196, %v5192
        %v6773 = vpack.c.b16 %v5197, %v5193
        %v6774 = vpack.c.b16 %v5198, %v5194
        %v6775 = vpack.c.b16 %v5199, %v5195
        %v6776 = vpack.c.b16 %v5204, %v5200
        %v6777 = vpack.c.b16 %v5205, %v5201
        %v6778 = vpack.c.b16 %v5206, %v5202
        %v6779 = vpack.c.b16 %v5207, %v5203
        %v6780 = vpack.c.b16 %v5212, %v5208
        %v6781 = vpack.c.b16 %v5213, %v5209
        %v6782 = vpack.c.b16 %v5214, %v5210
        %v6783 = vpack.c.b16 %v5215, %v5211
        %v6784 = vpack.c.b16 %v5220, %v5216
        %v6785 = vpack.c.b16 %v5221, %v5217
        %v6786 = vpack.c.b16 %v5222, %v5218
        %v6787 = vpack.c.b16 %v5223, %v5219
        %v6788 = vpack.c.b16 %v5228, %v5224
        %v6789 = vpack.c.b16 %v5229, %v5225
        %v6790 = vpack.c.b16 %v5230, %v5226
        %v6791 = vpack.c.b16 %v5231, %v5227
        %v6792 = vpack.c.b16 %v5236, %v5232
        %v6793 = vpack.c.b16 %v5237, %v5233
        %v6794 = vpack.c.b16 %v5238, %v5234
        %v6795 = vpack.c.b16 %v5239, %v5235
        %v6796 = vpack.c.b16 %v5244, %v5240
        %v6797 = vpack.c.b16 %v5245, %v5241
        %v6798 = vpack.c.b16 %v5246, %v5242
        %v6799 = vpack.c.b16 %v5247, %v5243
        %v6800 = vpack.c.b16 %v5252, %v5248
        %v6801 = vpack.c.b16 %v5253, %v5249
        %v6802 = vpack.c.b16 %v5254, %v5250
        %v6803 = vpack.c.b16 %v5255, %v5251
        %v6804 = vpack.c.b16 %v5260, %v5256
        %v6805 = vpack.c.b16 %v5261, %v5257
        %v6806 = vpack.c.b16 %v5262, %v5258
        %v6807 = vpack.c.b16 %v5263, %v5259
        %v6808 = vpack.c.b16 %v5268, %v5264
        %v6809 = vpack.c.b16 %v5269, %v5265
        %v6810 = vpack.c.b16 %v5270, %v5266
        %v6811 = vpack.c.b16 %v5271, %v5267
        %v6812 = vpack.c.b16 %v5276, %v5272
        %v6813 = vpack.c.b16 %v5277, %v5273
        %v6814 = vpack.c.b16 %v5278, %v5274
        %v6815 = vpack.c.b16 %v5279, %v5275
        %v6816 = vpack.c.b16 %v5284, %v5280
        %v6817 = vpack.c.b16 %v5285, %v5281
        %v6818 = vpack.c.b16 %v5286, %v5282
        %v6819 = vpack.c.b16 %v5287, %v5283
        %v6820 = vpack.c.b16 %v5292, %v5288
        %v6821 = vpack.c.b16 %v5293, %v5289
        %v6822 = vpack.c.b16 %v5294, %v5290
        %v6823 = vpack.c.b16 %v5295, %v5291
        %v6824 = vpack.c.b16 %v5300, %v5296
        %v6825 = vpack.c.b16 %v5301, %v5297
        %v6826 = vpack.c.b16 %v5302, %v5298
        %v6827 = vpack.c.b16 %v5303, %v5299
        %v6828 = vpack.c.b16 %v5308, %v5304
        %v6829 = vpack.c.b16 %v5309, %v5305
        %v6830 = vpack.c.b16 %v5310, %v5306
        %v6831 = vpack.c.b16 %v5311, %v5307
        %v6832 = vpack.c.b16 %v5316, %v5312
        %v6833 = vpack.c.b16 %v5317, %v5313
        %v6834 = vpack.c.b16 %v5318, %v5314
        %v6835 = vpack.c.b16 %v5319, %v5315
        %v6836 = vpack.c.b16 %v5324, %v5320
        %v6837 = vpack.c.b16 %v5325, %v5321
        %v6838 = vpack.c.b16 %v5326, %v5322
        %v6839 = vpack.c.b16 %v5327, %v5323
        %v6840 = vpack.c.b16 %v5332, %v5328
        %v6841 = vpack.c.b16 %v5333, %v5329
        %v6842 = vpack.c.b16 %v5334, %v5330
        %v6843 = vpack.c.b16 %v5335, %v5331
        %v6844 = vpack.c.b16 %v5340, %v5336
        %v6845 = vpack.c.b16 %v5341, %v5337
        %v6846 = vpack.c.b16 %v5342, %v5338
        %v6847 = vpack.c.b16 %v5343, %v5339
        %v6848 = vpack.c.b16 %v5348, %v5344
        %v6849 = vpack.c.b16 %v5349, %v5345
        %v6850 = vpack.c.b16 %v5350, %v5346
        %v6851 = vpack.c.b16 %v5351, %v5347
        %v6852 = vpack.c.b16 %v5356, %v5352
        %v6853 = vpack.c.b16 %v5357, %v5353
        %v6854 = vpack.c.b16 %v5358, %v5354
        %v6855 = vpack.c.b16 %v5359, %v5355
        %v6856 = vpack.c.b16 %v5364, %v5360
        %v6857 = vpack.c.b16 %v5365, %v5361
        %v6858 = vpack.c.b16 %v5366, %v5362
        %v6859 = vpack.c.b16 %v5367, %v5363
        %v6860 = vpack.c.b16 %v5372, %v5368
        %v6861 = vpack.c.b16 %v5373, %v5369
        %v6862 = vpack.c.b16 %v5374, %v5370
        %v6863 = vpack.c.b16 %v5375, %v5371
        %v6864 = vpack.c.b16 %v5380, %v5376
        %v6865 = vpack.c.b16 %v5381, %v5377
        %v6866 = vpack.c.b16 %v5382, %v5378
        %v6867 = vpack.c.b16 %v5383, %v5379
        %v6868 = vpack.c.b16 %v5388, %v5384
        %v6869 = vpack.c.b16 %v5389, %v5385
        %v6870 = vpack.c.b16 %v5390, %v5386
        %v6871 = vpack.c.b16 %v5391, %v5387
        %v6872 = vpack.c.b16 %v5396, %v5392
        %v6873 = vpack.c.b16 %v5397, %v5393
        %v6874 = vpack.c.b16 %v5398, %v5394
        %v6875 = vpack.c.b16 %v5399, %v5395
        %v6876 = vpack.c.b16 %v5404, %v5400
        %v6877 = vpack.c.b16 %v5405, %v5401
        %v6878 = vpack.c.b16 %v5406, %v5402
        %v6879 = vpack.c.b16 %v5407, %v5403
        %v6880 = vpack.c.b16 %v5412, %v5408
        %v6881 = vpack.c.b16 %v5413, %v5409
        %v6882 = vpack.c.b16 %v5414, %v5410
        %v6883 = vpack.c.b16 %v5415, %v5411
        %v6884 = vpack.c.b16 %v5420, %v5416
        %v6885 = vpack.c.b16 %v5421, %v5417
        %v6886 = vpack.c.b16 %v5422, %v5418
        %v6887 = vpack.c.b16 %v5423, %v5419
        %v6888 = vpack.c.b16 %v5428, %v5424
        %v6889 = vpack.c.b16 %v5429, %v5425
        %v6890 = vpack.c.b16 %v5430, %v5426
        %v6891 = vpack.c.b16 %v5431, %v5427
        %v6892 = vpack.c.b16 %v5436, %v5432
        %v6893 = vpack.c.b16 %v5437, %v5433
        %v6894 = vpack.c.b16 %v5438, %v5434
        %v6895 = vpack.c.b16 %v5439, %v5435
        %v6896 = vpack.c.b16 %v5444, %v5440
        %v6897 = vpack.c.b16 %v5445, %v5441
        %v6898 = vpack.c.b16 %v5446, %v5442
        %v6899 = vpack.c.b16 %v5447, %v5443
        %v6900 = vpack.c.b16 %v5452, %v5448
        %v6901 = vpack.c.b16 %v5453, %v5449
        %v6902 = vpack.c.b16 %v5454, %v5450
        %v6903 = vpack.c.b16 %v5455, %v5451
        %v6904 = vpack.c.b16 %v5460, %v5456
        %v6905 = vpack.c.b16 %v5461, %v5457
        %v6906 = vpack.c.b16 %v5462, %v5458
        %v6907 = vpack.c.b16 %v5463, %v5459
        %v6908 = vpack.c.b16 %v5468, %v5464
        %v6909 = vpack.c.b16 %v5469, %v5465
        %v6910 = vpack.c.b16 %v5470, %v5466
        %v6911 = vpack.c.b16 %v5471, %v5467
        %v6912 = vpack.c.b16 %v5476, %v5472
        %v6913 = vpack.c.b16 %v5477, %v5473
        %v6914 = vpack.c.b16 %v5478, %v5474
        %v6915 = vpack.c.b16 %v5479, %v5475
        %v6916 = vpack.c.b16 %v5484, %v5480
        %v6917 = vpack.c.b16 %v5485, %v5481
        %v6918 = vpack.c.b16 %v5486, %v5482
        %v6919 = vpack.c.b16 %v5487, %v5483
        %v6920 = vpack.c.b16 %v5492, %v5488
        %v6921 = vpack.c.b16 %v5493, %v5489
        %v6922 = vpack.c.b16 %v5494, %v5490
        %v6923 = vpack.c.b16 %v5495, %v5491
        %v6924 = vpack.c.b16 %v5500, %v5496
        %v6925 = vpack.c.b16 %v5501, %v5497
        %v6926 = vpack.c.b16 %v5502, %v5498
        %v6927 = vpack.c.b16 %v5503, %v5499
        %v6928 = vpack.c.b16 %v5508, %v5504
        %v6929 = vpack.c.b16 %v5509, %v5505
        %v6930 = vpack.c.b16 %v5510, %v5506
        %v6931 = vpack.c.b16 %v5511, %v5507
        %v6932 = vpack.c.b16 %v5516, %v5512
        %v6933 = vpack.c.b16 %v5517, %v5513
        %v6934 = vpack.c.b16 %v5518, %v5514
        %v6935 = vpack.c.b16 %v5519, %v5515
        %v6936 = vpack.c.b16 %v5524, %v5520
        %v6937 = vpack.c.b16 %v5525, %v5521
        %v6938 = vpack.c.b16 %v5526, %v5522
        %v6939 = vpack.c.b16 %v5527, %v5523
        %v6940 = vpack.c.b16 %v5532, %v5528
        %v6941 = vpack.c.b16 %v5533, %v5529
        %v6942 = vpack.c.b16 %v5534, %v5530
        %v6943 = vpack.c.b16 %v5535, %v5531
        %v6944 = vpack.c.b16 %v5540, %v5536
        %v6945 = vpack.c.b16 %v5541, %v5537
        %v6946 = vpack.c.b16 %v5542, %v5538
        %v6947 = vpack.c.b16 %v5543, %v5539
        %v6948 = vpack.c.b16 %v5548, %v5544
        %v6949 = vpack.c.b16 %v5549, %v5545
        %v6950 = vpack.c.b16 %v5550, %v5546
        %v6951 = vpack.c.b16 %v5551, %v5547
        %v6952 = vpack.c.b16 %v5556, %v5552
        %v6953 = vpack.c.b16 %v5557, %v5553
        %v6954 = vpack.c.b16 %v5558, %v5554
        %v6955 = vpack.c.b16 %v5559, %v5555
        %v6956 = vpack.c.b16 %v5564, %v5560
        %v6957 = vpack.c.b16 %v5565, %v5561
        %v6958 = vpack.c.b16 %v5566, %v5562
        %v6959 = vpack.c.b16 %v5567, %v5563
        %v6960 = vpack.c.b16 %v5572, %v5568
        %v6961 = vpack.c.b16 %v5573, %v5569
        %v6962 = vpack.c.b16 %v5574, %v5570
        %v6963 = vpack.c.b16 %v5575, %v5571
        %v6964 = vpack.c.b16 %v5580, %v5576
        %v6965 = vpack.c.b16 %v5581, %v5577
        %v6966 = vpack.c.b16 %v5582, %v5578
        %v6967 = vpack.c.b16 %v5583, %v5579
        %v6968 = vpack.c.b16 %v5588, %v5584
        %v6969 = vpack.c.b16 %v5589, %v5585
        %v6970 = vpack.c.b16 %v5590, %v5586
        %v6971 = vpack.c.b16 %v5591, %v5587
        %v6972 = vpack.c.b16 %v5596, %v5592
        %v6973 = vpack.c.b16 %v5597, %v5593
        %v6974 = vpack.c.b16 %v5598, %v5594
        %v6975 = vpack.c.b16 %v5599, %v5595
        %v6976 = vpack.c.b16 %v5604, %v5600
        %v6977 = vpack.c.b16 %v5605, %v5601
        %v6978 = vpack.c.b16 %v5606, %v5602
        %v6979 = vpack.c.b16 %v5607, %v5603
        %v6980 = vpack.c.b16 %v5612, %v5608
        %v6981 = vpack.c.b16 %v5613, %v5609
        %v6982 = vpack.c.b16 %v5614, %v5610
        %v6983 = vpack.c.b16 %v5615, %v5611
        %v6984 = vpack.c.b16 %v5620, %v5616
        %v6985 = vpack.c.b16 %v5621, %v5617
        %v6986 = vpack.c.b16 %v5622, %v5618
        %v6987 = vpack.c.b16 %v5623, %v5619
        %v6988 = vpack.c.b16 %v5628, %v5624
        %v6989 = vpack.c.b16 %v5629, %v5625
        %v6990 = vpack.c.b16 %v5630, %v5626
        %v6991 = vpack.c.b16 %v5631, %v5627
        %v6992 = vpack.c.b16 %v5636, %v5632
        %v6993 = vpack.c.b16 %v5637, %v5633
        %v6994 = vpack.c.b16 %v5638, %v5634
        %v6995 = vpack.c.b16 %v5639, %v5635
        %v6996 = vpack.c.b16 %v5644, %v5640
        %v6997 = vpack.c.b16 %v5645, %v5641
        %v6998 = vpack.c.b16 %v5646, %v5642
        %v6999 = vpack.c.b16 %v5647, %v5643
        %v7000 = vpack.c.b16 %v5652, %v5648
        %v7001 = vpack.c.b16 %v5653, %v5649
        %v7002 = vpack.c.b16 %v5654, %v5650
        %v7003 = vpack.c.b16 %v5655, %v5651
        %v7004 = vpack.c.b16 %v5660, %v5656
        %v7005 = vpack.c.b16 %v5661, %v5657
        %v7006 = vpack.c.b16 %v5662, %v5658
        %v7007 = vpack.c.b16 %v5663, %v5659
        %v7008 = vpack.c.b16 %v5668, %v5664
        %v7009 = vpack.c.b16 %v5669, %v5665
        %v7010 = vpack.c.b16 %v5670, %v5666
        %v7011 = vpack.c.b16 %v5671, %v5667
        %v7012 = vpack.c.b16 %v5676, %v5672
        %v7013 = vpack.c.b16 %v5677, %v5673
        %v7014 = vpack.c.b16 %v5678, %v5674
        %v7015 = vpack.c.b16 %v5679, %v5675
        %v7016 = vpack.c.b16 %v5684, %v5680
        %v7017 = vpack.c.b16 %v5685, %v5681
        %v7018 = vpack.c.b16 %v5686, %v5682
        %v7019 = vpack.c.b16 %v5687, %v5683
        %v7020 = vpack.c.b16 %v5692, %v5688
        %v7021 = vpack.c.b16 %v5693, %v5689
        %v7022 = vpack.c.b16 %v5694, %v5690
        %v7023 = vpack.c.b16 %v5695, %v5691
        %v7024 = vpack.c.b16 %v5700, %v5696
        %v7025 = vpack.c.b16 %v5701, %v5697
        %v7026 = vpack.c.b16 %v5702, %v5698
        %v7027 = vpack.c.b16 %v5703, %v5699
        %v7028 = vpack.c.b16 %v5708, %v5704
        %v7029 = vpack.c.b16 %v5709, %v5705
        %v7030 = vpack.c.b16 %v5710, %v5706
        %v7031 = vpack.c.b16 %v5711, %v5707
        %v7032 = vpack.c.b16 %v5716, %v5712
        %v7033 = vpack.c.b16 %v5717, %v5713
        %v7034 = vpack.c.b16 %v5718, %v5714
        %v7035 = vpack.c.b16 %v5719, %v5715
        %v7036 = vpack.c.b16 %v5724, %v5720
        %v7037 = vpack.c.b16 %v5725, %v5721
        %v7038 = vpack.c.b16 %v5726, %v5722
        %v7039 = vpack.c.b16 %v5727, %v5723
        %v7040 = vpack.c.b16 %v5732, %v5728
        %v7041 = vpack.c.b16 %v5733, %v5729
        %v7042 = vpack.c.b16 %v5734, %v5730
        %v7043 = vpack.c.b16 %v5735, %v5731
        %v7044 = vpack.c.b16 %v5740, %v5736
        %v7045 = vpack.c.b16 %v5741, %v5737
        %v7046 = vpack.c.b16 %v5742, %v5738
        %v7047 = vpack.c.b16 %v5743, %v5739
        %v7048 = vpack.c.b16 %v5748, %v5744
        %v7049 = vpack.c.b16 %v5749, %v5745
        %v7050 = vpack.c.b16 %v5750, %v5746
        %v7051 = vpack.c.b16 %v5751, %v5747
        %v7052 = vpack.c.b16 %v5756, %v5752
        %v7053 = vpack.c.b16 %v5757, %v5753
        %v7054 = vpack.c.b16 %v5758, %v5754
        %v7055 = vpack.c.b16 %v5759, %v5755
        %v7056 = vpack.c.b16 %v5764, %v5760
        %v7057 = vpack.c.b16 %v5765, %v5761
        %v7058 = vpack.c.b16 %v5766, %v5762
        %v7059 = vpack.c.b16 %v5767, %v5763
        %v7060 = vpack.c.b16 %v5772, %v5768
        %v7061 = vpack.c.b16 %v5773, %v5769
        %v7062 = vpack.c.b16 %v5774, %v5770
        %v7063 = vpack.c.b16 %v5775, %v5771
        %v7064 = vpack.c.b16 %v5780, %v5776
        %v7065 = vpack.c.b16 %v5781, %v5777
        %v7066 = vpack.c.b16 %v5782, %v5778
        %v7067 = vpack.c.b16 %v5783, %v5779
        %v7068 = vpack.c.b16 %v5788, %v5784
        %v7069 = vpack.c.b16 %v5789, %v5785
        %v7070 = vpack.c.b16 %v5790, %v5786
        %v7071 = vpack.c.b16 %v5791, %v5787
        %8352 = vmatpush.bf16.msra.mxu0 %v5820
        %8353 = vmatpush.bf16.msra.mxu0 %v5816
        %8354 = vmatpush.bf16.msra.mxu0 %v5812
        %8355 = vmatpush.bf16.msra.mxu0 %v5808
        %8356 = vmatpush.bf16.msra.mxu0 %v5804
        %8357 = vmatpush.bf16.msra.mxu0 %v5800
        %8358 = vmatpush.bf16.msra.mxu0 %v5796
        %8359 = vmatpush.bf16.msra.mxu0 %v5792
        %8360 = vmatmul.bf16.gmra.mxu0 %v628
        %v8361 = vpop.f32.mrf.mxu0
        %v8362 = vadd.f32 0.0, %v8361
        %v8363 = vpop.f32.mrf.mxu0
        %8364 = vdwg.mxu0
        %8365 = vmatpush.bf16.msra.mxu0 %v5852
        %8366 = vmatpush.bf16.msra.mxu0 %v5848
        %8367 = vmatpush.bf16.msra.mxu0 %v5844
        %8368 = vmatpush.bf16.msra.mxu0 %v5840
        %8369 = vmatpush.bf16.msra.mxu0 %v5836
        %8370 = vmatpush.bf16.msra.mxu0 %v5832
        %8371 = vmatpush.bf16.msra.mxu0 %v5828
        %8372 = vmatpush.bf16.msra.mxu0 %v5824
        %8373 = vmatmul.bf16.gmra.mxu0 %v629
        %v8374 = vpop.f32.mrf.mxu0
        %v8375 = vadd.f32 %v8362, %v8374
        %v8376 = vpop.f32.mrf.mxu0
        %8377 = vdwg.mxu0
        %8378 = vmatpush.bf16.msra.mxu0 %v5884
        %8379 = vmatpush.bf16.msra.mxu0 %v5880
        %8380 = vmatpush.bf16.msra.mxu0 %v5876
        %8381 = vmatpush.bf16.msra.mxu0 %v5872
        %8382 = vmatpush.bf16.msra.mxu0 %v5868
        %8383 = vmatpush.bf16.msra.mxu0 %v5864
        %8384 = vmatpush.bf16.msra.mxu0 %v5860
        %8385 = vmatpush.bf16.msra.mxu0 %v5856
        %8386 = vmatmul.bf16.gmra.mxu0 %v630
        %v8387 = vpop.f32.mrf.mxu0
        %v8388 = vadd.f32 %v8375, %v8387
        %v8389 = vpop.f32.mrf.mxu0
        %8390 = vdwg.mxu0
        %8391 = vmatpush.bf16.msra.mxu0 %v5916
        %8392 = vmatpush.bf16.msra.mxu0 %v5912
        %8393 = vmatpush.bf16.msra.mxu0 %v5908
        %8394 = vmatpush.bf16.msra.mxu0 %v5904
        %8395 = vmatpush.bf16.msra.mxu0 %v5900
        %8396 = vmatpush.bf16.msra.mxu0 %v5896
        %8397 = vmatpush.bf16.msra.mxu0 %v5892
        %8398 = vmatpush.bf16.msra.mxu0 %v5888
        %8399 = vmatmul.bf16.gmra.mxu0 %v631
        %v8400 = vpop.f32.mrf.mxu0
        %v8401 = vadd.f32 %v8388, %v8400
        %v8402 = vpop.f32.mrf.mxu0
        %8403 = vdwg.mxu0
        %8404 = vmatpush.bf16.msra.mxu0 %v5948
        %8405 = vmatpush.bf16.msra.mxu0 %v5944
        %8406 = vmatpush.bf16.msra.mxu0 %v5940
        %8407 = vmatpush.bf16.msra.mxu0 %v5936
        %8408 = vmatpush.bf16.msra.mxu0 %v5932
        %8409 = vmatpush.bf16.msra.mxu0 %v5928
        %8410 = vmatpush.bf16.msra.mxu0 %v5924
        %8411 = vmatpush.bf16.msra.mxu0 %v5920
        %8412 = vmatmul.bf16.gmra.mxu0 %v632
        %v8413 = vpop.f32.mrf.mxu0
        %v8414 = vadd.f32 %v8401, %v8413
        %v8415 = vpop.f32.mrf.mxu0
        %8416 = vdwg.mxu0
        %8417 = vmatpush.bf16.msra.mxu0 %v5980
        %8418 = vmatpush.bf16.msra.mxu0 %v5976
        %8419 = vmatpush.bf16.msra.mxu0 %v5972
        %8420 = vmatpush.bf16.msra.mxu0 %v5968
        %8421 = vmatpush.bf16.msra.mxu0 %v5964
        %8422 = vmatpush.bf16.msra.mxu0 %v5960
        %8423 = vmatpush.bf16.msra.mxu0 %v5956
        %8424 = vmatpush.bf16.msra.mxu0 %v5952
        %8425 = vmatmul.bf16.gmra.mxu0 %v633
        %v8426 = vpop.f32.mrf.mxu0
        %v8427 = vadd.f32 %v8414, %v8426
        %v8428 = vpop.f32.mrf.mxu0
        %8429 = vdwg.mxu0
        %8430 = vmatpush.bf16.msra.mxu0 %v6012
        %8431 = vmatpush.bf16.msra.mxu0 %v6008
        %8432 = vmatpush.bf16.msra.mxu0 %v6004
        %8433 = vmatpush.bf16.msra.mxu0 %v6000
        %8434 = vmatpush.bf16.msra.mxu0 %v5996
        %8435 = vmatpush.bf16.msra.mxu0 %v5992
        %8436 = vmatpush.bf16.msra.mxu0 %v5988
        %8437 = vmatpush.bf16.msra.mxu0 %v5984
        %8438 = vmatmul.bf16.gmra.mxu0 %v634
        %v8439 = vpop.f32.mrf.mxu0
        %v8440 = vadd.f32 %v8427, %v8439
        %v8441 = vpop.f32.mrf.mxu0
        %8442 = vdwg.mxu0
        %8443 = vmatpush.bf16.msra.mxu0 %v6044
        %8444 = vmatpush.bf16.msra.mxu0 %v6040
        %8445 = vmatpush.bf16.msra.mxu0 %v6036
        %8446 = vmatpush.bf16.msra.mxu0 %v6032
        %8447 = vmatpush.bf16.msra.mxu0 %v6028
        %8448 = vmatpush.bf16.msra.mxu0 %v6024
        %8449 = vmatpush.bf16.msra.mxu0 %v6020
        %8450 = vmatpush.bf16.msra.mxu0 %v6016
        %8451 = vmatmul.bf16.gmra.mxu0 %v635
        %v8452 = vpop.f32.mrf.mxu0
        %v8453 = vadd.f32 %v8440, %v8452
        %v8454 = vpop.f32.mrf.mxu0
        %8455 = vdwg.mxu0
        %8456 = vmatpush.bf16.msra.mxu0 %v6076
        %8457 = vmatpush.bf16.msra.mxu0 %v6072
        %8458 = vmatpush.bf16.msra.mxu0 %v6068
        %8459 = vmatpush.bf16.msra.mxu0 %v6064
        %8460 = vmatpush.bf16.msra.mxu0 %v6060
        %8461 = vmatpush.bf16.msra.mxu0 %v6056
        %8462 = vmatpush.bf16.msra.mxu0 %v6052
        %8463 = vmatpush.bf16.msra.mxu0 %v6048
        %8464 = vmatmul.bf16.gmra.mxu0 %v636
        %v8465 = vpop.f32.mrf.mxu0
        %v8466 = vadd.f32 %v8453, %v8465
        %v8467 = vpop.f32.mrf.mxu0
        %8468 = vdwg.mxu0
        %8469 = vmatpush.bf16.msra.mxu0 %v6108
        %8470 = vmatpush.bf16.msra.mxu0 %v6104
        %8471 = vmatpush.bf16.msra.mxu0 %v6100
        %8472 = vmatpush.bf16.msra.mxu0 %v6096
        %8473 = vmatpush.bf16.msra.mxu0 %v6092
        %8474 = vmatpush.bf16.msra.mxu0 %v6088
        %8475 = vmatpush.bf16.msra.mxu0 %v6084
        %8476 = vmatpush.bf16.msra.mxu0 %v6080
        %8477 = vmatmul.bf16.gmra.mxu0 %v637
        %v8478 = vpop.f32.mrf.mxu0
        %v8479 = vadd.f32 %v8466, %v8478
        %v8480 = vpop.f32.mrf.mxu0
        %8481 = vdwg.mxu0
        %8482 = vmatpush.bf16.msra.mxu0 %v6140
        %8483 = vmatpush.bf16.msra.mxu0 %v6136
        %8484 = vmatpush.bf16.msra.mxu0 %v6132
        %8485 = vmatpush.bf16.msra.mxu0 %v6128
        %8486 = vmatpush.bf16.msra.mxu0 %v6124
        %8487 = vmatpush.bf16.msra.mxu0 %v6120
        %8488 = vmatpush.bf16.msra.mxu0 %v6116
        %8489 = vmatpush.bf16.msra.mxu0 %v6112
        %8490 = vmatmul.bf16.gmra.mxu0 %v638
        %v8491 = vpop.f32.mrf.mxu0
        %v8492 = vadd.f32 %v8479, %v8491
        %v8493 = vpop.f32.mrf.mxu0
        %8494 = vdwg.mxu0
        %8495 = vmatpush.bf16.msra.mxu0 %v6172
        %8496 = vmatpush.bf16.msra.mxu0 %v6168
        %8497 = vmatpush.bf16.msra.mxu0 %v6164
        %8498 = vmatpush.bf16.msra.mxu0 %v6160
        %8499 = vmatpush.bf16.msra.mxu0 %v6156
        %8500 = vmatpush.bf16.msra.mxu0 %v6152
        %8501 = vmatpush.bf16.msra.mxu0 %v6148
        %8502 = vmatpush.bf16.msra.mxu0 %v6144
        %8503 = vmatmul.bf16.gmra.mxu0 %v639
        %v8504 = vpop.f32.mrf.mxu0
        %v8505 = vadd.f32 %v8492, %v8504
        %v8506 = vpop.f32.mrf.mxu0
        %8507 = vdwg.mxu0
        %8508 = vmatpush.bf16.msra.mxu0 %v6204
        %8509 = vmatpush.bf16.msra.mxu0 %v6200
        %8510 = vmatpush.bf16.msra.mxu0 %v6196
        %8511 = vmatpush.bf16.msra.mxu0 %v6192
        %8512 = vmatpush.bf16.msra.mxu0 %v6188
        %8513 = vmatpush.bf16.msra.mxu0 %v6184
        %8514 = vmatpush.bf16.msra.mxu0 %v6180
        %8515 = vmatpush.bf16.msra.mxu0 %v6176
        %8516 = vmatmul.bf16.gmra.mxu0 %v640
        %v8517 = vpop.f32.mrf.mxu0
        %v8518 = vadd.f32 %v8505, %v8517
        %v8519 = vpop.f32.mrf.mxu0
        %8520 = vdwg.mxu0
        %8521 = vmatpush.bf16.msra.mxu0 %v6236
        %8522 = vmatpush.bf16.msra.mxu0 %v6232
        %8523 = vmatpush.bf16.msra.mxu0 %v6228
        %8524 = vmatpush.bf16.msra.mxu0 %v6224
        %8525 = vmatpush.bf16.msra.mxu0 %v6220
        %8526 = vmatpush.bf16.msra.mxu0 %v6216
        %8527 = vmatpush.bf16.msra.mxu0 %v6212
        %8528 = vmatpush.bf16.msra.mxu0 %v6208
        %8529 = vmatmul.bf16.gmra.mxu0 %v641
        %v8530 = vpop.f32.mrf.mxu0
        %v8531 = vadd.f32 %v8518, %v8530
        %v8532 = vpop.f32.mrf.mxu0
        %8533 = vdwg.mxu0
        %8534 = vmatpush.bf16.msra.mxu0 %v6268
        %8535 = vmatpush.bf16.msra.mxu0 %v6264
        %8536 = vmatpush.bf16.msra.mxu0 %v6260
        %8537 = vmatpush.bf16.msra.mxu0 %v6256
        %8538 = vmatpush.bf16.msra.mxu0 %v6252
        %8539 = vmatpush.bf16.msra.mxu0 %v6248
        %8540 = vmatpush.bf16.msra.mxu0 %v6244
        %8541 = vmatpush.bf16.msra.mxu0 %v6240
        %8542 = vmatmul.bf16.gmra.mxu0 %v642
        %v8543 = vpop.f32.mrf.mxu0
        %v8544 = vadd.f32 %v8531, %v8543
        %v8545 = vpop.f32.mrf.mxu0
        %8546 = vdwg.mxu0
        %8547 = vmatpush.bf16.msra.mxu0 %v6300
        %8548 = vmatpush.bf16.msra.mxu0 %v6296
        %8549 = vmatpush.bf16.msra.mxu0 %v6292
        %8550 = vmatpush.bf16.msra.mxu0 %v6288
        %8551 = vmatpush.bf16.msra.mxu0 %v6284
        %8552 = vmatpush.bf16.msra.mxu0 %v6280
        %8553 = vmatpush.bf16.msra.mxu0 %v6276
        %8554 = vmatpush.bf16.msra.mxu0 %v6272
        %8555 = vmatmul.bf16.gmra.mxu0 %v643
        %v8556 = vpop.f32.mrf.mxu0
        %v8557 = vadd.f32 %v8544, %v8556
        %v8558 = vpop.f32.mrf.mxu0
        %8559 = vdwg.mxu0
        %8560 = vmatpush.bf16.msra.mxu0 %v6332
        %8561 = vmatpush.bf16.msra.mxu0 %v6328
        %8562 = vmatpush.bf16.msra.mxu0 %v6324
        %8563 = vmatpush.bf16.msra.mxu0 %v6320
        %8564 = vmatpush.bf16.msra.mxu0 %v6316
        %8565 = vmatpush.bf16.msra.mxu0 %v6312
        %8566 = vmatpush.bf16.msra.mxu0 %v6308
        %8567 = vmatpush.bf16.msra.mxu0 %v6304
        %8568 = vmatmul.bf16.gmra.mxu0 %v644
        %v8569 = vpop.f32.mrf.mxu0
        %v8570 = vadd.f32 %v8557, %v8569
        %v8571 = vpop.f32.mrf.mxu0
        %8572 = vdwg.mxu0
        %8573 = vmatpush.bf16.msra.mxu0 %v6364
        %8574 = vmatpush.bf16.msra.mxu0 %v6360
        %8575 = vmatpush.bf16.msra.mxu0 %v6356
        %8576 = vmatpush.bf16.msra.mxu0 %v6352
        %8577 = vmatpush.bf16.msra.mxu0 %v6348
        %8578 = vmatpush.bf16.msra.mxu0 %v6344
        %8579 = vmatpush.bf16.msra.mxu0 %v6340
        %8580 = vmatpush.bf16.msra.mxu0 %v6336
        %8581 = vmatmul.bf16.gmra.mxu0 %v645
        %v8582 = vpop.f32.mrf.mxu0
        %v8583 = vadd.f32 %v8570, %v8582
        %v8584 = vpop.f32.mrf.mxu0
        %8585 = vdwg.mxu0
        %8586 = vmatpush.bf16.msra.mxu0 %v6396
        %8587 = vmatpush.bf16.msra.mxu0 %v6392
        %8588 = vmatpush.bf16.msra.mxu0 %v6388
        %8589 = vmatpush.bf16.msra.mxu0 %v6384
        %8590 = vmatpush.bf16.msra.mxu0 %v6380
        %8591 = vmatpush.bf16.msra.mxu0 %v6376
        %8592 = vmatpush.bf16.msra.mxu0 %v6372
        %8593 = vmatpush.bf16.msra.mxu0 %v6368
        %8594 = vmatmul.bf16.gmra.mxu0 %v646
        %v8595 = vpop.f32.mrf.mxu0
        %v8596 = vadd.f32 %v8583, %v8595
        %v8597 = vpop.f32.mrf.mxu0
        %8598 = vdwg.mxu0
        %8599 = vmatpush.bf16.msra.mxu0 %v6428
        %8600 = vmatpush.bf16.msra.mxu0 %v6424
        %8601 = vmatpush.bf16.msra.mxu0 %v6420
        %8602 = vmatpush.bf16.msra.mxu0 %v6416
        %8603 = vmatpush.bf16.msra.mxu0 %v6412
        %8604 = vmatpush.bf16.msra.mxu0 %v6408
        %8605 = vmatpush.bf16.msra.mxu0 %v6404
        %8606 = vmatpush.bf16.msra.mxu0 %v6400
        %8607 = vmatmul.bf16.gmra.mxu0 %v647
        %v8608 = vpop.f32.mrf.mxu0
        %v8609 = vadd.f32 %v8596, %v8608
        %v8610 = vpop.f32.mrf.mxu0
        %8611 = vdwg.mxu0
        %8612 = vmatpush.bf16.msra.mxu0 %v6460
        %8613 = vmatpush.bf16.msra.mxu0 %v6456
        %8614 = vmatpush.bf16.msra.mxu0 %v6452
        %8615 = vmatpush.bf16.msra.mxu0 %v6448
        %8616 = vmatpush.bf16.msra.mxu0 %v6444
        %8617 = vmatpush.bf16.msra.mxu0 %v6440
        %8618 = vmatpush.bf16.msra.mxu0 %v6436
        %8619 = vmatpush.bf16.msra.mxu0 %v6432
        %8620 = vmatmul.bf16.gmra.mxu0 %v648
        %v8621 = vpop.f32.mrf.mxu0
        %v8622 = vadd.f32 %v8609, %v8621
        %v8623 = vpop.f32.mrf.mxu0
        %8624 = vdwg.mxu0
        %8625 = vmatpush.bf16.msra.mxu0 %v6492
        %8626 = vmatpush.bf16.msra.mxu0 %v6488
        %8627 = vmatpush.bf16.msra.mxu0 %v6484
        %8628 = vmatpush.bf16.msra.mxu0 %v6480
        %8629 = vmatpush.bf16.msra.mxu0 %v6476
        %8630 = vmatpush.bf16.msra.mxu0 %v6472
        %8631 = vmatpush.bf16.msra.mxu0 %v6468
        %8632 = vmatpush.bf16.msra.mxu0 %v6464
        %8633 = vmatmul.bf16.gmra.mxu0 %v649
        %v8634 = vpop.f32.mrf.mxu0
        %v8635 = vadd.f32 %v8622, %v8634
        %v8636 = vpop.f32.mrf.mxu0
        %8637 = vdwg.mxu0
        %8638 = vmatpush.bf16.msra.mxu0 %v6524
        %8639 = vmatpush.bf16.msra.mxu0 %v6520
        %8640 = vmatpush.bf16.msra.mxu0 %v6516
        %8641 = vmatpush.bf16.msra.mxu0 %v6512
        %8642 = vmatpush.bf16.msra.mxu0 %v6508
        %8643 = vmatpush.bf16.msra.mxu0 %v6504
        %8644 = vmatpush.bf16.msra.mxu0 %v6500
        %8645 = vmatpush.bf16.msra.mxu0 %v6496
        %8646 = vmatmul.bf16.gmra.mxu0 %v650
        %v8647 = vpop.f32.mrf.mxu0
        %v8648 = vadd.f32 %v8635, %v8647
        %v8649 = vpop.f32.mrf.mxu0
        %8650 = vdwg.mxu0
        %8651 = vmatpush.bf16.msra.mxu0 %v6556
        %8652 = vmatpush.bf16.msra.mxu0 %v6552
        %8653 = vmatpush.bf16.msra.mxu0 %v6548
        %8654 = vmatpush.bf16.msra.mxu0 %v6544
        %8655 = vmatpush.bf16.msra.mxu0 %v6540
        %8656 = vmatpush.bf16.msra.mxu0 %v6536
        %8657 = vmatpush.bf16.msra.mxu0 %v6532
        %8658 = vmatpush.bf16.msra.mxu0 %v6528
        %8659 = vmatmul.bf16.gmra.mxu0 %v651
        %v8660 = vpop.f32.mrf.mxu0
        %v8661 = vadd.f32 %v8648, %v8660
        %v8662 = vpop.f32.mrf.mxu0
        %8663 = vdwg.mxu0
        %8664 = vmatpush.bf16.msra.mxu0 %v6588
        %8665 = vmatpush.bf16.msra.mxu0 %v6584
        %8666 = vmatpush.bf16.msra.mxu0 %v6580
        %8667 = vmatpush.bf16.msra.mxu0 %v6576
        %8668 = vmatpush.bf16.msra.mxu0 %v6572
        %8669 = vmatpush.bf16.msra.mxu0 %v6568
        %8670 = vmatpush.bf16.msra.mxu0 %v6564
        %8671 = vmatpush.bf16.msra.mxu0 %v6560
        %8672 = vmatmul.bf16.gmra.mxu0 %v652
        %v8673 = vpop.f32.mrf.mxu0
        %v8674 = vadd.f32 %v8661, %v8673
        %v8675 = vpop.f32.mrf.mxu0
        %8676 = vdwg.mxu0
        %8677 = vmatpush.bf16.msra.mxu0 %v6620
        %8678 = vmatpush.bf16.msra.mxu0 %v6616
        %8679 = vmatpush.bf16.msra.mxu0 %v6612
        %8680 = vmatpush.bf16.msra.mxu0 %v6608
        %8681 = vmatpush.bf16.msra.mxu0 %v6604
        %8682 = vmatpush.bf16.msra.mxu0 %v6600
        %8683 = vmatpush.bf16.msra.mxu0 %v6596
        %8684 = vmatpush.bf16.msra.mxu0 %v6592
        %8685 = vmatmul.bf16.gmra.mxu0 %v653
        %v8686 = vpop.f32.mrf.mxu0
        %v8687 = vadd.f32 %v8674, %v8686
        %v8688 = vpop.f32.mrf.mxu0
        %8689 = vdwg.mxu0
        %8690 = vmatpush.bf16.msra.mxu0 %v6652
        %8691 = vmatpush.bf16.msra.mxu0 %v6648
        %8692 = vmatpush.bf16.msra.mxu0 %v6644
        %8693 = vmatpush.bf16.msra.mxu0 %v6640
        %8694 = vmatpush.bf16.msra.mxu0 %v6636
        %8695 = vmatpush.bf16.msra.mxu0 %v6632
        %8696 = vmatpush.bf16.msra.mxu0 %v6628
        %8697 = vmatpush.bf16.msra.mxu0 %v6624
        %8698 = vmatmul.bf16.gmra.mxu0 %v654
        %v8699 = vpop.f32.mrf.mxu0
        %v8700 = vadd.f32 %v8687, %v8699
        %v8701 = vpop.f32.mrf.mxu0
        %8702 = vdwg.mxu0
        %8703 = vmatpush.bf16.msra.mxu0 %v6684
        %8704 = vmatpush.bf16.msra.mxu0 %v6680
        %8705 = vmatpush.bf16.msra.mxu0 %v6676
        %8706 = vmatpush.bf16.msra.mxu0 %v6672
        %8707 = vmatpush.bf16.msra.mxu0 %v6668
        %8708 = vmatpush.bf16.msra.mxu0 %v6664
        %8709 = vmatpush.bf16.msra.mxu0 %v6660
        %8710 = vmatpush.bf16.msra.mxu0 %v6656
        %8711 = vmatmul.bf16.gmra.mxu0 %v655
        %v8712 = vpop.f32.mrf.mxu0
        %v8713 = vadd.f32 %v8700, %v8712
        %v8714 = vpop.f32.mrf.mxu0
        %8715 = vdwg.mxu0
        %8716 = vmatpush.bf16.msra.mxu0 %v6716
        %8717 = vmatpush.bf16.msra.mxu0 %v6712
        %8718 = vmatpush.bf16.msra.mxu0 %v6708
        %8719 = vmatpush.bf16.msra.mxu0 %v6704
        %8720 = vmatpush.bf16.msra.mxu0 %v6700
        %8721 = vmatpush.bf16.msra.mxu0 %v6696
        %8722 = vmatpush.bf16.msra.mxu0 %v6692
        %8723 = vmatpush.bf16.msra.mxu0 %v6688
        %8724 = vmatmul.bf16.gmra.mxu0 %v656
        %v8725 = vpop.f32.mrf.mxu0
        %v8726 = vadd.f32 %v8713, %v8725
        %v8727 = vpop.f32.mrf.mxu0
        %8728 = vdwg.mxu0
        %8729 = vmatpush.bf16.msra.mxu0 %v6748
        %8730 = vmatpush.bf16.msra.mxu0 %v6744
        %8731 = vmatpush.bf16.msra.mxu0 %v6740
        %8732 = vmatpush.bf16.msra.mxu0 %v6736
        %8733 = vmatpush.bf16.msra.mxu0 %v6732
        %8734 = vmatpush.bf16.msra.mxu0 %v6728
        %8735 = vmatpush.bf16.msra.mxu0 %v6724
        %8736 = vmatpush.bf16.msra.mxu0 %v6720
        %8737 = vmatmul.bf16.gmra.mxu0 %v657
        %v8738 = vpop.f32.mrf.mxu0
        %v8739 = vadd.f32 %v8726, %v8738
        %v8740 = vpop.f32.mrf.mxu0
        %8741 = vdwg.mxu0
        %8742 = vmatpush.bf16.msra.mxu0 %v6780
        %8743 = vmatpush.bf16.msra.mxu0 %v6776
        %8744 = vmatpush.bf16.msra.mxu0 %v6772
        %8745 = vmatpush.bf16.msra.mxu0 %v6768
        %8746 = vmatpush.bf16.msra.mxu0 %v6764
        %8747 = vmatpush.bf16.msra.mxu0 %v6760
        %8748 = vmatpush.bf16.msra.mxu0 %v6756
        %8749 = vmatpush.bf16.msra.mxu0 %v6752
        %8750 = vmatmul.bf16.gmra.mxu0 %v658
        %v8751 = vpop.f32.mrf.mxu0
        %v8752 = vadd.f32 %v8739, %v8751
        %v8753 = vpop.f32.mrf.mxu0
        %8754 = vdwg.mxu0
        %8755 = vmatpush.bf16.msra.mxu0 %v6812
        %8756 = vmatpush.bf16.msra.mxu0 %v6808
        %8757 = vmatpush.bf16.msra.mxu0 %v6804
        %8758 = vmatpush.bf16.msra.mxu0 %v6800
        %8759 = vmatpush.bf16.msra.mxu0 %v6796
        %8760 = vmatpush.bf16.msra.mxu0 %v6792
        %8761 = vmatpush.bf16.msra.mxu0 %v6788
        %8762 = vmatpush.bf16.msra.mxu0 %v6784
        %8763 = vmatmul.bf16.gmra.mxu0 %v659
        %v8764 = vpop.f32.mrf.mxu0
        %v8765 = vadd.f32 %v8752, %v8764
        %v8766 = vpop.f32.mrf.mxu0
        %8767 = vdwg.mxu0
        %8768 = vmatpush.bf16.msra.mxu0 %v6844
        %8769 = vmatpush.bf16.msra.mxu0 %v6840
        %8770 = vmatpush.bf16.msra.mxu0 %v6836
        %8771 = vmatpush.bf16.msra.mxu0 %v6832
        %8772 = vmatpush.bf16.msra.mxu0 %v6828
        %8773 = vmatpush.bf16.msra.mxu0 %v6824
        %8774 = vmatpush.bf16.msra.mxu0 %v6820
        %8775 = vmatpush.bf16.msra.mxu0 %v6816
        %8776 = vmatmul.bf16.gmra.mxu0 %v660
        %v8777 = vpop.f32.mrf.mxu0
        %v8778 = vadd.f32 %v8765, %v8777
        %v8779 = vpop.f32.mrf.mxu0
        %8780 = vdwg.mxu0
        %8781 = vmatpush.bf16.msra.mxu0 %v6876
        %8782 = vmatpush.bf16.msra.mxu0 %v6872
        %8783 = vmatpush.bf16.msra.mxu0 %v6868
        %8784 = vmatpush.bf16.msra.mxu0 %v6864
        %8785 = vmatpush.bf16.msra.mxu0 %v6860
        %8786 = vmatpush.bf16.msra.mxu0 %v6856
        %8787 = vmatpush.bf16.msra.mxu0 %v6852
        %8788 = vmatpush.bf16.msra.mxu0 %v6848
        %8789 = vmatmul.bf16.gmra.mxu0 %v661
        %v8790 = vpop.f32.mrf.mxu0
        %v8791 = vadd.f32 %v8778, %v8790
        %v8792 = vpop.f32.mrf.mxu0
        %8793 = vdwg.mxu0
        %8794 = vmatpush.bf16.msra.mxu0 %v6908
        %8795 = vmatpush.bf16.msra.mxu0 %v6904
        %8796 = vmatpush.bf16.msra.mxu0 %v6900
        %8797 = vmatpush.bf16.msra.mxu0 %v6896
        %8798 = vmatpush.bf16.msra.mxu0 %v6892
        %8799 = vmatpush.bf16.msra.mxu0 %v6888
        %8800 = vmatpush.bf16.msra.mxu0 %v6884
        %8801 = vmatpush.bf16.msra.mxu0 %v6880
        %8802 = vmatmul.bf16.gmra.mxu0 %v662
        %v8803 = vpop.f32.mrf.mxu0
        %v8804 = vadd.f32 %v8791, %v8803
        %v8805 = vpop.f32.mrf.mxu0
        %8806 = vdwg.mxu0
        %8807 = vmatpush.bf16.msra.mxu0 %v6940
        %8808 = vmatpush.bf16.msra.mxu0 %v6936
        %8809 = vmatpush.bf16.msra.mxu0 %v6932
        %8810 = vmatpush.bf16.msra.mxu0 %v6928
        %8811 = vmatpush.bf16.msra.mxu0 %v6924
        %8812 = vmatpush.bf16.msra.mxu0 %v6920
        %8813 = vmatpush.bf16.msra.mxu0 %v6916
        %8814 = vmatpush.bf16.msra.mxu0 %v6912
        %8815 = vmatmul.bf16.gmra.mxu0 %v663
        %v8816 = vpop.f32.mrf.mxu0
        %v8817 = vadd.f32 %v8804, %v8816
        %v8818 = vpop.f32.mrf.mxu0
        %8819 = vdwg.mxu0
        %8820 = vmatpush.bf16.msra.mxu0 %v6972
        %8821 = vmatpush.bf16.msra.mxu0 %v6968
        %8822 = vmatpush.bf16.msra.mxu0 %v6964
        %8823 = vmatpush.bf16.msra.mxu0 %v6960
        %8824 = vmatpush.bf16.msra.mxu0 %v6956
        %8825 = vmatpush.bf16.msra.mxu0 %v6952
        %8826 = vmatpush.bf16.msra.mxu0 %v6948
        %8827 = vmatpush.bf16.msra.mxu0 %v6944
        %8828 = vmatmul.bf16.gmra.mxu0 %v664
        %v8829 = vpop.f32.mrf.mxu0
        %v8830 = vadd.f32 %v8817, %v8829
        %v8831 = vpop.f32.mrf.mxu0
        %8832 = vdwg.mxu0
        %8833 = vmatpush.bf16.msra.mxu0 %v7004
        %8834 = vmatpush.bf16.msra.mxu0 %v7000
        %8835 = vmatpush.bf16.msra.mxu0 %v6996
        %8836 = vmatpush.bf16.msra.mxu0 %v6992
        %8837 = vmatpush.bf16.msra.mxu0 %v6988
        %8838 = vmatpush.bf16.msra.mxu0 %v6984
        %8839 = vmatpush.bf16.msra.mxu0 %v6980
        %8840 = vmatpush.bf16.msra.mxu0 %v6976
        %8841 = vmatmul.bf16.gmra.mxu0 %v665
        %v8842 = vpop.f32.mrf.mxu0
        %v8843 = vadd.f32 %v8830, %v8842
        %v8844 = vpop.f32.mrf.mxu0
        %8845 = vdwg.mxu0
        %8846 = vmatpush.bf16.msra.mxu0 %v7036
        %8847 = vmatpush.bf16.msra.mxu0 %v7032
        %8848 = vmatpush.bf16.msra.mxu0 %v7028
        %8849 = vmatpush.bf16.msra.mxu0 %v7024
        %8850 = vmatpush.bf16.msra.mxu0 %v7020
        %8851 = vmatpush.bf16.msra.mxu0 %v7016
        %8852 = vmatpush.bf16.msra.mxu0 %v7012
        %8853 = vmatpush.bf16.msra.mxu0 %v7008
        %8854 = vmatmul.bf16.gmra.mxu0 %v666
        %v8855 = vpop.f32.mrf.mxu0
        %v8856 = vadd.f32 %v8843, %v8855
        %v8857 = vpop.f32.mrf.mxu0
        %8858 = vdwg.mxu0
        %8859 = vmatpush.bf16.msra.mxu0 %v7068
        %8860 = vmatpush.bf16.msra.mxu0 %v7064
        %8861 = vmatpush.bf16.msra.mxu0 %v7060
        %8862 = vmatpush.bf16.msra.mxu0 %v7056
        %8863 = vmatpush.bf16.msra.mxu0 %v7052
        %8864 = vmatpush.bf16.msra.mxu0 %v7048
        %8865 = vmatpush.bf16.msra.mxu0 %v7044
        %8866 = vmatpush.bf16.msra.mxu0 %v7040
        %8867 = vmatmul.bf16.gmra.mxu0 %v667
        %v8868 = vpop.f32.mrf.mxu0
        %v8869 = vadd.f32 %v8856, %v8868
        %v8870 = vpop.f32.mrf.mxu0
        %8871 = vdwg.mxu0
        %8872 = vmatpush.bf16.msra.mxu0 %v5821
        %8873 = vmatpush.bf16.msra.mxu0 %v5817
        %8874 = vmatpush.bf16.msra.mxu0 %v5813
        %8875 = vmatpush.bf16.msra.mxu0 %v5809
        %8876 = vmatpush.bf16.msra.mxu0 %v5805
        %8877 = vmatpush.bf16.msra.mxu0 %v5801
        %8878 = vmatpush.bf16.msra.mxu0 %v5797
        %8879 = vmatpush.bf16.msra.mxu0 %v5793
        %8880 = vmatmul.bf16.gmra.mxu0 %v628
        %v8881 = vpop.f32.mrf.mxu0
        %v8882 = vadd.f32 0.0, %v8881
        %v8883 = vpop.f32.mrf.mxu0
        %8884 = vdwg.mxu0
        %8885 = vmatpush.bf16.msra.mxu0 %v5853
        %8886 = vmatpush.bf16.msra.mxu0 %v5849
        %8887 = vmatpush.bf16.msra.mxu0 %v5845
        %8888 = vmatpush.bf16.msra.mxu0 %v5841
        %8889 = vmatpush.bf16.msra.mxu0 %v5837
        %8890 = vmatpush.bf16.msra.mxu0 %v5833
        %8891 = vmatpush.bf16.msra.mxu0 %v5829
        %8892 = vmatpush.bf16.msra.mxu0 %v5825
        %8893 = vmatmul.bf16.gmra.mxu0 %v629
        %v8894 = vpop.f32.mrf.mxu0
        %v8895 = vadd.f32 %v8882, %v8894
        %v8896 = vpop.f32.mrf.mxu0
        %8897 = vdwg.mxu0
        %8898 = vmatpush.bf16.msra.mxu0 %v5885
        %8899 = vmatpush.bf16.msra.mxu0 %v5881
        %8900 = vmatpush.bf16.msra.mxu0 %v5877
        %8901 = vmatpush.bf16.msra.mxu0 %v5873
        %8902 = vmatpush.bf16.msra.mxu0 %v5869
        %8903 = vmatpush.bf16.msra.mxu0 %v5865
        %8904 = vmatpush.bf16.msra.mxu0 %v5861
        %8905 = vmatpush.bf16.msra.mxu0 %v5857
        %8906 = vmatmul.bf16.gmra.mxu0 %v630
        %v8907 = vpop.f32.mrf.mxu0
        %v8908 = vadd.f32 %v8895, %v8907
        %v8909 = vpop.f32.mrf.mxu0
        %8910 = vdwg.mxu0
        %8911 = vmatpush.bf16.msra.mxu0 %v5917
        %8912 = vmatpush.bf16.msra.mxu0 %v5913
        %8913 = vmatpush.bf16.msra.mxu0 %v5909
        %8914 = vmatpush.bf16.msra.mxu0 %v5905
        %8915 = vmatpush.bf16.msra.mxu0 %v5901
        %8916 = vmatpush.bf16.msra.mxu0 %v5897
        %8917 = vmatpush.bf16.msra.mxu0 %v5893
        %8918 = vmatpush.bf16.msra.mxu0 %v5889
        %8919 = vmatmul.bf16.gmra.mxu0 %v631
        %v8920 = vpop.f32.mrf.mxu0
        %v8921 = vadd.f32 %v8908, %v8920
        %v8922 = vpop.f32.mrf.mxu0
        %8923 = vdwg.mxu0
        %8924 = vmatpush.bf16.msra.mxu0 %v5949
        %8925 = vmatpush.bf16.msra.mxu0 %v5945
        %8926 = vmatpush.bf16.msra.mxu0 %v5941
        %8927 = vmatpush.bf16.msra.mxu0 %v5937
        %8928 = vmatpush.bf16.msra.mxu0 %v5933
        %8929 = vmatpush.bf16.msra.mxu0 %v5929
        %8930 = vmatpush.bf16.msra.mxu0 %v5925
        %8931 = vmatpush.bf16.msra.mxu0 %v5921
        %8932 = vmatmul.bf16.gmra.mxu0 %v632
        %v8933 = vpop.f32.mrf.mxu0
        %v8934 = vadd.f32 %v8921, %v8933
        %v8935 = vpop.f32.mrf.mxu0
        %8936 = vdwg.mxu0
        %8937 = vmatpush.bf16.msra.mxu0 %v5981
        %8938 = vmatpush.bf16.msra.mxu0 %v5977
        %8939 = vmatpush.bf16.msra.mxu0 %v5973
        %8940 = vmatpush.bf16.msra.mxu0 %v5969
        %8941 = vmatpush.bf16.msra.mxu0 %v5965
        %8942 = vmatpush.bf16.msra.mxu0 %v5961
        %8943 = vmatpush.bf16.msra.mxu0 %v5957
        %8944 = vmatpush.bf16.msra.mxu0 %v5953
        %8945 = vmatmul.bf16.gmra.mxu0 %v633
        %v8946 = vpop.f32.mrf.mxu0
        %v8947 = vadd.f32 %v8934, %v8946
        %v8948 = vpop.f32.mrf.mxu0
        %8949 = vdwg.mxu0
        %8950 = vmatpush.bf16.msra.mxu0 %v6013
        %8951 = vmatpush.bf16.msra.mxu0 %v6009
        %8952 = vmatpush.bf16.msra.mxu0 %v6005
        %8953 = vmatpush.bf16.msra.mxu0 %v6001
        %8954 = vmatpush.bf16.msra.mxu0 %v5997
        %8955 = vmatpush.bf16.msra.mxu0 %v5993
        %8956 = vmatpush.bf16.msra.mxu0 %v5989
        %8957 = vmatpush.bf16.msra.mxu0 %v5985
        %8958 = vmatmul.bf16.gmra.mxu0 %v634
        %v8959 = vpop.f32.mrf.mxu0
        %v8960 = vadd.f32 %v8947, %v8959
        %v8961 = vpop.f32.mrf.mxu0
        %8962 = vdwg.mxu0
        %8963 = vmatpush.bf16.msra.mxu0 %v6045
        %8964 = vmatpush.bf16.msra.mxu0 %v6041
        %8965 = vmatpush.bf16.msra.mxu0 %v6037
        %8966 = vmatpush.bf16.msra.mxu0 %v6033
        %8967 = vmatpush.bf16.msra.mxu0 %v6029
        %8968 = vmatpush.bf16.msra.mxu0 %v6025
        %8969 = vmatpush.bf16.msra.mxu0 %v6021
        %8970 = vmatpush.bf16.msra.mxu0 %v6017
        %8971 = vmatmul.bf16.gmra.mxu0 %v635
        %v8972 = vpop.f32.mrf.mxu0
        %v8973 = vadd.f32 %v8960, %v8972
        %v8974 = vpop.f32.mrf.mxu0
        %8975 = vdwg.mxu0
        %8976 = vmatpush.bf16.msra.mxu0 %v6077
        %8977 = vmatpush.bf16.msra.mxu0 %v6073
        %8978 = vmatpush.bf16.msra.mxu0 %v6069
        %8979 = vmatpush.bf16.msra.mxu0 %v6065
        %8980 = vmatpush.bf16.msra.mxu0 %v6061
        %8981 = vmatpush.bf16.msra.mxu0 %v6057
        %8982 = vmatpush.bf16.msra.mxu0 %v6053
        %8983 = vmatpush.bf16.msra.mxu0 %v6049
        %8984 = vmatmul.bf16.gmra.mxu0 %v636
        %v8985 = vpop.f32.mrf.mxu0
        %v8986 = vadd.f32 %v8973, %v8985
        %v8987 = vpop.f32.mrf.mxu0
        %8988 = vdwg.mxu0
        %8989 = vmatpush.bf16.msra.mxu0 %v6109
        %8990 = vmatpush.bf16.msra.mxu0 %v6105
        %8991 = vmatpush.bf16.msra.mxu0 %v6101
        %8992 = vmatpush.bf16.msra.mxu0 %v6097
        %8993 = vmatpush.bf16.msra.mxu0 %v6093
        %8994 = vmatpush.bf16.msra.mxu0 %v6089
        %8995 = vmatpush.bf16.msra.mxu0 %v6085
        %8996 = vmatpush.bf16.msra.mxu0 %v6081
        %8997 = vmatmul.bf16.gmra.mxu0 %v637
        %v8998 = vpop.f32.mrf.mxu0
        %v8999 = vadd.f32 %v8986, %v8998
        %v9000 = vpop.f32.mrf.mxu0
        %9001 = vdwg.mxu0
        %9002 = vmatpush.bf16.msra.mxu0 %v6141
        %9003 = vmatpush.bf16.msra.mxu0 %v6137
        %9004 = vmatpush.bf16.msra.mxu0 %v6133
        %9005 = vmatpush.bf16.msra.mxu0 %v6129
        %9006 = vmatpush.bf16.msra.mxu0 %v6125
        %9007 = vmatpush.bf16.msra.mxu0 %v6121
        %9008 = vmatpush.bf16.msra.mxu0 %v6117
        %9009 = vmatpush.bf16.msra.mxu0 %v6113
        %9010 = vmatmul.bf16.gmra.mxu0 %v638
        %v9011 = vpop.f32.mrf.mxu0
        %v9012 = vadd.f32 %v8999, %v9011
        %v9013 = vpop.f32.mrf.mxu0
        %9014 = vdwg.mxu0
        %9015 = vmatpush.bf16.msra.mxu0 %v6173
        %9016 = vmatpush.bf16.msra.mxu0 %v6169
        %9017 = vmatpush.bf16.msra.mxu0 %v6165
        %9018 = vmatpush.bf16.msra.mxu0 %v6161
        %9019 = vmatpush.bf16.msra.mxu0 %v6157
        %9020 = vmatpush.bf16.msra.mxu0 %v6153
        %9021 = vmatpush.bf16.msra.mxu0 %v6149
        %9022 = vmatpush.bf16.msra.mxu0 %v6145
        %9023 = vmatmul.bf16.gmra.mxu0 %v639
        %v9024 = vpop.f32.mrf.mxu0
        %v9025 = vadd.f32 %v9012, %v9024
        %v9026 = vpop.f32.mrf.mxu0
        %9027 = vdwg.mxu0
        %9028 = vmatpush.bf16.msra.mxu0 %v6205
        %9029 = vmatpush.bf16.msra.mxu0 %v6201
        %9030 = vmatpush.bf16.msra.mxu0 %v6197
        %9031 = vmatpush.bf16.msra.mxu0 %v6193
        %9032 = vmatpush.bf16.msra.mxu0 %v6189
        %9033 = vmatpush.bf16.msra.mxu0 %v6185
        %9034 = vmatpush.bf16.msra.mxu0 %v6181
        %9035 = vmatpush.bf16.msra.mxu0 %v6177
        %9036 = vmatmul.bf16.gmra.mxu0 %v640
        %v9037 = vpop.f32.mrf.mxu0
        %v9038 = vadd.f32 %v9025, %v9037
        %v9039 = vpop.f32.mrf.mxu0
        %9040 = vdwg.mxu0
        %9041 = vmatpush.bf16.msra.mxu0 %v6237
        %9042 = vmatpush.bf16.msra.mxu0 %v6233
        %9043 = vmatpush.bf16.msra.mxu0 %v6229
        %9044 = vmatpush.bf16.msra.mxu0 %v6225
        %9045 = vmatpush.bf16.msra.mxu0 %v6221
        %9046 = vmatpush.bf16.msra.mxu0 %v6217
        %9047 = vmatpush.bf16.msra.mxu0 %v6213
        %9048 = vmatpush.bf16.msra.mxu0 %v6209
        %9049 = vmatmul.bf16.gmra.mxu0 %v641
        %v9050 = vpop.f32.mrf.mxu0
        %v9051 = vadd.f32 %v9038, %v9050
        %v9052 = vpop.f32.mrf.mxu0
        %9053 = vdwg.mxu0
        %9054 = vmatpush.bf16.msra.mxu0 %v6269
        %9055 = vmatpush.bf16.msra.mxu0 %v6265
        %9056 = vmatpush.bf16.msra.mxu0 %v6261
        %9057 = vmatpush.bf16.msra.mxu0 %v6257
        %9058 = vmatpush.bf16.msra.mxu0 %v6253
        %9059 = vmatpush.bf16.msra.mxu0 %v6249
        %9060 = vmatpush.bf16.msra.mxu0 %v6245
        %9061 = vmatpush.bf16.msra.mxu0 %v6241
        %9062 = vmatmul.bf16.gmra.mxu0 %v642
        %v9063 = vpop.f32.mrf.mxu0
        %v9064 = vadd.f32 %v9051, %v9063
        %v9065 = vpop.f32.mrf.mxu0
        %9066 = vdwg.mxu0
        %9067 = vmatpush.bf16.msra.mxu0 %v6301
        %9068 = vmatpush.bf16.msra.mxu0 %v6297
        %9069 = vmatpush.bf16.msra.mxu0 %v6293
        %9070 = vmatpush.bf16.msra.mxu0 %v6289
        %9071 = vmatpush.bf16.msra.mxu0 %v6285
        %9072 = vmatpush.bf16.msra.mxu0 %v6281
        %9073 = vmatpush.bf16.msra.mxu0 %v6277
        %9074 = vmatpush.bf16.msra.mxu0 %v6273
        %9075 = vmatmul.bf16.gmra.mxu0 %v643
        %v9076 = vpop.f32.mrf.mxu0
        %v9077 = vadd.f32 %v9064, %v9076
        %v9078 = vpop.f32.mrf.mxu0
        %9079 = vdwg.mxu0
        %9080 = vmatpush.bf16.msra.mxu0 %v6333
        %9081 = vmatpush.bf16.msra.mxu0 %v6329
        %9082 = vmatpush.bf16.msra.mxu0 %v6325
        %9083 = vmatpush.bf16.msra.mxu0 %v6321
        %9084 = vmatpush.bf16.msra.mxu0 %v6317
        %9085 = vmatpush.bf16.msra.mxu0 %v6313
        %9086 = vmatpush.bf16.msra.mxu0 %v6309
        %9087 = vmatpush.bf16.msra.mxu0 %v6305
        %9088 = vmatmul.bf16.gmra.mxu0 %v644
        %v9089 = vpop.f32.mrf.mxu0
        %v9090 = vadd.f32 %v9077, %v9089
        %v9091 = vpop.f32.mrf.mxu0
        %9092 = vdwg.mxu0
        %9093 = vmatpush.bf16.msra.mxu0 %v6365
        %9094 = vmatpush.bf16.msra.mxu0 %v6361
        %9095 = vmatpush.bf16.msra.mxu0 %v6357
        %9096 = vmatpush.bf16.msra.mxu0 %v6353
        %9097 = vmatpush.bf16.msra.mxu0 %v6349
        %9098 = vmatpush.bf16.msra.mxu0 %v6345
        %9099 = vmatpush.bf16.msra.mxu0 %v6341
        %9100 = vmatpush.bf16.msra.mxu0 %v6337
        %9101 = vmatmul.bf16.gmra.mxu0 %v645
        %v9102 = vpop.f32.mrf.mxu0
        %v9103 = vadd.f32 %v9090, %v9102
        %v9104 = vpop.f32.mrf.mxu0
        %9105 = vdwg.mxu0
        %9106 = vmatpush.bf16.msra.mxu0 %v6397
        %9107 = vmatpush.bf16.msra.mxu0 %v6393
        %9108 = vmatpush.bf16.msra.mxu0 %v6389
        %9109 = vmatpush.bf16.msra.mxu0 %v6385
        %9110 = vmatpush.bf16.msra.mxu0 %v6381
        %9111 = vmatpush.bf16.msra.mxu0 %v6377
        %9112 = vmatpush.bf16.msra.mxu0 %v6373
        %9113 = vmatpush.bf16.msra.mxu0 %v6369
        %9114 = vmatmul.bf16.gmra.mxu0 %v646
        %v9115 = vpop.f32.mrf.mxu0
        %v9116 = vadd.f32 %v9103, %v9115
        %v9117 = vpop.f32.mrf.mxu0
        %9118 = vdwg.mxu0
        %9119 = vmatpush.bf16.msra.mxu0 %v6429
        %9120 = vmatpush.bf16.msra.mxu0 %v6425
        %9121 = vmatpush.bf16.msra.mxu0 %v6421
        %9122 = vmatpush.bf16.msra.mxu0 %v6417
        %9123 = vmatpush.bf16.msra.mxu0 %v6413
        %9124 = vmatpush.bf16.msra.mxu0 %v6409
        %9125 = vmatpush.bf16.msra.mxu0 %v6405
        %9126 = vmatpush.bf16.msra.mxu0 %v6401
        %9127 = vmatmul.bf16.gmra.mxu0 %v647
        %v9128 = vpop.f32.mrf.mxu0
        %v9129 = vadd.f32 %v9116, %v9128
        %v9130 = vpop.f32.mrf.mxu0
        %9131 = vdwg.mxu0
        %9132 = vmatpush.bf16.msra.mxu0 %v6461
        %9133 = vmatpush.bf16.msra.mxu0 %v6457
        %9134 = vmatpush.bf16.msra.mxu0 %v6453
        %9135 = vmatpush.bf16.msra.mxu0 %v6449
        %9136 = vmatpush.bf16.msra.mxu0 %v6445
        %9137 = vmatpush.bf16.msra.mxu0 %v6441
        %9138 = vmatpush.bf16.msra.mxu0 %v6437
        %9139 = vmatpush.bf16.msra.mxu0 %v6433
        %9140 = vmatmul.bf16.gmra.mxu0 %v648
        %v9141 = vpop.f32.mrf.mxu0
        %v9142 = vadd.f32 %v9129, %v9141
        %v9143 = vpop.f32.mrf.mxu0
        %9144 = vdwg.mxu0
        %9145 = vmatpush.bf16.msra.mxu0 %v6493
        %9146 = vmatpush.bf16.msra.mxu0 %v6489
        %9147 = vmatpush.bf16.msra.mxu0 %v6485
        %9148 = vmatpush.bf16.msra.mxu0 %v6481
        %9149 = vmatpush.bf16.msra.mxu0 %v6477
        %9150 = vmatpush.bf16.msra.mxu0 %v6473
        %9151 = vmatpush.bf16.msra.mxu0 %v6469
        %9152 = vmatpush.bf16.msra.mxu0 %v6465
        %9153 = vmatmul.bf16.gmra.mxu0 %v649
        %v9154 = vpop.f32.mrf.mxu0
        %v9155 = vadd.f32 %v9142, %v9154
        %v9156 = vpop.f32.mrf.mxu0
        %9157 = vdwg.mxu0
        %9158 = vmatpush.bf16.msra.mxu0 %v6525
        %9159 = vmatpush.bf16.msra.mxu0 %v6521
        %9160 = vmatpush.bf16.msra.mxu0 %v6517
        %9161 = vmatpush.bf16.msra.mxu0 %v6513
        %9162 = vmatpush.bf16.msra.mxu0 %v6509
        %9163 = vmatpush.bf16.msra.mxu0 %v6505
        %9164 = vmatpush.bf16.msra.mxu0 %v6501
        %9165 = vmatpush.bf16.msra.mxu0 %v6497
        %9166 = vmatmul.bf16.gmra.mxu0 %v650
        %v9167 = vpop.f32.mrf.mxu0
        %v9168 = vadd.f32 %v9155, %v9167
        %v9169 = vpop.f32.mrf.mxu0
        %9170 = vdwg.mxu0
        %9171 = vmatpush.bf16.msra.mxu0 %v6557
        %9172 = vmatpush.bf16.msra.mxu0 %v6553
        %9173 = vmatpush.bf16.msra.mxu0 %v6549
        %9174 = vmatpush.bf16.msra.mxu0 %v6545
        %9175 = vmatpush.bf16.msra.mxu0 %v6541
        %9176 = vmatpush.bf16.msra.mxu0 %v6537
        %9177 = vmatpush.bf16.msra.mxu0 %v6533
        %9178 = vmatpush.bf16.msra.mxu0 %v6529
        %9179 = vmatmul.bf16.gmra.mxu0 %v651
        %v9180 = vpop.f32.mrf.mxu0
        %v9181 = vadd.f32 %v9168, %v9180
        %v9182 = vpop.f32.mrf.mxu0
        %9183 = vdwg.mxu0
        %9184 = vmatpush.bf16.msra.mxu0 %v6589
        %9185 = vmatpush.bf16.msra.mxu0 %v6585
        %9186 = vmatpush.bf16.msra.mxu0 %v6581
        %9187 = vmatpush.bf16.msra.mxu0 %v6577
        %9188 = vmatpush.bf16.msra.mxu0 %v6573
        %9189 = vmatpush.bf16.msra.mxu0 %v6569
        %9190 = vmatpush.bf16.msra.mxu0 %v6565
        %9191 = vmatpush.bf16.msra.mxu0 %v6561
        %9192 = vmatmul.bf16.gmra.mxu0 %v652
        %v9193 = vpop.f32.mrf.mxu0
        %v9194 = vadd.f32 %v9181, %v9193
        %v9195 = vpop.f32.mrf.mxu0
        %9196 = vdwg.mxu0
        %9197 = vmatpush.bf16.msra.mxu0 %v6621
        %9198 = vmatpush.bf16.msra.mxu0 %v6617
        %9199 = vmatpush.bf16.msra.mxu0 %v6613
        %9200 = vmatpush.bf16.msra.mxu0 %v6609
        %9201 = vmatpush.bf16.msra.mxu0 %v6605
        %9202 = vmatpush.bf16.msra.mxu0 %v6601
        %9203 = vmatpush.bf16.msra.mxu0 %v6597
        %9204 = vmatpush.bf16.msra.mxu0 %v6593
        %9205 = vmatmul.bf16.gmra.mxu0 %v653
        %v9206 = vpop.f32.mrf.mxu0
        %v9207 = vadd.f32 %v9194, %v9206
        %v9208 = vpop.f32.mrf.mxu0
        %9209 = vdwg.mxu0
        %9210 = vmatpush.bf16.msra.mxu0 %v6653
        %9211 = vmatpush.bf16.msra.mxu0 %v6649
        %9212 = vmatpush.bf16.msra.mxu0 %v6645
        %9213 = vmatpush.bf16.msra.mxu0 %v6641
        %9214 = vmatpush.bf16.msra.mxu0 %v6637
        %9215 = vmatpush.bf16.msra.mxu0 %v6633
        %9216 = vmatpush.bf16.msra.mxu0 %v6629
        %9217 = vmatpush.bf16.msra.mxu0 %v6625
        %9218 = vmatmul.bf16.gmra.mxu0 %v654
        %v9219 = vpop.f32.mrf.mxu0
        %v9220 = vadd.f32 %v9207, %v9219
        %v9221 = vpop.f32.mrf.mxu0
        %9222 = vdwg.mxu0
        %9223 = vmatpush.bf16.msra.mxu0 %v6685
        %9224 = vmatpush.bf16.msra.mxu0 %v6681
        %9225 = vmatpush.bf16.msra.mxu0 %v6677
        %9226 = vmatpush.bf16.msra.mxu0 %v6673
        %9227 = vmatpush.bf16.msra.mxu0 %v6669
        %9228 = vmatpush.bf16.msra.mxu0 %v6665
        %9229 = vmatpush.bf16.msra.mxu0 %v6661
        %9230 = vmatpush.bf16.msra.mxu0 %v6657
        %9231 = vmatmul.bf16.gmra.mxu0 %v655
        %v9232 = vpop.f32.mrf.mxu0
        %v9233 = vadd.f32 %v9220, %v9232
        %v9234 = vpop.f32.mrf.mxu0
        %9235 = vdwg.mxu0
        %9236 = vmatpush.bf16.msra.mxu0 %v6717
        %9237 = vmatpush.bf16.msra.mxu0 %v6713
        %9238 = vmatpush.bf16.msra.mxu0 %v6709
        %9239 = vmatpush.bf16.msra.mxu0 %v6705
        %9240 = vmatpush.bf16.msra.mxu0 %v6701
        %9241 = vmatpush.bf16.msra.mxu0 %v6697
        %9242 = vmatpush.bf16.msra.mxu0 %v6693
        %9243 = vmatpush.bf16.msra.mxu0 %v6689
        %9244 = vmatmul.bf16.gmra.mxu0 %v656
        %v9245 = vpop.f32.mrf.mxu0
        %v9246 = vadd.f32 %v9233, %v9245
        %v9247 = vpop.f32.mrf.mxu0
        %9248 = vdwg.mxu0
        %9249 = vmatpush.bf16.msra.mxu0 %v6749
        %9250 = vmatpush.bf16.msra.mxu0 %v6745
        %9251 = vmatpush.bf16.msra.mxu0 %v6741
        %9252 = vmatpush.bf16.msra.mxu0 %v6737
        %9253 = vmatpush.bf16.msra.mxu0 %v6733
        %9254 = vmatpush.bf16.msra.mxu0 %v6729
        %9255 = vmatpush.bf16.msra.mxu0 %v6725
        %9256 = vmatpush.bf16.msra.mxu0 %v6721
        %9257 = vmatmul.bf16.gmra.mxu0 %v657
        %v9258 = vpop.f32.mrf.mxu0
        %v9259 = vadd.f32 %v9246, %v9258
        %v9260 = vpop.f32.mrf.mxu0
        %9261 = vdwg.mxu0
        %9262 = vmatpush.bf16.msra.mxu0 %v6781
        %9263 = vmatpush.bf16.msra.mxu0 %v6777
        %9264 = vmatpush.bf16.msra.mxu0 %v6773
        %9265 = vmatpush.bf16.msra.mxu0 %v6769
        %9266 = vmatpush.bf16.msra.mxu0 %v6765
        %9267 = vmatpush.bf16.msra.mxu0 %v6761
        %9268 = vmatpush.bf16.msra.mxu0 %v6757
        %9269 = vmatpush.bf16.msra.mxu0 %v6753
        %9270 = vmatmul.bf16.gmra.mxu0 %v658
        %v9271 = vpop.f32.mrf.mxu0
        %v9272 = vadd.f32 %v9259, %v9271
        %v9273 = vpop.f32.mrf.mxu0
        %9274 = vdwg.mxu0
        %9275 = vmatpush.bf16.msra.mxu0 %v6813
        %9276 = vmatpush.bf16.msra.mxu0 %v6809
        %9277 = vmatpush.bf16.msra.mxu0 %v6805
        %9278 = vmatpush.bf16.msra.mxu0 %v6801
        %9279 = vmatpush.bf16.msra.mxu0 %v6797
        %9280 = vmatpush.bf16.msra.mxu0 %v6793
        %9281 = vmatpush.bf16.msra.mxu0 %v6789
        %9282 = vmatpush.bf16.msra.mxu0 %v6785
        %9283 = vmatmul.bf16.gmra.mxu0 %v659
        %v9284 = vpop.f32.mrf.mxu0
        %v9285 = vadd.f32 %v9272, %v9284
        %v9286 = vpop.f32.mrf.mxu0
        %9287 = vdwg.mxu0
        %9288 = vmatpush.bf16.msra.mxu0 %v6845
        %9289 = vmatpush.bf16.msra.mxu0 %v6841
        %9290 = vmatpush.bf16.msra.mxu0 %v6837
        %9291 = vmatpush.bf16.msra.mxu0 %v6833
        %9292 = vmatpush.bf16.msra.mxu0 %v6829
        %9293 = vmatpush.bf16.msra.mxu0 %v6825
        %9294 = vmatpush.bf16.msra.mxu0 %v6821
        %9295 = vmatpush.bf16.msra.mxu0 %v6817
        %9296 = vmatmul.bf16.gmra.mxu0 %v660
        %v9297 = vpop.f32.mrf.mxu0
        %v9298 = vadd.f32 %v9285, %v9297
        %v9299 = vpop.f32.mrf.mxu0
        %9300 = vdwg.mxu0
        %9301 = vmatpush.bf16.msra.mxu0 %v6877
        %9302 = vmatpush.bf16.msra.mxu0 %v6873
        %9303 = vmatpush.bf16.msra.mxu0 %v6869
        %9304 = vmatpush.bf16.msra.mxu0 %v6865
        %9305 = vmatpush.bf16.msra.mxu0 %v6861
        %9306 = vmatpush.bf16.msra.mxu0 %v6857
        %9307 = vmatpush.bf16.msra.mxu0 %v6853
        %9308 = vmatpush.bf16.msra.mxu0 %v6849
        %9309 = vmatmul.bf16.gmra.mxu0 %v661
        %v9310 = vpop.f32.mrf.mxu0
        %v9311 = vadd.f32 %v9298, %v9310
        %v9312 = vpop.f32.mrf.mxu0
        %9313 = vdwg.mxu0
        %9314 = vmatpush.bf16.msra.mxu0 %v6909
        %9315 = vmatpush.bf16.msra.mxu0 %v6905
        %9316 = vmatpush.bf16.msra.mxu0 %v6901
        %9317 = vmatpush.bf16.msra.mxu0 %v6897
        %9318 = vmatpush.bf16.msra.mxu0 %v6893
        %9319 = vmatpush.bf16.msra.mxu0 %v6889
        %9320 = vmatpush.bf16.msra.mxu0 %v6885
        %9321 = vmatpush.bf16.msra.mxu0 %v6881
        %9322 = vmatmul.bf16.gmra.mxu0 %v662
        %v9323 = vpop.f32.mrf.mxu0
        %v9324 = vadd.f32 %v9311, %v9323
        %v9325 = vpop.f32.mrf.mxu0
        %9326 = vdwg.mxu0
        %9327 = vmatpush.bf16.msra.mxu0 %v6941
        %9328 = vmatpush.bf16.msra.mxu0 %v6937
        %9329 = vmatpush.bf16.msra.mxu0 %v6933
        %9330 = vmatpush.bf16.msra.mxu0 %v6929
        %9331 = vmatpush.bf16.msra.mxu0 %v6925
        %9332 = vmatpush.bf16.msra.mxu0 %v6921
        %9333 = vmatpush.bf16.msra.mxu0 %v6917
        %9334 = vmatpush.bf16.msra.mxu0 %v6913
        %9335 = vmatmul.bf16.gmra.mxu0 %v663
        %v9336 = vpop.f32.mrf.mxu0
        %v9337 = vadd.f32 %v9324, %v9336
        %v9338 = vpop.f32.mrf.mxu0
        %9339 = vdwg.mxu0
        %9340 = vmatpush.bf16.msra.mxu0 %v6973
        %9341 = vmatpush.bf16.msra.mxu0 %v6969
        %9342 = vmatpush.bf16.msra.mxu0 %v6965
        %9343 = vmatpush.bf16.msra.mxu0 %v6961
        %9344 = vmatpush.bf16.msra.mxu0 %v6957
        %9345 = vmatpush.bf16.msra.mxu0 %v6953
        %9346 = vmatpush.bf16.msra.mxu0 %v6949
        %9347 = vmatpush.bf16.msra.mxu0 %v6945
        %9348 = vmatmul.bf16.gmra.mxu0 %v664
        %v9349 = vpop.f32.mrf.mxu0
        %v9350 = vadd.f32 %v9337, %v9349
        %v9351 = vpop.f32.mrf.mxu0
        %9352 = vdwg.mxu0
        %9353 = vmatpush.bf16.msra.mxu0 %v7005
        %9354 = vmatpush.bf16.msra.mxu0 %v7001
        %9355 = vmatpush.bf16.msra.mxu0 %v6997
        %9356 = vmatpush.bf16.msra.mxu0 %v6993
        %9357 = vmatpush.bf16.msra.mxu0 %v6989
        %9358 = vmatpush.bf16.msra.mxu0 %v6985
        %9359 = vmatpush.bf16.msra.mxu0 %v6981
        %9360 = vmatpush.bf16.msra.mxu0 %v6977
        %9361 = vmatmul.bf16.gmra.mxu0 %v665
        %v9362 = vpop.f32.mrf.mxu0
        %v9363 = vadd.f32 %v9350, %v9362
        %v9364 = vpop.f32.mrf.mxu0
        %9365 = vdwg.mxu0
        %9366 = vmatpush.bf16.msra.mxu0 %v7037
        %9367 = vmatpush.bf16.msra.mxu0 %v7033
        %9368 = vmatpush.bf16.msra.mxu0 %v7029
        %9369 = vmatpush.bf16.msra.mxu0 %v7025
        %9370 = vmatpush.bf16.msra.mxu0 %v7021
        %9371 = vmatpush.bf16.msra.mxu0 %v7017
        %9372 = vmatpush.bf16.msra.mxu0 %v7013
        %9373 = vmatpush.bf16.msra.mxu0 %v7009
        %9374 = vmatmul.bf16.gmra.mxu0 %v666
        %v9375 = vpop.f32.mrf.mxu0
        %v9376 = vadd.f32 %v9363, %v9375
        %v9377 = vpop.f32.mrf.mxu0
        %9378 = vdwg.mxu0
        %9379 = vmatpush.bf16.msra.mxu0 %v7069
        %9380 = vmatpush.bf16.msra.mxu0 %v7065
        %9381 = vmatpush.bf16.msra.mxu0 %v7061
        %9382 = vmatpush.bf16.msra.mxu0 %v7057
        %9383 = vmatpush.bf16.msra.mxu0 %v7053
        %9384 = vmatpush.bf16.msra.mxu0 %v7049
        %9385 = vmatpush.bf16.msra.mxu0 %v7045
        %9386 = vmatpush.bf16.msra.mxu0 %v7041
        %9387 = vmatmul.bf16.gmra.mxu0 %v667
        %v9388 = vpop.f32.mrf.mxu0
        %v9389 = vadd.f32 %v9376, %v9388
        %v9390 = vpop.f32.mrf.mxu0
        %9391 = vdwg.mxu0
        %9392 = vmatpush.bf16.msra.mxu0 %v5822
        %9393 = vmatpush.bf16.msra.mxu0 %v5818
        %9394 = vmatpush.bf16.msra.mxu0 %v5814
        %9395 = vmatpush.bf16.msra.mxu0 %v5810
        %9396 = vmatpush.bf16.msra.mxu0 %v5806
        %9397 = vmatpush.bf16.msra.mxu0 %v5802
        %9398 = vmatpush.bf16.msra.mxu0 %v5798
        %9399 = vmatpush.bf16.msra.mxu0 %v5794
        %9400 = vmatmul.bf16.gmra.mxu0 %v628
        %v9401 = vpop.f32.mrf.mxu0
        %v9402 = vadd.f32 0.0, %v9401
        %v9403 = vpop.f32.mrf.mxu0
        %9404 = vdwg.mxu0
        %9405 = vmatpush.bf16.msra.mxu0 %v5854
        %9406 = vmatpush.bf16.msra.mxu0 %v5850
        %9407 = vmatpush.bf16.msra.mxu0 %v5846
        %9408 = vmatpush.bf16.msra.mxu0 %v5842
        %9409 = vmatpush.bf16.msra.mxu0 %v5838
        %9410 = vmatpush.bf16.msra.mxu0 %v5834
        %9411 = vmatpush.bf16.msra.mxu0 %v5830
        %9412 = vmatpush.bf16.msra.mxu0 %v5826
        %9413 = vmatmul.bf16.gmra.mxu0 %v629
        %v9414 = vpop.f32.mrf.mxu0
        %v9415 = vadd.f32 %v9402, %v9414
        %v9416 = vpop.f32.mrf.mxu0
        %9417 = vdwg.mxu0
        %9418 = vmatpush.bf16.msra.mxu0 %v5886
        %9419 = vmatpush.bf16.msra.mxu0 %v5882
        %9420 = vmatpush.bf16.msra.mxu0 %v5878
        %9421 = vmatpush.bf16.msra.mxu0 %v5874
        %9422 = vmatpush.bf16.msra.mxu0 %v5870
        %9423 = vmatpush.bf16.msra.mxu0 %v5866
        %9424 = vmatpush.bf16.msra.mxu0 %v5862
        %9425 = vmatpush.bf16.msra.mxu0 %v5858
        %9426 = vmatmul.bf16.gmra.mxu0 %v630
        %v9427 = vpop.f32.mrf.mxu0
        %v9428 = vadd.f32 %v9415, %v9427
        %v9429 = vpop.f32.mrf.mxu0
        %9430 = vdwg.mxu0
        %9431 = vmatpush.bf16.msra.mxu0 %v5918
        %9432 = vmatpush.bf16.msra.mxu0 %v5914
        %9433 = vmatpush.bf16.msra.mxu0 %v5910
        %9434 = vmatpush.bf16.msra.mxu0 %v5906
        %9435 = vmatpush.bf16.msra.mxu0 %v5902
        %9436 = vmatpush.bf16.msra.mxu0 %v5898
        %9437 = vmatpush.bf16.msra.mxu0 %v5894
        %9438 = vmatpush.bf16.msra.mxu0 %v5890
        %9439 = vmatmul.bf16.gmra.mxu0 %v631
        %v9440 = vpop.f32.mrf.mxu0
        %v9441 = vadd.f32 %v9428, %v9440
        %v9442 = vpop.f32.mrf.mxu0
        %9443 = vdwg.mxu0
        %9444 = vmatpush.bf16.msra.mxu0 %v5950
        %9445 = vmatpush.bf16.msra.mxu0 %v5946
        %9446 = vmatpush.bf16.msra.mxu0 %v5942
        %9447 = vmatpush.bf16.msra.mxu0 %v5938
        %9448 = vmatpush.bf16.msra.mxu0 %v5934
        %9449 = vmatpush.bf16.msra.mxu0 %v5930
        %9450 = vmatpush.bf16.msra.mxu0 %v5926
        %9451 = vmatpush.bf16.msra.mxu0 %v5922
        %9452 = vmatmul.bf16.gmra.mxu0 %v632
        %v9453 = vpop.f32.mrf.mxu0
        %v9454 = vadd.f32 %v9441, %v9453
        %v9455 = vpop.f32.mrf.mxu0
        %9456 = vdwg.mxu0
        %9457 = vmatpush.bf16.msra.mxu0 %v5982
        %9458 = vmatpush.bf16.msra.mxu0 %v5978
        %9459 = vmatpush.bf16.msra.mxu0 %v5974
        %9460 = vmatpush.bf16.msra.mxu0 %v5970
        %9461 = vmatpush.bf16.msra.mxu0 %v5966
        %9462 = vmatpush.bf16.msra.mxu0 %v5962
        %9463 = vmatpush.bf16.msra.mxu0 %v5958
        %9464 = vmatpush.bf16.msra.mxu0 %v5954
        %9465 = vmatmul.bf16.gmra.mxu0 %v633
        %v9466 = vpop.f32.mrf.mxu0
        %v9467 = vadd.f32 %v9454, %v9466
        %v9468 = vpop.f32.mrf.mxu0
        %9469 = vdwg.mxu0
        %9470 = vmatpush.bf16.msra.mxu0 %v6014
        %9471 = vmatpush.bf16.msra.mxu0 %v6010
        %9472 = vmatpush.bf16.msra.mxu0 %v6006
        %9473 = vmatpush.bf16.msra.mxu0 %v6002
        %9474 = vmatpush.bf16.msra.mxu0 %v5998
        %9475 = vmatpush.bf16.msra.mxu0 %v5994
        %9476 = vmatpush.bf16.msra.mxu0 %v5990
        %9477 = vmatpush.bf16.msra.mxu0 %v5986
        %9478 = vmatmul.bf16.gmra.mxu0 %v634
        %v9479 = vpop.f32.mrf.mxu0
        %v9480 = vadd.f32 %v9467, %v9479
        %v9481 = vpop.f32.mrf.mxu0
        %9482 = vdwg.mxu0
        %9483 = vmatpush.bf16.msra.mxu0 %v6046
        %9484 = vmatpush.bf16.msra.mxu0 %v6042
        %9485 = vmatpush.bf16.msra.mxu0 %v6038
        %9486 = vmatpush.bf16.msra.mxu0 %v6034
        %9487 = vmatpush.bf16.msra.mxu0 %v6030
        %9488 = vmatpush.bf16.msra.mxu0 %v6026
        %9489 = vmatpush.bf16.msra.mxu0 %v6022
        %9490 = vmatpush.bf16.msra.mxu0 %v6018
        %9491 = vmatmul.bf16.gmra.mxu0 %v635
        %v9492 = vpop.f32.mrf.mxu0
        %v9493 = vadd.f32 %v9480, %v9492
        %v9494 = vpop.f32.mrf.mxu0
        %9495 = vdwg.mxu0
        %9496 = vmatpush.bf16.msra.mxu0 %v6078
        %9497 = vmatpush.bf16.msra.mxu0 %v6074
        %9498 = vmatpush.bf16.msra.mxu0 %v6070
        %9499 = vmatpush.bf16.msra.mxu0 %v6066
        %9500 = vmatpush.bf16.msra.mxu0 %v6062
        %9501 = vmatpush.bf16.msra.mxu0 %v6058
        %9502 = vmatpush.bf16.msra.mxu0 %v6054
        %9503 = vmatpush.bf16.msra.mxu0 %v6050
        %9504 = vmatmul.bf16.gmra.mxu0 %v636
        %v9505 = vpop.f32.mrf.mxu0
        %v9506 = vadd.f32 %v9493, %v9505
        %v9507 = vpop.f32.mrf.mxu0
        %9508 = vdwg.mxu0
        %9509 = vmatpush.bf16.msra.mxu0 %v6110
        %9510 = vmatpush.bf16.msra.mxu0 %v6106
        %9511 = vmatpush.bf16.msra.mxu0 %v6102
        %9512 = vmatpush.bf16.msra.mxu0 %v6098
        %9513 = vmatpush.bf16.msra.mxu0 %v6094
        %9514 = vmatpush.bf16.msra.mxu0 %v6090
        %9515 = vmatpush.bf16.msra.mxu0 %v6086
        %9516 = vmatpush.bf16.msra.mxu0 %v6082
        %9517 = vmatmul.bf16.gmra.mxu0 %v637
        %v9518 = vpop.f32.mrf.mxu0
        %v9519 = vadd.f32 %v9506, %v9518
        %v9520 = vpop.f32.mrf.mxu0
        %9521 = vdwg.mxu0
        %9522 = vmatpush.bf16.msra.mxu0 %v6142
        %9523 = vmatpush.bf16.msra.mxu0 %v6138
        %9524 = vmatpush.bf16.msra.mxu0 %v6134
        %9525 = vmatpush.bf16.msra.mxu0 %v6130
        %9526 = vmatpush.bf16.msra.mxu0 %v6126
        %9527 = vmatpush.bf16.msra.mxu0 %v6122
        %9528 = vmatpush.bf16.msra.mxu0 %v6118
        %9529 = vmatpush.bf16.msra.mxu0 %v6114
        %9530 = vmatmul.bf16.gmra.mxu0 %v638
        %v9531 = vpop.f32.mrf.mxu0
        %v9532 = vadd.f32 %v9519, %v9531
        %v9533 = vpop.f32.mrf.mxu0
        %9534 = vdwg.mxu0
        %9535 = vmatpush.bf16.msra.mxu0 %v6174
        %9536 = vmatpush.bf16.msra.mxu0 %v6170
        %9537 = vmatpush.bf16.msra.mxu0 %v6166
        %9538 = vmatpush.bf16.msra.mxu0 %v6162
        %9539 = vmatpush.bf16.msra.mxu0 %v6158
        %9540 = vmatpush.bf16.msra.mxu0 %v6154
        %9541 = vmatpush.bf16.msra.mxu0 %v6150
        %9542 = vmatpush.bf16.msra.mxu0 %v6146
        %9543 = vmatmul.bf16.gmra.mxu0 %v639
        %v9544 = vpop.f32.mrf.mxu0
        %v9545 = vadd.f32 %v9532, %v9544
        %v9546 = vpop.f32.mrf.mxu0
        %9547 = vdwg.mxu0
        %9548 = vmatpush.bf16.msra.mxu0 %v6206
        %9549 = vmatpush.bf16.msra.mxu0 %v6202
        %9550 = vmatpush.bf16.msra.mxu0 %v6198
        %9551 = vmatpush.bf16.msra.mxu0 %v6194
        %9552 = vmatpush.bf16.msra.mxu0 %v6190
        %9553 = vmatpush.bf16.msra.mxu0 %v6186
        %9554 = vmatpush.bf16.msra.mxu0 %v6182
        %9555 = vmatpush.bf16.msra.mxu0 %v6178
        %9556 = vmatmul.bf16.gmra.mxu0 %v640
        %v9557 = vpop.f32.mrf.mxu0
        %v9558 = vadd.f32 %v9545, %v9557
        %v9559 = vpop.f32.mrf.mxu0
        %9560 = vdwg.mxu0
        %9561 = vmatpush.bf16.msra.mxu0 %v6238
        %9562 = vmatpush.bf16.msra.mxu0 %v6234
        %9563 = vmatpush.bf16.msra.mxu0 %v6230
        %9564 = vmatpush.bf16.msra.mxu0 %v6226
        %9565 = vmatpush.bf16.msra.mxu0 %v6222
        %9566 = vmatpush.bf16.msra.mxu0 %v6218
        %9567 = vmatpush.bf16.msra.mxu0 %v6214
        %9568 = vmatpush.bf16.msra.mxu0 %v6210
        %9569 = vmatmul.bf16.gmra.mxu0 %v641
        %v9570 = vpop.f32.mrf.mxu0
        %v9571 = vadd.f32 %v9558, %v9570
        %v9572 = vpop.f32.mrf.mxu0
        %9573 = vdwg.mxu0
        %9574 = vmatpush.bf16.msra.mxu0 %v6270
        %9575 = vmatpush.bf16.msra.mxu0 %v6266
        %9576 = vmatpush.bf16.msra.mxu0 %v6262
        %9577 = vmatpush.bf16.msra.mxu0 %v6258
        %9578 = vmatpush.bf16.msra.mxu0 %v6254
        %9579 = vmatpush.bf16.msra.mxu0 %v6250
        %9580 = vmatpush.bf16.msra.mxu0 %v6246
        %9581 = vmatpush.bf16.msra.mxu0 %v6242
        %9582 = vmatmul.bf16.gmra.mxu0 %v642
        %v9583 = vpop.f32.mrf.mxu0
        %v9584 = vadd.f32 %v9571, %v9583
        %v9585 = vpop.f32.mrf.mxu0
        %9586 = vdwg.mxu0
        %9587 = vmatpush.bf16.msra.mxu0 %v6302
        %9588 = vmatpush.bf16.msra.mxu0 %v6298
        %9589 = vmatpush.bf16.msra.mxu0 %v6294
        %9590 = vmatpush.bf16.msra.mxu0 %v6290
        %9591 = vmatpush.bf16.msra.mxu0 %v6286
        %9592 = vmatpush.bf16.msra.mxu0 %v6282
        %9593 = vmatpush.bf16.msra.mxu0 %v6278
        %9594 = vmatpush.bf16.msra.mxu0 %v6274
        %9595 = vmatmul.bf16.gmra.mxu0 %v643
        %v9596 = vpop.f32.mrf.mxu0
        %v9597 = vadd.f32 %v9584, %v9596
        %v9598 = vpop.f32.mrf.mxu0
        %9599 = vdwg.mxu0
        %9600 = vmatpush.bf16.msra.mxu0 %v6334
        %9601 = vmatpush.bf16.msra.mxu0 %v6330
        %9602 = vmatpush.bf16.msra.mxu0 %v6326
        %9603 = vmatpush.bf16.msra.mxu0 %v6322
        %9604 = vmatpush.bf16.msra.mxu0 %v6318
        %9605 = vmatpush.bf16.msra.mxu0 %v6314
        %9606 = vmatpush.bf16.msra.mxu0 %v6310
        %9607 = vmatpush.bf16.msra.mxu0 %v6306
        %9608 = vmatmul.bf16.gmra.mxu0 %v644
        %v9609 = vpop.f32.mrf.mxu0
        %v9610 = vadd.f32 %v9597, %v9609
        %v9611 = vpop.f32.mrf.mxu0
        %9612 = vdwg.mxu0
        %9613 = vmatpush.bf16.msra.mxu0 %v6366
        %9614 = vmatpush.bf16.msra.mxu0 %v6362
        %9615 = vmatpush.bf16.msra.mxu0 %v6358
        %9616 = vmatpush.bf16.msra.mxu0 %v6354
        %9617 = vmatpush.bf16.msra.mxu0 %v6350
        %9618 = vmatpush.bf16.msra.mxu0 %v6346
        %9619 = vmatpush.bf16.msra.mxu0 %v6342
        %9620 = vmatpush.bf16.msra.mxu0 %v6338
        %9621 = vmatmul.bf16.gmra.mxu0 %v645
        %v9622 = vpop.f32.mrf.mxu0
        %v9623 = vadd.f32 %v9610, %v9622
        %v9624 = vpop.f32.mrf.mxu0
        %9625 = vdwg.mxu0
        %9626 = vmatpush.bf16.msra.mxu0 %v6398
        %9627 = vmatpush.bf16.msra.mxu0 %v6394
        %9628 = vmatpush.bf16.msra.mxu0 %v6390
        %9629 = vmatpush.bf16.msra.mxu0 %v6386
        %9630 = vmatpush.bf16.msra.mxu0 %v6382
        %9631 = vmatpush.bf16.msra.mxu0 %v6378
        %9632 = vmatpush.bf16.msra.mxu0 %v6374
        %9633 = vmatpush.bf16.msra.mxu0 %v6370
        %9634 = vmatmul.bf16.gmra.mxu0 %v646
        %v9635 = vpop.f32.mrf.mxu0
        %v9636 = vadd.f32 %v9623, %v9635
        %v9637 = vpop.f32.mrf.mxu0
        %9638 = vdwg.mxu0
        %9639 = vmatpush.bf16.msra.mxu0 %v6430
        %9640 = vmatpush.bf16.msra.mxu0 %v6426
        %9641 = vmatpush.bf16.msra.mxu0 %v6422
        %9642 = vmatpush.bf16.msra.mxu0 %v6418
        %9643 = vmatpush.bf16.msra.mxu0 %v6414
        %9644 = vmatpush.bf16.msra.mxu0 %v6410
        %9645 = vmatpush.bf16.msra.mxu0 %v6406
        %9646 = vmatpush.bf16.msra.mxu0 %v6402
        %9647 = vmatmul.bf16.gmra.mxu0 %v647
        %v9648 = vpop.f32.mrf.mxu0
        %v9649 = vadd.f32 %v9636, %v9648
        %v9650 = vpop.f32.mrf.mxu0
        %9651 = vdwg.mxu0
        %9652 = vmatpush.bf16.msra.mxu0 %v6462
        %9653 = vmatpush.bf16.msra.mxu0 %v6458
        %9654 = vmatpush.bf16.msra.mxu0 %v6454
        %9655 = vmatpush.bf16.msra.mxu0 %v6450
        %9656 = vmatpush.bf16.msra.mxu0 %v6446
        %9657 = vmatpush.bf16.msra.mxu0 %v6442
        %9658 = vmatpush.bf16.msra.mxu0 %v6438
        %9659 = vmatpush.bf16.msra.mxu0 %v6434
        %9660 = vmatmul.bf16.gmra.mxu0 %v648
        %v9661 = vpop.f32.mrf.mxu0
        %v9662 = vadd.f32 %v9649, %v9661
        %v9663 = vpop.f32.mrf.mxu0
        %9664 = vdwg.mxu0
        %9665 = vmatpush.bf16.msra.mxu0 %v6494
        %9666 = vmatpush.bf16.msra.mxu0 %v6490
        %9667 = vmatpush.bf16.msra.mxu0 %v6486
        %9668 = vmatpush.bf16.msra.mxu0 %v6482
        %9669 = vmatpush.bf16.msra.mxu0 %v6478
        %9670 = vmatpush.bf16.msra.mxu0 %v6474
        %9671 = vmatpush.bf16.msra.mxu0 %v6470
        %9672 = vmatpush.bf16.msra.mxu0 %v6466
        %9673 = vmatmul.bf16.gmra.mxu0 %v649
        %v9674 = vpop.f32.mrf.mxu0
        %v9675 = vadd.f32 %v9662, %v9674
        %v9676 = vpop.f32.mrf.mxu0
        %9677 = vdwg.mxu0
        %9678 = vmatpush.bf16.msra.mxu0 %v6526
        %9679 = vmatpush.bf16.msra.mxu0 %v6522
        %9680 = vmatpush.bf16.msra.mxu0 %v6518
        %9681 = vmatpush.bf16.msra.mxu0 %v6514
        %9682 = vmatpush.bf16.msra.mxu0 %v6510
        %9683 = vmatpush.bf16.msra.mxu0 %v6506
        %9684 = vmatpush.bf16.msra.mxu0 %v6502
        %9685 = vmatpush.bf16.msra.mxu0 %v6498
        %9686 = vmatmul.bf16.gmra.mxu0 %v650
        %v9687 = vpop.f32.mrf.mxu0
        %v9688 = vadd.f32 %v9675, %v9687
        %v9689 = vpop.f32.mrf.mxu0
        %9690 = vdwg.mxu0
        %9691 = vmatpush.bf16.msra.mxu0 %v6558
        %9692 = vmatpush.bf16.msra.mxu0 %v6554
        %9693 = vmatpush.bf16.msra.mxu0 %v6550
        %9694 = vmatpush.bf16.msra.mxu0 %v6546
        %9695 = vmatpush.bf16.msra.mxu0 %v6542
        %9696 = vmatpush.bf16.msra.mxu0 %v6538
        %9697 = vmatpush.bf16.msra.mxu0 %v6534
        %9698 = vmatpush.bf16.msra.mxu0 %v6530
        %9699 = vmatmul.bf16.gmra.mxu0 %v651
        %v9700 = vpop.f32.mrf.mxu0
        %v9701 = vadd.f32 %v9688, %v9700
        %v9702 = vpop.f32.mrf.mxu0
        %9703 = vdwg.mxu0
        %9704 = vmatpush.bf16.msra.mxu0 %v6590
        %9705 = vmatpush.bf16.msra.mxu0 %v6586
        %9706 = vmatpush.bf16.msra.mxu0 %v6582
        %9707 = vmatpush.bf16.msra.mxu0 %v6578
        %9708 = vmatpush.bf16.msra.mxu0 %v6574
        %9709 = vmatpush.bf16.msra.mxu0 %v6570
        %9710 = vmatpush.bf16.msra.mxu0 %v6566
        %9711 = vmatpush.bf16.msra.mxu0 %v6562
        %9712 = vmatmul.bf16.gmra.mxu0 %v652
        %v9713 = vpop.f32.mrf.mxu0
        %v9714 = vadd.f32 %v9701, %v9713
        %v9715 = vpop.f32.mrf.mxu0
        %9716 = vdwg.mxu0
        %9717 = vmatpush.bf16.msra.mxu0 %v6622
        %9718 = vmatpush.bf16.msra.mxu0 %v6618
        %9719 = vmatpush.bf16.msra.mxu0 %v6614
        %9720 = vmatpush.bf16.msra.mxu0 %v6610
        %9721 = vmatpush.bf16.msra.mxu0 %v6606
        %9722 = vmatpush.bf16.msra.mxu0 %v6602
        %9723 = vmatpush.bf16.msra.mxu0 %v6598
        %9724 = vmatpush.bf16.msra.mxu0 %v6594
        %9725 = vmatmul.bf16.gmra.mxu0 %v653
        %v9726 = vpop.f32.mrf.mxu0
        %v9727 = vadd.f32 %v9714, %v9726
        %v9728 = vpop.f32.mrf.mxu0
        %9729 = vdwg.mxu0
        %9730 = vmatpush.bf16.msra.mxu0 %v6654
        %9731 = vmatpush.bf16.msra.mxu0 %v6650
        %9732 = vmatpush.bf16.msra.mxu0 %v6646
        %9733 = vmatpush.bf16.msra.mxu0 %v6642
        %9734 = vmatpush.bf16.msra.mxu0 %v6638
        %9735 = vmatpush.bf16.msra.mxu0 %v6634
        %9736 = vmatpush.bf16.msra.mxu0 %v6630
        %9737 = vmatpush.bf16.msra.mxu0 %v6626
        %9738 = vmatmul.bf16.gmra.mxu0 %v654
        %v9739 = vpop.f32.mrf.mxu0
        %v9740 = vadd.f32 %v9727, %v9739
        %v9741 = vpop.f32.mrf.mxu0
        %9742 = vdwg.mxu0
        %9743 = vmatpush.bf16.msra.mxu0 %v6686
        %9744 = vmatpush.bf16.msra.mxu0 %v6682
        %9745 = vmatpush.bf16.msra.mxu0 %v6678
        %9746 = vmatpush.bf16.msra.mxu0 %v6674
        %9747 = vmatpush.bf16.msra.mxu0 %v6670
        %9748 = vmatpush.bf16.msra.mxu0 %v6666
        %9749 = vmatpush.bf16.msra.mxu0 %v6662
        %9750 = vmatpush.bf16.msra.mxu0 %v6658
        %9751 = vmatmul.bf16.gmra.mxu0 %v655
        %v9752 = vpop.f32.mrf.mxu0
        %v9753 = vadd.f32 %v9740, %v9752
        %v9754 = vpop.f32.mrf.mxu0
        %9755 = vdwg.mxu0
        %9756 = vmatpush.bf16.msra.mxu0 %v6718
        %9757 = vmatpush.bf16.msra.mxu0 %v6714
        %9758 = vmatpush.bf16.msra.mxu0 %v6710
        %9759 = vmatpush.bf16.msra.mxu0 %v6706
        %9760 = vmatpush.bf16.msra.mxu0 %v6702
        %9761 = vmatpush.bf16.msra.mxu0 %v6698
        %9762 = vmatpush.bf16.msra.mxu0 %v6694
        %9763 = vmatpush.bf16.msra.mxu0 %v6690
        %9764 = vmatmul.bf16.gmra.mxu0 %v656
        %v9765 = vpop.f32.mrf.mxu0
        %v9766 = vadd.f32 %v9753, %v9765
        %v9767 = vpop.f32.mrf.mxu0
        %9768 = vdwg.mxu0
        %9769 = vmatpush.bf16.msra.mxu0 %v6750
        %9770 = vmatpush.bf16.msra.mxu0 %v6746
        %9771 = vmatpush.bf16.msra.mxu0 %v6742
        %9772 = vmatpush.bf16.msra.mxu0 %v6738
        %9773 = vmatpush.bf16.msra.mxu0 %v6734
        %9774 = vmatpush.bf16.msra.mxu0 %v6730
        %9775 = vmatpush.bf16.msra.mxu0 %v6726
        %9776 = vmatpush.bf16.msra.mxu0 %v6722
        %9777 = vmatmul.bf16.gmra.mxu0 %v657
        %v9778 = vpop.f32.mrf.mxu0
        %v9779 = vadd.f32 %v9766, %v9778
        %v9780 = vpop.f32.mrf.mxu0
        %9781 = vdwg.mxu0
        %9782 = vmatpush.bf16.msra.mxu0 %v6782
        %9783 = vmatpush.bf16.msra.mxu0 %v6778
        %9784 = vmatpush.bf16.msra.mxu0 %v6774
        %9785 = vmatpush.bf16.msra.mxu0 %v6770
        %9786 = vmatpush.bf16.msra.mxu0 %v6766
        %9787 = vmatpush.bf16.msra.mxu0 %v6762
        %9788 = vmatpush.bf16.msra.mxu0 %v6758
        %9789 = vmatpush.bf16.msra.mxu0 %v6754
        %9790 = vmatmul.bf16.gmra.mxu0 %v658
        %v9791 = vpop.f32.mrf.mxu0
        %v9792 = vadd.f32 %v9779, %v9791
        %v9793 = vpop.f32.mrf.mxu0
        %9794 = vdwg.mxu0
        %9795 = vmatpush.bf16.msra.mxu0 %v6814
        %9796 = vmatpush.bf16.msra.mxu0 %v6810
        %9797 = vmatpush.bf16.msra.mxu0 %v6806
        %9798 = vmatpush.bf16.msra.mxu0 %v6802
        %9799 = vmatpush.bf16.msra.mxu0 %v6798
        %9800 = vmatpush.bf16.msra.mxu0 %v6794
        %9801 = vmatpush.bf16.msra.mxu0 %v6790
        %9802 = vmatpush.bf16.msra.mxu0 %v6786
        %9803 = vmatmul.bf16.gmra.mxu0 %v659
        %v9804 = vpop.f32.mrf.mxu0
        %v9805 = vadd.f32 %v9792, %v9804
        %v9806 = vpop.f32.mrf.mxu0
        %9807 = vdwg.mxu0
        %9808 = vmatpush.bf16.msra.mxu0 %v6846
        %9809 = vmatpush.bf16.msra.mxu0 %v6842
        %9810 = vmatpush.bf16.msra.mxu0 %v6838
        %9811 = vmatpush.bf16.msra.mxu0 %v6834
        %9812 = vmatpush.bf16.msra.mxu0 %v6830
        %9813 = vmatpush.bf16.msra.mxu0 %v6826
        %9814 = vmatpush.bf16.msra.mxu0 %v6822
        %9815 = vmatpush.bf16.msra.mxu0 %v6818
        %9816 = vmatmul.bf16.gmra.mxu0 %v660
        %v9817 = vpop.f32.mrf.mxu0
        %v9818 = vadd.f32 %v9805, %v9817
        %v9819 = vpop.f32.mrf.mxu0
        %9820 = vdwg.mxu0
        %9821 = vmatpush.bf16.msra.mxu0 %v6878
        %9822 = vmatpush.bf16.msra.mxu0 %v6874
        %9823 = vmatpush.bf16.msra.mxu0 %v6870
        %9824 = vmatpush.bf16.msra.mxu0 %v6866
        %9825 = vmatpush.bf16.msra.mxu0 %v6862
        %9826 = vmatpush.bf16.msra.mxu0 %v6858
        %9827 = vmatpush.bf16.msra.mxu0 %v6854
        %9828 = vmatpush.bf16.msra.mxu0 %v6850
        %9829 = vmatmul.bf16.gmra.mxu0 %v661
        %v9830 = vpop.f32.mrf.mxu0
        %v9831 = vadd.f32 %v9818, %v9830
        %v9832 = vpop.f32.mrf.mxu0
        %9833 = vdwg.mxu0
        %9834 = vmatpush.bf16.msra.mxu0 %v6910
        %9835 = vmatpush.bf16.msra.mxu0 %v6906
        %9836 = vmatpush.bf16.msra.mxu0 %v6902
        %9837 = vmatpush.bf16.msra.mxu0 %v6898
        %9838 = vmatpush.bf16.msra.mxu0 %v6894
        %9839 = vmatpush.bf16.msra.mxu0 %v6890
        %9840 = vmatpush.bf16.msra.mxu0 %v6886
        %9841 = vmatpush.bf16.msra.mxu0 %v6882
        %9842 = vmatmul.bf16.gmra.mxu0 %v662
        %v9843 = vpop.f32.mrf.mxu0
        %v9844 = vadd.f32 %v9831, %v9843
        %v9845 = vpop.f32.mrf.mxu0
        %9846 = vdwg.mxu0
        %9847 = vmatpush.bf16.msra.mxu0 %v6942
        %9848 = vmatpush.bf16.msra.mxu0 %v6938
        %9849 = vmatpush.bf16.msra.mxu0 %v6934
        %9850 = vmatpush.bf16.msra.mxu0 %v6930
        %9851 = vmatpush.bf16.msra.mxu0 %v6926
        %9852 = vmatpush.bf16.msra.mxu0 %v6922
        %9853 = vmatpush.bf16.msra.mxu0 %v6918
        %9854 = vmatpush.bf16.msra.mxu0 %v6914
        %9855 = vmatmul.bf16.gmra.mxu0 %v663
        %v9856 = vpop.f32.mrf.mxu0
        %v9857 = vadd.f32 %v9844, %v9856
        %v9858 = vpop.f32.mrf.mxu0
        %9859 = vdwg.mxu0
        %9860 = vmatpush.bf16.msra.mxu0 %v6974
        %9861 = vmatpush.bf16.msra.mxu0 %v6970
        %9862 = vmatpush.bf16.msra.mxu0 %v6966
        %9863 = vmatpush.bf16.msra.mxu0 %v6962
        %9864 = vmatpush.bf16.msra.mxu0 %v6958
        %9865 = vmatpush.bf16.msra.mxu0 %v6954
        %9866 = vmatpush.bf16.msra.mxu0 %v6950
        %9867 = vmatpush.bf16.msra.mxu0 %v6946
        %9868 = vmatmul.bf16.gmra.mxu0 %v664
        %v9869 = vpop.f32.mrf.mxu0
        %v9870 = vadd.f32 %v9857, %v9869
        %v9871 = vpop.f32.mrf.mxu0
        %9872 = vdwg.mxu0
        %9873 = vmatpush.bf16.msra.mxu0 %v7006
        %9874 = vmatpush.bf16.msra.mxu0 %v7002
        %9875 = vmatpush.bf16.msra.mxu0 %v6998
        %9876 = vmatpush.bf16.msra.mxu0 %v6994
        %9877 = vmatpush.bf16.msra.mxu0 %v6990
        %9878 = vmatpush.bf16.msra.mxu0 %v6986
        %9879 = vmatpush.bf16.msra.mxu0 %v6982
        %9880 = vmatpush.bf16.msra.mxu0 %v6978
        %9881 = vmatmul.bf16.gmra.mxu0 %v665
        %v9882 = vpop.f32.mrf.mxu0
        %v9883 = vadd.f32 %v9870, %v9882
        %v9884 = vpop.f32.mrf.mxu0
        %9885 = vdwg.mxu0
        %9886 = vmatpush.bf16.msra.mxu0 %v7038
        %9887 = vmatpush.bf16.msra.mxu0 %v7034
        %9888 = vmatpush.bf16.msra.mxu0 %v7030
        %9889 = vmatpush.bf16.msra.mxu0 %v7026
        %9890 = vmatpush.bf16.msra.mxu0 %v7022
        %9891 = vmatpush.bf16.msra.mxu0 %v7018
        %9892 = vmatpush.bf16.msra.mxu0 %v7014
        %9893 = vmatpush.bf16.msra.mxu0 %v7010
        %9894 = vmatmul.bf16.gmra.mxu0 %v666
        %v9895 = vpop.f32.mrf.mxu0
        %v9896 = vadd.f32 %v9883, %v9895
        %v9897 = vpop.f32.mrf.mxu0
        %9898 = vdwg.mxu0
        %9899 = vmatpush.bf16.msra.mxu0 %v7070
        %9900 = vmatpush.bf16.msra.mxu0 %v7066
        %9901 = vmatpush.bf16.msra.mxu0 %v7062
        %9902 = vmatpush.bf16.msra.mxu0 %v7058
        %9903 = vmatpush.bf16.msra.mxu0 %v7054
        %9904 = vmatpush.bf16.msra.mxu0 %v7050
        %9905 = vmatpush.bf16.msra.mxu0 %v7046
        %9906 = vmatpush.bf16.msra.mxu0 %v7042
        %9907 = vmatmul.bf16.gmra.mxu0 %v667
        %v9908 = vpop.f32.mrf.mxu0
        %v9909 = vadd.f32 %v9896, %v9908
        %v9910 = vpop.f32.mrf.mxu0
        %9911 = vdwg.mxu0
        %9912 = vmatpush.bf16.msra.mxu0 %v5823
        %9913 = vmatpush.bf16.msra.mxu0 %v5819
        %9914 = vmatpush.bf16.msra.mxu0 %v5815
        %9915 = vmatpush.bf16.msra.mxu0 %v5811
        %9916 = vmatpush.bf16.msra.mxu0 %v5807
        %9917 = vmatpush.bf16.msra.mxu0 %v5803
        %9918 = vmatpush.bf16.msra.mxu0 %v5799
        %9919 = vmatpush.bf16.msra.mxu0 %v5795
        %9920 = vmatmul.bf16.gmra.mxu0 %v628
        %v9921 = vpop.f32.mrf.mxu0
        %v9922 = vadd.f32 0.0, %v9921
        %v9923 = vpop.f32.mrf.mxu0
        %9924 = vdwg.mxu0
        %9925 = vmatpush.bf16.msra.mxu0 %v5855
        %9926 = vmatpush.bf16.msra.mxu0 %v5851
        %9927 = vmatpush.bf16.msra.mxu0 %v5847
        %9928 = vmatpush.bf16.msra.mxu0 %v5843
        %9929 = vmatpush.bf16.msra.mxu0 %v5839
        %9930 = vmatpush.bf16.msra.mxu0 %v5835
        %9931 = vmatpush.bf16.msra.mxu0 %v5831
        %9932 = vmatpush.bf16.msra.mxu0 %v5827
        %9933 = vmatmul.bf16.gmra.mxu0 %v629
        %v9934 = vpop.f32.mrf.mxu0
        %v9935 = vadd.f32 %v9922, %v9934
        %v9936 = vpop.f32.mrf.mxu0
        %9937 = vdwg.mxu0
        %9938 = vmatpush.bf16.msra.mxu0 %v5887
        %9939 = vmatpush.bf16.msra.mxu0 %v5883
        %9940 = vmatpush.bf16.msra.mxu0 %v5879
        %9941 = vmatpush.bf16.msra.mxu0 %v5875
        %9942 = vmatpush.bf16.msra.mxu0 %v5871
        %9943 = vmatpush.bf16.msra.mxu0 %v5867
        %9944 = vmatpush.bf16.msra.mxu0 %v5863
        %9945 = vmatpush.bf16.msra.mxu0 %v5859
        %9946 = vmatmul.bf16.gmra.mxu0 %v630
        %v9947 = vpop.f32.mrf.mxu0
        %v9948 = vadd.f32 %v9935, %v9947
        %v9949 = vpop.f32.mrf.mxu0
        %9950 = vdwg.mxu0
        %9951 = vmatpush.bf16.msra.mxu0 %v5919
        %9952 = vmatpush.bf16.msra.mxu0 %v5915
        %9953 = vmatpush.bf16.msra.mxu0 %v5911
        %9954 = vmatpush.bf16.msra.mxu0 %v5907
        %9955 = vmatpush.bf16.msra.mxu0 %v5903
        %9956 = vmatpush.bf16.msra.mxu0 %v5899
        %9957 = vmatpush.bf16.msra.mxu0 %v5895
        %9958 = vmatpush.bf16.msra.mxu0 %v5891
        %9959 = vmatmul.bf16.gmra.mxu0 %v631
        %v9960 = vpop.f32.mrf.mxu0
        %v9961 = vadd.f32 %v9948, %v9960
        %v9962 = vpop.f32.mrf.mxu0
        %9963 = vdwg.mxu0
        %9964 = vmatpush.bf16.msra.mxu0 %v5951
        %9965 = vmatpush.bf16.msra.mxu0 %v5947
        %9966 = vmatpush.bf16.msra.mxu0 %v5943
        %9967 = vmatpush.bf16.msra.mxu0 %v5939
        %9968 = vmatpush.bf16.msra.mxu0 %v5935
        %9969 = vmatpush.bf16.msra.mxu0 %v5931
        %9970 = vmatpush.bf16.msra.mxu0 %v5927
        %9971 = vmatpush.bf16.msra.mxu0 %v5923
        %9972 = vmatmul.bf16.gmra.mxu0 %v632
        %v9973 = vpop.f32.mrf.mxu0
        %v9974 = vadd.f32 %v9961, %v9973
        %v9975 = vpop.f32.mrf.mxu0
        %9976 = vdwg.mxu0
        %9977 = vmatpush.bf16.msra.mxu0 %v5983
        %9978 = vmatpush.bf16.msra.mxu0 %v5979
        %9979 = vmatpush.bf16.msra.mxu0 %v5975
        %9980 = vmatpush.bf16.msra.mxu0 %v5971
        %9981 = vmatpush.bf16.msra.mxu0 %v5967
        %9982 = vmatpush.bf16.msra.mxu0 %v5963
        %9983 = vmatpush.bf16.msra.mxu0 %v5959
        %9984 = vmatpush.bf16.msra.mxu0 %v5955
        %9985 = vmatmul.bf16.gmra.mxu0 %v633
        %v9986 = vpop.f32.mrf.mxu0
        %v9987 = vadd.f32 %v9974, %v9986
        %v9988 = vpop.f32.mrf.mxu0
        %9989 = vdwg.mxu0
        %9990 = vmatpush.bf16.msra.mxu0 %v6015
        %9991 = vmatpush.bf16.msra.mxu0 %v6011
        %9992 = vmatpush.bf16.msra.mxu0 %v6007
        %9993 = vmatpush.bf16.msra.mxu0 %v6003
        %9994 = vmatpush.bf16.msra.mxu0 %v5999
        %9995 = vmatpush.bf16.msra.mxu0 %v5995
        %9996 = vmatpush.bf16.msra.mxu0 %v5991
        %9997 = vmatpush.bf16.msra.mxu0 %v5987
        %9998 = vmatmul.bf16.gmra.mxu0 %v634
        %v9999 = vpop.f32.mrf.mxu0
        %v10000 = vadd.f32 %v9987, %v9999
        %v10001 = vpop.f32.mrf.mxu0
        %10002 = vdwg.mxu0
        %10003 = vmatpush.bf16.msra.mxu0 %v6047
        %10004 = vmatpush.bf16.msra.mxu0 %v6043
        %10005 = vmatpush.bf16.msra.mxu0 %v6039
        %10006 = vmatpush.bf16.msra.mxu0 %v6035
        %10007 = vmatpush.bf16.msra.mxu0 %v6031
        %10008 = vmatpush.bf16.msra.mxu0 %v6027
        %10009 = vmatpush.bf16.msra.mxu0 %v6023
        %10010 = vmatpush.bf16.msra.mxu0 %v6019
        %10011 = vmatmul.bf16.gmra.mxu0 %v635
        %v10012 = vpop.f32.mrf.mxu0
        %v10013 = vadd.f32 %v10000, %v10012
        %v10014 = vpop.f32.mrf.mxu0
        %10015 = vdwg.mxu0
        %10016 = vmatpush.bf16.msra.mxu0 %v6079
        %10017 = vmatpush.bf16.msra.mxu0 %v6075
        %10018 = vmatpush.bf16.msra.mxu0 %v6071
        %10019 = vmatpush.bf16.msra.mxu0 %v6067
        %10020 = vmatpush.bf16.msra.mxu0 %v6063
        %10021 = vmatpush.bf16.msra.mxu0 %v6059
        %10022 = vmatpush.bf16.msra.mxu0 %v6055
        %10023 = vmatpush.bf16.msra.mxu0 %v6051
        %10024 = vmatmul.bf16.gmra.mxu0 %v636
        %v10025 = vpop.f32.mrf.mxu0
        %v10026 = vadd.f32 %v10013, %v10025
        %v10027 = vpop.f32.mrf.mxu0
        %10028 = vdwg.mxu0
        %10029 = vmatpush.bf16.msra.mxu0 %v6111
        %10030 = vmatpush.bf16.msra.mxu0 %v6107
        %10031 = vmatpush.bf16.msra.mxu0 %v6103
        %10032 = vmatpush.bf16.msra.mxu0 %v6099
        %10033 = vmatpush.bf16.msra.mxu0 %v6095
        %10034 = vmatpush.bf16.msra.mxu0 %v6091
        %10035 = vmatpush.bf16.msra.mxu0 %v6087
        %10036 = vmatpush.bf16.msra.mxu0 %v6083
        %10037 = vmatmul.bf16.gmra.mxu0 %v637
        %v10038 = vpop.f32.mrf.mxu0
        %v10039 = vadd.f32 %v10026, %v10038
        %v10040 = vpop.f32.mrf.mxu0
        %10041 = vdwg.mxu0
        %10042 = vmatpush.bf16.msra.mxu0 %v6143
        %10043 = vmatpush.bf16.msra.mxu0 %v6139
        %10044 = vmatpush.bf16.msra.mxu0 %v6135
        %10045 = vmatpush.bf16.msra.mxu0 %v6131
        %10046 = vmatpush.bf16.msra.mxu0 %v6127
        %10047 = vmatpush.bf16.msra.mxu0 %v6123
        %10048 = vmatpush.bf16.msra.mxu0 %v6119
        %10049 = vmatpush.bf16.msra.mxu0 %v6115
        %10050 = vmatmul.bf16.gmra.mxu0 %v638
        %v10051 = vpop.f32.mrf.mxu0
        %v10052 = vadd.f32 %v10039, %v10051
        %v10053 = vpop.f32.mrf.mxu0
        %10054 = vdwg.mxu0
        %10055 = vmatpush.bf16.msra.mxu0 %v6175
        %10056 = vmatpush.bf16.msra.mxu0 %v6171
        %10057 = vmatpush.bf16.msra.mxu0 %v6167
        %10058 = vmatpush.bf16.msra.mxu0 %v6163
        %10059 = vmatpush.bf16.msra.mxu0 %v6159
        %10060 = vmatpush.bf16.msra.mxu0 %v6155
        %10061 = vmatpush.bf16.msra.mxu0 %v6151
        %10062 = vmatpush.bf16.msra.mxu0 %v6147
        %10063 = vmatmul.bf16.gmra.mxu0 %v639
        %v10064 = vpop.f32.mrf.mxu0
        %v10065 = vadd.f32 %v10052, %v10064
        %v10066 = vpop.f32.mrf.mxu0
        %10067 = vdwg.mxu0
        %10068 = vmatpush.bf16.msra.mxu0 %v6207
        %10069 = vmatpush.bf16.msra.mxu0 %v6203
        %10070 = vmatpush.bf16.msra.mxu0 %v6199
        %10071 = vmatpush.bf16.msra.mxu0 %v6195
        %10072 = vmatpush.bf16.msra.mxu0 %v6191
        %10073 = vmatpush.bf16.msra.mxu0 %v6187
        %10074 = vmatpush.bf16.msra.mxu0 %v6183
        %10075 = vmatpush.bf16.msra.mxu0 %v6179
        %10076 = vmatmul.bf16.gmra.mxu0 %v640
        %v10077 = vpop.f32.mrf.mxu0
        %v10078 = vadd.f32 %v10065, %v10077
        %v10079 = vpop.f32.mrf.mxu0
        %10080 = vdwg.mxu0
        %10081 = vmatpush.bf16.msra.mxu0 %v6239
        %10082 = vmatpush.bf16.msra.mxu0 %v6235
        %10083 = vmatpush.bf16.msra.mxu0 %v6231
        %10084 = vmatpush.bf16.msra.mxu0 %v6227
        %10085 = vmatpush.bf16.msra.mxu0 %v6223
        %10086 = vmatpush.bf16.msra.mxu0 %v6219
        %10087 = vmatpush.bf16.msra.mxu0 %v6215
        %10088 = vmatpush.bf16.msra.mxu0 %v6211
        %10089 = vmatmul.bf16.gmra.mxu0 %v641
        %v10090 = vpop.f32.mrf.mxu0
        %v10091 = vadd.f32 %v10078, %v10090
        %v10092 = vpop.f32.mrf.mxu0
        %10093 = vdwg.mxu0
        %10094 = vmatpush.bf16.msra.mxu0 %v6271
        %10095 = vmatpush.bf16.msra.mxu0 %v6267
        %10096 = vmatpush.bf16.msra.mxu0 %v6263
        %10097 = vmatpush.bf16.msra.mxu0 %v6259
        %10098 = vmatpush.bf16.msra.mxu0 %v6255
        %10099 = vmatpush.bf16.msra.mxu0 %v6251
        %10100 = vmatpush.bf16.msra.mxu0 %v6247
        %10101 = vmatpush.bf16.msra.mxu0 %v6243
        %10102 = vmatmul.bf16.gmra.mxu0 %v642
        %v10103 = vpop.f32.mrf.mxu0
        %v10104 = vadd.f32 %v10091, %v10103
        %v10105 = vpop.f32.mrf.mxu0
        %10106 = vdwg.mxu0
        %10107 = vmatpush.bf16.msra.mxu0 %v6303
        %10108 = vmatpush.bf16.msra.mxu0 %v6299
        %10109 = vmatpush.bf16.msra.mxu0 %v6295
        %10110 = vmatpush.bf16.msra.mxu0 %v6291
        %10111 = vmatpush.bf16.msra.mxu0 %v6287
        %10112 = vmatpush.bf16.msra.mxu0 %v6283
        %10113 = vmatpush.bf16.msra.mxu0 %v6279
        %10114 = vmatpush.bf16.msra.mxu0 %v6275
        %10115 = vmatmul.bf16.gmra.mxu0 %v643
        %v10116 = vpop.f32.mrf.mxu0
        %v10117 = vadd.f32 %v10104, %v10116
        %v10118 = vpop.f32.mrf.mxu0
        %10119 = vdwg.mxu0
        %10120 = vmatpush.bf16.msra.mxu0 %v6335
        %10121 = vmatpush.bf16.msra.mxu0 %v6331
        %10122 = vmatpush.bf16.msra.mxu0 %v6327
        %10123 = vmatpush.bf16.msra.mxu0 %v6323
        %10124 = vmatpush.bf16.msra.mxu0 %v6319
        %10125 = vmatpush.bf16.msra.mxu0 %v6315
        %10126 = vmatpush.bf16.msra.mxu0 %v6311
        %10127 = vmatpush.bf16.msra.mxu0 %v6307
        %10128 = vmatmul.bf16.gmra.mxu0 %v644
        %v10129 = vpop.f32.mrf.mxu0
        %v10130 = vadd.f32 %v10117, %v10129
        %v10131 = vpop.f32.mrf.mxu0
        %10132 = vdwg.mxu0
        %10133 = vmatpush.bf16.msra.mxu0 %v6367
        %10134 = vmatpush.bf16.msra.mxu0 %v6363
        %10135 = vmatpush.bf16.msra.mxu0 %v6359
        %10136 = vmatpush.bf16.msra.mxu0 %v6355
        %10137 = vmatpush.bf16.msra.mxu0 %v6351
        %10138 = vmatpush.bf16.msra.mxu0 %v6347
        %10139 = vmatpush.bf16.msra.mxu0 %v6343
        %10140 = vmatpush.bf16.msra.mxu0 %v6339
        %10141 = vmatmul.bf16.gmra.mxu0 %v645
        %v10142 = vpop.f32.mrf.mxu0
        %v10143 = vadd.f32 %v10130, %v10142
        %v10144 = vpop.f32.mrf.mxu0
        %10145 = vdwg.mxu0
        %10146 = vmatpush.bf16.msra.mxu0 %v6399
        %10147 = vmatpush.bf16.msra.mxu0 %v6395
        %10148 = vmatpush.bf16.msra.mxu0 %v6391
        %10149 = vmatpush.bf16.msra.mxu0 %v6387
        %10150 = vmatpush.bf16.msra.mxu0 %v6383
        %10151 = vmatpush.bf16.msra.mxu0 %v6379
        %10152 = vmatpush.bf16.msra.mxu0 %v6375
        %10153 = vmatpush.bf16.msra.mxu0 %v6371
        %10154 = vmatmul.bf16.gmra.mxu0 %v646
        %v10155 = vpop.f32.mrf.mxu0
        %v10156 = vadd.f32 %v10143, %v10155
        %v10157 = vpop.f32.mrf.mxu0
        %10158 = vdwg.mxu0
        %10159 = vmatpush.bf16.msra.mxu0 %v6431
        %10160 = vmatpush.bf16.msra.mxu0 %v6427
        %10161 = vmatpush.bf16.msra.mxu0 %v6423
        %10162 = vmatpush.bf16.msra.mxu0 %v6419
        %10163 = vmatpush.bf16.msra.mxu0 %v6415
        %10164 = vmatpush.bf16.msra.mxu0 %v6411
        %10165 = vmatpush.bf16.msra.mxu0 %v6407
        %10166 = vmatpush.bf16.msra.mxu0 %v6403
        %10167 = vmatmul.bf16.gmra.mxu0 %v647
        %v10168 = vpop.f32.mrf.mxu0
        %v10169 = vadd.f32 %v10156, %v10168
        %v10170 = vpop.f32.mrf.mxu0
        %10171 = vdwg.mxu0
        %10172 = vmatpush.bf16.msra.mxu0 %v6463
        %10173 = vmatpush.bf16.msra.mxu0 %v6459
        %10174 = vmatpush.bf16.msra.mxu0 %v6455
        %10175 = vmatpush.bf16.msra.mxu0 %v6451
        %10176 = vmatpush.bf16.msra.mxu0 %v6447
        %10177 = vmatpush.bf16.msra.mxu0 %v6443
        %10178 = vmatpush.bf16.msra.mxu0 %v6439
        %10179 = vmatpush.bf16.msra.mxu0 %v6435
        %10180 = vmatmul.bf16.gmra.mxu0 %v648
        %v10181 = vpop.f32.mrf.mxu0
        %v10182 = vadd.f32 %v10169, %v10181
        %v10183 = vpop.f32.mrf.mxu0
        %10184 = vdwg.mxu0
        %10185 = vmatpush.bf16.msra.mxu0 %v6495
        %10186 = vmatpush.bf16.msra.mxu0 %v6491
        %10187 = vmatpush.bf16.msra.mxu0 %v6487
        %10188 = vmatpush.bf16.msra.mxu0 %v6483
        %10189 = vmatpush.bf16.msra.mxu0 %v6479
        %10190 = vmatpush.bf16.msra.mxu0 %v6475
        %10191 = vmatpush.bf16.msra.mxu0 %v6471
        %10192 = vmatpush.bf16.msra.mxu0 %v6467
        %10193 = vmatmul.bf16.gmra.mxu0 %v649
        %v10194 = vpop.f32.mrf.mxu0
        %v10195 = vadd.f32 %v10182, %v10194
        %v10196 = vpop.f32.mrf.mxu0
        %10197 = vdwg.mxu0
        %10198 = vmatpush.bf16.msra.mxu0 %v6527
        %10199 = vmatpush.bf16.msra.mxu0 %v6523
        %10200 = vmatpush.bf16.msra.mxu0 %v6519
        %10201 = vmatpush.bf16.msra.mxu0 %v6515
        %10202 = vmatpush.bf16.msra.mxu0 %v6511
        %10203 = vmatpush.bf16.msra.mxu0 %v6507
        %10204 = vmatpush.bf16.msra.mxu0 %v6503
        %10205 = vmatpush.bf16.msra.mxu0 %v6499
        %10206 = vmatmul.bf16.gmra.mxu0 %v650
        %v10207 = vpop.f32.mrf.mxu0
        %v10208 = vadd.f32 %v10195, %v10207
        %v10209 = vpop.f32.mrf.mxu0
        %10210 = vdwg.mxu0
        %10211 = vmatpush.bf16.msra.mxu0 %v6559
        %10212 = vmatpush.bf16.msra.mxu0 %v6555
        %10213 = vmatpush.bf16.msra.mxu0 %v6551
        %10214 = vmatpush.bf16.msra.mxu0 %v6547
        %10215 = vmatpush.bf16.msra.mxu0 %v6543
        %10216 = vmatpush.bf16.msra.mxu0 %v6539
        %10217 = vmatpush.bf16.msra.mxu0 %v6535
        %10218 = vmatpush.bf16.msra.mxu0 %v6531
        %10219 = vmatmul.bf16.gmra.mxu0 %v651
        %v10220 = vpop.f32.mrf.mxu0
        %v10221 = vadd.f32 %v10208, %v10220
        %v10222 = vpop.f32.mrf.mxu0
        %10223 = vdwg.mxu0
        %10224 = vmatpush.bf16.msra.mxu0 %v6591
        %10225 = vmatpush.bf16.msra.mxu0 %v6587
        %10226 = vmatpush.bf16.msra.mxu0 %v6583
        %10227 = vmatpush.bf16.msra.mxu0 %v6579
        %10228 = vmatpush.bf16.msra.mxu0 %v6575
        %10229 = vmatpush.bf16.msra.mxu0 %v6571
        %10230 = vmatpush.bf16.msra.mxu0 %v6567
        %10231 = vmatpush.bf16.msra.mxu0 %v6563
        %10232 = vmatmul.bf16.gmra.mxu0 %v652
        %v10233 = vpop.f32.mrf.mxu0
        %v10234 = vadd.f32 %v10221, %v10233
        %v10235 = vpop.f32.mrf.mxu0
        %10236 = vdwg.mxu0
        %10237 = vmatpush.bf16.msra.mxu0 %v6623
        %10238 = vmatpush.bf16.msra.mxu0 %v6619
        %10239 = vmatpush.bf16.msra.mxu0 %v6615
        %10240 = vmatpush.bf16.msra.mxu0 %v6611
        %10241 = vmatpush.bf16.msra.mxu0 %v6607
        %10242 = vmatpush.bf16.msra.mxu0 %v6603
        %10243 = vmatpush.bf16.msra.mxu0 %v6599
        %10244 = vmatpush.bf16.msra.mxu0 %v6595
        %10245 = vmatmul.bf16.gmra.mxu0 %v653
        %v10246 = vpop.f32.mrf.mxu0
        %v10247 = vadd.f32 %v10234, %v10246
        %v10248 = vpop.f32.mrf.mxu0
        %10249 = vdwg.mxu0
        %10250 = vmatpush.bf16.msra.mxu0 %v6655
        %10251 = vmatpush.bf16.msra.mxu0 %v6651
        %10252 = vmatpush.bf16.msra.mxu0 %v6647
        %10253 = vmatpush.bf16.msra.mxu0 %v6643
        %10254 = vmatpush.bf16.msra.mxu0 %v6639
        %10255 = vmatpush.bf16.msra.mxu0 %v6635
        %10256 = vmatpush.bf16.msra.mxu0 %v6631
        %10257 = vmatpush.bf16.msra.mxu0 %v6627
        %10258 = vmatmul.bf16.gmra.mxu0 %v654
        %v10259 = vpop.f32.mrf.mxu0
        %v10260 = vadd.f32 %v10247, %v10259
        %v10261 = vpop.f32.mrf.mxu0
        %10262 = vdwg.mxu0
        %10263 = vmatpush.bf16.msra.mxu0 %v6687
        %10264 = vmatpush.bf16.msra.mxu0 %v6683
        %10265 = vmatpush.bf16.msra.mxu0 %v6679
        %10266 = vmatpush.bf16.msra.mxu0 %v6675
        %10267 = vmatpush.bf16.msra.mxu0 %v6671
        %10268 = vmatpush.bf16.msra.mxu0 %v6667
        %10269 = vmatpush.bf16.msra.mxu0 %v6663
        %10270 = vmatpush.bf16.msra.mxu0 %v6659
        %10271 = vmatmul.bf16.gmra.mxu0 %v655
        %v10272 = vpop.f32.mrf.mxu0
        %v10273 = vadd.f32 %v10260, %v10272
        %v10274 = vpop.f32.mrf.mxu0
        %10275 = vdwg.mxu0
        %10276 = vmatpush.bf16.msra.mxu0 %v6719
        %10277 = vmatpush.bf16.msra.mxu0 %v6715
        %10278 = vmatpush.bf16.msra.mxu0 %v6711
        %10279 = vmatpush.bf16.msra.mxu0 %v6707
        %10280 = vmatpush.bf16.msra.mxu0 %v6703
        %10281 = vmatpush.bf16.msra.mxu0 %v6699
        %10282 = vmatpush.bf16.msra.mxu0 %v6695
        %10283 = vmatpush.bf16.msra.mxu0 %v6691
        %10284 = vmatmul.bf16.gmra.mxu0 %v656
        %v10285 = vpop.f32.mrf.mxu0
        %v10286 = vadd.f32 %v10273, %v10285
        %v10287 = vpop.f32.mrf.mxu0
        %10288 = vdwg.mxu0
        %10289 = vmatpush.bf16.msra.mxu0 %v6751
        %10290 = vmatpush.bf16.msra.mxu0 %v6747
        %10291 = vmatpush.bf16.msra.mxu0 %v6743
        %10292 = vmatpush.bf16.msra.mxu0 %v6739
        %10293 = vmatpush.bf16.msra.mxu0 %v6735
        %10294 = vmatpush.bf16.msra.mxu0 %v6731
        %10295 = vmatpush.bf16.msra.mxu0 %v6727
        %10296 = vmatpush.bf16.msra.mxu0 %v6723
        %10297 = vmatmul.bf16.gmra.mxu0 %v657
        %v10298 = vpop.f32.mrf.mxu0
        %v10299 = vadd.f32 %v10286, %v10298
        %v10300 = vpop.f32.mrf.mxu0
        %10301 = vdwg.mxu0
        %10302 = vmatpush.bf16.msra.mxu0 %v6783
        %10303 = vmatpush.bf16.msra.mxu0 %v6779
        %10304 = vmatpush.bf16.msra.mxu0 %v6775
        %10305 = vmatpush.bf16.msra.mxu0 %v6771
        %10306 = vmatpush.bf16.msra.mxu0 %v6767
        %10307 = vmatpush.bf16.msra.mxu0 %v6763
        %10308 = vmatpush.bf16.msra.mxu0 %v6759
        %10309 = vmatpush.bf16.msra.mxu0 %v6755
        %10310 = vmatmul.bf16.gmra.mxu0 %v658
        %v10311 = vpop.f32.mrf.mxu0
        %v10312 = vadd.f32 %v10299, %v10311
        %v10313 = vpop.f32.mrf.mxu0
        %10314 = vdwg.mxu0
        %10315 = vmatpush.bf16.msra.mxu0 %v6815
        %10316 = vmatpush.bf16.msra.mxu0 %v6811
        %10317 = vmatpush.bf16.msra.mxu0 %v6807
        %10318 = vmatpush.bf16.msra.mxu0 %v6803
        %10319 = vmatpush.bf16.msra.mxu0 %v6799
        %10320 = vmatpush.bf16.msra.mxu0 %v6795
        %10321 = vmatpush.bf16.msra.mxu0 %v6791
        %10322 = vmatpush.bf16.msra.mxu0 %v6787
        %10323 = vmatmul.bf16.gmra.mxu0 %v659
        %v10324 = vpop.f32.mrf.mxu0
        %v10325 = vadd.f32 %v10312, %v10324
        %v10326 = vpop.f32.mrf.mxu0
        %10327 = vdwg.mxu0
        %10328 = vmatpush.bf16.msra.mxu0 %v6847
        %10329 = vmatpush.bf16.msra.mxu0 %v6843
        %10330 = vmatpush.bf16.msra.mxu0 %v6839
        %10331 = vmatpush.bf16.msra.mxu0 %v6835
        %10332 = vmatpush.bf16.msra.mxu0 %v6831
        %10333 = vmatpush.bf16.msra.mxu0 %v6827
        %10334 = vmatpush.bf16.msra.mxu0 %v6823
        %10335 = vmatpush.bf16.msra.mxu0 %v6819
        %10336 = vmatmul.bf16.gmra.mxu0 %v660
        %v10337 = vpop.f32.mrf.mxu0
        %v10338 = vadd.f32 %v10325, %v10337
        %v10339 = vpop.f32.mrf.mxu0
        %10340 = vdwg.mxu0
        %10341 = vmatpush.bf16.msra.mxu0 %v6879
        %10342 = vmatpush.bf16.msra.mxu0 %v6875
        %10343 = vmatpush.bf16.msra.mxu0 %v6871
        %10344 = vmatpush.bf16.msra.mxu0 %v6867
        %10345 = vmatpush.bf16.msra.mxu0 %v6863
        %10346 = vmatpush.bf16.msra.mxu0 %v6859
        %10347 = vmatpush.bf16.msra.mxu0 %v6855
        %10348 = vmatpush.bf16.msra.mxu0 %v6851
        %10349 = vmatmul.bf16.gmra.mxu0 %v661
        %v10350 = vpop.f32.mrf.mxu0
        %v10351 = vadd.f32 %v10338, %v10350
        %v10352 = vpop.f32.mrf.mxu0
        %10353 = vdwg.mxu0
        %10354 = vmatpush.bf16.msra.mxu0 %v6911
        %10355 = vmatpush.bf16.msra.mxu0 %v6907
        %10356 = vmatpush.bf16.msra.mxu0 %v6903
        %10357 = vmatpush.bf16.msra.mxu0 %v6899
        %10358 = vmatpush.bf16.msra.mxu0 %v6895
        %10359 = vmatpush.bf16.msra.mxu0 %v6891
        %10360 = vmatpush.bf16.msra.mxu0 %v6887
        %10361 = vmatpush.bf16.msra.mxu0 %v6883
        %10362 = vmatmul.bf16.gmra.mxu0 %v662
        %v10363 = vpop.f32.mrf.mxu0
        %v10364 = vadd.f32 %v10351, %v10363
        %v10365 = vpop.f32.mrf.mxu0
        %10366 = vdwg.mxu0
        %10367 = vmatpush.bf16.msra.mxu0 %v6943
        %10368 = vmatpush.bf16.msra.mxu0 %v6939
        %10369 = vmatpush.bf16.msra.mxu0 %v6935
        %10370 = vmatpush.bf16.msra.mxu0 %v6931
        %10371 = vmatpush.bf16.msra.mxu0 %v6927
        %10372 = vmatpush.bf16.msra.mxu0 %v6923
        %10373 = vmatpush.bf16.msra.mxu0 %v6919
        %10374 = vmatpush.bf16.msra.mxu0 %v6915
        %10375 = vmatmul.bf16.gmra.mxu0 %v663
        %v10376 = vpop.f32.mrf.mxu0
        %v10377 = vadd.f32 %v10364, %v10376
        %v10378 = vpop.f32.mrf.mxu0
        %10379 = vdwg.mxu0
        %10380 = vmatpush.bf16.msra.mxu0 %v6975
        %10381 = vmatpush.bf16.msra.mxu0 %v6971
        %10382 = vmatpush.bf16.msra.mxu0 %v6967
        %10383 = vmatpush.bf16.msra.mxu0 %v6963
        %10384 = vmatpush.bf16.msra.mxu0 %v6959
        %10385 = vmatpush.bf16.msra.mxu0 %v6955
        %10386 = vmatpush.bf16.msra.mxu0 %v6951
        %10387 = vmatpush.bf16.msra.mxu0 %v6947
        %10388 = vmatmul.bf16.gmra.mxu0 %v664
        %v10389 = vpop.f32.mrf.mxu0
        %v10390 = vadd.f32 %v10377, %v10389
        %v10391 = vpop.f32.mrf.mxu0
        %10392 = vdwg.mxu0
        %10393 = vmatpush.bf16.msra.mxu0 %v7007
        %10394 = vmatpush.bf16.msra.mxu0 %v7003
        %10395 = vmatpush.bf16.msra.mxu0 %v6999
        %10396 = vmatpush.bf16.msra.mxu0 %v6995
        %10397 = vmatpush.bf16.msra.mxu0 %v6991
        %10398 = vmatpush.bf16.msra.mxu0 %v6987
        %10399 = vmatpush.bf16.msra.mxu0 %v6983
        %10400 = vmatpush.bf16.msra.mxu0 %v6979
        %10401 = vmatmul.bf16.gmra.mxu0 %v665
        %v10402 = vpop.f32.mrf.mxu0
        %v10403 = vadd.f32 %v10390, %v10402
        %v10404 = vpop.f32.mrf.mxu0
        %10405 = vdwg.mxu0
        %10406 = vmatpush.bf16.msra.mxu0 %v7039
        %10407 = vmatpush.bf16.msra.mxu0 %v7035
        %10408 = vmatpush.bf16.msra.mxu0 %v7031
        %10409 = vmatpush.bf16.msra.mxu0 %v7027
        %10410 = vmatpush.bf16.msra.mxu0 %v7023
        %10411 = vmatpush.bf16.msra.mxu0 %v7019
        %10412 = vmatpush.bf16.msra.mxu0 %v7015
        %10413 = vmatpush.bf16.msra.mxu0 %v7011
        %10414 = vmatmul.bf16.gmra.mxu0 %v666
        %v10415 = vpop.f32.mrf.mxu0
        %v10416 = vadd.f32 %v10403, %v10415
        %v10417 = vpop.f32.mrf.mxu0
        %10418 = vdwg.mxu0
        %10419 = vmatpush.bf16.msra.mxu0 %v7071
        %10420 = vmatpush.bf16.msra.mxu0 %v7067
        %10421 = vmatpush.bf16.msra.mxu0 %v7063
        %10422 = vmatpush.bf16.msra.mxu0 %v7059
        %10423 = vmatpush.bf16.msra.mxu0 %v7055
        %10424 = vmatpush.bf16.msra.mxu0 %v7051
        %10425 = vmatpush.bf16.msra.mxu0 %v7047
        %10426 = vmatpush.bf16.msra.mxu0 %v7043
        %10427 = vmatmul.bf16.gmra.mxu0 %v667
        %v10428 = vpop.f32.mrf.mxu0
        %v10429 = vadd.f32 %v10416, %v10428
        %v10430 = vpop.f32.mrf.mxu0
        %10431 = vdwg.mxu0
        %v10432 = vadd.f32 %v668, %v8869
        %v10433 = vadd.f32 %v669, %v9389
        %v10434 = vadd.f32 %v670, %v9909
        %v10435 = vadd.f32 %v671, %v10429
        %10436 = vst [vmem:[#allocation2] sm:$0xff] %v10432
        %10437 = vst [vmem:[#allocation2 + $0x8] sm:$0xff] %v10433
        %10438 = vst [vmem:[#allocation2 + $0x10] sm:$0xff] %v10434
        %10439 = vst [vmem:[#allocation2 + $0x18] sm:$0xff] %v10435
        %p10440 = scmp.eq.s32.totalorder %s30, 1
        // Predicated region
        $region85: #{fake_news_detector_forward.1} parent=55 // pred_check
          %p10441 = pneg %p10440
        $region86: #{fake_news_detector_forward.1} parent=55 // pred_check_branch
          %10443 = sbr.rel (%p10441) target = $region88
        $region87: #{fake_news_detector_forward.1} parent=55 // pred_region
          %v10444 = vld [vmem:[#allocation2] sm:$0xff]
          %v10445 = vld [vmem:[#allocation2 + $0x8] sm:$0xff]
          %v10446 = vld [vmem:[#allocation2 + $0x10] sm:$0xff]
          %v10447 = vld [vmem:[#allocation2 + $0x18] sm:$0xff]
          %v10448 = vld [vmem:[#allocation8] sm:$0xf]
          %v10450 = vperm.slane %v10448, 0
          %v10451 = vperm.slane %v10448, 1
          %v10452 = vperm.slane %v10448, 2
          %v10453 = vperm.slane %v10448, 3
          %v10458 = vadd.f32 %v10444, %v10450
          %v10459 = vadd.f32 %v10445, %v10451
          %v10460 = vadd.f32 %v10446, %v10452
          %v10461 = vadd.f32 %v10447, %v10453
          %v10462 = vmax.f32 %v10458, 0.0
          %v10463 = vmax.f32 %v10459, 0.0
          %v10464 = vmax.f32 %v10460, 0.0
          %v10465 = vmax.f32 %v10461, 0.0
          %v10466 = vld [vmem:[#allocation9] sm:$0xff]
          %v10467 = vld [vmem:[#allocation9 + $0x8] sm:$0xff]
          %v10468 = vld [vmem:[#allocation9 + $0x10] sm:$0xff]
          %v10469 = vld [vmem:[#allocation9 + $0x18] sm:$0xff]
          %v10470 = vld [vmem:[#allocation9 + $0x20] sm:$0xff]
          %v10471 = vld [vmem:[#allocation9 + $0x28] sm:$0xff]
          %v10472 = vld [vmem:[#allocation9 + $0x30] sm:$0xff]
          %v10473 = vld [vmem:[#allocation9 + $0x38] sm:$0xff]
          %v10474 = vld [vmem:[#allocation9 + $0x40] sm:$0xff]
          %v10475 = vld [vmem:[#allocation9 + $0x48] sm:$0xff]
          %v10476 = vld [vmem:[#allocation9 + $0x50] sm:$0xff]
          %v10477 = vld [vmem:[#allocation9 + $0x58] sm:$0xff]
          %v10478 = vld [vmem:[#allocation9 + $0x60] sm:$0xff]
          %v10479 = vld [vmem:[#allocation9 + $0x68] sm:$0xff]
          %v10480 = vld [vmem:[#allocation9 + $0x70] sm:$0xff]
          %v10481 = vld [vmem:[#allocation9 + $0x78] sm:$0xff]
          %v10482 = vld [vmem:[#allocation9 + $0x80] sm:$0xff]
          %v10483 = vld [vmem:[#allocation9 + $0x88] sm:$0xff]
          %v10484 = vld [vmem:[#allocation9 + $0x90] sm:$0xff]
          %v10485 = vld [vmem:[#allocation9 + $0x98] sm:$0xff]
          %v10486 = vld [vmem:[#allocation9 + $0xa0] sm:$0xff]
          %v10487 = vld [vmem:[#allocation9 + $0xa8] sm:$0xff]
          %v10488 = vld [vmem:[#allocation9 + $0xb0] sm:$0xff]
          %v10489 = vld [vmem:[#allocation9 + $0xb8] sm:$0xff]
          %v10490 = vld [vmem:[#allocation9 + $0xc0] sm:$0xff]
          %v10491 = vld [vmem:[#allocation9 + $0xc8] sm:$0xff]
          %v10492 = vld [vmem:[#allocation9 + $0xd0] sm:$0xff]
          %v10493 = vld [vmem:[#allocation9 + $0xd8] sm:$0xff]
          %v10494 = vld [vmem:[#allocation9 + $0xe0] sm:$0xff]
          %v10495 = vld [vmem:[#allocation9 + $0xe8] sm:$0xff]
          %v10496 = vld [vmem:[#allocation9 + $0xf0] sm:$0xff]
          %v10497 = vld [vmem:[#allocation9 + $0xf8] sm:$0xff]
          %v10498 = vld [vmem:[#allocation9 + $0x100] sm:$0xff]
          %v10499 = vld [vmem:[#allocation9 + $0x108] sm:$0xff]
          %v10500 = vld [vmem:[#allocation9 + $0x110] sm:$0xff]
          %v10501 = vld [vmem:[#allocation9 + $0x118] sm:$0xff]
          %v10502 = vld [vmem:[#allocation9 + $0x120] sm:$0xff]
          %v10503 = vld [vmem:[#allocation9 + $0x128] sm:$0xff]
          %v10504 = vld [vmem:[#allocation9 + $0x130] sm:$0xff]
          %v10505 = vld [vmem:[#allocation9 + $0x138] sm:$0xff]
          %v10506 = vld [vmem:[#allocation9 + $0x140] sm:$0xff]
          %v10507 = vld [vmem:[#allocation9 + $0x148] sm:$0xff]
          %v10508 = vld [vmem:[#allocation9 + $0x150] sm:$0xff]
          %v10509 = vld [vmem:[#allocation9 + $0x158] sm:$0xff]
          %v10510 = vld [vmem:[#allocation9 + $0x160] sm:$0xff]
          %v10511 = vld [vmem:[#allocation9 + $0x168] sm:$0xff]
          %v10512 = vld [vmem:[#allocation9 + $0x170] sm:$0xff]
          %v10513 = vld [vmem:[#allocation9 + $0x178] sm:$0xff]
          %v10514 = vld [vmem:[#allocation9 + $0x180] sm:$0xff]
          %v10515 = vld [vmem:[#allocation9 + $0x188] sm:$0xff]
          %v10516 = vld [vmem:[#allocation9 + $0x190] sm:$0xff]
          %v10517 = vld [vmem:[#allocation9 + $0x198] sm:$0xff]
          %v10518 = vld [vmem:[#allocation9 + $0x1a0] sm:$0xff]
          %v10519 = vld [vmem:[#allocation9 + $0x1a8] sm:$0xff]
          %v10520 = vld [vmem:[#allocation9 + $0x1b0] sm:$0xff]
          %v10521 = vld [vmem:[#allocation9 + $0x1b8] sm:$0xff]
          %v10522 = vld [vmem:[#allocation9 + $0x1c0] sm:$0xff]
          %v10523 = vld [vmem:[#allocation9 + $0x1c8] sm:$0xff]
          %v10524 = vld [vmem:[#allocation9 + $0x1d0] sm:$0xff]
          %v10525 = vld [vmem:[#allocation9 + $0x1d8] sm:$0xff]
          %v10526 = vld [vmem:[#allocation9 + $0x1e0] sm:$0xff]
          %v10527 = vld [vmem:[#allocation9 + $0x1e8] sm:$0xff]
          %v10528 = vld [vmem:[#allocation9 + $0x1f0] sm:$0xff]
          %v10529 = vld [vmem:[#allocation9 + $0x1f8] sm:$0xff]
          %v10530 = vld [vmem:[#allocation11] sm:$0x1]
          %v10532 = vperm.slane %v10530, 0
          %10534 = vmatpush.msra.mxu0 %v10481
          %10535 = vmatpush.msra.mxu0 %v10480
          %10536 = vmatpush.msra.mxu0 %v10479
          %10537 = vmatpush.msra.mxu0 %v10478
          %10538 = vmatpush.msra.mxu0 %v10477
          %10539 = vmatpush.msra.mxu0 %v10476
          %10540 = vmatpush.msra.mxu0 %v10475
          %10541 = vmatpush.msra.mxu0 %v10474
          %10542 = vmatpush.msra.mxu0 %v10473
          %10543 = vmatpush.msra.mxu0 %v10472
          %10544 = vmatpush.msra.mxu0 %v10471
          %10545 = vmatpush.msra.mxu0 %v10470
          %10546 = vmatpush.msra.mxu0 %v10469
          %10547 = vmatpush.msra.mxu0 %v10468
          %10548 = vmatpush.msra.mxu0 %v10467
          %10549 = vmatpush.msra.mxu0 %v10466
          %10550 = vmatmul.f32.gmra.mxu0 %v10462
          %v10551 = vpop.f32.mrf.mxu0
          %v10552 = vadd.f32 %v10532, %v10551
          %10553 = vdwg.mxu0
          %10554 = vmatpush.msra.mxu0 %v10497
          %10555 = vmatpush.msra.mxu0 %v10496
          %10556 = vmatpush.msra.mxu0 %v10495
          %10557 = vmatpush.msra.mxu0 %v10494
          %10558 = vmatpush.msra.mxu0 %v10493
          %10559 = vmatpush.msra.mxu0 %v10492
          %10560 = vmatpush.msra.mxu0 %v10491
          %10561 = vmatpush.msra.mxu0 %v10490
          %10562 = vmatpush.msra.mxu0 %v10489
          %10563 = vmatpush.msra.mxu0 %v10488
          %10564 = vmatpush.msra.mxu0 %v10487
          %10565 = vmatpush.msra.mxu0 %v10486
          %10566 = vmatpush.msra.mxu0 %v10485
          %10567 = vmatpush.msra.mxu0 %v10484
          %10568 = vmatpush.msra.mxu0 %v10483
          %10569 = vmatpush.msra.mxu0 %v10482
          %10570 = vmatmul.f32.gmra.mxu0 %v10463
          %v10571 = vpop.f32.mrf.mxu0
          %v10572 = vadd.f32 %v10552, %v10571
          %10573 = vdwg.mxu0
          %10574 = vmatpush.msra.mxu0 %v10513
          %10575 = vmatpush.msra.mxu0 %v10512
          %10576 = vmatpush.msra.mxu0 %v10511
          %10577 = vmatpush.msra.mxu0 %v10510
          %10578 = vmatpush.msra.mxu0 %v10509
          %10579 = vmatpush.msra.mxu0 %v10508
          %10580 = vmatpush.msra.mxu0 %v10507
          %10581 = vmatpush.msra.mxu0 %v10506
          %10582 = vmatpush.msra.mxu0 %v10505
          %10583 = vmatpush.msra.mxu0 %v10504
          %10584 = vmatpush.msra.mxu0 %v10503
          %10585 = vmatpush.msra.mxu0 %v10502
          %10586 = vmatpush.msra.mxu0 %v10501
          %10587 = vmatpush.msra.mxu0 %v10500
          %10588 = vmatpush.msra.mxu0 %v10499
          %10589 = vmatpush.msra.mxu0 %v10498
          %10590 = vmatmul.f32.gmra.mxu0 %v10464
          %v10591 = vpop.f32.mrf.mxu0
          %v10592 = vadd.f32 %v10572, %v10591
          %10593 = vdwg.mxu0
          %10594 = vmatpush.msra.mxu0 %v10529
          %10595 = vmatpush.msra.mxu0 %v10528
          %10596 = vmatpush.msra.mxu0 %v10527
          %10597 = vmatpush.msra.mxu0 %v10526
          %10598 = vmatpush.msra.mxu0 %v10525
          %10599 = vmatpush.msra.mxu0 %v10524
          %10600 = vmatpush.msra.mxu0 %v10523
          %10601 = vmatpush.msra.mxu0 %v10522
          %10602 = vmatpush.msra.mxu0 %v10521
          %10603 = vmatpush.msra.mxu0 %v10520
          %10604 = vmatpush.msra.mxu0 %v10519
          %10605 = vmatpush.msra.mxu0 %v10518
          %10606 = vmatpush.msra.mxu0 %v10517
          %10607 = vmatpush.msra.mxu0 %v10516
          %10608 = vmatpush.msra.mxu0 %v10515
          %10609 = vmatpush.msra.mxu0 %v10514
          %10610 = vmatmul.f32.gmra.mxu0 %v10465
          %v10611 = vpop.f32.mrf.mxu0
          %v10612 = vadd.f32 %v10592, %v10611
          %10613 = vdwg.mxu0
          %v10614 = vmax.f32 %v10612, 0.0
          %v10615 = vld [vmem:[%s5] sm:$0xff]
          %v10616 = vld [vmem:[%s5 + $0x8] sm:$0xff]
          %v10617 = vld [vmem:[%s5 + $0x10] sm:$0xff]
          %v10618 = vld [vmem:[%s5 + $0x18] sm:$0xff]
          %v10619 = vld [vmem:[%s5 + $0x20] sm:$0xff]
          %v10620 = vld [vmem:[%s5 + $0x28] sm:$0xff]
          %v10621 = vld [vmem:[%s5 + $0x30] sm:$0xff]
          %v10622 = vld [vmem:[%s5 + $0x38] sm:$0xff]
          %v10623 = vld [vmem:[%s5 + $0x40] sm:$0xff]
          %v10624 = vld [vmem:[%s5 + $0x48] sm:$0xff]
          %v10625 = vld [vmem:[%s5 + $0x50] sm:$0xff]
          %v10626 = vld [vmem:[%s5 + $0x58] sm:$0xff]
          %v10627 = vld [vmem:[%s5 + $0x60] sm:$0xff]
          %v10628 = vld [vmem:[%s5 + $0x68] sm:$0xff]
          %v10629 = vld [vmem:[%s5 + $0x70] sm:$0xff]
          %v10630 = vld [vmem:[%s5 + $0x78] sm:$0xff]
          %v10631 = vld [vmem:[#allocation12] sm:$0x1]
          %v10633 = vperm.slane %v10631, 0
          %10635 = vmatpush.msra.mxu0 %v10630
          %10636 = vmatpush.msra.mxu0 %v10629
          %10637 = vmatpush.msra.mxu0 %v10628
          %10638 = vmatpush.msra.mxu0 %v10627
          %10639 = vmatpush.msra.mxu0 %v10626
          %10640 = vmatpush.msra.mxu0 %v10625
          %10641 = vmatpush.msra.mxu0 %v10624
          %10642 = vmatpush.msra.mxu0 %v10623
          %10643 = vmatpush.msra.mxu0 %v10622
          %10644 = vmatpush.msra.mxu0 %v10621
          %10645 = vmatpush.msra.mxu0 %v10620
          %10646 = vmatpush.msra.mxu0 %v10619
          %10647 = vmatpush.msra.mxu0 %v10618
          %10648 = vmatpush.msra.mxu0 %v10617
          %10649 = vmatpush.msra.mxu0 %v10616
          %10650 = vmatpush.msra.mxu0 %v10615
          %10651 = vmatmul.f32.gmra.mxu0 %v10614
          %v10652 = vpop.f32.mrf.mxu0
          %v10653 = vadd.f32 %v10633, %v10652
          %10654 = vdwg.mxu0
          %v10655 = vmax.f32 %v10653, 0.0
          %v10656 = vld [vmem:[%s7] sm:$0xff]
          %v10657 = vld [vmem:[%s7 + $0x8] sm:$0xff]
          %v10658 = vld [vmem:[%s7 + $0x10] sm:$0xff]
          %v10659 = vld [vmem:[%s7 + $0x18] sm:$0xff]
          %v10660 = vld [vmem:[#allocation3] sm:$0x1]
          %v10662 = vperm.slane %v10660, 0
          %vm10664 = vcmask 261120
          %v10666 = vsel %vm10664, %v10655, 0
          %10668 = vmatpush.msra.mxu0 0.0
          %10669 = vmatpush.msra.mxu0 0.0
          %10670 = vmatpush.msra.mxu0 0.0
          %10671 = vmatpush.msra.mxu0 0.0
          %10672 = vmatpush.msra.mxu0 0.0
          %10673 = vmatpush.msra.mxu0 0.0
          %10674 = vmatpush.msra.mxu0 0.0
          %10675 = vmatpush.msra.mxu0 0.0
          %10676 = vmatpush.msra.mxu0 0.0
          %10677 = vmatpush.msra.mxu0 0.0
          %10678 = vmatpush.msra.mxu0 0.0
          %10679 = vmatpush.msra.mxu0 0.0
          %10680 = vmatpush.msra.mxu0 %v10659
          %10681 = vmatpush.msra.mxu0 %v10658
          %10682 = vmatpush.msra.mxu0 %v10657
          %10683 = vmatpush.msra.mxu0 %v10656
          %10684 = vmatmul.f32.gmra.mxu0 %v10666
          %v10685 = vpop.f32.mrf.mxu0
          %v10686 = vadd.f32 %v10662, %v10685
          %10687 = vdwg.mxu0
          %v10688 = vsub.f32 0.0, %v10686
          %v10689 = vmul.f32 %v10688, 1.442695
          %v10690 = vpow.pop %v10689
          %v10691 = vadd.f32 %v10690, 1.0
          %v10692 = vrcp.pop %v10691
          %v10693 = vmul.f32 %v10691, %v10692
          %v10694 = vsub.f32 1.0, %v10693
          %v10695 = vmul.f32 %v10692, %v10694
          %v10696 = vadd.f32 %v10692, %v10695
          %vm10697 = vweird.f32 %v10691
          %vm10698 = vweird.f32 %v10692
          %vm10699 = vmor %vm10697, %vm10698
          %v10700 = vsel %vm10699, %v10692, %v10696
          %v10701 = vand.u32 2147483647, %v10691
          %vm10702 = vcmp.eq.f32.partialorder %v10701, 8.507059e+37
          %v10703 = vand.u32 %v10691, 2147483648
          %v10704 = vor.u32 1.1754944e-38, %v10703
          %v10705 = vsel %vm10702, %v10704, %v10700
          %v10706 = vmul.f32 1.0, %v10705
          %vm10707 = vcmask 7168
          %10708 = vst.msk [vmem:[%s9] sm:$0xff] %vm10707, %v10706
        $region88: #{fake_news_detector_forward.1} parent=55 // pred_fallthru
          _
        // Predicated region
        $region89: #{fake_news_detector_forward.1} parent=55 // pred_check
          %p10709 = pneg %p242
        $region90: #{fake_news_detector_forward.1} parent=55 // pred_check_branch
          %10711 = sbr.rel (%p10709) target = $region92
        $region91: #{fake_news_detector_forward.1} parent=55 // pred_region
          _
        $region92: #{fake_news_detector_forward.1} parent=55 // pred_fallthru
          _
        // Predicated region
        $region93: #{fake_news_detector_forward.1} parent=55 // pred_check
          %p10712 = pneg %p242
        $region94: #{fake_news_detector_forward.1} parent=55 // pred_check_branch
          %10714 = sbr.rel (%p10712) target = $region96
        $region95: #{fake_news_detector_forward.1} parent=55 // pred_region
          _
        $region96: #{fake_news_detector_forward.1} parent=55 // pred_fallthru
          _
      $region56: #{fake_news_detector_forward.1} parent=5 // pred_fallthru
        _
      %p10715 = scmp.le.s32.totalorder 2, %s25
      // Predicated region
      $region97: #{fake_news_detector_forward.1} parent=5 // pred_check
        %p10716 = pneg %p10715
      $region98: #{fake_news_detector_forward.1} parent=5 // pred_check_branch
        %10718 = sbr.rel (%p10716) target = $region100
      $region99: #{fake_news_detector_forward.1} parent=5 // pred_region
        %s10719 = ssub.s32 %s25, 2
      $region100: #{fake_news_detector_forward.1} parent=5 // pred_fallthru
        _
    $region6: #{fake_news_detector_forward.1} parent=1 // loop_footer
      %s29 = sadd.s32 1, %s25
    $region7: #{fake_news_detector_forward.1} parent=1 // loop_footer_branch
      %24 = sbr.rel target = $region3
    $region8: #{fake_news_detector_forward.1} parent=1 // loop_exit
      _
    %10720 = vsyncpa [#allocation5], 1
    %s10721 = scalar_lea.sflag [#allocation5], 1
    %10722 = vsyncpa %s10721, 1
    %10723 = vsyncpa [#allocation7], 1
    %s10724 = scalar_lea.sflag [#allocation7], 1
    %10725 = vsyncpa %s10724, 1
    %10726 = vsyncpa [#allocation10], 1
    %10727 = vsyncpa [#allocation13], 1

</llo_original>
